<compile_context>
chip_gen: v7x
topology: tpu7x:2x2x1
jax: 0.10.0
libtpu: 0.0.40
codegen_flags: <defaults>
</compile_context>

<pallas_src>
import math
import functools

import jax
import jax.numpy as jnp
from jax.experimental import pallas as pl
from jax.experimental.pallas import tpu as pltpu


# ----------------------------------------------------------------------------
# Pallas kernel: full 3-layer MLP forward for one dense (8, L) batch tile.
# ----------------------------------------------------------------------------
def _mlp_kernel(x_ref, w1_ref, b1_ref, w2_ref, b2_ref, w3_ref, b3_ref, o_ref):
    x = x_ref[...]                                        # (8, L) f32

    def sigmoid(v):
        # single EUP tanh per element instead of exp + reciprocal
        return 0.5 * (jnp.tanh(0.5 * v) + 1.0)

    # ---- Layer 1: 1 -> 16 (VPU broadcast mul/add, no K=1 MXU call) ----------
    # Replicate the batch tile 16x along sublanes: row k*8 + r  <->  x[r].
    xt = jnp.concatenate([x] * 16, axis=0)                # (128, L)
    h1 = sigmoid(w1_ref[...] * xt + b1_ref[...])          # (128, L)

    # ---- Layer 2: 16 -> 32 as one dense MXU matmul --------------------------
    # w2_ref holds kron(W2, I8): (256, 128), so rows stay grouped per sublane.
    h2 = jnp.dot(w2_ref[...], h1,
                 preferred_element_type=jnp.float32)      # (256, L)
    h2 = sigmoid(h2 + b2_ref[...])

    # ---- Layer 3: 32 -> 1 (broadcast mul + slab reduction, no N=1 MXU) ------
    p = w3_ref[...] * h2                                  # (256, L)
    acc = p[0:8, :]
    for j in range(1, 32):                                # static, unrolled
        acc = acc + p[8 * j:8 * (j + 1), :]
    o_ref[...] = (acc + b3_ref[...]).astype(o_ref.dtype)  # (8, L)


# ----------------------------------------------------------------------------
# Wrapper: flatten, pad to a tile multiple, pre-pack weights, tiled pallas_call.
# ----------------------------------------------------------------------------
@functools.partial(jax.jit, static_argnames=("lane_tile",))
def mlp_forward(x, params, lane_tile=2048):
    w1, b1, w2, b2, w3, b3 = params          # torch layouts: (out,in), (out,)

    x_flat = x.reshape(-1).astype(jnp.float32)
    n = x_flat.shape[0]
    samples_per_tile = 8 * lane_tile
    n_tiles = max(1, -(-n // samples_per_tile))           # cdiv
    n_pad = n_tiles * samples_per_tile
    if n_pad != n:
        x_flat = jnp.pad(x_flat, (0, n_pad - n))
    x2 = x_flat.reshape(n_tiles * 8, lane_tile)           # dense (8,128) tiles

    # --- pre-pack weights/biases into kernel-ready, sublane-replicated form --
    f32 = jnp.float32
    w1big = jnp.repeat(w1.reshape(16, 1).astype(f32), 8, axis=0)    # (128, 1)
    b1big = jnp.repeat(b1.reshape(16, 1).astype(f32), 8, axis=0)    # (128, 1)
    w2big = jnp.kron(w2.astype(f32), jnp.eye(8, dtype=f32))         # (256, 128)
    b2big = jnp.repeat(b2.reshape(32, 1).astype(f32), 8, axis=0)    # (256, 1)
    w3big = jnp.repeat(w3.reshape(32, 1).astype(f32), 8, axis=0)    # (256, 1)
    b3m = b3.reshape(1, 1).astype(f32)                              # (1, 1)

    const = lambda i: (0, 0)   # weights stay VMEM-resident across grid steps

    out = pl.pallas_call(
        _mlp_kernel,
        out_shape=jax.ShapeDtypeStruct((n_tiles * 8, lane_tile), jnp.float32),
        grid_spec=pltpu.PrefetchScalarGridSpec(
            num_scalar_prefetch=0,
            grid=(n_tiles,),
            in_specs=[
                pl.BlockSpec((8, lane_tile), lambda i: (i, 0)),   # x tile
                pl.BlockSpec((128, 1), const),                    # w1 (repl. x8)
                pl.BlockSpec((128, 1), const),                    # b1
                pl.BlockSpec((256, 128), const),                  # kron(W2, I8)
                pl.BlockSpec((256, 1), const),                    # b2
                pl.BlockSpec((256, 1), const),                    # w3
                pl.BlockSpec((1, 1), const),                      # b3
            ],
            out_specs=pl.BlockSpec((8, lane_tile), lambda i: (i, 0)),
        ),
        compiler_params=pltpu.CompilerParams(
            dimension_semantics=("parallel",),
            vmem_limit_bytes=32 * 1024 * 1024,
        ),
    )(x2, w1big, b1big, w2big, b2big, w3big, b3m)

    return out.reshape(-1)[:n]                            # matches x.reshape(-1)


# ----------------------------------------------------------------------------
# Deterministic parameter init (PyTorch nn.Linear default U(-1/sqrt(fan_in), .)).
# Stored in torch layouts: weight (out, in), bias (out,).
# ----------------------------------------------------------------------------
def init_params(key):
    def linear_init(key, fan_in, fan_out):
        kw, kb = jax.random.split(key)
        bound = 1.0 / math.sqrt(fan_in)
        w = jax.random.uniform(kw, (fan_out, fan_in), jnp.float32, -bound, bound)
        b = jax.random.uniform(kb, (fan_out,), jnp.float32, -bound, bound)
        return w, b

    k1, k2, k3 = jax.random.split(key, 3)
    w1, b1 = linear_init(k1, 1, 16)
    w2, b2 = linear_init(k2, 16, 32)
    w3, b3 = linear_init(k3, 32, 1)
    return (w1, b1, w2, b2, w3, b3)


# ----------------------------------------------------------------------------
# Pure-JAX reference (mirrors the PyTorch forward exactly).
# ----------------------------------------------------------------------------
def mlp_reference(x, params):
    w1, b1, w2, b2, w3, b3 = params
    h = x.reshape(-1, 1).astype(jnp.float32)
    h = jax.nn.sigmoid(h @ w1.T + b1)
    h = jax.nn.sigmoid(h @ w2.T + b2)
    return (h @ w3.T + b3).reshape(-1)


if __name__ == "__main__":
    key = jax.random.PRNGKey(0)
    k_params, k_x = jax.random.split(key)

    params = init_params(k_params)

    # Any input shape is flattened to scalar samples; 20200 samples -> 2 grid
    # steps with tail padding (exercises both the grid and the pad/slice path).
    x = jax.random.normal(k_x, (2, 100, 101), dtype=jnp.float32)

    y = mlp_forward(x, params)
    y = jax.block_until_ready(y)

    y_ref = mlp_reference(x, params)
    assert y.shape == (x.size,), (y.shape, x.size)
    assert jnp.allclose(y, y_ref, atol=1e-5, rtol=1e-5), "mismatch vs reference"

    print("KERNEL_OK")
</pallas_src>

<mosaic_0001>
module attributes {stable_mosaic.version = 11 : i64} {
  func.func @_mlp_kernel(%arg0: i32, %arg1: memref<8x2048xf32, #tpu.memory_space<vmem>>, %arg2: memref<128x1xf32, #tpu.memory_space<vmem>>, %arg3: memref<128x1xf32, #tpu.memory_space<vmem>>, %arg4: memref<256x128xf32, #tpu.memory_space<vmem>>, %arg5: memref<256x1xf32, #tpu.memory_space<vmem>>, %arg6: memref<256x1xf32, #tpu.memory_space<vmem>>, %arg7: memref<1x1xf32, #tpu.memory_space<vmem>>, %arg8: memref<8x2048xf32, #tpu.memory_space<vmem>>) attributes {dimension_semantics = [#tpu.dimension_semantics<parallel>], iteration_bounds = array<i64: 2>, scalar_prefetch = 0 : i64, scratch_operands = 0 : i64, tpu.core_type = #tpu.core_type<tc>, window_params = [{transform_indices = @transform_0, window_bounds = array<i64: 8, 2048>}, {pipeline_mode = #tpu.pipeline_mode<synchronous>, transform_indices = @transform_1, window_bounds = array<i64: 128, 1>}, {pipeline_mode = #tpu.pipeline_mode<synchronous>, transform_indices = @transform_2, window_bounds = array<i64: 128, 1>}, {pipeline_mode = #tpu.pipeline_mode<synchronous>, transform_indices = @transform_3, window_bounds = array<i64: 256, 128>}, {pipeline_mode = #tpu.pipeline_mode<synchronous>, transform_indices = @transform_4, window_bounds = array<i64: 256, 1>}, {pipeline_mode = #tpu.pipeline_mode<synchronous>, transform_indices = @transform_5, window_bounds = array<i64: 256, 1>}, {pipeline_mode = #tpu.pipeline_mode<synchronous>, transform_indices = @transform_6, window_bounds = array<i64: 1, 1>}, {transform_indices = @transform_7, window_bounds = array<i64: 8, 2048>}]} {
    %c0 = arith.constant 0 : index
    %c0_0 = arith.constant 0 : index
    %0 = vector.load %arg1[%c0, %c0_0] : memref<8x2048xf32, #tpu.memory_space<vmem>>, vector<8x2048xf32>
    %1 = tpu.concatenate %0, %0, %0, %0, %0, %0, %0, %0, %0, %0, %0, %0, %0, %0, %0, %0 in 0 : vector<8x2048xf32>, vector<8x2048xf32>, vector<8x2048xf32>, vector<8x2048xf32>, vector<8x2048xf32>, vector<8x2048xf32>, vector<8x2048xf32>, vector<8x2048xf32>, vector<8x2048xf32>, vector<8x2048xf32>, vector<8x2048xf32>, vector<8x2048xf32>, vector<8x2048xf32>, vector<8x2048xf32>, vector<8x2048xf32>, vector<8x2048xf32> -> vector<128x2048xf32>
    %c0_1 = arith.constant 0 : index
    %c0_2 = arith.constant 0 : index
    %2 = vector.load %arg2[%c0_1, %c0_2] : memref<128x1xf32, #tpu.memory_space<vmem>>, vector<128x1xf32>
    %3 = vector.broadcast %2 : vector<128x1xf32> to vector<128x2048xf32>
    %4 = arith.mulf %3, %1 : vector<128x2048xf32>
    %c0_3 = arith.constant 0 : index
    %c0_4 = arith.constant 0 : index
    %5 = vector.load %arg3[%c0_3, %c0_4] : memref<128x1xf32, #tpu.memory_space<vmem>>, vector<128x1xf32>
    %6 = vector.broadcast %5 : vector<128x1xf32> to vector<128x2048xf32>
    %7 = arith.addf %4, %6 : vector<128x2048xf32>
    %cst = arith.constant 5.000000e-01 : f32
    %8 = vector.broadcast %cst : f32 to vector<128x2048xf32>
    %9 = arith.mulf %8, %7 : vector<128x2048xf32>
    %10 = math.tanh %9 : vector<128x2048xf32>
    %cst_5 = arith.constant 1.000000e+00 : f32
    %11 = vector.broadcast %cst_5 : f32 to vector<128x2048xf32>
    %12 = arith.addf %10, %11 : vector<128x2048xf32>
    %cst_6 = arith.constant 5.000000e-01 : f32
    %13 = vector.broadcast %cst_6 : f32 to vector<128x2048xf32>
    %14 = arith.mulf %13, %12 : vector<128x2048xf32>
    %c0_7 = arith.constant 0 : index
    %c0_8 = arith.constant 0 : index
    %15 = vector.load %arg4[%c0_7, %c0_8] : memref<256x128xf32, #tpu.memory_space<vmem>>, vector<256x128xf32>
    %cst_9 = arith.constant dense<0.000000e+00> : vector<256x2048xf32>
    %16 = tpu.matmul %15, %14, %cst_9 {dimension_numbers = #tpu.dot_dimension_numbers<[1], [0], [0], [1], [0, 0, 1, 1], [], []>} : vector<256x128xf32>, vector<128x2048xf32>, vector<256x2048xf32> -> vector<256x2048xf32>
    %c0_10 = arith.constant 0 : index
    %c0_11 = arith.constant 0 : index
    %17 = vector.load %arg5[%c0_10, %c0_11] : memref<256x1xf32, #tpu.memory_space<vmem>>, vector<256x1xf32>
    %18 = vector.broadcast %17 : vector<256x1xf32> to vector<256x2048xf32>
    %19 = arith.addf %16, %18 : vector<256x2048xf32>
    %cst_12 = arith.constant 5.000000e-01 : f32
    %20 = vector.broadcast %cst_12 : f32 to vector<256x2048xf32>
    %21 = arith.mulf %20, %19 : vector<256x2048xf32>
    %22 = math.tanh %21 : vector<256x2048xf32>
    %cst_13 = arith.constant 1.000000e+00 : f32
    %23 = vector.broadcast %cst_13 : f32 to vector<256x2048xf32>
    %24 = arith.addf %22, %23 : vector<256x2048xf32>
    %cst_14 = arith.constant 5.000000e-01 : f32
    %25 = vector.broadcast %cst_14 : f32 to vector<256x2048xf32>
    %26 = arith.mulf %25, %24 : vector<256x2048xf32>
    %c0_15 = arith.constant 0 : index
    %c0_16 = arith.constant 0 : index
    %27 = vector.load %arg6[%c0_15, %c0_16] : memref<256x1xf32, #tpu.memory_space<vmem>>, vector<256x1xf32>
    %28 = vector.broadcast %27 : vector<256x1xf32> to vector<256x2048xf32>
    %29 = arith.mulf %28, %26 : vector<256x2048xf32>
    %30 = vector.extract_strided_slice %29 {offsets = [0, 0], sizes = [8, 2048], strides = [1, 1]} : vector<256x2048xf32> to vector<8x2048xf32>
    %31 = vector.extract_strided_slice %29 {offsets = [8, 0], sizes = [8, 2048], strides = [1, 1]} : vector<256x2048xf32> to vector<8x2048xf32>
    %32 = arith.addf %30, %31 : vector<8x2048xf32>
    %33 = vector.extract_strided_slice %29 {offsets = [16, 0], sizes = [8, 2048], strides = [1, 1]} : vector<256x2048xf32> to vector<8x2048xf32>
    %34 = arith.addf %32, %33 : vector<8x2048xf32>
    %35 = vector.extract_strided_slice %29 {offsets = [24, 0], sizes = [8, 2048], strides = [1, 1]} : vector<256x2048xf32> to vector<8x2048xf32>
    %36 = arith.addf %34, %35 : vector<8x2048xf32>
    %37 = vector.extract_strided_slice %29 {offsets = [32, 0], sizes = [8, 2048], strides = [1, 1]} : vector<256x2048xf32> to vector<8x2048xf32>
    %38 = arith.addf %36, %37 : vector<8x2048xf32>
    %39 = vector.extract_strided_slice %29 {offsets = [40, 0], sizes = [8, 2048], strides = [1, 1]} : vector<256x2048xf32> to vector<8x2048xf32>
    %40 = arith.addf %38, %39 : vector<8x2048xf32>
    %41 = vector.extract_strided_slice %29 {offsets = [48, 0], sizes = [8, 2048], strides = [1, 1]} : vector<256x2048xf32> to vector<8x2048xf32>
    %42 = arith.addf %40, %41 : vector<8x2048xf32>
    %43 = vector.extract_strided_slice %29 {offsets = [56, 0], sizes = [8, 2048], strides = [1, 1]} : vector<256x2048xf32> to vector<8x2048xf32>
    %44 = arith.addf %42, %43 : vector<8x2048xf32>
    %45 = vector.extract_strided_slice %29 {offsets = [64, 0], sizes = [8, 2048], strides = [1, 1]} : vector<256x2048xf32> to vector<8x2048xf32>
    %46 = arith.addf %44, %45 : vector<8x2048xf32>
    %47 = vector.extract_strided_slice %29 {offsets = [72, 0], sizes = [8, 2048], strides = [1, 1]} : vector<256x2048xf32> to vector<8x2048xf32>
    %48 = arith.addf %46, %47 : vector<8x2048xf32>
    %49 = vector.extract_strided_slice %29 {offsets = [80, 0], sizes = [8, 2048], strides = [1, 1]} : vector<256x2048xf32> to vector<8x2048xf32>
    %50 = arith.addf %48, %49 : vector<8x2048xf32>
    %51 = vector.extract_strided_slice %29 {offsets = [88, 0], sizes = [8, 2048], strides = [1, 1]} : vector<256x2048xf32> to vector<8x2048xf32>
    %52 = arith.addf %50, %51 : vector<8x2048xf32>
    %53 = vector.extract_strided_slice %29 {offsets = [96, 0], sizes = [8, 2048], strides = [1, 1]} : vector<256x2048xf32> to vector<8x2048xf32>
    %54 = arith.addf %52, %53 : vector<8x2048xf32>
    %55 = vector.extract_strided_slice %29 {offsets = [104, 0], sizes = [8, 2048], strides = [1, 1]} : vector<256x2048xf32> to vector<8x2048xf32>
    %56 = arith.addf %54, %55 : vector<8x2048xf32>
    %57 = vector.extract_strided_slice %29 {offsets = [112, 0], sizes = [8, 2048], strides = [1, 1]} : vector<256x2048xf32> to vector<8x2048xf32>
    %58 = arith.addf %56, %57 : vector<8x2048xf32>
    %59 = vector.extract_strided_slice %29 {offsets = [120, 0], sizes = [8, 2048], strides = [1, 1]} : vector<256x2048xf32> to vector<8x2048xf32>
    %60 = arith.addf %58, %59 : vector<8x2048xf32>
    %61 = vector.extract_strided_slice %29 {offsets = [128, 0], sizes = [8, 2048], strides = [1, 1]} : vector<256x2048xf32> to vector<8x2048xf32>
    %62 = arith.addf %60, %61 : vector<8x2048xf32>
    %63 = vector.extract_strided_slice %29 {offsets = [136, 0], sizes = [8, 2048], strides = [1, 1]} : vector<256x2048xf32> to vector<8x2048xf32>
    %64 = arith.addf %62, %63 : vector<8x2048xf32>
    %65 = vector.extract_strided_slice %29 {offsets = [144, 0], sizes = [8, 2048], strides = [1, 1]} : vector<256x2048xf32> to vector<8x2048xf32>
    %66 = arith.addf %64, %65 : vector<8x2048xf32>
    %67 = vector.extract_strided_slice %29 {offsets = [152, 0], sizes = [8, 2048], strides = [1, 1]} : vector<256x2048xf32> to vector<8x2048xf32>
    %68 = arith.addf %66, %67 : vector<8x2048xf32>
    %69 = vector.extract_strided_slice %29 {offsets = [160, 0], sizes = [8, 2048], strides = [1, 1]} : vector<256x2048xf32> to vector<8x2048xf32>
    %70 = arith.addf %68, %69 : vector<8x2048xf32>
    %71 = vector.extract_strided_slice %29 {offsets = [168, 0], sizes = [8, 2048], strides = [1, 1]} : vector<256x2048xf32> to vector<8x2048xf32>
    %72 = arith.addf %70, %71 : vector<8x2048xf32>
    %73 = vector.extract_strided_slice %29 {offsets = [176, 0], sizes = [8, 2048], strides = [1, 1]} : vector<256x2048xf32> to vector<8x2048xf32>
    %74 = arith.addf %72, %73 : vector<8x2048xf32>
    %75 = vector.extract_strided_slice %29 {offsets = [184, 0], sizes = [8, 2048], strides = [1, 1]} : vector<256x2048xf32> to vector<8x2048xf32>
    %76 = arith.addf %74, %75 : vector<8x2048xf32>
    %77 = vector.extract_strided_slice %29 {offsets = [192, 0], sizes = [8, 2048], strides = [1, 1]} : vector<256x2048xf32> to vector<8x2048xf32>
    %78 = arith.addf %76, %77 : vector<8x2048xf32>
    %79 = vector.extract_strided_slice %29 {offsets = [200, 0], sizes = [8, 2048], strides = [1, 1]} : vector<256x2048xf32> to vector<8x2048xf32>
    %80 = arith.addf %78, %79 : vector<8x2048xf32>
    %81 = vector.extract_strided_slice %29 {offsets = [208, 0], sizes = [8, 2048], strides = [1, 1]} : vector<256x2048xf32> to vector<8x2048xf32>
    %82 = arith.addf %80, %81 : vector<8x2048xf32>
    %83 = vector.extract_strided_slice %29 {offsets = [216, 0], sizes = [8, 2048], strides = [1, 1]} : vector<256x2048xf32> to vector<8x2048xf32>
    %84 = arith.addf %82, %83 : vector<8x2048xf32>
    %85 = vector.extract_strided_slice %29 {offsets = [224, 0], sizes = [8, 2048], strides = [1, 1]} : vector<256x2048xf32> to vector<8x2048xf32>
    %86 = arith.addf %84, %85 : vector<8x2048xf32>
    %87 = vector.extract_strided_slice %29 {offsets = [232, 0], sizes = [8, 2048], strides = [1, 1]} : vector<256x2048xf32> to vector<8x2048xf32>
    %88 = arith.addf %86, %87 : vector<8x2048xf32>
    %89 = vector.extract_strided_slice %29 {offsets = [240, 0], sizes = [8, 2048], strides = [1, 1]} : vector<256x2048xf32> to vector<8x2048xf32>
    %90 = arith.addf %88, %89 : vector<8x2048xf32>
    %91 = vector.extract_strided_slice %29 {offsets = [248, 0], sizes = [8, 2048], strides = [1, 1]} : vector<256x2048xf32> to vector<8x2048xf32>
    %92 = arith.addf %90, %91 : vector<8x2048xf32>
    %c0_17 = arith.constant 0 : index
    %c0_18 = arith.constant 0 : index
    %93 = vector.load %arg7[%c0_17, %c0_18] : memref<1x1xf32, #tpu.memory_space<vmem>>, vector<1x1xf32>
    %94 = vector.broadcast %93 : vector<1x1xf32> to vector<8x2048xf32>
    %95 = arith.addf %92, %94 : vector<8x2048xf32>
    %c0_19 = arith.constant 0 : index
    %c0_20 = arith.constant 0 : index
    %96 = vector.load %arg8[%c0_19, %c0_20] : memref<8x2048xf32, #tpu.memory_space<vmem>>, vector<8x2048xf32>
    tpu.vector_store %arg8[%c0_19, %c0_20], %95 {strides = array<i32>} : memref<8x2048xf32, #tpu.memory_space<vmem>>, vector<8x2048xf32>,
    return
  }
  func.func @transform_0(%arg0: i32) -> (i32, i32) {
    %c0_i32 = arith.constant 0 : i32
    %c0_i32_0 = arith.constant 0 : i32
    return %arg0, %c0_i32 : i32, i32
  }
  func.func @transform_1(%arg0: i32) -> (i32, i32) {
    %c0_i32 = arith.constant 0 : i32
    %c0_i32_0 = arith.constant 0 : i32
    %c0_i32_1 = arith.constant 0 : i32
    return %c0_i32, %c0_i32_0 : i32, i32
  }
  func.func @transform_2(%arg0: i32) -> (i32, i32) {
    %c0_i32 = arith.constant 0 : i32
    %c0_i32_0 = arith.constant 0 : i32
    %c0_i32_1 = arith.constant 0 : i32
    return %c0_i32, %c0_i32_0 : i32, i32
  }
  func.func @transform_3(%arg0: i32) -> (i32, i32) {
    %c0_i32 = arith.constant 0 : i32
    %c0_i32_0 = arith.constant 0 : i32
    %c0_i32_1 = arith.constant 0 : i32
    return %c0_i32, %c0_i32_0 : i32, i32
  }
  func.func @transform_4(%arg0: i32) -> (i32, i32) {
    %c0_i32 = arith.constant 0 : i32
    %c0_i32_0 = arith.constant 0 : i32
    %c0_i32_1 = arith.constant 0 : i32
    return %c0_i32, %c0_i32_0 : i32, i32
  }
  func.func @transform_5(%arg0: i32) -> (i32, i32) {
    %c0_i32 = arith.constant 0 : i32
    %c0_i32_0 = arith.constant 0 : i32
    %c0_i32_1 = arith.constant 0 : i32
    return %c0_i32, %c0_i32_0 : i32, i32
  }
  func.func @transform_6(%arg0: i32) -> (i32, i32) {
    %c0_i32 = arith.constant 0 : i32
    %c0_i32_0 = arith.constant 0 : i32
    %c0_i32_1 = arith.constant 0 : i32
    return %c0_i32, %c0_i32_0 : i32, i32
  }
  func.func @transform_7(%arg0: i32) -> (i32, i32) {
    %c0_i32 = arith.constant 0 : i32
    %c0_i32_0 = arith.constant 0 : i32
    return %arg0, %c0_i32 : i32, i32
  }
}

</mosaic_0001>

<llo_original>
// kernel: mlp_forward.1
$region0: #{mlp_forward.1}
  #allocation0 [shape = 'u32[]', space=smem, size = 0x4, offset = 0x4, fixed_abs, tag = 'smem constant byte address 0x4 - core index']
  #allocation1 [shape = 'u32[144,128]{1,0:T(1,128)}', space=vmem, size = 0x12000, scoped, tag = 'internal scratch']
  #allocation2 [shape = 'f32[1,1]{1,0:T(1,128)S(1)}', space=vmem, size = 0x200, scoped, tag = 'scoped memory for mlp_forward.1']
  %s0 = inlined_call_operand.vmem [shape: f32[16,2048], index: 0, kind: input, shape index: {}]
  %s1 = inlined_call_operand.vmem [shape: f32[128,1], index: 1, kind: input, shape index: {}]
  %s2 = inlined_call_operand.vmem [shape: f32[128,1], index: 2, kind: input, shape index: {}]
  %s3 = inlined_call_operand.vmem [shape: f32[256,128], index: 3, kind: input, shape index: {}]
  %s4 = inlined_call_operand.vmem [shape: f32[256,1], index: 4, kind: input, shape index: {}]
  %s5 = inlined_call_operand.vmem [shape: f32[256,1], index: 5, kind: input, shape index: {}]
  %s6 = inlined_call_operand.<no memory space> [shape: f32[1,1], index: 6, kind: input, shape index: {}]
  %s7 = inlined_call_operand.vmem [shape: f32[16,2048], index: 7, kind: output, shape index: {}]
  %s8 = sld [smem:[#allocation0]]
  $region61: #{mlp_forward.1} parent=0
    _
  %s10 = ssub.s32 1, %s8
  %s11 = scalar_select 0, %s10, %s8
  %v12 = vstv %s6
  %13 = vst [vmem:[#allocation2] sm:$0x1] %v12
  loop: start=0, step=1, limit=4
  $region2: #{mlp_forward.1} parent=0 // loop_pre_header
    _
  $region3: #{mlp_forward.1} parent=0 // loop_header
    %s15 = sphi 0, %s19
    %p16 = scmp.ge.s32.totalorder %s15, 4
    %s25 = sphi 0, %s27
    %s28 = sphi 0, %s25
    %s29 = sphi 0, %s28
    %s45 = sphi 0, %s29
    %s49 = sphi 0, %s49
    %s51 = sphi 0, %s49
    %s52 = sphi 0, %s51
    %s66 = sphi 0, %s52
    %s70 = sphi 0, %s70
    %s72 = sphi 0, %s70
    %s73 = sphi 0, %s72
    %s87 = sphi 0, %s73
    %s91 = sphi 0, %s91
    %s93 = sphi 0, %s91
    %s94 = sphi 0, %s93
    %s108 = sphi 0, %s94
    %s112 = sphi 0, %s112
    %s114 = sphi 0, %s112
    %s115 = sphi 0, %s114
    %s129 = sphi 0, %s115
    %s133 = sphi 0, %s133
    %s135 = sphi 0, %s133
    %s136 = sphi 0, %s135
    %s150 = sphi 0, %s136
    %s154 = sphi 0, %s154
    %s156 = sphi 0, %s154
    %s157 = sphi 0, %s156
    %s171 = sphi 0, %s157
    %s177 = sphi 0, %s179
    %s180 = sphi 0, %s177
    %s181 = sphi 0, %s180
    %s197 = sphi 0, %s181
  $region4: #{mlp_forward.1} parent=0 // loop_header_branch
    %18 = sbr.rel (%p16) target = $region8
  $region5: #{mlp_forward.1} parent=0 // loop_body
    %s20 = ssub.s32 %s15, 1
    %s21 = ssub.s32 %s15, 2
    %s22 = sadd.s32 %s15, 1
    %s23 = ssub.s32 %s15, %s22
    %p24 = scmp.eq.s32.totalorder %s23, 0
    %s26 = sadd.s32 %s25, 1
    %s27 = scalar_select %p24, %s25, %s26
    %p30 = pneg %p24
    %p31 = scmp.eq.s32.totalorder %s15, 1
    %p32 = por %p30, %p31
    %p33 = scmp.ne.s32.totalorder %s25, %s28
    %p34 = scmp.eq.s32.totalorder %s15, 0
    %p35 = por %p33, %p34
    %p36 = scmp.ne.s32.totalorder %s25, %s28
    %p37 = scmp.eq.s32.totalorder %s20, 1
    %p38 = por %p36, %p37
    %p39 = scmp.ne.s32.totalorder %s28, %s29
    %p40 = scmp.eq.s32.totalorder %s20, 0
    %p41 = por %p39, %p40
    %p42 = scmp.ne.s32.totalorder %s28, %s29
    %p43 = scmp.eq.s32.totalorder %s21, 1
    %p44 = por %p42, %p43
    %p46 = scmp.ne.s32.totalorder %s29, %s45
    %p47 = scmp.eq.s32.totalorder %s21, 0
    %p48 = por %p46, %p47
    %s50 = sadd.s32 %s49, 1
    %p53 = scmp.eq.s32.totalorder %s15, 1
    %p54 = scmp.ne.s32.totalorder %s49, %s51
    %p55 = scmp.eq.s32.totalorder %s15, 0
    %p56 = por %p54, %p55
    %p57 = scmp.ne.s32.totalorder %s49, %s51
    %p58 = scmp.eq.s32.totalorder %s20, 1
    %p59 = por %p57, %p58
    %p60 = scmp.ne.s32.totalorder %s51, %s52
    %p61 = scmp.eq.s32.totalorder %s20, 0
    %p62 = por %p60, %p61
    %p63 = scmp.ne.s32.totalorder %s51, %s52
    %p64 = scmp.eq.s32.totalorder %s21, 1
    %p65 = por %p63, %p64
    %p67 = scmp.ne.s32.totalorder %s52, %s66
    %p68 = scmp.eq.s32.totalorder %s21, 0
    %p69 = por %p67, %p68
    %s71 = sadd.s32 %s70, 1
    %p74 = scmp.eq.s32.totalorder %s15, 1
    %p75 = scmp.ne.s32.totalorder %s70, %s72
    %p76 = scmp.eq.s32.totalorder %s15, 0
    %p77 = por %p75, %p76
    %p78 = scmp.ne.s32.totalorder %s70, %s72
    %p79 = scmp.eq.s32.totalorder %s20, 1
    %p80 = por %p78, %p79
    %p81 = scmp.ne.s32.totalorder %s72, %s73
    %p82 = scmp.eq.s32.totalorder %s20, 0
    %p83 = por %p81, %p82
    %p84 = scmp.ne.s32.totalorder %s72, %s73
    %p85 = scmp.eq.s32.totalorder %s21, 1
    %p86 = por %p84, %p85
    %p88 = scmp.ne.s32.totalorder %s73, %s87
    %p89 = scmp.eq.s32.totalorder %s21, 0
    %p90 = por %p88, %p89
    %s92 = sadd.s32 %s91, 1
    %p95 = scmp.eq.s32.totalorder %s15, 1
    %p96 = scmp.ne.s32.totalorder %s91, %s93
    %p97 = scmp.eq.s32.totalorder %s15, 0
    %p98 = por %p96, %p97
    %p99 = scmp.ne.s32.totalorder %s91, %s93
    %p100 = scmp.eq.s32.totalorder %s20, 1
    %p101 = por %p99, %p100
    %p102 = scmp.ne.s32.totalorder %s93, %s94
    %p103 = scmp.eq.s32.totalorder %s20, 0
    %p104 = por %p102, %p103
    %p105 = scmp.ne.s32.totalorder %s93, %s94
    %p106 = scmp.eq.s32.totalorder %s21, 1
    %p107 = por %p105, %p106
    %p109 = scmp.ne.s32.totalorder %s94, %s108
    %p110 = scmp.eq.s32.totalorder %s21, 0
    %p111 = por %p109, %p110
    %s113 = sadd.s32 %s112, 1
    %p116 = scmp.eq.s32.totalorder %s15, 1
    %p117 = scmp.ne.s32.totalorder %s112, %s114
    %p118 = scmp.eq.s32.totalorder %s15, 0
    %p119 = por %p117, %p118
    %p120 = scmp.ne.s32.totalorder %s112, %s114
    %p121 = scmp.eq.s32.totalorder %s20, 1
    %p122 = por %p120, %p121
    %p123 = scmp.ne.s32.totalorder %s114, %s115
    %p124 = scmp.eq.s32.totalorder %s20, 0
    %p125 = por %p123, %p124
    %p126 = scmp.ne.s32.totalorder %s114, %s115
    %p127 = scmp.eq.s32.totalorder %s21, 1
    %p128 = por %p126, %p127
    %p130 = scmp.ne.s32.totalorder %s115, %s129
    %p131 = scmp.eq.s32.totalorder %s21, 0
    %p132 = por %p130, %p131
    %s134 = sadd.s32 %s133, 1
    %p137 = scmp.eq.s32.totalorder %s15, 1
    %p138 = scmp.ne.s32.totalorder %s133, %s135
    %p139 = scmp.eq.s32.totalorder %s15, 0
    %p140 = por %p138, %p139
    %p141 = scmp.ne.s32.totalorder %s133, %s135
    %p142 = scmp.eq.s32.totalorder %s20, 1
    %p143 = por %p141, %p142
    %p144 = scmp.ne.s32.totalorder %s135, %s136
    %p145 = scmp.eq.s32.totalorder %s20, 0
    %p146 = por %p144, %p145
    %p147 = scmp.ne.s32.totalorder %s135, %s136
    %p148 = scmp.eq.s32.totalorder %s21, 1
    %p149 = por %p147, %p148
    %p151 = scmp.ne.s32.totalorder %s136, %s150
    %p152 = scmp.eq.s32.totalorder %s21, 0
    %p153 = por %p151, %p152
    %s155 = sadd.s32 %s154, 1
    %p158 = scmp.eq.s32.totalorder %s15, 1
    %p159 = scmp.ne.s32.totalorder %s154, %s156
    %p160 = scmp.eq.s32.totalorder %s15, 0
    %p161 = por %p159, %p160
    %p162 = scmp.ne.s32.totalorder %s154, %s156
    %p163 = scmp.eq.s32.totalorder %s20, 1
    %p164 = por %p162, %p163
    %p165 = scmp.ne.s32.totalorder %s156, %s157
    %p166 = scmp.eq.s32.totalorder %s20, 0
    %p167 = por %p165, %p166
    %p168 = scmp.ne.s32.totalorder %s156, %s157
    %p169 = scmp.eq.s32.totalorder %s21, 1
    %p170 = por %p168, %p169
    %p172 = scmp.ne.s32.totalorder %s157, %s171
    %p173 = scmp.eq.s32.totalorder %s21, 0
    %p174 = por %p172, %p173
    %s175 = ssub.s32 %s15, %s22
    %p176 = scmp.eq.s32.totalorder %s175, 0
    %s178 = sadd.s32 %s177, 1
    %s179 = scalar_select %p176, %s177, %s178
    %p182 = pneg %p176
    %p183 = scmp.eq.s32.totalorder %s15, 1
    %p184 = por %p182, %p183
    %p185 = scmp.ne.s32.totalorder %s177, %s180
    %p186 = scmp.eq.s32.totalorder %s15, 0
    %p187 = por %p185, %p186
    %p188 = scmp.ne.s32.totalorder %s177, %s180
    %p189 = scmp.eq.s32.totalorder %s20, 1
    %p190 = por %p188, %p189
    %p191 = scmp.ne.s32.totalorder %s180, %s181
    %p192 = scmp.eq.s32.totalorder %s20, 0
    %p193 = por %p191, %p192
    %p194 = scmp.ne.s32.totalorder %s180, %s181
    %p195 = scmp.eq.s32.totalorder %s21, 1
    %p196 = por %p194, %p195
    %p198 = scmp.ne.s32.totalorder %s181, %s197
    %p199 = scmp.eq.s32.totalorder %s21, 0
    %p200 = por %p198, %p199
    %p201 = scmp.le.s32.totalorder 1, %s15
    %p202 = scmp.lt.s32.totalorder %s15, 3
    %p203 = pnand %p201, %p202
    %p204 = pneg %p203
    // Predicated region
    $region9: #{mlp_forward.1} parent=5 // pred_check
      _
    $region10: #{mlp_forward.1} parent=5 // pred_check_branch
      %206 = sbr.rel (%p203) target = $region12
    $region11: #{mlp_forward.1} parent=5 // pred_region
      %s207 = ssub.s32 %s15, 1
      // Predicated region
      $region13: #{mlp_forward.1} parent=11 // pred_check
        %p208 = pneg %p62
      $region14: #{mlp_forward.1} parent=11 // pred_check_branch
        %210 = sbr.rel (%p208) target = $region16
      $region15: #{mlp_forward.1} parent=11 // pred_region
        _
      $region16: #{mlp_forward.1} parent=11 // pred_fallthru
        _
      // Predicated region
      $region17: #{mlp_forward.1} parent=11 // pred_check
        %p211 = pneg %p83
      $region18: #{mlp_forward.1} parent=11 // pred_check_branch
        %213 = sbr.rel (%p211) target = $region20
      $region19: #{mlp_forward.1} parent=11 // pred_region
        _
      $region20: #{mlp_forward.1} parent=11 // pred_fallthru
        _
      // Predicated region
      $region21: #{mlp_forward.1} parent=11 // pred_check
        %p214 = pneg %p104
      $region22: #{mlp_forward.1} parent=11 // pred_check_branch
        %216 = sbr.rel (%p214) target = $region24
      $region23: #{mlp_forward.1} parent=11 // pred_region
        _
      $region24: #{mlp_forward.1} parent=11 // pred_fallthru
        _
      // Predicated region
      $region25: #{mlp_forward.1} parent=11 // pred_check
        %p217 = pneg %p125
      $region26: #{mlp_forward.1} parent=11 // pred_check_branch
        %219 = sbr.rel (%p217) target = $region28
      $region27: #{mlp_forward.1} parent=11 // pred_region
        _
      $region28: #{mlp_forward.1} parent=11 // pred_fallthru
        _
      // Predicated region
      $region29: #{mlp_forward.1} parent=11 // pred_check
        %p220 = pneg %p146
      $region30: #{mlp_forward.1} parent=11 // pred_check_branch
        %222 = sbr.rel (%p220) target = $region32
      $region31: #{mlp_forward.1} parent=11 // pred_region
        _
      $region32: #{mlp_forward.1} parent=11 // pred_fallthru
        _
      // Predicated region
      $region33: #{mlp_forward.1} parent=11 // pred_check
        %p223 = pneg %p167
      $region34: #{mlp_forward.1} parent=11 // pred_check_branch
        %225 = sbr.rel (%p223) target = $region36
      $region35: #{mlp_forward.1} parent=11 // pred_region
        _
      $region36: #{mlp_forward.1} parent=11 // pred_fallthru
        _
    $region12: #{mlp_forward.1} parent=5 // pred_fallthru
      _
    %p226 = scmp.lt.s32.totalorder %s15, 2
    // Predicated region
    $region37: #{mlp_forward.1} parent=5 // pred_check
      %p227 = pneg %p226
    $region38: #{mlp_forward.1} parent=5 // pred_check_branch
      %229 = sbr.rel (%p227) target = $region40
    $region39: #{mlp_forward.1} parent=5 // pred_region
      // Predicated region
      $region41: #{mlp_forward.1} parent=39 // pred_check
        %p230 = pneg %p35
      $region42: #{mlp_forward.1} parent=39 // pred_check_branch
        %232 = sbr.rel (%p230) target = $region44
      $region43: #{mlp_forward.1} parent=39 // pred_region
        %p233 = scmp.lt.s32.totalorder %s15, 1
        %s234 = scalar_select %p233, %s15, 1
        %s235 = smul.addr %s234, 16
        %s236 = smul.addr %s235, 8
        %s237 = scalar_lea.vmem %s0, %s236
      $region44: #{mlp_forward.1} parent=39 // pred_fallthru
        _
    $region40: #{mlp_forward.1} parent=5 // pred_fallthru
      _
    %p238 = scmp.le.s32.totalorder 1, %s15
    %p239 = scmp.lt.s32.totalorder %s15, 3
    %p240 = pnand %p238, %p239
    %p241 = pneg %p240
    // Predicated region
    $region45: #{mlp_forward.1} parent=5 // pred_check
      _
    $region46: #{mlp_forward.1} parent=5 // pred_check_branch
      %243 = sbr.rel (%p240) target = $region48
    $region47: #{mlp_forward.1} parent=5 // pred_region
      %s244 = ssub.s32 %s15, 1
      %p245 = scmp.lt.s32.totalorder %s20, 1
      %s246 = scalar_select %p245, %s20, 1
      %s247 = smul.addr %s246, 16
      %s248 = smul.addr %s247, 8
      %s249 = scalar_lea.vmem %s0, %s248
      %p250 = pneg %p41
      %p251 = pneg %p38
      %p252 = pneg %p62
      %p253 = pneg %p59
      %p254 = pneg %p83
      %p255 = pneg %p80
      %p256 = pneg %p104
      %p257 = pneg %p101
      %p258 = pneg %p125
      %p259 = pneg %p122
      %p260 = pneg %p146
      %p261 = pneg %p143
      %p262 = pneg %p167
      %p263 = pneg %p164
      %p264 = pneg %p193
      %p265 = pneg %p190
      %p266 = scmp.lt.s32.totalorder %s20, 1
      %s267 = scalar_select %p266, %s20, 1
      %s268 = smul.addr %s267, 16
      %s269 = smul.addr %s268, 8
      %s270 = scalar_lea.vmem %s7, %s269
      %p271 = scmp.lt.s32.totalorder %s20, 1
      %s272 = scalar_select %p271, %s20, 1
      %s273 = smul.addr %s272, 16
      %s274 = smul.addr %s273, 8
      %s275 = scalar_lea.vmem %s0, %s274
      %p276 = scmp.lt.s32.totalorder %s20, 1
      %s277 = scalar_select %p276, %s20, 1
      %s278 = smul.addr %s277, 16
      %s279 = smul.addr %s278, 8
      %s280 = scalar_lea.vmem %s7, %s279
      %v281 = vld [vmem:[%s275] sm:$0xff]
      %v282 = vld [vmem:[%s275 + $0x8] sm:$0xff]
      %v283 = vld [vmem:[%s275 + $0x10] sm:$0xff]
      %v284 = vld [vmem:[%s275 + $0x18] sm:$0xff]
      %v285 = vld [vmem:[%s275 + $0x20] sm:$0xff]
      %v286 = vld [vmem:[%s275 + $0x28] sm:$0xff]
      %v287 = vld [vmem:[%s275 + $0x30] sm:$0xff]
      %v288 = vld [vmem:[%s275 + $0x38] sm:$0xff]
      %v289 = vld [vmem:[%s275 + $0x40] sm:$0xff]
      %v290 = vld [vmem:[%s275 + $0x48] sm:$0xff]
      %v291 = vld [vmem:[%s275 + $0x50] sm:$0xff]
      %v292 = vld [vmem:[%s275 + $0x58] sm:$0xff]
      %v293 = vld [vmem:[%s275 + $0x60] sm:$0xff]
      %v294 = vld [vmem:[%s275 + $0x68] sm:$0xff]
      %v295 = vld [vmem:[%s275 + $0x70] sm:$0xff]
      %v296 = vld [vmem:[%s275 + $0x78] sm:$0xff]
      %v297 = vld [vmem:[%s1] sm:$0xff]
      %v298 = vld [vmem:[%s1 + $0x8] sm:$0xff]
      %v299 = vld [vmem:[%s1 + $0x10] sm:$0xff]
      %v300 = vld [vmem:[%s1 + $0x18] sm:$0xff]
      %v301 = vld [vmem:[%s1 + $0x20] sm:$0xff]
      %v302 = vld [vmem:[%s1 + $0x28] sm:$0xff]
      %v303 = vld [vmem:[%s1 + $0x30] sm:$0xff]
      %v304 = vld [vmem:[%s1 + $0x38] sm:$0xff]
      %v305 = vld [vmem:[%s1 + $0x40] sm:$0xff]
      %v306 = vld [vmem:[%s1 + $0x48] sm:$0xff]
      %v307 = vld [vmem:[%s1 + $0x50] sm:$0xff]
      %v308 = vld [vmem:[%s1 + $0x58] sm:$0xff]
      %v309 = vld [vmem:[%s1 + $0x60] sm:$0xff]
      %v310 = vld [vmem:[%s1 + $0x68] sm:$0xff]
      %v311 = vld [vmem:[%s1 + $0x70] sm:$0xff]
      %v312 = vld [vmem:[%s1 + $0x78] sm:$0xff]
      %314 = vset.pattern.permute.xlu0 0
      %315 = vperm.xlu0 %314, %v297
      %v316 = vpop.permute.xlu0 %315
      %319 = vset.pattern.permute.xlu0 0
      %320 = vperm.xlu0 %319, %v298
      %v321 = vpop.permute.xlu0 %320
      %324 = vset.pattern.permute.xlu0 0
      %325 = vperm.xlu0 %324, %v299
      %v326 = vpop.permute.xlu0 %325
      %329 = vset.pattern.permute.xlu0 0
      %330 = vperm.xlu0 %329, %v300
      %v331 = vpop.permute.xlu0 %330
      %334 = vset.pattern.permute.xlu0 0
      %335 = vperm.xlu0 %334, %v301
      %v336 = vpop.permute.xlu0 %335
      %339 = vset.pattern.permute.xlu0 0
      %340 = vperm.xlu0 %339, %v302
      %v341 = vpop.permute.xlu0 %340
      %344 = vset.pattern.permute.xlu0 0
      %345 = vperm.xlu0 %344, %v303
      %v346 = vpop.permute.xlu0 %345
      %349 = vset.pattern.permute.xlu0 0
      %350 = vperm.xlu0 %349, %v304
      %v351 = vpop.permute.xlu0 %350
      %354 = vset.pattern.permute.xlu0 0
      %355 = vperm.xlu0 %354, %v305
      %v356 = vpop.permute.xlu0 %355
      %359 = vset.pattern.permute.xlu0 0
      %360 = vperm.xlu0 %359, %v306
      %v361 = vpop.permute.xlu0 %360
      %364 = vset.pattern.permute.xlu0 0
      %365 = vperm.xlu0 %364, %v307
      %v366 = vpop.permute.xlu0 %365
      %369 = vset.pattern.permute.xlu0 0
      %370 = vperm.xlu0 %369, %v308
      %v371 = vpop.permute.xlu0 %370
      %374 = vset.pattern.permute.xlu0 0
      %375 = vperm.xlu0 %374, %v309
      %v376 = vpop.permute.xlu0 %375
      %379 = vset.pattern.permute.xlu0 0
      %380 = vperm.xlu0 %379, %v310
      %v381 = vpop.permute.xlu0 %380
      %384 = vset.pattern.permute.xlu0 0
      %385 = vperm.xlu0 %384, %v311
      %v386 = vpop.permute.xlu0 %385
      %389 = vset.pattern.permute.xlu0 0
      %390 = vperm.xlu0 %389, %v312
      %v391 = vpop.permute.xlu0 %390
      %v393 = vmul.f32 %v316, %v281
      %v394 = vmul.f32 %v316, %v282
      %v395 = vmul.f32 %v316, %v283
      %v396 = vmul.f32 %v316, %v284
      %v397 = vmul.f32 %v316, %v285
      %v398 = vmul.f32 %v316, %v286
      %v399 = vmul.f32 %v316, %v287
      %v400 = vmul.f32 %v316, %v288
      %v401 = vmul.f32 %v316, %v289
      %v402 = vmul.f32 %v316, %v290
      %v403 = vmul.f32 %v316, %v291
      %v404 = vmul.f32 %v316, %v292
      %v405 = vmul.f32 %v316, %v293
      %v406 = vmul.f32 %v316, %v294
      %v407 = vmul.f32 %v316, %v295
      %v408 = vmul.f32 %v316, %v296
      %v409 = vmul.f32 %v321, %v281
      %v410 = vmul.f32 %v321, %v282
      %v411 = vmul.f32 %v321, %v283
      %v412 = vmul.f32 %v321, %v284
      %v413 = vmul.f32 %v321, %v285
      %v414 = vmul.f32 %v321, %v286
      %v415 = vmul.f32 %v321, %v287
      %v416 = vmul.f32 %v321, %v288
      %v417 = vmul.f32 %v321, %v289
      %v418 = vmul.f32 %v321, %v290
      %v419 = vmul.f32 %v321, %v291
      %v420 = vmul.f32 %v321, %v292
      %v421 = vmul.f32 %v321, %v293
      %v422 = vmul.f32 %v321, %v294
      %v423 = vmul.f32 %v321, %v295
      %v424 = vmul.f32 %v321, %v296
      %v425 = vmul.f32 %v326, %v281
      %v426 = vmul.f32 %v326, %v282
      %v427 = vmul.f32 %v326, %v283
      %v428 = vmul.f32 %v326, %v284
      %v429 = vmul.f32 %v326, %v285
      %v430 = vmul.f32 %v326, %v286
      %v431 = vmul.f32 %v326, %v287
      %v432 = vmul.f32 %v326, %v288
      %v433 = vmul.f32 %v326, %v289
      %v434 = vmul.f32 %v326, %v290
      %v435 = vmul.f32 %v326, %v291
      %v436 = vmul.f32 %v326, %v292
      %v437 = vmul.f32 %v326, %v293
      %v438 = vmul.f32 %v326, %v294
      %v439 = vmul.f32 %v326, %v295
      %v440 = vmul.f32 %v326, %v296
      %v441 = vmul.f32 %v331, %v281
      %v442 = vmul.f32 %v331, %v282
      %v443 = vmul.f32 %v331, %v283
      %v444 = vmul.f32 %v331, %v284
      %v445 = vmul.f32 %v331, %v285
      %v446 = vmul.f32 %v331, %v286
      %v447 = vmul.f32 %v331, %v287
      %v448 = vmul.f32 %v331, %v288
      %v449 = vmul.f32 %v331, %v289
      %v450 = vmul.f32 %v331, %v290
      %v451 = vmul.f32 %v331, %v291
      %v452 = vmul.f32 %v331, %v292
      %v453 = vmul.f32 %v331, %v293
      %v454 = vmul.f32 %v331, %v294
      %v455 = vmul.f32 %v331, %v295
      %v456 = vmul.f32 %v331, %v296
      %v457 = vmul.f32 %v336, %v281
      %v458 = vmul.f32 %v336, %v282
      %v459 = vmul.f32 %v336, %v283
      %v460 = vmul.f32 %v336, %v284
      %v461 = vmul.f32 %v336, %v285
      %v462 = vmul.f32 %v336, %v286
      %v463 = vmul.f32 %v336, %v287
      %v464 = vmul.f32 %v336, %v288
      %v465 = vmul.f32 %v336, %v289
      %v466 = vmul.f32 %v336, %v290
      %v467 = vmul.f32 %v336, %v291
      %v468 = vmul.f32 %v336, %v292
      %v469 = vmul.f32 %v336, %v293
      %v470 = vmul.f32 %v336, %v294
      %v471 = vmul.f32 %v336, %v295
      %v472 = vmul.f32 %v336, %v296
      %v473 = vmul.f32 %v341, %v281
      %v474 = vmul.f32 %v341, %v282
      %v475 = vmul.f32 %v341, %v283
      %v476 = vmul.f32 %v341, %v284
      %v477 = vmul.f32 %v341, %v285
      %v478 = vmul.f32 %v341, %v286
      %v479 = vmul.f32 %v341, %v287
      %v480 = vmul.f32 %v341, %v288
      %v481 = vmul.f32 %v341, %v289
      %v482 = vmul.f32 %v341, %v290
      %v483 = vmul.f32 %v341, %v291
      %v484 = vmul.f32 %v341, %v292
      %v485 = vmul.f32 %v341, %v293
      %v486 = vmul.f32 %v341, %v294
      %v487 = vmul.f32 %v341, %v295
      %v488 = vmul.f32 %v341, %v296
      %v489 = vmul.f32 %v346, %v281
      %v490 = vmul.f32 %v346, %v282
      %v491 = vmul.f32 %v346, %v283
      %v492 = vmul.f32 %v346, %v284
      %v493 = vmul.f32 %v346, %v285
      %v494 = vmul.f32 %v346, %v286
      %v495 = vmul.f32 %v346, %v287
      %v496 = vmul.f32 %v346, %v288
      %v497 = vmul.f32 %v346, %v289
      %v498 = vmul.f32 %v346, %v290
      %v499 = vmul.f32 %v346, %v291
      %v500 = vmul.f32 %v346, %v292
      %v501 = vmul.f32 %v346, %v293
      %v502 = vmul.f32 %v346, %v294
      %v503 = vmul.f32 %v346, %v295
      %v504 = vmul.f32 %v346, %v296
      %v505 = vmul.f32 %v351, %v281
      %v506 = vmul.f32 %v351, %v282
      %v507 = vmul.f32 %v351, %v283
      %v508 = vmul.f32 %v351, %v284
      %v509 = vmul.f32 %v351, %v285
      %v510 = vmul.f32 %v351, %v286
      %v511 = vmul.f32 %v351, %v287
      %v512 = vmul.f32 %v351, %v288
      %v513 = vmul.f32 %v351, %v289
      %v514 = vmul.f32 %v351, %v290
      %v515 = vmul.f32 %v351, %v291
      %v516 = vmul.f32 %v351, %v292
      %v517 = vmul.f32 %v351, %v293
      %v518 = vmul.f32 %v351, %v294
      %v519 = vmul.f32 %v351, %v295
      %v520 = vmul.f32 %v351, %v296
      %v521 = vmul.f32 %v356, %v281
      %v522 = vmul.f32 %v356, %v282
      %v523 = vmul.f32 %v356, %v283
      %v524 = vmul.f32 %v356, %v284
      %v525 = vmul.f32 %v356, %v285
      %v526 = vmul.f32 %v356, %v286
      %v527 = vmul.f32 %v356, %v287
      %v528 = vmul.f32 %v356, %v288
      %v529 = vmul.f32 %v356, %v289
      %v530 = vmul.f32 %v356, %v290
      %v531 = vmul.f32 %v356, %v291
      %v532 = vmul.f32 %v356, %v292
      %v533 = vmul.f32 %v356, %v293
      %v534 = vmul.f32 %v356, %v294
      %v535 = vmul.f32 %v356, %v295
      %v536 = vmul.f32 %v356, %v296
      %v537 = vmul.f32 %v361, %v281
      %v538 = vmul.f32 %v361, %v282
      %v539 = vmul.f32 %v361, %v283
      %v540 = vmul.f32 %v361, %v284
      %v541 = vmul.f32 %v361, %v285
      %v542 = vmul.f32 %v361, %v286
      %v543 = vmul.f32 %v361, %v287
      %v544 = vmul.f32 %v361, %v288
      %v545 = vmul.f32 %v361, %v289
      %v546 = vmul.f32 %v361, %v290
      %v547 = vmul.f32 %v361, %v291
      %v548 = vmul.f32 %v361, %v292
      %v549 = vmul.f32 %v361, %v293
      %v550 = vmul.f32 %v361, %v294
      %v551 = vmul.f32 %v361, %v295
      %v552 = vmul.f32 %v361, %v296
      %v553 = vmul.f32 %v366, %v281
      %v554 = vmul.f32 %v366, %v282
      %v555 = vmul.f32 %v366, %v283
      %v556 = vmul.f32 %v366, %v284
      %v557 = vmul.f32 %v366, %v285
      %v558 = vmul.f32 %v366, %v286
      %v559 = vmul.f32 %v366, %v287
      %v560 = vmul.f32 %v366, %v288
      %v561 = vmul.f32 %v366, %v289
      %v562 = vmul.f32 %v366, %v290
      %v563 = vmul.f32 %v366, %v291
      %v564 = vmul.f32 %v366, %v292
      %v565 = vmul.f32 %v366, %v293
      %v566 = vmul.f32 %v366, %v294
      %v567 = vmul.f32 %v366, %v295
      %v568 = vmul.f32 %v366, %v296
      %v569 = vmul.f32 %v371, %v281
      %v570 = vmul.f32 %v371, %v282
      %v571 = vmul.f32 %v371, %v283
      %v572 = vmul.f32 %v371, %v284
      %v573 = vmul.f32 %v371, %v285
      %v574 = vmul.f32 %v371, %v286
      %v575 = vmul.f32 %v371, %v287
      %v576 = vmul.f32 %v371, %v288
      %v577 = vmul.f32 %v371, %v289
      %v578 = vmul.f32 %v371, %v290
      %v579 = vmul.f32 %v371, %v291
      %v580 = vmul.f32 %v371, %v292
      %v581 = vmul.f32 %v371, %v293
      %v582 = vmul.f32 %v371, %v294
      %v583 = vmul.f32 %v371, %v295
      %v584 = vmul.f32 %v371, %v296
      %v585 = vmul.f32 %v376, %v281
      %v586 = vmul.f32 %v376, %v282
      %v587 = vmul.f32 %v376, %v283
      %v588 = vmul.f32 %v376, %v284
      %v589 = vmul.f32 %v376, %v285
      %v590 = vmul.f32 %v376, %v286
      %v591 = vmul.f32 %v376, %v287
      %v592 = vmul.f32 %v376, %v288
      %v593 = vmul.f32 %v376, %v289
      %v594 = vmul.f32 %v376, %v290
      %v595 = vmul.f32 %v376, %v291
      %v596 = vmul.f32 %v376, %v292
      %v597 = vmul.f32 %v376, %v293
      %v598 = vmul.f32 %v376, %v294
      %v599 = vmul.f32 %v376, %v295
      %v600 = vmul.f32 %v376, %v296
      %v601 = vmul.f32 %v381, %v281
      %v602 = vmul.f32 %v381, %v282
      %v603 = vmul.f32 %v381, %v283
      %v604 = vmul.f32 %v381, %v284
      %v605 = vmul.f32 %v381, %v285
      %v606 = vmul.f32 %v381, %v286
      %v607 = vmul.f32 %v381, %v287
      %v608 = vmul.f32 %v381, %v288
      %v609 = vmul.f32 %v381, %v289
      %v610 = vmul.f32 %v381, %v290
      %v611 = vmul.f32 %v381, %v291
      %v612 = vmul.f32 %v381, %v292
      %v613 = vmul.f32 %v381, %v293
      %v614 = vmul.f32 %v381, %v294
      %v615 = vmul.f32 %v381, %v295
      %v616 = vmul.f32 %v381, %v296
      %v617 = vmul.f32 %v386, %v281
      %v618 = vmul.f32 %v386, %v282
      %v619 = vmul.f32 %v386, %v283
      %v620 = vmul.f32 %v386, %v284
      %v621 = vmul.f32 %v386, %v285
      %v622 = vmul.f32 %v386, %v286
      %v623 = vmul.f32 %v386, %v287
      %v624 = vmul.f32 %v386, %v288
      %v625 = vmul.f32 %v386, %v289
      %v626 = vmul.f32 %v386, %v290
      %v627 = vmul.f32 %v386, %v291
      %v628 = vmul.f32 %v386, %v292
      %v629 = vmul.f32 %v386, %v293
      %v630 = vmul.f32 %v386, %v294
      %v631 = vmul.f32 %v386, %v295
      %v632 = vmul.f32 %v386, %v296
      %v633 = vmul.f32 %v391, %v281
      %v634 = vmul.f32 %v391, %v282
      %v635 = vmul.f32 %v391, %v283
      %v636 = vmul.f32 %v391, %v284
      %v637 = vmul.f32 %v391, %v285
      %v638 = vmul.f32 %v391, %v286
      %v639 = vmul.f32 %v391, %v287
      %v640 = vmul.f32 %v391, %v288
      %v641 = vmul.f32 %v391, %v289
      %v642 = vmul.f32 %v391, %v290
      %v643 = vmul.f32 %v391, %v291
      %v644 = vmul.f32 %v391, %v292
      %v645 = vmul.f32 %v391, %v293
      %v646 = vmul.f32 %v391, %v294
      %v647 = vmul.f32 %v391, %v295
      %v648 = vmul.f32 %v391, %v296
      %v649 = vld [vmem:[%s2] sm:$0xff]
      %v650 = vld [vmem:[%s2 + $0x8] sm:$0xff]
      %v651 = vld [vmem:[%s2 + $0x10] sm:$0xff]
      %v652 = vld [vmem:[%s2 + $0x18] sm:$0xff]
      %v653 = vld [vmem:[%s2 + $0x20] sm:$0xff]
      %v654 = vld [vmem:[%s2 + $0x28] sm:$0xff]
      %v655 = vld [vmem:[%s2 + $0x30] sm:$0xff]
      %v656 = vld [vmem:[%s2 + $0x38] sm:$0xff]
      %v657 = vld [vmem:[%s2 + $0x40] sm:$0xff]
      %v658 = vld [vmem:[%s2 + $0x48] sm:$0xff]
      %v659 = vld [vmem:[%s2 + $0x50] sm:$0xff]
      %v660 = vld [vmem:[%s2 + $0x58] sm:$0xff]
      %v661 = vld [vmem:[%s2 + $0x60] sm:$0xff]
      %v662 = vld [vmem:[%s2 + $0x68] sm:$0xff]
      %v663 = vld [vmem:[%s2 + $0x70] sm:$0xff]
      %v664 = vld [vmem:[%s2 + $0x78] sm:$0xff]
      %666 = vset.pattern.permute.xlu0 0
      %667 = vperm.xlu0 %666, %v649
      %v668 = vpop.permute.xlu0 %667
      %671 = vset.pattern.permute.xlu0 0
      %672 = vperm.xlu0 %671, %v650
      %v673 = vpop.permute.xlu0 %672
      %676 = vset.pattern.permute.xlu0 0
      %677 = vperm.xlu0 %676, %v651
      %v678 = vpop.permute.xlu0 %677
      %681 = vset.pattern.permute.xlu0 0
      %682 = vperm.xlu0 %681, %v652
      %v683 = vpop.permute.xlu0 %682
      %686 = vset.pattern.permute.xlu0 0
      %687 = vperm.xlu0 %686, %v653
      %v688 = vpop.permute.xlu0 %687
      %691 = vset.pattern.permute.xlu0 0
      %692 = vperm.xlu0 %691, %v654
      %v693 = vpop.permute.xlu0 %692
      %696 = vset.pattern.permute.xlu0 0
      %697 = vperm.xlu0 %696, %v655
      %v698 = vpop.permute.xlu0 %697
      %701 = vset.pattern.permute.xlu0 0
      %702 = vperm.xlu0 %701, %v656
      %v703 = vpop.permute.xlu0 %702
      %706 = vset.pattern.permute.xlu0 0
      %707 = vperm.xlu0 %706, %v657
      %v708 = vpop.permute.xlu0 %707
      %711 = vset.pattern.permute.xlu0 0
      %712 = vperm.xlu0 %711, %v658
      %v713 = vpop.permute.xlu0 %712
      %716 = vset.pattern.permute.xlu0 0
      %717 = vperm.xlu0 %716, %v659
      %v718 = vpop.permute.xlu0 %717
      %721 = vset.pattern.permute.xlu0 0
      %722 = vperm.xlu0 %721, %v660
      %v723 = vpop.permute.xlu0 %722
      %726 = vset.pattern.permute.xlu0 0
      %727 = vperm.xlu0 %726, %v661
      %v728 = vpop.permute.xlu0 %727
      %731 = vset.pattern.permute.xlu0 0
      %732 = vperm.xlu0 %731, %v662
      %v733 = vpop.permute.xlu0 %732
      %736 = vset.pattern.permute.xlu0 0
      %737 = vperm.xlu0 %736, %v663
      %v738 = vpop.permute.xlu0 %737
      %741 = vset.pattern.permute.xlu0 0
      %742 = vperm.xlu0 %741, %v664
      %v743 = vpop.permute.xlu0 %742
      %v745 = vadd.f32 %v393, %v668
      %v746 = vadd.f32 %v394, %v668
      %v747 = vadd.f32 %v395, %v668
      %v748 = vadd.f32 %v396, %v668
      %v749 = vadd.f32 %v397, %v668
      %v750 = vadd.f32 %v398, %v668
      %v751 = vadd.f32 %v399, %v668
      %v752 = vadd.f32 %v400, %v668
      %v753 = vadd.f32 %v401, %v668
      %v754 = vadd.f32 %v402, %v668
      %v755 = vadd.f32 %v403, %v668
      %v756 = vadd.f32 %v404, %v668
      %v757 = vadd.f32 %v405, %v668
      %v758 = vadd.f32 %v406, %v668
      %v759 = vadd.f32 %v407, %v668
      %v760 = vadd.f32 %v408, %v668
      %v761 = vadd.f32 %v409, %v673
      %v762 = vadd.f32 %v410, %v673
      %v763 = vadd.f32 %v411, %v673
      %v764 = vadd.f32 %v412, %v673
      %v765 = vadd.f32 %v413, %v673
      %v766 = vadd.f32 %v414, %v673
      %v767 = vadd.f32 %v415, %v673
      %v768 = vadd.f32 %v416, %v673
      %v769 = vadd.f32 %v417, %v673
      %v770 = vadd.f32 %v418, %v673
      %v771 = vadd.f32 %v419, %v673
      %v772 = vadd.f32 %v420, %v673
      %v773 = vadd.f32 %v421, %v673
      %v774 = vadd.f32 %v422, %v673
      %v775 = vadd.f32 %v423, %v673
      %v776 = vadd.f32 %v424, %v673
      %v777 = vadd.f32 %v425, %v678
      %v778 = vadd.f32 %v426, %v678
      %v779 = vadd.f32 %v427, %v678
      %v780 = vadd.f32 %v428, %v678
      %v781 = vadd.f32 %v429, %v678
      %v782 = vadd.f32 %v430, %v678
      %v783 = vadd.f32 %v431, %v678
      %v784 = vadd.f32 %v432, %v678
      %v785 = vadd.f32 %v433, %v678
      %v786 = vadd.f32 %v434, %v678
      %v787 = vadd.f32 %v435, %v678
      %v788 = vadd.f32 %v436, %v678
      %v789 = vadd.f32 %v437, %v678
      %v790 = vadd.f32 %v438, %v678
      %v791 = vadd.f32 %v439, %v678
      %v792 = vadd.f32 %v440, %v678
      %v793 = vadd.f32 %v441, %v683
      %v794 = vadd.f32 %v442, %v683
      %v795 = vadd.f32 %v443, %v683
      %v796 = vadd.f32 %v444, %v683
      %v797 = vadd.f32 %v445, %v683
      %v798 = vadd.f32 %v446, %v683
      %v799 = vadd.f32 %v447, %v683
      %v800 = vadd.f32 %v448, %v683
      %v801 = vadd.f32 %v449, %v683
      %v802 = vadd.f32 %v450, %v683
      %v803 = vadd.f32 %v451, %v683
      %v804 = vadd.f32 %v452, %v683
      %v805 = vadd.f32 %v453, %v683
      %v806 = vadd.f32 %v454, %v683
      %v807 = vadd.f32 %v455, %v683
      %v808 = vadd.f32 %v456, %v683
      %v809 = vadd.f32 %v457, %v688
      %v810 = vadd.f32 %v458, %v688
      %v811 = vadd.f32 %v459, %v688
      %v812 = vadd.f32 %v460, %v688
      %v813 = vadd.f32 %v461, %v688
      %v814 = vadd.f32 %v462, %v688
      %v815 = vadd.f32 %v463, %v688
      %v816 = vadd.f32 %v464, %v688
      %v817 = vadd.f32 %v465, %v688
      %v818 = vadd.f32 %v466, %v688
      %v819 = vadd.f32 %v467, %v688
      %v820 = vadd.f32 %v468, %v688
      %v821 = vadd.f32 %v469, %v688
      %v822 = vadd.f32 %v470, %v688
      %v823 = vadd.f32 %v471, %v688
      %v824 = vadd.f32 %v472, %v688
      %v825 = vadd.f32 %v473, %v693
      %v826 = vadd.f32 %v474, %v693
      %v827 = vadd.f32 %v475, %v693
      %v828 = vadd.f32 %v476, %v693
      %v829 = vadd.f32 %v477, %v693
      %v830 = vadd.f32 %v478, %v693
      %v831 = vadd.f32 %v479, %v693
      %v832 = vadd.f32 %v480, %v693
      %v833 = vadd.f32 %v481, %v693
      %v834 = vadd.f32 %v482, %v693
      %v835 = vadd.f32 %v483, %v693
      %v836 = vadd.f32 %v484, %v693
      %v837 = vadd.f32 %v485, %v693
      %v838 = vadd.f32 %v486, %v693
      %v839 = vadd.f32 %v487, %v693
      %v840 = vadd.f32 %v488, %v693
      %v841 = vadd.f32 %v489, %v698
      %v842 = vadd.f32 %v490, %v698
      %v843 = vadd.f32 %v491, %v698
      %v844 = vadd.f32 %v492, %v698
      %v845 = vadd.f32 %v493, %v698
      %v846 = vadd.f32 %v494, %v698
      %v847 = vadd.f32 %v495, %v698
      %v848 = vadd.f32 %v496, %v698
      %v849 = vadd.f32 %v497, %v698
      %v850 = vadd.f32 %v498, %v698
      %v851 = vadd.f32 %v499, %v698
      %v852 = vadd.f32 %v500, %v698
      %v853 = vadd.f32 %v501, %v698
      %v854 = vadd.f32 %v502, %v698
      %v855 = vadd.f32 %v503, %v698
      %v856 = vadd.f32 %v504, %v698
      %v857 = vadd.f32 %v505, %v703
      %v858 = vadd.f32 %v506, %v703
      %v859 = vadd.f32 %v507, %v703
      %v860 = vadd.f32 %v508, %v703
      %v861 = vadd.f32 %v509, %v703
      %v862 = vadd.f32 %v510, %v703
      %v863 = vadd.f32 %v511, %v703
      %v864 = vadd.f32 %v512, %v703
      %v865 = vadd.f32 %v513, %v703
      %v866 = vadd.f32 %v514, %v703
      %v867 = vadd.f32 %v515, %v703
      %v868 = vadd.f32 %v516, %v703
      %v869 = vadd.f32 %v517, %v703
      %v870 = vadd.f32 %v518, %v703
      %v871 = vadd.f32 %v519, %v703
      %v872 = vadd.f32 %v520, %v703
      %v873 = vadd.f32 %v521, %v708
      %v874 = vadd.f32 %v522, %v708
      %v875 = vadd.f32 %v523, %v708
      %v876 = vadd.f32 %v524, %v708
      %v877 = vadd.f32 %v525, %v708
      %v878 = vadd.f32 %v526, %v708
      %v879 = vadd.f32 %v527, %v708
      %v880 = vadd.f32 %v528, %v708
      %v881 = vadd.f32 %v529, %v708
      %v882 = vadd.f32 %v530, %v708
      %v883 = vadd.f32 %v531, %v708
      %v884 = vadd.f32 %v532, %v708
      %v885 = vadd.f32 %v533, %v708
      %v886 = vadd.f32 %v534, %v708
      %v887 = vadd.f32 %v535, %v708
      %v888 = vadd.f32 %v536, %v708
      %v889 = vadd.f32 %v537, %v713
      %v890 = vadd.f32 %v538, %v713
      %v891 = vadd.f32 %v539, %v713
      %v892 = vadd.f32 %v540, %v713
      %v893 = vadd.f32 %v541, %v713
      %v894 = vadd.f32 %v542, %v713
      %v895 = vadd.f32 %v543, %v713
      %v896 = vadd.f32 %v544, %v713
      %v897 = vadd.f32 %v545, %v713
      %v898 = vadd.f32 %v546, %v713
      %v899 = vadd.f32 %v547, %v713
      %v900 = vadd.f32 %v548, %v713
      %v901 = vadd.f32 %v549, %v713
      %v902 = vadd.f32 %v550, %v713
      %v903 = vadd.f32 %v551, %v713
      %v904 = vadd.f32 %v552, %v713
      %v905 = vadd.f32 %v553, %v718
      %v906 = vadd.f32 %v554, %v718
      %v907 = vadd.f32 %v555, %v718
      %v908 = vadd.f32 %v556, %v718
      %v909 = vadd.f32 %v557, %v718
      %v910 = vadd.f32 %v558, %v718
      %v911 = vadd.f32 %v559, %v718
      %v912 = vadd.f32 %v560, %v718
      %v913 = vadd.f32 %v561, %v718
      %v914 = vadd.f32 %v562, %v718
      %v915 = vadd.f32 %v563, %v718
      %v916 = vadd.f32 %v564, %v718
      %v917 = vadd.f32 %v565, %v718
      %v918 = vadd.f32 %v566, %v718
      %v919 = vadd.f32 %v567, %v718
      %v920 = vadd.f32 %v568, %v718
      %v921 = vadd.f32 %v569, %v723
      %v922 = vadd.f32 %v570, %v723
      %v923 = vadd.f32 %v571, %v723
      %v924 = vadd.f32 %v572, %v723
      %v925 = vadd.f32 %v573, %v723
      %v926 = vadd.f32 %v574, %v723
      %v927 = vadd.f32 %v575, %v723
      %v928 = vadd.f32 %v576, %v723
      %v929 = vadd.f32 %v577, %v723
      %v930 = vadd.f32 %v578, %v723
      %v931 = vadd.f32 %v579, %v723
      %v932 = vadd.f32 %v580, %v723
      %v933 = vadd.f32 %v581, %v723
      %v934 = vadd.f32 %v582, %v723
      %v935 = vadd.f32 %v583, %v723
      %v936 = vadd.f32 %v584, %v723
      %v937 = vadd.f32 %v585, %v728
      %v938 = vadd.f32 %v586, %v728
      %v939 = vadd.f32 %v587, %v728
      %v940 = vadd.f32 %v588, %v728
      %v941 = vadd.f32 %v589, %v728
      %v942 = vadd.f32 %v590, %v728
      %v943 = vadd.f32 %v591, %v728
      %v944 = vadd.f32 %v592, %v728
      %v945 = vadd.f32 %v593, %v728
      %v946 = vadd.f32 %v594, %v728
      %v947 = vadd.f32 %v595, %v728
      %v948 = vadd.f32 %v596, %v728
      %v949 = vadd.f32 %v597, %v728
      %v950 = vadd.f32 %v598, %v728
      %v951 = vadd.f32 %v599, %v728
      %v952 = vadd.f32 %v600, %v728
      %v953 = vadd.f32 %v601, %v733
      %v954 = vadd.f32 %v602, %v733
      %v955 = vadd.f32 %v603, %v733
      %v956 = vadd.f32 %v604, %v733
      %v957 = vadd.f32 %v605, %v733
      %v958 = vadd.f32 %v606, %v733
      %v959 = vadd.f32 %v607, %v733
      %v960 = vadd.f32 %v608, %v733
      %v961 = vadd.f32 %v609, %v733
      %v962 = vadd.f32 %v610, %v733
      %v963 = vadd.f32 %v611, %v733
      %v964 = vadd.f32 %v612, %v733
      %v965 = vadd.f32 %v613, %v733
      %v966 = vadd.f32 %v614, %v733
      %v967 = vadd.f32 %v615, %v733
      %v968 = vadd.f32 %v616, %v733
      %v969 = vadd.f32 %v617, %v738
      %v970 = vadd.f32 %v618, %v738
      %v971 = vadd.f32 %v619, %v738
      %v972 = vadd.f32 %v620, %v738
      %v973 = vadd.f32 %v621, %v738
      %v974 = vadd.f32 %v622, %v738
      %v975 = vadd.f32 %v623, %v738
      %v976 = vadd.f32 %v624, %v738
      %v977 = vadd.f32 %v625, %v738
      %v978 = vadd.f32 %v626, %v738
      %v979 = vadd.f32 %v627, %v738
      %v980 = vadd.f32 %v628, %v738
      %v981 = vadd.f32 %v629, %v738
      %v982 = vadd.f32 %v630, %v738
      %v983 = vadd.f32 %v631, %v738
      %v984 = vadd.f32 %v632, %v738
      %v985 = vadd.f32 %v633, %v743
      %v986 = vadd.f32 %v634, %v743
      %v987 = vadd.f32 %v635, %v743
      %v988 = vadd.f32 %v636, %v743
      %v989 = vadd.f32 %v637, %v743
      %v990 = vadd.f32 %v638, %v743
      %v991 = vadd.f32 %v639, %v743
      %v992 = vadd.f32 %v640, %v743
      %v993 = vadd.f32 %v641, %v743
      %v994 = vadd.f32 %v642, %v743
      %v995 = vadd.f32 %v643, %v743
      %v996 = vadd.f32 %v644, %v743
      %v997 = vadd.f32 %v645, %v743
      %v998 = vadd.f32 %v646, %v743
      %v999 = vadd.f32 %v647, %v743
      %v1000 = vadd.f32 %v648, %v743
      %v1001 = vmul.f32 %v745, 0.5
      %v1002 = vmul.f32 %v746, 0.5
      %v1003 = vmul.f32 %v747, 0.5
      %v1004 = vmul.f32 %v748, 0.5
      %v1005 = vmul.f32 %v749, 0.5
      %v1006 = vmul.f32 %v750, 0.5
      %v1007 = vmul.f32 %v751, 0.5
      %v1008 = vmul.f32 %v752, 0.5
      %v1009 = vmul.f32 %v753, 0.5
      %v1010 = vmul.f32 %v754, 0.5
      %v1011 = vmul.f32 %v755, 0.5
      %v1012 = vmul.f32 %v756, 0.5
      %v1013 = vmul.f32 %v757, 0.5
      %v1014 = vmul.f32 %v758, 0.5
      %v1015 = vmul.f32 %v759, 0.5
      %v1016 = vmul.f32 %v760, 0.5
      %v1017 = vmul.f32 %v761, 0.5
      %v1018 = vmul.f32 %v762, 0.5
      %v1019 = vmul.f32 %v763, 0.5
      %v1020 = vmul.f32 %v764, 0.5
      %v1021 = vmul.f32 %v765, 0.5
      %v1022 = vmul.f32 %v766, 0.5
      %v1023 = vmul.f32 %v767, 0.5
      %v1024 = vmul.f32 %v768, 0.5
      %v1025 = vmul.f32 %v769, 0.5
      %v1026 = vmul.f32 %v770, 0.5
      %v1027 = vmul.f32 %v771, 0.5
      %v1028 = vmul.f32 %v772, 0.5
      %v1029 = vmul.f32 %v773, 0.5
      %v1030 = vmul.f32 %v774, 0.5
      %v1031 = vmul.f32 %v775, 0.5
      %v1032 = vmul.f32 %v776, 0.5
      %v1033 = vmul.f32 %v777, 0.5
      %v1034 = vmul.f32 %v778, 0.5
      %v1035 = vmul.f32 %v779, 0.5
      %v1036 = vmul.f32 %v780, 0.5
      %v1037 = vmul.f32 %v781, 0.5
      %v1038 = vmul.f32 %v782, 0.5
      %v1039 = vmul.f32 %v783, 0.5
      %v1040 = vmul.f32 %v784, 0.5
      %v1041 = vmul.f32 %v785, 0.5
      %v1042 = vmul.f32 %v786, 0.5
      %v1043 = vmul.f32 %v787, 0.5
      %v1044 = vmul.f32 %v788, 0.5
      %v1045 = vmul.f32 %v789, 0.5
      %v1046 = vmul.f32 %v790, 0.5
      %v1047 = vmul.f32 %v791, 0.5
      %v1048 = vmul.f32 %v792, 0.5
      %v1049 = vmul.f32 %v793, 0.5
      %v1050 = vmul.f32 %v794, 0.5
      %v1051 = vmul.f32 %v795, 0.5
      %v1052 = vmul.f32 %v796, 0.5
      %v1053 = vmul.f32 %v797, 0.5
      %v1054 = vmul.f32 %v798, 0.5
      %v1055 = vmul.f32 %v799, 0.5
      %v1056 = vmul.f32 %v800, 0.5
      %v1057 = vmul.f32 %v801, 0.5
      %v1058 = vmul.f32 %v802, 0.5
      %v1059 = vmul.f32 %v803, 0.5
      %v1060 = vmul.f32 %v804, 0.5
      %v1061 = vmul.f32 %v805, 0.5
      %v1062 = vmul.f32 %v806, 0.5
      %v1063 = vmul.f32 %v807, 0.5
      %v1064 = vmul.f32 %v808, 0.5
      %v1065 = vmul.f32 %v809, 0.5
      %v1066 = vmul.f32 %v810, 0.5
      %v1067 = vmul.f32 %v811, 0.5
      %v1068 = vmul.f32 %v812, 0.5
      %v1069 = vmul.f32 %v813, 0.5
      %v1070 = vmul.f32 %v814, 0.5
      %v1071 = vmul.f32 %v815, 0.5
      %v1072 = vmul.f32 %v816, 0.5
      %v1073 = vmul.f32 %v817, 0.5
      %v1074 = vmul.f32 %v818, 0.5
      %v1075 = vmul.f32 %v819, 0.5
      %v1076 = vmul.f32 %v820, 0.5
      %v1077 = vmul.f32 %v821, 0.5
      %v1078 = vmul.f32 %v822, 0.5
      %v1079 = vmul.f32 %v823, 0.5
      %v1080 = vmul.f32 %v824, 0.5
      %v1081 = vmul.f32 %v825, 0.5
      %v1082 = vmul.f32 %v826, 0.5
      %v1083 = vmul.f32 %v827, 0.5
      %v1084 = vmul.f32 %v828, 0.5
      %v1085 = vmul.f32 %v829, 0.5
      %v1086 = vmul.f32 %v830, 0.5
      %v1087 = vmul.f32 %v831, 0.5
      %v1088 = vmul.f32 %v832, 0.5
      %v1089 = vmul.f32 %v833, 0.5
      %v1090 = vmul.f32 %v834, 0.5
      %v1091 = vmul.f32 %v835, 0.5
      %v1092 = vmul.f32 %v836, 0.5
      %v1093 = vmul.f32 %v837, 0.5
      %v1094 = vmul.f32 %v838, 0.5
      %v1095 = vmul.f32 %v839, 0.5
      %v1096 = vmul.f32 %v840, 0.5
      %v1097 = vmul.f32 %v841, 0.5
      %v1098 = vmul.f32 %v842, 0.5
      %v1099 = vmul.f32 %v843, 0.5
      %v1100 = vmul.f32 %v844, 0.5
      %v1101 = vmul.f32 %v845, 0.5
      %v1102 = vmul.f32 %v846, 0.5
      %v1103 = vmul.f32 %v847, 0.5
      %v1104 = vmul.f32 %v848, 0.5
      %v1105 = vmul.f32 %v849, 0.5
      %v1106 = vmul.f32 %v850, 0.5
      %v1107 = vmul.f32 %v851, 0.5
      %v1108 = vmul.f32 %v852, 0.5
      %v1109 = vmul.f32 %v853, 0.5
      %v1110 = vmul.f32 %v854, 0.5
      %v1111 = vmul.f32 %v855, 0.5
      %v1112 = vmul.f32 %v856, 0.5
      %v1113 = vmul.f32 %v857, 0.5
      %v1114 = vmul.f32 %v858, 0.5
      %v1115 = vmul.f32 %v859, 0.5
      %v1116 = vmul.f32 %v860, 0.5
      %v1117 = vmul.f32 %v861, 0.5
      %v1118 = vmul.f32 %v862, 0.5
      %v1119 = vmul.f32 %v863, 0.5
      %v1120 = vmul.f32 %v864, 0.5
      %v1121 = vmul.f32 %v865, 0.5
      %v1122 = vmul.f32 %v866, 0.5
      %v1123 = vmul.f32 %v867, 0.5
      %v1124 = vmul.f32 %v868, 0.5
      %v1125 = vmul.f32 %v869, 0.5
      %v1126 = vmul.f32 %v870, 0.5
      %v1127 = vmul.f32 %v871, 0.5
      %v1128 = vmul.f32 %v872, 0.5
      %v1129 = vmul.f32 %v873, 0.5
      %v1130 = vmul.f32 %v874, 0.5
      %v1131 = vmul.f32 %v875, 0.5
      %v1132 = vmul.f32 %v876, 0.5
      %v1133 = vmul.f32 %v877, 0.5
      %v1134 = vmul.f32 %v878, 0.5
      %v1135 = vmul.f32 %v879, 0.5
      %v1136 = vmul.f32 %v880, 0.5
      %v1137 = vmul.f32 %v881, 0.5
      %v1138 = vmul.f32 %v882, 0.5
      %v1139 = vmul.f32 %v883, 0.5
      %v1140 = vmul.f32 %v884, 0.5
      %v1141 = vmul.f32 %v885, 0.5
      %v1142 = vmul.f32 %v886, 0.5
      %v1143 = vmul.f32 %v887, 0.5
      %v1144 = vmul.f32 %v888, 0.5
      %v1145 = vmul.f32 %v889, 0.5
      %v1146 = vmul.f32 %v890, 0.5
      %v1147 = vmul.f32 %v891, 0.5
      %v1148 = vmul.f32 %v892, 0.5
      %v1149 = vmul.f32 %v893, 0.5
      %v1150 = vmul.f32 %v894, 0.5
      %v1151 = vmul.f32 %v895, 0.5
      %v1152 = vmul.f32 %v896, 0.5
      %v1153 = vmul.f32 %v897, 0.5
      %v1154 = vmul.f32 %v898, 0.5
      %v1155 = vmul.f32 %v899, 0.5
      %v1156 = vmul.f32 %v900, 0.5
      %v1157 = vmul.f32 %v901, 0.5
      %v1158 = vmul.f32 %v902, 0.5
      %v1159 = vmul.f32 %v903, 0.5
      %v1160 = vmul.f32 %v904, 0.5
      %v1161 = vmul.f32 %v905, 0.5
      %v1162 = vmul.f32 %v906, 0.5
      %v1163 = vmul.f32 %v907, 0.5
      %v1164 = vmul.f32 %v908, 0.5
      %v1165 = vmul.f32 %v909, 0.5
      %v1166 = vmul.f32 %v910, 0.5
      %v1167 = vmul.f32 %v911, 0.5
      %v1168 = vmul.f32 %v912, 0.5
      %v1169 = vmul.f32 %v913, 0.5
      %v1170 = vmul.f32 %v914, 0.5
      %v1171 = vmul.f32 %v915, 0.5
      %v1172 = vmul.f32 %v916, 0.5
      %v1173 = vmul.f32 %v917, 0.5
      %v1174 = vmul.f32 %v918, 0.5
      %v1175 = vmul.f32 %v919, 0.5
      %v1176 = vmul.f32 %v920, 0.5
      %v1177 = vmul.f32 %v921, 0.5
      %v1178 = vmul.f32 %v922, 0.5
      %v1179 = vmul.f32 %v923, 0.5
      %v1180 = vmul.f32 %v924, 0.5
      %v1181 = vmul.f32 %v925, 0.5
      %v1182 = vmul.f32 %v926, 0.5
      %v1183 = vmul.f32 %v927, 0.5
      %v1184 = vmul.f32 %v928, 0.5
      %v1185 = vmul.f32 %v929, 0.5
      %v1186 = vmul.f32 %v930, 0.5
      %v1187 = vmul.f32 %v931, 0.5
      %v1188 = vmul.f32 %v932, 0.5
      %v1189 = vmul.f32 %v933, 0.5
      %v1190 = vmul.f32 %v934, 0.5
      %v1191 = vmul.f32 %v935, 0.5
      %v1192 = vmul.f32 %v936, 0.5
      %v1193 = vmul.f32 %v937, 0.5
      %v1194 = vmul.f32 %v938, 0.5
      %v1195 = vmul.f32 %v939, 0.5
      %v1196 = vmul.f32 %v940, 0.5
      %v1197 = vmul.f32 %v941, 0.5
      %v1198 = vmul.f32 %v942, 0.5
      %v1199 = vmul.f32 %v943, 0.5
      %v1200 = vmul.f32 %v944, 0.5
      %v1201 = vmul.f32 %v945, 0.5
      %v1202 = vmul.f32 %v946, 0.5
      %v1203 = vmul.f32 %v947, 0.5
      %v1204 = vmul.f32 %v948, 0.5
      %v1205 = vmul.f32 %v949, 0.5
      %v1206 = vmul.f32 %v950, 0.5
      %v1207 = vmul.f32 %v951, 0.5
      %v1208 = vmul.f32 %v952, 0.5
      %v1209 = vmul.f32 %v953, 0.5
      %v1210 = vmul.f32 %v954, 0.5
      %v1211 = vmul.f32 %v955, 0.5
      %v1212 = vmul.f32 %v956, 0.5
      %v1213 = vmul.f32 %v957, 0.5
      %v1214 = vmul.f32 %v958, 0.5
      %v1215 = vmul.f32 %v959, 0.5
      %v1216 = vmul.f32 %v960, 0.5
      %v1217 = vmul.f32 %v961, 0.5
      %v1218 = vmul.f32 %v962, 0.5
      %v1219 = vmul.f32 %v963, 0.5
      %v1220 = vmul.f32 %v964, 0.5
      %v1221 = vmul.f32 %v965, 0.5
      %v1222 = vmul.f32 %v966, 0.5
      %v1223 = vmul.f32 %v967, 0.5
      %v1224 = vmul.f32 %v968, 0.5
      %v1225 = vmul.f32 %v969, 0.5
      %v1226 = vmul.f32 %v970, 0.5
      %v1227 = vmul.f32 %v971, 0.5
      %v1228 = vmul.f32 %v972, 0.5
      %v1229 = vmul.f32 %v973, 0.5
      %v1230 = vmul.f32 %v974, 0.5
      %v1231 = vmul.f32 %v975, 0.5
      %v1232 = vmul.f32 %v976, 0.5
      %v1233 = vmul.f32 %v977, 0.5
      %v1234 = vmul.f32 %v978, 0.5
      %v1235 = vmul.f32 %v979, 0.5
      %v1236 = vmul.f32 %v980, 0.5
      %v1237 = vmul.f32 %v981, 0.5
      %v1238 = vmul.f32 %v982, 0.5
      %v1239 = vmul.f32 %v983, 0.5
      %v1240 = vmul.f32 %v984, 0.5
      %v1241 = vmul.f32 %v985, 0.5
      %v1242 = vmul.f32 %v986, 0.5
      %v1243 = vmul.f32 %v987, 0.5
      %v1244 = vmul.f32 %v988, 0.5
      %v1245 = vmul.f32 %v989, 0.5
      %v1246 = vmul.f32 %v990, 0.5
      %v1247 = vmul.f32 %v991, 0.5
      %v1248 = vmul.f32 %v992, 0.5
      %v1249 = vmul.f32 %v993, 0.5
      %v1250 = vmul.f32 %v994, 0.5
      %v1251 = vmul.f32 %v995, 0.5
      %v1252 = vmul.f32 %v996, 0.5
      %v1253 = vmul.f32 %v997, 0.5
      %v1254 = vmul.f32 %v998, 0.5
      %v1255 = vmul.f32 %v999, 0.5
      %v1256 = vmul.f32 %v1000, 0.5
      %v1257 = vtanh.pop %v1001
      %v1258 = vtanh.pop %v1002
      %v1259 = vtanh.pop %v1003
      %v1260 = vtanh.pop %v1004
      %v1261 = vtanh.pop %v1005
      %v1262 = vtanh.pop %v1006
      %v1263 = vtanh.pop %v1007
      %v1264 = vtanh.pop %v1008
      %v1265 = vtanh.pop %v1009
      %v1266 = vtanh.pop %v1010
      %v1267 = vtanh.pop %v1011
      %v1268 = vtanh.pop %v1012
      %v1269 = vtanh.pop %v1013
      %v1270 = vtanh.pop %v1014
      %v1271 = vtanh.pop %v1015
      %v1272 = vtanh.pop %v1016
      %v1273 = vtanh.pop %v1017
      %v1274 = vtanh.pop %v1018
      %v1275 = vtanh.pop %v1019
      %v1276 = vtanh.pop %v1020
      %v1277 = vtanh.pop %v1021
      %v1278 = vtanh.pop %v1022
      %v1279 = vtanh.pop %v1023
      %v1280 = vtanh.pop %v1024
      %v1281 = vtanh.pop %v1025
      %v1282 = vtanh.pop %v1026
      %v1283 = vtanh.pop %v1027
      %v1284 = vtanh.pop %v1028
      %v1285 = vtanh.pop %v1029
      %v1286 = vtanh.pop %v1030
      %v1287 = vtanh.pop %v1031
      %v1288 = vtanh.pop %v1032
      %v1289 = vtanh.pop %v1033
      %v1290 = vtanh.pop %v1034
      %v1291 = vtanh.pop %v1035
      %v1292 = vtanh.pop %v1036
      %v1293 = vtanh.pop %v1037
      %v1294 = vtanh.pop %v1038
      %v1295 = vtanh.pop %v1039
      %v1296 = vtanh.pop %v1040
      %v1297 = vtanh.pop %v1041
      %v1298 = vtanh.pop %v1042
      %v1299 = vtanh.pop %v1043
      %v1300 = vtanh.pop %v1044
      %v1301 = vtanh.pop %v1045
      %v1302 = vtanh.pop %v1046
      %v1303 = vtanh.pop %v1047
      %v1304 = vtanh.pop %v1048
      %v1305 = vtanh.pop %v1049
      %v1306 = vtanh.pop %v1050
      %v1307 = vtanh.pop %v1051
      %v1308 = vtanh.pop %v1052
      %v1309 = vtanh.pop %v1053
      %v1310 = vtanh.pop %v1054
      %v1311 = vtanh.pop %v1055
      %v1312 = vtanh.pop %v1056
      %v1313 = vtanh.pop %v1057
      %v1314 = vtanh.pop %v1058
      %v1315 = vtanh.pop %v1059
      %v1316 = vtanh.pop %v1060
      %v1317 = vtanh.pop %v1061
      %v1318 = vtanh.pop %v1062
      %v1319 = vtanh.pop %v1063
      %v1320 = vtanh.pop %v1064
      %v1321 = vtanh.pop %v1065
      %v1322 = vtanh.pop %v1066
      %v1323 = vtanh.pop %v1067
      %v1324 = vtanh.pop %v1068
      %v1325 = vtanh.pop %v1069
      %v1326 = vtanh.pop %v1070
      %v1327 = vtanh.pop %v1071
      %v1328 = vtanh.pop %v1072
      %v1329 = vtanh.pop %v1073
      %v1330 = vtanh.pop %v1074
      %v1331 = vtanh.pop %v1075
      %v1332 = vtanh.pop %v1076
      %v1333 = vtanh.pop %v1077
      %v1334 = vtanh.pop %v1078
      %v1335 = vtanh.pop %v1079
      %v1336 = vtanh.pop %v1080
      %v1337 = vtanh.pop %v1081
      %v1338 = vtanh.pop %v1082
      %v1339 = vtanh.pop %v1083
      %v1340 = vtanh.pop %v1084
      %v1341 = vtanh.pop %v1085
      %v1342 = vtanh.pop %v1086
      %v1343 = vtanh.pop %v1087
      %v1344 = vtanh.pop %v1088
      %v1345 = vtanh.pop %v1089
      %v1346 = vtanh.pop %v1090
      %v1347 = vtanh.pop %v1091
      %v1348 = vtanh.pop %v1092
      %v1349 = vtanh.pop %v1093
      %v1350 = vtanh.pop %v1094
      %v1351 = vtanh.pop %v1095
      %v1352 = vtanh.pop %v1096
      %v1353 = vtanh.pop %v1097
      %v1354 = vtanh.pop %v1098
      %v1355 = vtanh.pop %v1099
      %v1356 = vtanh.pop %v1100
      %v1357 = vtanh.pop %v1101
      %v1358 = vtanh.pop %v1102
      %v1359 = vtanh.pop %v1103
      %v1360 = vtanh.pop %v1104
      %v1361 = vtanh.pop %v1105
      %v1362 = vtanh.pop %v1106
      %v1363 = vtanh.pop %v1107
      %v1364 = vtanh.pop %v1108
      %v1365 = vtanh.pop %v1109
      %v1366 = vtanh.pop %v1110
      %v1367 = vtanh.pop %v1111
      %v1368 = vtanh.pop %v1112
      %v1369 = vtanh.pop %v1113
      %v1370 = vtanh.pop %v1114
      %v1371 = vtanh.pop %v1115
      %v1372 = vtanh.pop %v1116
      %v1373 = vtanh.pop %v1117
      %v1374 = vtanh.pop %v1118
      %v1375 = vtanh.pop %v1119
      %v1376 = vtanh.pop %v1120
      %v1377 = vtanh.pop %v1121
      %v1378 = vtanh.pop %v1122
      %v1379 = vtanh.pop %v1123
      %v1380 = vtanh.pop %v1124
      %v1381 = vtanh.pop %v1125
      %v1382 = vtanh.pop %v1126
      %v1383 = vtanh.pop %v1127
      %v1384 = vtanh.pop %v1128
      %v1385 = vtanh.pop %v1129
      %v1386 = vtanh.pop %v1130
      %v1387 = vtanh.pop %v1131
      %v1388 = vtanh.pop %v1132
      %v1389 = vtanh.pop %v1133
      %v1390 = vtanh.pop %v1134
      %v1391 = vtanh.pop %v1135
      %v1392 = vtanh.pop %v1136
      %v1393 = vtanh.pop %v1137
      %v1394 = vtanh.pop %v1138
      %v1395 = vtanh.pop %v1139
      %v1396 = vtanh.pop %v1140
      %v1397 = vtanh.pop %v1141
      %v1398 = vtanh.pop %v1142
      %v1399 = vtanh.pop %v1143
      %v1400 = vtanh.pop %v1144
      %v1401 = vtanh.pop %v1145
      %v1402 = vtanh.pop %v1146
      %v1403 = vtanh.pop %v1147
      %v1404 = vtanh.pop %v1148
      %v1405 = vtanh.pop %v1149
      %v1406 = vtanh.pop %v1150
      %v1407 = vtanh.pop %v1151
      %v1408 = vtanh.pop %v1152
      %v1409 = vtanh.pop %v1153
      %v1410 = vtanh.pop %v1154
      %v1411 = vtanh.pop %v1155
      %v1412 = vtanh.pop %v1156
      %v1413 = vtanh.pop %v1157
      %v1414 = vtanh.pop %v1158
      %v1415 = vtanh.pop %v1159
      %v1416 = vtanh.pop %v1160
      %v1417 = vtanh.pop %v1161
      %v1418 = vtanh.pop %v1162
      %v1419 = vtanh.pop %v1163
      %v1420 = vtanh.pop %v1164
      %v1421 = vtanh.pop %v1165
      %v1422 = vtanh.pop %v1166
      %v1423 = vtanh.pop %v1167
      %v1424 = vtanh.pop %v1168
      %v1425 = vtanh.pop %v1169
      %v1426 = vtanh.pop %v1170
      %v1427 = vtanh.pop %v1171
      %v1428 = vtanh.pop %v1172
      %v1429 = vtanh.pop %v1173
      %v1430 = vtanh.pop %v1174
      %v1431 = vtanh.pop %v1175
      %v1432 = vtanh.pop %v1176
      %v1433 = vtanh.pop %v1177
      %v1434 = vtanh.pop %v1178
      %v1435 = vtanh.pop %v1179
      %v1436 = vtanh.pop %v1180
      %v1437 = vtanh.pop %v1181
      %v1438 = vtanh.pop %v1182
      %v1439 = vtanh.pop %v1183
      %v1440 = vtanh.pop %v1184
      %v1441 = vtanh.pop %v1185
      %v1442 = vtanh.pop %v1186
      %v1443 = vtanh.pop %v1187
      %v1444 = vtanh.pop %v1188
      %v1445 = vtanh.pop %v1189
      %v1446 = vtanh.pop %v1190
      %v1447 = vtanh.pop %v1191
      %v1448 = vtanh.pop %v1192
      %v1449 = vtanh.pop %v1193
      %v1450 = vtanh.pop %v1194
      %v1451 = vtanh.pop %v1195
      %v1452 = vtanh.pop %v1196
      %v1453 = vtanh.pop %v1197
      %v1454 = vtanh.pop %v1198
      %v1455 = vtanh.pop %v1199
      %v1456 = vtanh.pop %v1200
      %v1457 = vtanh.pop %v1201
      %v1458 = vtanh.pop %v1202
      %v1459 = vtanh.pop %v1203
      %v1460 = vtanh.pop %v1204
      %v1461 = vtanh.pop %v1205
      %v1462 = vtanh.pop %v1206
      %v1463 = vtanh.pop %v1207
      %v1464 = vtanh.pop %v1208
      %v1465 = vtanh.pop %v1209
      %v1466 = vtanh.pop %v1210
      %v1467 = vtanh.pop %v1211
      %v1468 = vtanh.pop %v1212
      %v1469 = vtanh.pop %v1213
      %v1470 = vtanh.pop %v1214
      %v1471 = vtanh.pop %v1215
      %v1472 = vtanh.pop %v1216
      %v1473 = vtanh.pop %v1217
      %v1474 = vtanh.pop %v1218
      %v1475 = vtanh.pop %v1219
      %v1476 = vtanh.pop %v1220
      %v1477 = vtanh.pop %v1221
      %v1478 = vtanh.pop %v1222
      %v1479 = vtanh.pop %v1223
      %v1480 = vtanh.pop %v1224
      %v1481 = vtanh.pop %v1225
      %v1482 = vtanh.pop %v1226
      %v1483 = vtanh.pop %v1227
      %v1484 = vtanh.pop %v1228
      %v1485 = vtanh.pop %v1229
      %v1486 = vtanh.pop %v1230
      %v1487 = vtanh.pop %v1231
      %v1488 = vtanh.pop %v1232
      %v1489 = vtanh.pop %v1233
      %v1490 = vtanh.pop %v1234
      %v1491 = vtanh.pop %v1235
      %v1492 = vtanh.pop %v1236
      %v1493 = vtanh.pop %v1237
      %v1494 = vtanh.pop %v1238
      %v1495 = vtanh.pop %v1239
      %v1496 = vtanh.pop %v1240
      %v1497 = vtanh.pop %v1241
      %v1498 = vtanh.pop %v1242
      %v1499 = vtanh.pop %v1243
      %v1500 = vtanh.pop %v1244
      %v1501 = vtanh.pop %v1245
      %v1502 = vtanh.pop %v1246
      %v1503 = vtanh.pop %v1247
      %v1504 = vtanh.pop %v1248
      %v1505 = vtanh.pop %v1249
      %v1506 = vtanh.pop %v1250
      %v1507 = vtanh.pop %v1251
      %v1508 = vtanh.pop %v1252
      %v1509 = vtanh.pop %v1253
      %v1510 = vtanh.pop %v1254
      %v1511 = vtanh.pop %v1255
      %v1512 = vtanh.pop %v1256
      %v1513 = vadd.f32 %v1257, 1.0
      %v1514 = vadd.f32 %v1258, 1.0
      %v1515 = vadd.f32 %v1259, 1.0
      %v1516 = vadd.f32 %v1260, 1.0
      %v1517 = vadd.f32 %v1261, 1.0
      %v1518 = vadd.f32 %v1262, 1.0
      %v1519 = vadd.f32 %v1263, 1.0
      %v1520 = vadd.f32 %v1264, 1.0
      %v1521 = vadd.f32 %v1265, 1.0
      %v1522 = vadd.f32 %v1266, 1.0
      %v1523 = vadd.f32 %v1267, 1.0
      %v1524 = vadd.f32 %v1268, 1.0
      %v1525 = vadd.f32 %v1269, 1.0
      %v1526 = vadd.f32 %v1270, 1.0
      %v1527 = vadd.f32 %v1271, 1.0
      %v1528 = vadd.f32 %v1272, 1.0
      %v1529 = vadd.f32 %v1273, 1.0
      %v1530 = vadd.f32 %v1274, 1.0
      %v1531 = vadd.f32 %v1275, 1.0
      %v1532 = vadd.f32 %v1276, 1.0
      %v1533 = vadd.f32 %v1277, 1.0
      %v1534 = vadd.f32 %v1278, 1.0
      %v1535 = vadd.f32 %v1279, 1.0
      %v1536 = vadd.f32 %v1280, 1.0
      %v1537 = vadd.f32 %v1281, 1.0
      %v1538 = vadd.f32 %v1282, 1.0
      %v1539 = vadd.f32 %v1283, 1.0
      %v1540 = vadd.f32 %v1284, 1.0
      %v1541 = vadd.f32 %v1285, 1.0
      %v1542 = vadd.f32 %v1286, 1.0
      %v1543 = vadd.f32 %v1287, 1.0
      %v1544 = vadd.f32 %v1288, 1.0
      %v1545 = vadd.f32 %v1289, 1.0
      %v1546 = vadd.f32 %v1290, 1.0
      %v1547 = vadd.f32 %v1291, 1.0
      %v1548 = vadd.f32 %v1292, 1.0
      %v1549 = vadd.f32 %v1293, 1.0
      %v1550 = vadd.f32 %v1294, 1.0
      %v1551 = vadd.f32 %v1295, 1.0
      %v1552 = vadd.f32 %v1296, 1.0
      %v1553 = vadd.f32 %v1297, 1.0
      %v1554 = vadd.f32 %v1298, 1.0
      %v1555 = vadd.f32 %v1299, 1.0
      %v1556 = vadd.f32 %v1300, 1.0
      %v1557 = vadd.f32 %v1301, 1.0
      %v1558 = vadd.f32 %v1302, 1.0
      %v1559 = vadd.f32 %v1303, 1.0
      %v1560 = vadd.f32 %v1304, 1.0
      %v1561 = vadd.f32 %v1305, 1.0
      %v1562 = vadd.f32 %v1306, 1.0
      %v1563 = vadd.f32 %v1307, 1.0
      %v1564 = vadd.f32 %v1308, 1.0
      %v1565 = vadd.f32 %v1309, 1.0
      %v1566 = vadd.f32 %v1310, 1.0
      %v1567 = vadd.f32 %v1311, 1.0
      %v1568 = vadd.f32 %v1312, 1.0
      %v1569 = vadd.f32 %v1313, 1.0
      %v1570 = vadd.f32 %v1314, 1.0
      %v1571 = vadd.f32 %v1315, 1.0
      %v1572 = vadd.f32 %v1316, 1.0
      %v1573 = vadd.f32 %v1317, 1.0
      %v1574 = vadd.f32 %v1318, 1.0
      %v1575 = vadd.f32 %v1319, 1.0
      %v1576 = vadd.f32 %v1320, 1.0
      %v1577 = vadd.f32 %v1321, 1.0
      %v1578 = vadd.f32 %v1322, 1.0
      %v1579 = vadd.f32 %v1323, 1.0
      %v1580 = vadd.f32 %v1324, 1.0
      %v1581 = vadd.f32 %v1325, 1.0
      %v1582 = vadd.f32 %v1326, 1.0
      %v1583 = vadd.f32 %v1327, 1.0
      %v1584 = vadd.f32 %v1328, 1.0
      %v1585 = vadd.f32 %v1329, 1.0
      %v1586 = vadd.f32 %v1330, 1.0
      %v1587 = vadd.f32 %v1331, 1.0
      %v1588 = vadd.f32 %v1332, 1.0
      %v1589 = vadd.f32 %v1333, 1.0
      %v1590 = vadd.f32 %v1334, 1.0
      %v1591 = vadd.f32 %v1335, 1.0
      %v1592 = vadd.f32 %v1336, 1.0
      %v1593 = vadd.f32 %v1337, 1.0
      %v1594 = vadd.f32 %v1338, 1.0
      %v1595 = vadd.f32 %v1339, 1.0
      %v1596 = vadd.f32 %v1340, 1.0
      %v1597 = vadd.f32 %v1341, 1.0
      %v1598 = vadd.f32 %v1342, 1.0
      %v1599 = vadd.f32 %v1343, 1.0
      %v1600 = vadd.f32 %v1344, 1.0
      %v1601 = vadd.f32 %v1345, 1.0
      %v1602 = vadd.f32 %v1346, 1.0
      %v1603 = vadd.f32 %v1347, 1.0
      %v1604 = vadd.f32 %v1348, 1.0
      %v1605 = vadd.f32 %v1349, 1.0
      %v1606 = vadd.f32 %v1350, 1.0
      %v1607 = vadd.f32 %v1351, 1.0
      %v1608 = vadd.f32 %v1352, 1.0
      %v1609 = vadd.f32 %v1353, 1.0
      %v1610 = vadd.f32 %v1354, 1.0
      %v1611 = vadd.f32 %v1355, 1.0
      %v1612 = vadd.f32 %v1356, 1.0
      %v1613 = vadd.f32 %v1357, 1.0
      %v1614 = vadd.f32 %v1358, 1.0
      %v1615 = vadd.f32 %v1359, 1.0
      %v1616 = vadd.f32 %v1360, 1.0
      %v1617 = vadd.f32 %v1361, 1.0
      %v1618 = vadd.f32 %v1362, 1.0
      %v1619 = vadd.f32 %v1363, 1.0
      %v1620 = vadd.f32 %v1364, 1.0
      %v1621 = vadd.f32 %v1365, 1.0
      %v1622 = vadd.f32 %v1366, 1.0
      %v1623 = vadd.f32 %v1367, 1.0
      %v1624 = vadd.f32 %v1368, 1.0
      %v1625 = vadd.f32 %v1369, 1.0
      %v1626 = vadd.f32 %v1370, 1.0
      %v1627 = vadd.f32 %v1371, 1.0
      %v1628 = vadd.f32 %v1372, 1.0
      %v1629 = vadd.f32 %v1373, 1.0
      %v1630 = vadd.f32 %v1374, 1.0
      %v1631 = vadd.f32 %v1375, 1.0
      %v1632 = vadd.f32 %v1376, 1.0
      %v1633 = vadd.f32 %v1377, 1.0
      %v1634 = vadd.f32 %v1378, 1.0
      %v1635 = vadd.f32 %v1379, 1.0
      %v1636 = vadd.f32 %v1380, 1.0
      %v1637 = vadd.f32 %v1381, 1.0
      %v1638 = vadd.f32 %v1382, 1.0
      %v1639 = vadd.f32 %v1383, 1.0
      %v1640 = vadd.f32 %v1384, 1.0
      %v1641 = vadd.f32 %v1385, 1.0
      %v1642 = vadd.f32 %v1386, 1.0
      %v1643 = vadd.f32 %v1387, 1.0
      %v1644 = vadd.f32 %v1388, 1.0
      %v1645 = vadd.f32 %v1389, 1.0
      %v1646 = vadd.f32 %v1390, 1.0
      %v1647 = vadd.f32 %v1391, 1.0
      %v1648 = vadd.f32 %v1392, 1.0
      %v1649 = vadd.f32 %v1393, 1.0
      %v1650 = vadd.f32 %v1394, 1.0
      %v1651 = vadd.f32 %v1395, 1.0
      %v1652 = vadd.f32 %v1396, 1.0
      %v1653 = vadd.f32 %v1397, 1.0
      %v1654 = vadd.f32 %v1398, 1.0
      %v1655 = vadd.f32 %v1399, 1.0
      %v1656 = vadd.f32 %v1400, 1.0
      %v1657 = vadd.f32 %v1401, 1.0
      %v1658 = vadd.f32 %v1402, 1.0
      %v1659 = vadd.f32 %v1403, 1.0
      %v1660 = vadd.f32 %v1404, 1.0
      %v1661 = vadd.f32 %v1405, 1.0
      %v1662 = vadd.f32 %v1406, 1.0
      %v1663 = vadd.f32 %v1407, 1.0
      %v1664 = vadd.f32 %v1408, 1.0
      %v1665 = vadd.f32 %v1409, 1.0
      %v1666 = vadd.f32 %v1410, 1.0
      %v1667 = vadd.f32 %v1411, 1.0
      %v1668 = vadd.f32 %v1412, 1.0
      %v1669 = vadd.f32 %v1413, 1.0
      %v1670 = vadd.f32 %v1414, 1.0
      %v1671 = vadd.f32 %v1415, 1.0
      %v1672 = vadd.f32 %v1416, 1.0
      %v1673 = vadd.f32 %v1417, 1.0
      %v1674 = vadd.f32 %v1418, 1.0
      %v1675 = vadd.f32 %v1419, 1.0
      %v1676 = vadd.f32 %v1420, 1.0
      %v1677 = vadd.f32 %v1421, 1.0
      %v1678 = vadd.f32 %v1422, 1.0
      %v1679 = vadd.f32 %v1423, 1.0
      %v1680 = vadd.f32 %v1424, 1.0
      %v1681 = vadd.f32 %v1425, 1.0
      %v1682 = vadd.f32 %v1426, 1.0
      %v1683 = vadd.f32 %v1427, 1.0
      %v1684 = vadd.f32 %v1428, 1.0
      %v1685 = vadd.f32 %v1429, 1.0
      %v1686 = vadd.f32 %v1430, 1.0
      %v1687 = vadd.f32 %v1431, 1.0
      %v1688 = vadd.f32 %v1432, 1.0
      %v1689 = vadd.f32 %v1433, 1.0
      %v1690 = vadd.f32 %v1434, 1.0
      %v1691 = vadd.f32 %v1435, 1.0
      %v1692 = vadd.f32 %v1436, 1.0
      %v1693 = vadd.f32 %v1437, 1.0
      %v1694 = vadd.f32 %v1438, 1.0
      %v1695 = vadd.f32 %v1439, 1.0
      %v1696 = vadd.f32 %v1440, 1.0
      %v1697 = vadd.f32 %v1441, 1.0
      %v1698 = vadd.f32 %v1442, 1.0
      %v1699 = vadd.f32 %v1443, 1.0
      %v1700 = vadd.f32 %v1444, 1.0
      %v1701 = vadd.f32 %v1445, 1.0
      %v1702 = vadd.f32 %v1446, 1.0
      %v1703 = vadd.f32 %v1447, 1.0
      %v1704 = vadd.f32 %v1448, 1.0
      %v1705 = vadd.f32 %v1449, 1.0
      %v1706 = vadd.f32 %v1450, 1.0
      %v1707 = vadd.f32 %v1451, 1.0
      %v1708 = vadd.f32 %v1452, 1.0
      %v1709 = vadd.f32 %v1453, 1.0
      %v1710 = vadd.f32 %v1454, 1.0
      %v1711 = vadd.f32 %v1455, 1.0
      %v1712 = vadd.f32 %v1456, 1.0
      %v1713 = vadd.f32 %v1457, 1.0
      %v1714 = vadd.f32 %v1458, 1.0
      %v1715 = vadd.f32 %v1459, 1.0
      %v1716 = vadd.f32 %v1460, 1.0
      %v1717 = vadd.f32 %v1461, 1.0
      %v1718 = vadd.f32 %v1462, 1.0
      %v1719 = vadd.f32 %v1463, 1.0
      %v1720 = vadd.f32 %v1464, 1.0
      %v1721 = vadd.f32 %v1465, 1.0
      %v1722 = vadd.f32 %v1466, 1.0
      %v1723 = vadd.f32 %v1467, 1.0
      %v1724 = vadd.f32 %v1468, 1.0
      %v1725 = vadd.f32 %v1469, 1.0
      %v1726 = vadd.f32 %v1470, 1.0
      %v1727 = vadd.f32 %v1471, 1.0
      %v1728 = vadd.f32 %v1472, 1.0
      %v1729 = vadd.f32 %v1473, 1.0
      %v1730 = vadd.f32 %v1474, 1.0
      %v1731 = vadd.f32 %v1475, 1.0
      %v1732 = vadd.f32 %v1476, 1.0
      %v1733 = vadd.f32 %v1477, 1.0
      %v1734 = vadd.f32 %v1478, 1.0
      %v1735 = vadd.f32 %v1479, 1.0
      %v1736 = vadd.f32 %v1480, 1.0
      %v1737 = vadd.f32 %v1481, 1.0
      %v1738 = vadd.f32 %v1482, 1.0
      %v1739 = vadd.f32 %v1483, 1.0
      %v1740 = vadd.f32 %v1484, 1.0
      %v1741 = vadd.f32 %v1485, 1.0
      %v1742 = vadd.f32 %v1486, 1.0
      %v1743 = vadd.f32 %v1487, 1.0
      %v1744 = vadd.f32 %v1488, 1.0
      %v1745 = vadd.f32 %v1489, 1.0
      %v1746 = vadd.f32 %v1490, 1.0
      %v1747 = vadd.f32 %v1491, 1.0
      %v1748 = vadd.f32 %v1492, 1.0
      %v1749 = vadd.f32 %v1493, 1.0
      %v1750 = vadd.f32 %v1494, 1.0
      %v1751 = vadd.f32 %v1495, 1.0
      %v1752 = vadd.f32 %v1496, 1.0
      %v1753 = vadd.f32 %v1497, 1.0
      %v1754 = vadd.f32 %v1498, 1.0
      %v1755 = vadd.f32 %v1499, 1.0
      %v1756 = vadd.f32 %v1500, 1.0
      %v1757 = vadd.f32 %v1501, 1.0
      %v1758 = vadd.f32 %v1502, 1.0
      %v1759 = vadd.f32 %v1503, 1.0
      %v1760 = vadd.f32 %v1504, 1.0
      %v1761 = vadd.f32 %v1505, 1.0
      %v1762 = vadd.f32 %v1506, 1.0
      %v1763 = vadd.f32 %v1507, 1.0
      %v1764 = vadd.f32 %v1508, 1.0
      %v1765 = vadd.f32 %v1509, 1.0
      %v1766 = vadd.f32 %v1510, 1.0
      %v1767 = vadd.f32 %v1511, 1.0
      %v1768 = vadd.f32 %v1512, 1.0
      %v1769 = vmul.f32 %v1513, 0.5
      %v1770 = vmul.f32 %v1514, 0.5
      %v1771 = vmul.f32 %v1515, 0.5
      %v1772 = vmul.f32 %v1516, 0.5
      %v1773 = vmul.f32 %v1517, 0.5
      %v1774 = vmul.f32 %v1518, 0.5
      %v1775 = vmul.f32 %v1519, 0.5
      %v1776 = vmul.f32 %v1520, 0.5
      %v1777 = vmul.f32 %v1521, 0.5
      %v1778 = vmul.f32 %v1522, 0.5
      %v1779 = vmul.f32 %v1523, 0.5
      %v1780 = vmul.f32 %v1524, 0.5
      %v1781 = vmul.f32 %v1525, 0.5
      %v1782 = vmul.f32 %v1526, 0.5
      %v1783 = vmul.f32 %v1527, 0.5
      %v1784 = vmul.f32 %v1528, 0.5
      %v1785 = vmul.f32 %v1529, 0.5
      %v1786 = vmul.f32 %v1530, 0.5
      %v1787 = vmul.f32 %v1531, 0.5
      %v1788 = vmul.f32 %v1532, 0.5
      %v1789 = vmul.f32 %v1533, 0.5
      %v1790 = vmul.f32 %v1534, 0.5
      %v1791 = vmul.f32 %v1535, 0.5
      %v1792 = vmul.f32 %v1536, 0.5
      %v1793 = vmul.f32 %v1537, 0.5
      %v1794 = vmul.f32 %v1538, 0.5
      %v1795 = vmul.f32 %v1539, 0.5
      %v1796 = vmul.f32 %v1540, 0.5
      %v1797 = vmul.f32 %v1541, 0.5
      %v1798 = vmul.f32 %v1542, 0.5
      %v1799 = vmul.f32 %v1543, 0.5
      %v1800 = vmul.f32 %v1544, 0.5
      %v1801 = vmul.f32 %v1545, 0.5
      %v1802 = vmul.f32 %v1546, 0.5
      %v1803 = vmul.f32 %v1547, 0.5
      %v1804 = vmul.f32 %v1548, 0.5
      %v1805 = vmul.f32 %v1549, 0.5
      %v1806 = vmul.f32 %v1550, 0.5
      %v1807 = vmul.f32 %v1551, 0.5
      %v1808 = vmul.f32 %v1552, 0.5
      %v1809 = vmul.f32 %v1553, 0.5
      %v1810 = vmul.f32 %v1554, 0.5
      %v1811 = vmul.f32 %v1555, 0.5
      %v1812 = vmul.f32 %v1556, 0.5
      %v1813 = vmul.f32 %v1557, 0.5
      %v1814 = vmul.f32 %v1558, 0.5
      %v1815 = vmul.f32 %v1559, 0.5
      %v1816 = vmul.f32 %v1560, 0.5
      %v1817 = vmul.f32 %v1561, 0.5
      %v1818 = vmul.f32 %v1562, 0.5
      %v1819 = vmul.f32 %v1563, 0.5
      %v1820 = vmul.f32 %v1564, 0.5
      %v1821 = vmul.f32 %v1565, 0.5
      %v1822 = vmul.f32 %v1566, 0.5
      %v1823 = vmul.f32 %v1567, 0.5
      %v1824 = vmul.f32 %v1568, 0.5
      %v1825 = vmul.f32 %v1569, 0.5
      %v1826 = vmul.f32 %v1570, 0.5
      %v1827 = vmul.f32 %v1571, 0.5
      %v1828 = vmul.f32 %v1572, 0.5
      %v1829 = vmul.f32 %v1573, 0.5
      %v1830 = vmul.f32 %v1574, 0.5
      %v1831 = vmul.f32 %v1575, 0.5
      %v1832 = vmul.f32 %v1576, 0.5
      %v1833 = vmul.f32 %v1577, 0.5
      %v1834 = vmul.f32 %v1578, 0.5
      %v1835 = vmul.f32 %v1579, 0.5
      %v1836 = vmul.f32 %v1580, 0.5
      %v1837 = vmul.f32 %v1581, 0.5
      %v1838 = vmul.f32 %v1582, 0.5
      %v1839 = vmul.f32 %v1583, 0.5
      %v1840 = vmul.f32 %v1584, 0.5
      %v1841 = vmul.f32 %v1585, 0.5
      %v1842 = vmul.f32 %v1586, 0.5
      %v1843 = vmul.f32 %v1587, 0.5
      %v1844 = vmul.f32 %v1588, 0.5
      %v1845 = vmul.f32 %v1589, 0.5
      %v1846 = vmul.f32 %v1590, 0.5
      %v1847 = vmul.f32 %v1591, 0.5
      %v1848 = vmul.f32 %v1592, 0.5
      %v1849 = vmul.f32 %v1593, 0.5
      %v1850 = vmul.f32 %v1594, 0.5
      %v1851 = vmul.f32 %v1595, 0.5
      %v1852 = vmul.f32 %v1596, 0.5
      %v1853 = vmul.f32 %v1597, 0.5
      %v1854 = vmul.f32 %v1598, 0.5
      %v1855 = vmul.f32 %v1599, 0.5
      %v1856 = vmul.f32 %v1600, 0.5
      %v1857 = vmul.f32 %v1601, 0.5
      %v1858 = vmul.f32 %v1602, 0.5
      %v1859 = vmul.f32 %v1603, 0.5
      %v1860 = vmul.f32 %v1604, 0.5
      %v1861 = vmul.f32 %v1605, 0.5
      %v1862 = vmul.f32 %v1606, 0.5
      %v1863 = vmul.f32 %v1607, 0.5
      %v1864 = vmul.f32 %v1608, 0.5
      %v1865 = vmul.f32 %v1609, 0.5
      %v1866 = vmul.f32 %v1610, 0.5
      %v1867 = vmul.f32 %v1611, 0.5
      %v1868 = vmul.f32 %v1612, 0.5
      %v1869 = vmul.f32 %v1613, 0.5
      %v1870 = vmul.f32 %v1614, 0.5
      %v1871 = vmul.f32 %v1615, 0.5
      %v1872 = vmul.f32 %v1616, 0.5
      %v1873 = vmul.f32 %v1617, 0.5
      %v1874 = vmul.f32 %v1618, 0.5
      %v1875 = vmul.f32 %v1619, 0.5
      %v1876 = vmul.f32 %v1620, 0.5
      %v1877 = vmul.f32 %v1621, 0.5
      %v1878 = vmul.f32 %v1622, 0.5
      %v1879 = vmul.f32 %v1623, 0.5
      %v1880 = vmul.f32 %v1624, 0.5
      %v1881 = vmul.f32 %v1625, 0.5
      %v1882 = vmul.f32 %v1626, 0.5
      %v1883 = vmul.f32 %v1627, 0.5
      %v1884 = vmul.f32 %v1628, 0.5
      %v1885 = vmul.f32 %v1629, 0.5
      %v1886 = vmul.f32 %v1630, 0.5
      %v1887 = vmul.f32 %v1631, 0.5
      %v1888 = vmul.f32 %v1632, 0.5
      %v1889 = vmul.f32 %v1633, 0.5
      %v1890 = vmul.f32 %v1634, 0.5
      %v1891 = vmul.f32 %v1635, 0.5
      %v1892 = vmul.f32 %v1636, 0.5
      %v1893 = vmul.f32 %v1637, 0.5
      %v1894 = vmul.f32 %v1638, 0.5
      %v1895 = vmul.f32 %v1639, 0.5
      %v1896 = vmul.f32 %v1640, 0.5
      %v1897 = vmul.f32 %v1641, 0.5
      %v1898 = vmul.f32 %v1642, 0.5
      %v1899 = vmul.f32 %v1643, 0.5
      %v1900 = vmul.f32 %v1644, 0.5
      %v1901 = vmul.f32 %v1645, 0.5
      %v1902 = vmul.f32 %v1646, 0.5
      %v1903 = vmul.f32 %v1647, 0.5
      %v1904 = vmul.f32 %v1648, 0.5
      %v1905 = vmul.f32 %v1649, 0.5
      %v1906 = vmul.f32 %v1650, 0.5
      %v1907 = vmul.f32 %v1651, 0.5
      %v1908 = vmul.f32 %v1652, 0.5
      %v1909 = vmul.f32 %v1653, 0.5
      %v1910 = vmul.f32 %v1654, 0.5
      %v1911 = vmul.f32 %v1655, 0.5
      %v1912 = vmul.f32 %v1656, 0.5
      %v1913 = vmul.f32 %v1657, 0.5
      %v1914 = vmul.f32 %v1658, 0.5
      %v1915 = vmul.f32 %v1659, 0.5
      %v1916 = vmul.f32 %v1660, 0.5
      %v1917 = vmul.f32 %v1661, 0.5
      %v1918 = vmul.f32 %v1662, 0.5
      %v1919 = vmul.f32 %v1663, 0.5
      %v1920 = vmul.f32 %v1664, 0.5
      %v1921 = vmul.f32 %v1665, 0.5
      %v1922 = vmul.f32 %v1666, 0.5
      %v1923 = vmul.f32 %v1667, 0.5
      %v1924 = vmul.f32 %v1668, 0.5
      %v1925 = vmul.f32 %v1669, 0.5
      %v1926 = vmul.f32 %v1670, 0.5
      %v1927 = vmul.f32 %v1671, 0.5
      %v1928 = vmul.f32 %v1672, 0.5
      %v1929 = vmul.f32 %v1673, 0.5
      %v1930 = vmul.f32 %v1674, 0.5
      %v1931 = vmul.f32 %v1675, 0.5
      %v1932 = vmul.f32 %v1676, 0.5
      %v1933 = vmul.f32 %v1677, 0.5
      %v1934 = vmul.f32 %v1678, 0.5
      %v1935 = vmul.f32 %v1679, 0.5
      %v1936 = vmul.f32 %v1680, 0.5
      %v1937 = vmul.f32 %v1681, 0.5
      %v1938 = vmul.f32 %v1682, 0.5
      %v1939 = vmul.f32 %v1683, 0.5
      %v1940 = vmul.f32 %v1684, 0.5
      %v1941 = vmul.f32 %v1685, 0.5
      %v1942 = vmul.f32 %v1686, 0.5
      %v1943 = vmul.f32 %v1687, 0.5
      %v1944 = vmul.f32 %v1688, 0.5
      %v1945 = vmul.f32 %v1689, 0.5
      %v1946 = vmul.f32 %v1690, 0.5
      %v1947 = vmul.f32 %v1691, 0.5
      %v1948 = vmul.f32 %v1692, 0.5
      %v1949 = vmul.f32 %v1693, 0.5
      %v1950 = vmul.f32 %v1694, 0.5
      %v1951 = vmul.f32 %v1695, 0.5
      %v1952 = vmul.f32 %v1696, 0.5
      %v1953 = vmul.f32 %v1697, 0.5
      %v1954 = vmul.f32 %v1698, 0.5
      %v1955 = vmul.f32 %v1699, 0.5
      %v1956 = vmul.f32 %v1700, 0.5
      %v1957 = vmul.f32 %v1701, 0.5
      %v1958 = vmul.f32 %v1702, 0.5
      %v1959 = vmul.f32 %v1703, 0.5
      %v1960 = vmul.f32 %v1704, 0.5
      %v1961 = vmul.f32 %v1705, 0.5
      %v1962 = vmul.f32 %v1706, 0.5
      %v1963 = vmul.f32 %v1707, 0.5
      %v1964 = vmul.f32 %v1708, 0.5
      %v1965 = vmul.f32 %v1709, 0.5
      %v1966 = vmul.f32 %v1710, 0.5
      %v1967 = vmul.f32 %v1711, 0.5
      %v1968 = vmul.f32 %v1712, 0.5
      %v1969 = vmul.f32 %v1713, 0.5
      %v1970 = vmul.f32 %v1714, 0.5
      %v1971 = vmul.f32 %v1715, 0.5
      %v1972 = vmul.f32 %v1716, 0.5
      %v1973 = vmul.f32 %v1717, 0.5
      %v1974 = vmul.f32 %v1718, 0.5
      %v1975 = vmul.f32 %v1719, 0.5
      %v1976 = vmul.f32 %v1720, 0.5
      %v1977 = vmul.f32 %v1721, 0.5
      %v1978 = vmul.f32 %v1722, 0.5
      %v1979 = vmul.f32 %v1723, 0.5
      %v1980 = vmul.f32 %v1724, 0.5
      %v1981 = vmul.f32 %v1725, 0.5
      %v1982 = vmul.f32 %v1726, 0.5
      %v1983 = vmul.f32 %v1727, 0.5
      %v1984 = vmul.f32 %v1728, 0.5
      %v1985 = vmul.f32 %v1729, 0.5
      %v1986 = vmul.f32 %v1730, 0.5
      %v1987 = vmul.f32 %v1731, 0.5
      %v1988 = vmul.f32 %v1732, 0.5
      %v1989 = vmul.f32 %v1733, 0.5
      %v1990 = vmul.f32 %v1734, 0.5
      %v1991 = vmul.f32 %v1735, 0.5
      %v1992 = vmul.f32 %v1736, 0.5
      %v1993 = vmul.f32 %v1737, 0.5
      %v1994 = vmul.f32 %v1738, 0.5
      %v1995 = vmul.f32 %v1739, 0.5
      %v1996 = vmul.f32 %v1740, 0.5
      %v1997 = vmul.f32 %v1741, 0.5
      %v1998 = vmul.f32 %v1742, 0.5
      %v1999 = vmul.f32 %v1743, 0.5
      %v2000 = vmul.f32 %v1744, 0.5
      %v2001 = vmul.f32 %v1745, 0.5
      %v2002 = vmul.f32 %v1746, 0.5
      %v2003 = vmul.f32 %v1747, 0.5
      %v2004 = vmul.f32 %v1748, 0.5
      %v2005 = vmul.f32 %v1749, 0.5
      %v2006 = vmul.f32 %v1750, 0.5
      %v2007 = vmul.f32 %v1751, 0.5
      %v2008 = vmul.f32 %v1752, 0.5
      %v2009 = vmul.f32 %v1753, 0.5
      %v2010 = vmul.f32 %v1754, 0.5
      %v2011 = vmul.f32 %v1755, 0.5
      %v2012 = vmul.f32 %v1756, 0.5
      %v2013 = vmul.f32 %v1757, 0.5
      %v2014 = vmul.f32 %v1758, 0.5
      %v2015 = vmul.f32 %v1759, 0.5
      %v2016 = vmul.f32 %v1760, 0.5
      %v2017 = vmul.f32 %v1761, 0.5
      %v2018 = vmul.f32 %v1762, 0.5
      %v2019 = vmul.f32 %v1763, 0.5
      %v2020 = vmul.f32 %v1764, 0.5
      %v2021 = vmul.f32 %v1765, 0.5
      %v2022 = vmul.f32 %v1766, 0.5
      %v2023 = vmul.f32 %v1767, 0.5
      %v2024 = vmul.f32 %v1768, 0.5
      %v2025 = vld [vmem:[%s3] sm:$0xff]
      %v2026 = vld [vmem:[%s3 + $0x8] sm:$0xff]
      %v2027 = vld [vmem:[%s3 + $0x10] sm:$0xff]
      %v2028 = vld [vmem:[%s3 + $0x18] sm:$0xff]
      %v2029 = vld [vmem:[%s3 + $0x20] sm:$0xff]
      %v2030 = vld [vmem:[%s3 + $0x28] sm:$0xff]
      %v2031 = vld [vmem:[%s3 + $0x30] sm:$0xff]
      %v2032 = vld [vmem:[%s3 + $0x38] sm:$0xff]
      %v2033 = vld [vmem:[%s3 + $0x40] sm:$0xff]
      %v2034 = vld [vmem:[%s3 + $0x48] sm:$0xff]
      %v2035 = vld [vmem:[%s3 + $0x50] sm:$0xff]
      %v2036 = vld [vmem:[%s3 + $0x58] sm:$0xff]
      %v2037 = vld [vmem:[%s3 + $0x60] sm:$0xff]
      %v2038 = vld [vmem:[%s3 + $0x68] sm:$0xff]
      %v2039 = vld [vmem:[%s3 + $0x70] sm:$0xff]
      %v2040 = vld [vmem:[%s3 + $0x78] sm:$0xff]
      %v2041 = vld [vmem:[%s3 + $0x80] sm:$0xff]
      %v2042 = vld [vmem:[%s3 + $0x88] sm:$0xff]
      %v2043 = vld [vmem:[%s3 + $0x90] sm:$0xff]
      %v2044 = vld [vmem:[%s3 + $0x98] sm:$0xff]
      %v2045 = vld [vmem:[%s3 + $0xa0] sm:$0xff]
      %v2046 = vld [vmem:[%s3 + $0xa8] sm:$0xff]
      %v2047 = vld [vmem:[%s3 + $0xb0] sm:$0xff]
      %v2048 = vld [vmem:[%s3 + $0xb8] sm:$0xff]
      %v2049 = vld [vmem:[%s3 + $0xc0] sm:$0xff]
      %v2050 = vld [vmem:[%s3 + $0xc8] sm:$0xff]
      %v2051 = vld [vmem:[%s3 + $0xd0] sm:$0xff]
      %v2052 = vld [vmem:[%s3 + $0xd8] sm:$0xff]
      %v2053 = vld [vmem:[%s3 + $0xe0] sm:$0xff]
      %v2054 = vld [vmem:[%s3 + $0xe8] sm:$0xff]
      %v2055 = vld [vmem:[%s3 + $0xf0] sm:$0xff]
      %v2056 = vld [vmem:[%s3 + $0xf8] sm:$0xff]
      %v2057 = vld [vmem:[%s4] sm:$0xff]
      %v2058 = vld [vmem:[%s4 + $0x8] sm:$0xff]
      %v2059 = vld [vmem:[%s4 + $0x10] sm:$0xff]
      %v2060 = vld [vmem:[%s4 + $0x18] sm:$0xff]
      %v2061 = vld [vmem:[%s4 + $0x20] sm:$0xff]
      %v2062 = vld [vmem:[%s4 + $0x28] sm:$0xff]
      %v2063 = vld [vmem:[%s4 + $0x30] sm:$0xff]
      %v2064 = vld [vmem:[%s4 + $0x38] sm:$0xff]
      %v2065 = vld [vmem:[%s4 + $0x40] sm:$0xff]
      %v2066 = vld [vmem:[%s4 + $0x48] sm:$0xff]
      %v2067 = vld [vmem:[%s4 + $0x50] sm:$0xff]
      %v2068 = vld [vmem:[%s4 + $0x58] sm:$0xff]
      %v2069 = vld [vmem:[%s4 + $0x60] sm:$0xff]
      %v2070 = vld [vmem:[%s4 + $0x68] sm:$0xff]
      %v2071 = vld [vmem:[%s4 + $0x70] sm:$0xff]
      %v2072 = vld [vmem:[%s4 + $0x78] sm:$0xff]
      %v2073 = vld [vmem:[%s4 + $0x80] sm:$0xff]
      %v2074 = vld [vmem:[%s4 + $0x88] sm:$0xff]
      %v2075 = vld [vmem:[%s4 + $0x90] sm:$0xff]
      %v2076 = vld [vmem:[%s4 + $0x98] sm:$0xff]
      %v2077 = vld [vmem:[%s4 + $0xa0] sm:$0xff]
      %v2078 = vld [vmem:[%s4 + $0xa8] sm:$0xff]
      %v2079 = vld [vmem:[%s4 + $0xb0] sm:$0xff]
      %v2080 = vld [vmem:[%s4 + $0xb8] sm:$0xff]
      %v2081 = vld [vmem:[%s4 + $0xc0] sm:$0xff]
      %v2082 = vld [vmem:[%s4 + $0xc8] sm:$0xff]
      %v2083 = vld [vmem:[%s4 + $0xd0] sm:$0xff]
      %v2084 = vld [vmem:[%s4 + $0xd8] sm:$0xff]
      %v2085 = vld [vmem:[%s4 + $0xe0] sm:$0xff]
      %v2086 = vld [vmem:[%s4 + $0xe8] sm:$0xff]
      %v2087 = vld [vmem:[%s4 + $0xf0] sm:$0xff]
      %v2088 = vld [vmem:[%s4 + $0xf8] sm:$0xff]
      %2090 = vset.pattern.permute.xlu0 0
      %2091 = vperm.xlu0 %2090, %v2057
      %v2092 = vpop.permute.xlu0 %2091
      %2095 = vset.pattern.permute.xlu0 0
      %2096 = vperm.xlu0 %2095, %v2058
      %v2097 = vpop.permute.xlu0 %2096
      %2100 = vset.pattern.permute.xlu0 0
      %2101 = vperm.xlu0 %2100, %v2059
      %v2102 = vpop.permute.xlu0 %2101
      %2105 = vset.pattern.permute.xlu0 0
      %2106 = vperm.xlu0 %2105, %v2060
      %v2107 = vpop.permute.xlu0 %2106
      %2110 = vset.pattern.permute.xlu0 0
      %2111 = vperm.xlu0 %2110, %v2061
      %v2112 = vpop.permute.xlu0 %2111
      %2115 = vset.pattern.permute.xlu0 0
      %2116 = vperm.xlu0 %2115, %v2062
      %v2117 = vpop.permute.xlu0 %2116
      %2120 = vset.pattern.permute.xlu0 0
      %2121 = vperm.xlu0 %2120, %v2063
      %v2122 = vpop.permute.xlu0 %2121
      %2125 = vset.pattern.permute.xlu0 0
      %2126 = vperm.xlu0 %2125, %v2064
      %v2127 = vpop.permute.xlu0 %2126
      %2130 = vset.pattern.permute.xlu0 0
      %2131 = vperm.xlu0 %2130, %v2065
      %v2132 = vpop.permute.xlu0 %2131
      %2135 = vset.pattern.permute.xlu0 0
      %2136 = vperm.xlu0 %2135, %v2066
      %v2137 = vpop.permute.xlu0 %2136
      %2140 = vset.pattern.permute.xlu0 0
      %2141 = vperm.xlu0 %2140, %v2067
      %v2142 = vpop.permute.xlu0 %2141
      %2145 = vset.pattern.permute.xlu0 0
      %2146 = vperm.xlu0 %2145, %v2068
      %v2147 = vpop.permute.xlu0 %2146
      %2150 = vset.pattern.permute.xlu0 0
      %2151 = vperm.xlu0 %2150, %v2069
      %v2152 = vpop.permute.xlu0 %2151
      %2155 = vset.pattern.permute.xlu0 0
      %2156 = vperm.xlu0 %2155, %v2070
      %v2157 = vpop.permute.xlu0 %2156
      %2160 = vset.pattern.permute.xlu0 0
      %2161 = vperm.xlu0 %2160, %v2071
      %v2162 = vpop.permute.xlu0 %2161
      %2165 = vset.pattern.permute.xlu0 0
      %2166 = vperm.xlu0 %2165, %v2072
      %v2167 = vpop.permute.xlu0 %2166
      %2170 = vset.pattern.permute.xlu0 0
      %2171 = vperm.xlu0 %2170, %v2073
      %v2172 = vpop.permute.xlu0 %2171
      %2175 = vset.pattern.permute.xlu0 0
      %2176 = vperm.xlu0 %2175, %v2074
      %v2177 = vpop.permute.xlu0 %2176
      %2180 = vset.pattern.permute.xlu0 0
      %2181 = vperm.xlu0 %2180, %v2075
      %v2182 = vpop.permute.xlu0 %2181
      %2185 = vset.pattern.permute.xlu0 0
      %2186 = vperm.xlu0 %2185, %v2076
      %v2187 = vpop.permute.xlu0 %2186
      %2190 = vset.pattern.permute.xlu0 0
      %2191 = vperm.xlu0 %2190, %v2077
      %v2192 = vpop.permute.xlu0 %2191
      %2195 = vset.pattern.permute.xlu0 0
      %2196 = vperm.xlu0 %2195, %v2078
      %v2197 = vpop.permute.xlu0 %2196
      %2200 = vset.pattern.permute.xlu0 0
      %2201 = vperm.xlu0 %2200, %v2079
      %v2202 = vpop.permute.xlu0 %2201
      %2205 = vset.pattern.permute.xlu0 0
      %2206 = vperm.xlu0 %2205, %v2080
      %v2207 = vpop.permute.xlu0 %2206
      %2210 = vset.pattern.permute.xlu0 0
      %2211 = vperm.xlu0 %2210, %v2081
      %v2212 = vpop.permute.xlu0 %2211
      %2215 = vset.pattern.permute.xlu0 0
      %2216 = vperm.xlu0 %2215, %v2082
      %v2217 = vpop.permute.xlu0 %2216
      %2220 = vset.pattern.permute.xlu0 0
      %2221 = vperm.xlu0 %2220, %v2083
      %v2222 = vpop.permute.xlu0 %2221
      %2225 = vset.pattern.permute.xlu0 0
      %2226 = vperm.xlu0 %2225, %v2084
      %v2227 = vpop.permute.xlu0 %2226
      %2230 = vset.pattern.permute.xlu0 0
      %2231 = vperm.xlu0 %2230, %v2085
      %v2232 = vpop.permute.xlu0 %2231
      %2235 = vset.pattern.permute.xlu0 0
      %2236 = vperm.xlu0 %2235, %v2086
      %v2237 = vpop.permute.xlu0 %2236
      %2240 = vset.pattern.permute.xlu0 0
      %2241 = vperm.xlu0 %2240, %v2087
      %v2242 = vpop.permute.xlu0 %2241
      %2245 = vset.pattern.permute.xlu0 0
      %2246 = vperm.xlu0 %2245, %v2088
      %v2247 = vpop.permute.xlu0 %2246
      %2249 = vmatprep.subr.mxu0 %v1770
      %2250 = vmatpush1.msra.mxu0 %v1769
      %2251 = vmatprep.subr.mxu0 %v1786
      %2252 = vmatpush1.msra.mxu0 %v1785
      %2253 = vmatprep.subr.mxu0 %v1802
      %2254 = vmatpush1.msra.mxu0 %v1801
      %2255 = vmatprep.subr.mxu0 %v1818
      %2256 = vmatpush1.msra.mxu0 %v1817
      %2257 = vmatprep.subr.mxu0 %v1834
      %2258 = vmatpush1.msra.mxu0 %v1833
      %2259 = vmatprep.subr.mxu0 %v1850
      %2260 = vmatpush1.msra.mxu0 %v1849
      %2261 = vmatprep.subr.mxu0 %v1866
      %2262 = vmatpush1.msra.mxu0 %v1865
      %2263 = vmatprep.subr.mxu0 %v1882
      %2264 = vmatpush1.msra.mxu0 %v1881
      %2265 = vmatprep.subr.mxu0 %v1898
      %2266 = vmatpush1.msra.mxu0 %v1897
      %2267 = vmatprep.subr.mxu0 %v1914
      %2268 = vmatpush1.msra.mxu0 %v1913
      %2269 = vmatprep.subr.mxu0 %v1930
      %2270 = vmatpush1.msra.mxu0 %v1929
      %2271 = vmatprep.subr.mxu0 %v1946
      %2272 = vmatpush1.msra.mxu0 %v1945
      %2273 = vmatprep.subr.mxu0 %v1962
      %2274 = vmatpush1.msra.mxu0 %v1961
      %2275 = vmatprep.subr.mxu0 %v1978
      %2276 = vmatpush1.msra.mxu0 %v1977
      %2277 = vmatprep.subr.mxu0 %v1994
      %2278 = vmatpush1.msra.mxu0 %v1993
      %2279 = vmatprep.subr.mxu0 %v2010
      %2280 = vmatpush1.msra.mxu0 %v2009
      %2281 = vmatprep.subr.mxu0 0.0
      %2282 = vmatpush1.msra.mxu0 0.0
      %2283 = vmatprep.subr.mxu0 0.0
      %2284 = vmatpush1.msra.mxu0 0.0
      %2285 = vmatprep.subr.mxu0 0.0
      %2286 = vmatpush1.msra.mxu0 0.0
      %2287 = vmatprep.subr.mxu0 0.0
      %2288 = vmatpush1.msra.mxu0 0.0
      %2289 = vmatprep.subr.mxu0 0.0
      %2290 = vmatpush1.msra.mxu0 0.0
      %2291 = vmatprep.subr.mxu0 0.0
      %2292 = vmatpush1.msra.mxu0 0.0
      %2293 = vmatprep.subr.mxu0 0.0
      %2294 = vmatpush1.msra.mxu0 0.0
      %2295 = vmatprep.subr.mxu0 0.0
      %2296 = vmatpush1.msra.mxu0 0.0
      %2297 = vmatprep.subr.mxu0 0.0
      %2298 = vmatpush1.msra.mxu0 0.0
      %2299 = vmatprep.subr.mxu0 0.0
      %2300 = vmatpush1.msra.mxu0 0.0
      %2301 = vmatprep.subr.mxu0 0.0
      %2302 = vmatpush1.msra.mxu0 0.0
      %2303 = vmatprep.subr.mxu0 0.0
      %2304 = vmatpush1.msra.mxu0 0.0
      %2305 = vmatprep.subr.mxu0 0.0
      %2306 = vmatpush1.msra.mxu0 0.0
      %2307 = vmatprep.subr.mxu0 0.0
      %2308 = vmatpush1.msra.mxu0 0.0
      %2309 = vmatprep.subr.mxu0 0.0
      %2310 = vmatpush1.msra.mxu0 0.0
      %2311 = vmatprep.subr.mxu0 0.0
      %2312 = vmatpush1.msra.mxu0 0.0
      %2313 = vmatprep.mubr.f32.mxu0 0.0
      %2314 = vmatmul.mubr.f32.gmra.mrb[0].mxu0 %v2025
      %v2315 = vpop.f32.mrb[0].mxu0
      %v2316 = vadd.f32 %v2092, %v2315
      %v2317 = vpop.f32.mrb[0].mxu0
      %v2318 = vadd.f32 %v2092, %v2317
      %2319 = vmatprep.mubr.f32.mxu0 0.0
      %2320 = vmatmul.mubr.f32.gmra.mrb[0].mxu0 %v2026
      %v2321 = vpop.f32.mrb[0].mxu0
      %v2322 = vadd.f32 %v2097, %v2321
      %v2323 = vpop.f32.mrb[0].mxu0
      %v2324 = vadd.f32 %v2097, %v2323
      %2325 = vmatprep.mubr.f32.mxu0 0.0
      %2326 = vmatmul.mubr.f32.gmra.mrb[0].mxu0 %v2027
      %v2327 = vpop.f32.mrb[0].mxu0
      %v2328 = vadd.f32 %v2102, %v2327
      %v2329 = vpop.f32.mrb[0].mxu0
      %v2330 = vadd.f32 %v2102, %v2329
      %2331 = vmatprep.mubr.f32.mxu0 0.0
      %2332 = vmatmul.mubr.f32.gmra.mrb[0].mxu0 %v2028
      %v2333 = vpop.f32.mrb[0].mxu0
      %v2334 = vadd.f32 %v2107, %v2333
      %v2335 = vpop.f32.mrb[0].mxu0
      %v2336 = vadd.f32 %v2107, %v2335
      %2337 = vmatprep.mubr.f32.mxu0 0.0
      %2338 = vmatmul.mubr.f32.gmra.mrb[0].mxu0 %v2029
      %v2339 = vpop.f32.mrb[0].mxu0
      %v2340 = vadd.f32 %v2112, %v2339
      %v2341 = vpop.f32.mrb[0].mxu0
      %v2342 = vadd.f32 %v2112, %v2341
      %2343 = vmatprep.mubr.f32.mxu0 0.0
      %2344 = vmatmul.mubr.f32.gmra.mrb[0].mxu0 %v2030
      %v2345 = vpop.f32.mrb[0].mxu0
      %v2346 = vadd.f32 %v2117, %v2345
      %v2347 = vpop.f32.mrb[0].mxu0
      %v2348 = vadd.f32 %v2117, %v2347
      %2349 = vmatprep.mubr.f32.mxu0 0.0
      %2350 = vmatmul.mubr.f32.gmra.mrb[0].mxu0 %v2031
      %v2351 = vpop.f32.mrb[0].mxu0
      %v2352 = vadd.f32 %v2122, %v2351
      %v2353 = vpop.f32.mrb[0].mxu0
      %v2354 = vadd.f32 %v2122, %v2353
      %2355 = vmatprep.mubr.f32.mxu0 0.0
      %2356 = vmatmul.mubr.f32.gmra.mrb[0].mxu0 %v2032
      %v2357 = vpop.f32.mrb[0].mxu0
      %v2358 = vadd.f32 %v2127, %v2357
      %v2359 = vpop.f32.mrb[0].mxu0
      %v2360 = vadd.f32 %v2127, %v2359
      %2361 = vmatprep.mubr.f32.mxu0 0.0
      %2362 = vmatmul.mubr.f32.gmra.mrb[0].mxu0 %v2033
      %v2363 = vpop.f32.mrb[0].mxu0
      %v2364 = vadd.f32 %v2132, %v2363
      %v2365 = vpop.f32.mrb[0].mxu0
      %v2366 = vadd.f32 %v2132, %v2365
      %2367 = vmatprep.mubr.f32.mxu0 0.0
      %2368 = vmatmul.mubr.f32.gmra.mrb[0].mxu0 %v2034
      %v2369 = vpop.f32.mrb[0].mxu0
      %v2370 = vadd.f32 %v2137, %v2369
      %v2371 = vpop.f32.mrb[0].mxu0
      %v2372 = vadd.f32 %v2137, %v2371
      %2373 = vmatprep.mubr.f32.mxu0 0.0
      %2374 = vmatmul.mubr.f32.gmra.mrb[0].mxu0 %v2035
      %v2375 = vpop.f32.mrb[0].mxu0
      %v2376 = vadd.f32 %v2142, %v2375
      %v2377 = vpop.f32.mrb[0].mxu0
      %v2378 = vadd.f32 %v2142, %v2377
      %2379 = vmatprep.mubr.f32.mxu0 0.0
      %2380 = vmatmul.mubr.f32.gmra.mrb[0].mxu0 %v2036
      %v2381 = vpop.f32.mrb[0].mxu0
      %v2382 = vadd.f32 %v2147, %v2381
      %v2383 = vpop.f32.mrb[0].mxu0
      %v2384 = vadd.f32 %v2147, %v2383
      %2385 = vmatprep.mubr.f32.mxu0 0.0
      %2386 = vmatmul.mubr.f32.gmra.mrb[0].mxu0 %v2037
      %v2387 = vpop.f32.mrb[0].mxu0
      %v2388 = vadd.f32 %v2152, %v2387
      %v2389 = vpop.f32.mrb[0].mxu0
      %v2390 = vadd.f32 %v2152, %v2389
      %2391 = vmatprep.mubr.f32.mxu0 0.0
      %2392 = vmatmul.mubr.f32.gmra.mrb[0].mxu0 %v2038
      %v2393 = vpop.f32.mrb[0].mxu0
      %v2394 = vadd.f32 %v2157, %v2393
      %v2395 = vpop.f32.mrb[0].mxu0
      %v2396 = vadd.f32 %v2157, %v2395
      %2397 = vmatprep.mubr.f32.mxu0 0.0
      %2398 = vmatmul.mubr.f32.gmra.mrb[0].mxu0 %v2039
      %v2399 = vpop.f32.mrb[0].mxu0
      %v2400 = vadd.f32 %v2162, %v2399
      %v2401 = vpop.f32.mrb[0].mxu0
      %v2402 = vadd.f32 %v2162, %v2401
      %2403 = vmatprep.mubr.f32.mxu0 0.0
      %2404 = vmatmul.mubr.f32.gmra.mrb[0].mxu0 %v2040
      %v2405 = vpop.f32.mrb[0].mxu0
      %v2406 = vadd.f32 %v2167, %v2405
      %v2407 = vpop.f32.mrb[0].mxu0
      %v2408 = vadd.f32 %v2167, %v2407
      %2409 = vmatprep.mubr.f32.mxu0 0.0
      %2410 = vmatmul.mubr.f32.gmra.mrb[0].mxu0 %v2041
      %v2411 = vpop.f32.mrb[0].mxu0
      %v2412 = vadd.f32 %v2172, %v2411
      %v2413 = vpop.f32.mrb[0].mxu0
      %v2414 = vadd.f32 %v2172, %v2413
      %2415 = vmatprep.mubr.f32.mxu0 0.0
      %2416 = vmatmul.mubr.f32.gmra.mrb[0].mxu0 %v2042
      %v2417 = vpop.f32.mrb[0].mxu0
      %v2418 = vadd.f32 %v2177, %v2417
      %v2419 = vpop.f32.mrb[0].mxu0
      %v2420 = vadd.f32 %v2177, %v2419
      %2421 = vmatprep.mubr.f32.mxu0 0.0
      %2422 = vmatmul.mubr.f32.gmra.mrb[0].mxu0 %v2043
      %v2423 = vpop.f32.mrb[0].mxu0
      %v2424 = vadd.f32 %v2182, %v2423
      %v2425 = vpop.f32.mrb[0].mxu0
      %v2426 = vadd.f32 %v2182, %v2425
      %2427 = vmatprep.mubr.f32.mxu0 0.0
      %2428 = vmatmul.mubr.f32.gmra.mrb[0].mxu0 %v2044
      %v2429 = vpop.f32.mrb[0].mxu0
      %v2430 = vadd.f32 %v2187, %v2429
      %v2431 = vpop.f32.mrb[0].mxu0
      %v2432 = vadd.f32 %v2187, %v2431
      %2433 = vmatprep.mubr.f32.mxu0 0.0
      %2434 = vmatmul.mubr.f32.gmra.mrb[0].mxu0 %v2045
      %v2435 = vpop.f32.mrb[0].mxu0
      %v2436 = vadd.f32 %v2192, %v2435
      %v2437 = vpop.f32.mrb[0].mxu0
      %v2438 = vadd.f32 %v2192, %v2437
      %2439 = vmatprep.mubr.f32.mxu0 0.0
      %2440 = vmatmul.mubr.f32.gmra.mrb[0].mxu0 %v2046
      %v2441 = vpop.f32.mrb[0].mxu0
      %v2442 = vadd.f32 %v2197, %v2441
      %v2443 = vpop.f32.mrb[0].mxu0
      %v2444 = vadd.f32 %v2197, %v2443
      %2445 = vmatprep.mubr.f32.mxu0 0.0
      %2446 = vmatmul.mubr.f32.gmra.mrb[0].mxu0 %v2047
      %v2447 = vpop.f32.mrb[0].mxu0
      %v2448 = vadd.f32 %v2202, %v2447
      %v2449 = vpop.f32.mrb[0].mxu0
      %v2450 = vadd.f32 %v2202, %v2449
      %2451 = vmatprep.mubr.f32.mxu0 0.0
      %2452 = vmatmul.mubr.f32.gmra.mrb[0].mxu0 %v2048
      %v2453 = vpop.f32.mrb[0].mxu0
      %v2454 = vadd.f32 %v2207, %v2453
      %v2455 = vpop.f32.mrb[0].mxu0
      %v2456 = vadd.f32 %v2207, %v2455
      %2457 = vmatprep.mubr.f32.mxu0 0.0
      %2458 = vmatmul.mubr.f32.gmra.mrb[0].mxu0 %v2049
      %v2459 = vpop.f32.mrb[0].mxu0
      %v2460 = vadd.f32 %v2212, %v2459
      %v2461 = vpop.f32.mrb[0].mxu0
      %v2462 = vadd.f32 %v2212, %v2461
      %2463 = vmatprep.mubr.f32.mxu0 0.0
      %2464 = vmatmul.mubr.f32.gmra.mrb[0].mxu0 %v2050
      %v2465 = vpop.f32.mrb[0].mxu0
      %v2466 = vadd.f32 %v2217, %v2465
      %v2467 = vpop.f32.mrb[0].mxu0
      %v2468 = vadd.f32 %v2217, %v2467
      %2469 = vmatprep.mubr.f32.mxu0 0.0
      %2470 = vmatmul.mubr.f32.gmra.mrb[0].mxu0 %v2051
      %v2471 = vpop.f32.mrb[0].mxu0
      %v2472 = vadd.f32 %v2222, %v2471
      %v2473 = vpop.f32.mrb[0].mxu0
      %v2474 = vadd.f32 %v2222, %v2473
      %2475 = vmatprep.mubr.f32.mxu0 0.0
      %2476 = vmatmul.mubr.f32.gmra.mrb[0].mxu0 %v2052
      %v2477 = vpop.f32.mrb[0].mxu0
      %v2478 = vadd.f32 %v2227, %v2477
      %v2479 = vpop.f32.mrb[0].mxu0
      %v2480 = vadd.f32 %v2227, %v2479
      %2481 = vmatprep.mubr.f32.mxu0 0.0
      %2482 = vmatmul.mubr.f32.gmra.mrb[0].mxu0 %v2053
      %v2483 = vpop.f32.mrb[0].mxu0
      %v2484 = vadd.f32 %v2232, %v2483
      %v2485 = vpop.f32.mrb[0].mxu0
      %v2486 = vadd.f32 %v2232, %v2485
      %2487 = vmatprep.mubr.f32.mxu0 0.0
      %2488 = vmatmul.mubr.f32.gmra.mrb[0].mxu0 %v2054
      %v2489 = vpop.f32.mrb[0].mxu0
      %v2490 = vadd.f32 %v2237, %v2489
      %v2491 = vpop.f32.mrb[0].mxu0
      %v2492 = vadd.f32 %v2237, %v2491
      %2493 = vmatprep.mubr.f32.mxu0 0.0
      %2494 = vmatmul.mubr.f32.gmra.mrb[0].mxu0 %v2055
      %v2495 = vpop.f32.mrb[0].mxu0
      %v2496 = vadd.f32 %v2242, %v2495
      %v2497 = vpop.f32.mrb[0].mxu0
      %v2498 = vadd.f32 %v2242, %v2497
      %2499 = vmatprep.mubr.f32.mxu0 0.0
      %2500 = vmatmul.mubr.f32.gmra.mrb[0].mxu0 %v2056
      %v2501 = vpop.f32.mrb[0].mxu0
      %v2502 = vadd.f32 %v2247, %v2501
      %v2503 = vpop.f32.mrb[0].mxu0
      %v2504 = vadd.f32 %v2247, %v2503
      %2505 = vdwg.mxu0
      %2506 = vmatprep.subr.mxu0 %v1772
      %2507 = vmatpush1.msra.mxu0 %v1771
      %2508 = vmatprep.subr.mxu0 %v1788
      %2509 = vmatpush1.msra.mxu0 %v1787
      %2510 = vmatprep.subr.mxu0 %v1804
      %2511 = vmatpush1.msra.mxu0 %v1803
      %2512 = vmatprep.subr.mxu0 %v1820
      %2513 = vmatpush1.msra.mxu0 %v1819
      %2514 = vmatprep.subr.mxu0 %v1836
      %2515 = vmatpush1.msra.mxu0 %v1835
      %2516 = vmatprep.subr.mxu0 %v1852
      %2517 = vmatpush1.msra.mxu0 %v1851
      %2518 = vmatprep.subr.mxu0 %v1868
      %2519 = vmatpush1.msra.mxu0 %v1867
      %2520 = vmatprep.subr.mxu0 %v1884
      %2521 = vmatpush1.msra.mxu0 %v1883
      %2522 = vmatprep.subr.mxu0 %v1900
      %2523 = vmatpush1.msra.mxu0 %v1899
      %2524 = vmatprep.subr.mxu0 %v1916
      %2525 = vmatpush1.msra.mxu0 %v1915
      %2526 = vmatprep.subr.mxu0 %v1932
      %2527 = vmatpush1.msra.mxu0 %v1931
      %2528 = vmatprep.subr.mxu0 %v1948
      %2529 = vmatpush1.msra.mxu0 %v1947
      %2530 = vmatprep.subr.mxu0 %v1964
      %2531 = vmatpush1.msra.mxu0 %v1963
      %2532 = vmatprep.subr.mxu0 %v1980
      %2533 = vmatpush1.msra.mxu0 %v1979
      %2534 = vmatprep.subr.mxu0 %v1996
      %2535 = vmatpush1.msra.mxu0 %v1995
      %2536 = vmatprep.subr.mxu0 %v2012
      %2537 = vmatpush1.msra.mxu0 %v2011
      %2538 = vmatprep.subr.mxu0 0.0
      %2539 = vmatpush1.msra.mxu0 0.0
      %2540 = vmatprep.subr.mxu0 0.0
      %2541 = vmatpush1.msra.mxu0 0.0
      %2542 = vmatprep.subr.mxu0 0.0
      %2543 = vmatpush1.msra.mxu0 0.0
      %2544 = vmatprep.subr.mxu0 0.0
      %2545 = vmatpush1.msra.mxu0 0.0
      %2546 = vmatprep.subr.mxu0 0.0
      %2547 = vmatpush1.msra.mxu0 0.0
      %2548 = vmatprep.subr.mxu0 0.0
      %2549 = vmatpush1.msra.mxu0 0.0
      %2550 = vmatprep.subr.mxu0 0.0
      %2551 = vmatpush1.msra.mxu0 0.0
      %2552 = vmatprep.subr.mxu0 0.0
      %2553 = vmatpush1.msra.mxu0 0.0
      %2554 = vmatprep.subr.mxu0 0.0
      %2555 = vmatpush1.msra.mxu0 0.0
      %2556 = vmatprep.subr.mxu0 0.0
      %2557 = vmatpush1.msra.mxu0 0.0
      %2558 = vmatprep.subr.mxu0 0.0
      %2559 = vmatpush1.msra.mxu0 0.0
      %2560 = vmatprep.subr.mxu0 0.0
      %2561 = vmatpush1.msra.mxu0 0.0
      %2562 = vmatprep.subr.mxu0 0.0
      %2563 = vmatpush1.msra.mxu0 0.0
      %2564 = vmatprep.subr.mxu0 0.0
      %2565 = vmatpush1.msra.mxu0 0.0
      %2566 = vmatprep.subr.mxu0 0.0
      %2567 = vmatpush1.msra.mxu0 0.0
      %2568 = vmatprep.subr.mxu0 0.0
      %2569 = vmatpush1.msra.mxu0 0.0
      %2570 = vmatprep.mubr.f32.mxu0 0.0
      %2571 = vmatmul.mubr.f32.gmra.mrb[0].mxu0 %v2025
      %v2572 = vpop.f32.mrb[0].mxu0
      %v2573 = vadd.f32 %v2092, %v2572
      %v2574 = vpop.f32.mrb[0].mxu0
      %v2575 = vadd.f32 %v2092, %v2574
      %2576 = vmatprep.mubr.f32.mxu0 0.0
      %2577 = vmatmul.mubr.f32.gmra.mrb[0].mxu0 %v2026
      %v2578 = vpop.f32.mrb[0].mxu0
      %v2579 = vadd.f32 %v2097, %v2578
      %v2580 = vpop.f32.mrb[0].mxu0
      %v2581 = vadd.f32 %v2097, %v2580
      %2582 = vmatprep.mubr.f32.mxu0 0.0
      %2583 = vmatmul.mubr.f32.gmra.mrb[0].mxu0 %v2027
      %v2584 = vpop.f32.mrb[0].mxu0
      %v2585 = vadd.f32 %v2102, %v2584
      %v2586 = vpop.f32.mrb[0].mxu0
      %v2587 = vadd.f32 %v2102, %v2586
      %2588 = vmatprep.mubr.f32.mxu0 0.0
      %2589 = vmatmul.mubr.f32.gmra.mrb[0].mxu0 %v2028
      %v2590 = vpop.f32.mrb[0].mxu0
      %v2591 = vadd.f32 %v2107, %v2590
      %v2592 = vpop.f32.mrb[0].mxu0
      %v2593 = vadd.f32 %v2107, %v2592
      %2594 = vmatprep.mubr.f32.mxu0 0.0
      %2595 = vmatmul.mubr.f32.gmra.mrb[0].mxu0 %v2029
      %v2596 = vpop.f32.mrb[0].mxu0
      %v2597 = vadd.f32 %v2112, %v2596
      %v2598 = vpop.f32.mrb[0].mxu0
      %v2599 = vadd.f32 %v2112, %v2598
      %2600 = vmatprep.mubr.f32.mxu0 0.0
      %2601 = vmatmul.mubr.f32.gmra.mrb[0].mxu0 %v2030
      %v2602 = vpop.f32.mrb[0].mxu0
      %v2603 = vadd.f32 %v2117, %v2602
      %v2604 = vpop.f32.mrb[0].mxu0
      %v2605 = vadd.f32 %v2117, %v2604
      %2606 = vmatprep.mubr.f32.mxu0 0.0
      %2607 = vmatmul.mubr.f32.gmra.mrb[0].mxu0 %v2031
      %v2608 = vpop.f32.mrb[0].mxu0
      %v2609 = vadd.f32 %v2122, %v2608
      %v2610 = vpop.f32.mrb[0].mxu0
      %v2611 = vadd.f32 %v2122, %v2610
      %2612 = vmatprep.mubr.f32.mxu0 0.0
      %2613 = vmatmul.mubr.f32.gmra.mrb[0].mxu0 %v2032
      %v2614 = vpop.f32.mrb[0].mxu0
      %v2615 = vadd.f32 %v2127, %v2614
      %v2616 = vpop.f32.mrb[0].mxu0
      %v2617 = vadd.f32 %v2127, %v2616
      %2618 = vmatprep.mubr.f32.mxu0 0.0
      %2619 = vmatmul.mubr.f32.gmra.mrb[0].mxu0 %v2033
      %v2620 = vpop.f32.mrb[0].mxu0
      %v2621 = vadd.f32 %v2132, %v2620
      %v2622 = vpop.f32.mrb[0].mxu0
      %v2623 = vadd.f32 %v2132, %v2622
      %2624 = vmatprep.mubr.f32.mxu0 0.0
      %2625 = vmatmul.mubr.f32.gmra.mrb[0].mxu0 %v2034
      %v2626 = vpop.f32.mrb[0].mxu0
      %v2627 = vadd.f32 %v2137, %v2626
      %v2628 = vpop.f32.mrb[0].mxu0
      %v2629 = vadd.f32 %v2137, %v2628
      %2630 = vmatprep.mubr.f32.mxu0 0.0
      %2631 = vmatmul.mubr.f32.gmra.mrb[0].mxu0 %v2035
      %v2632 = vpop.f32.mrb[0].mxu0
      %v2633 = vadd.f32 %v2142, %v2632
      %v2634 = vpop.f32.mrb[0].mxu0
      %v2635 = vadd.f32 %v2142, %v2634
      %2636 = vmatprep.mubr.f32.mxu0 0.0
      %2637 = vmatmul.mubr.f32.gmra.mrb[0].mxu0 %v2036
      %v2638 = vpop.f32.mrb[0].mxu0
      %v2639 = vadd.f32 %v2147, %v2638
      %v2640 = vpop.f32.mrb[0].mxu0
      %v2641 = vadd.f32 %v2147, %v2640
      %2642 = vmatprep.mubr.f32.mxu0 0.0
      %2643 = vmatmul.mubr.f32.gmra.mrb[0].mxu0 %v2037
      %v2644 = vpop.f32.mrb[0].mxu0
      %v2645 = vadd.f32 %v2152, %v2644
      %v2646 = vpop.f32.mrb[0].mxu0
      %v2647 = vadd.f32 %v2152, %v2646
      %2648 = vmatprep.mubr.f32.mxu0 0.0
      %2649 = vmatmul.mubr.f32.gmra.mrb[0].mxu0 %v2038
      %v2650 = vpop.f32.mrb[0].mxu0
      %v2651 = vadd.f32 %v2157, %v2650
      %v2652 = vpop.f32.mrb[0].mxu0
      %v2653 = vadd.f32 %v2157, %v2652
      %2654 = vmatprep.mubr.f32.mxu0 0.0
      %2655 = vmatmul.mubr.f32.gmra.mrb[0].mxu0 %v2039
      %v2656 = vpop.f32.mrb[0].mxu0
      %v2657 = vadd.f32 %v2162, %v2656
      %v2658 = vpop.f32.mrb[0].mxu0
      %v2659 = vadd.f32 %v2162, %v2658
      %2660 = vmatprep.mubr.f32.mxu0 0.0
      %2661 = vmatmul.mubr.f32.gmra.mrb[0].mxu0 %v2040
      %v2662 = vpop.f32.mrb[0].mxu0
      %v2663 = vadd.f32 %v2167, %v2662
      %v2664 = vpop.f32.mrb[0].mxu0
      %v2665 = vadd.f32 %v2167, %v2664
      %2666 = vmatprep.mubr.f32.mxu0 0.0
      %2667 = vmatmul.mubr.f32.gmra.mrb[0].mxu0 %v2041
      %v2668 = vpop.f32.mrb[0].mxu0
      %v2669 = vadd.f32 %v2172, %v2668
      %v2670 = vpop.f32.mrb[0].mxu0
      %v2671 = vadd.f32 %v2172, %v2670
      %2672 = vmatprep.mubr.f32.mxu0 0.0
      %2673 = vmatmul.mubr.f32.gmra.mrb[0].mxu0 %v2042
      %v2674 = vpop.f32.mrb[0].mxu0
      %v2675 = vadd.f32 %v2177, %v2674
      %v2676 = vpop.f32.mrb[0].mxu0
      %v2677 = vadd.f32 %v2177, %v2676
      %2678 = vmatprep.mubr.f32.mxu0 0.0
      %2679 = vmatmul.mubr.f32.gmra.mrb[0].mxu0 %v2043
      %v2680 = vpop.f32.mrb[0].mxu0
      %v2681 = vadd.f32 %v2182, %v2680
      %v2682 = vpop.f32.mrb[0].mxu0
      %v2683 = vadd.f32 %v2182, %v2682
      %2684 = vmatprep.mubr.f32.mxu0 0.0
      %2685 = vmatmul.mubr.f32.gmra.mrb[0].mxu0 %v2044
      %v2686 = vpop.f32.mrb[0].mxu0
      %v2687 = vadd.f32 %v2187, %v2686
      %v2688 = vpop.f32.mrb[0].mxu0
      %v2689 = vadd.f32 %v2187, %v2688
      %2690 = vmatprep.mubr.f32.mxu0 0.0
      %2691 = vmatmul.mubr.f32.gmra.mrb[0].mxu0 %v2045
      %v2692 = vpop.f32.mrb[0].mxu0
      %v2693 = vadd.f32 %v2192, %v2692
      %v2694 = vpop.f32.mrb[0].mxu0
      %v2695 = vadd.f32 %v2192, %v2694
      %2696 = vmatprep.mubr.f32.mxu0 0.0
      %2697 = vmatmul.mubr.f32.gmra.mrb[0].mxu0 %v2046
      %v2698 = vpop.f32.mrb[0].mxu0
      %v2699 = vadd.f32 %v2197, %v2698
      %v2700 = vpop.f32.mrb[0].mxu0
      %v2701 = vadd.f32 %v2197, %v2700
      %2702 = vmatprep.mubr.f32.mxu0 0.0
      %2703 = vmatmul.mubr.f32.gmra.mrb[0].mxu0 %v2047
      %v2704 = vpop.f32.mrb[0].mxu0
      %v2705 = vadd.f32 %v2202, %v2704
      %v2706 = vpop.f32.mrb[0].mxu0
      %v2707 = vadd.f32 %v2202, %v2706
      %2708 = vmatprep.mubr.f32.mxu0 0.0
      %2709 = vmatmul.mubr.f32.gmra.mrb[0].mxu0 %v2048
      %v2710 = vpop.f32.mrb[0].mxu0
      %v2711 = vadd.f32 %v2207, %v2710
      %v2712 = vpop.f32.mrb[0].mxu0
      %v2713 = vadd.f32 %v2207, %v2712
      %2714 = vmatprep.mubr.f32.mxu0 0.0
      %2715 = vmatmul.mubr.f32.gmra.mrb[0].mxu0 %v2049
      %v2716 = vpop.f32.mrb[0].mxu0
      %v2717 = vadd.f32 %v2212, %v2716
      %v2718 = vpop.f32.mrb[0].mxu0
      %v2719 = vadd.f32 %v2212, %v2718
      %2720 = vmatprep.mubr.f32.mxu0 0.0
      %2721 = vmatmul.mubr.f32.gmra.mrb[0].mxu0 %v2050
      %v2722 = vpop.f32.mrb[0].mxu0
      %v2723 = vadd.f32 %v2217, %v2722
      %v2724 = vpop.f32.mrb[0].mxu0
      %v2725 = vadd.f32 %v2217, %v2724
      %2726 = vmatprep.mubr.f32.mxu0 0.0
      %2727 = vmatmul.mubr.f32.gmra.mrb[0].mxu0 %v2051
      %v2728 = vpop.f32.mrb[0].mxu0
      %v2729 = vadd.f32 %v2222, %v2728
      %v2730 = vpop.f32.mrb[0].mxu0
      %v2731 = vadd.f32 %v2222, %v2730
      %2732 = vmatprep.mubr.f32.mxu0 0.0
      %2733 = vmatmul.mubr.f32.gmra.mrb[0].mxu0 %v2052
      %v2734 = vpop.f32.mrb[0].mxu0
      %v2735 = vadd.f32 %v2227, %v2734
      %v2736 = vpop.f32.mrb[0].mxu0
      %v2737 = vadd.f32 %v2227, %v2736
      %2738 = vmatprep.mubr.f32.mxu0 0.0
      %2739 = vmatmul.mubr.f32.gmra.mrb[0].mxu0 %v2053
      %v2740 = vpop.f32.mrb[0].mxu0
      %v2741 = vadd.f32 %v2232, %v2740
      %v2742 = vpop.f32.mrb[0].mxu0
      %v2743 = vadd.f32 %v2232, %v2742
      %2744 = vmatprep.mubr.f32.mxu0 0.0
      %2745 = vmatmul.mubr.f32.gmra.mrb[0].mxu0 %v2054
      %v2746 = vpop.f32.mrb[0].mxu0
      %v2747 = vadd.f32 %v2237, %v2746
      %v2748 = vpop.f32.mrb[0].mxu0
      %v2749 = vadd.f32 %v2237, %v2748
      %2750 = vmatprep.mubr.f32.mxu0 0.0
      %2751 = vmatmul.mubr.f32.gmra.mrb[0].mxu0 %v2055
      %v2752 = vpop.f32.mrb[0].mxu0
      %v2753 = vadd.f32 %v2242, %v2752
      %v2754 = vpop.f32.mrb[0].mxu0
      %v2755 = vadd.f32 %v2242, %v2754
      %2756 = vmatprep.mubr.f32.mxu0 0.0
      %2757 = vmatmul.mubr.f32.gmra.mrb[0].mxu0 %v2056
      %v2758 = vpop.f32.mrb[0].mxu0
      %v2759 = vadd.f32 %v2247, %v2758
      %v2760 = vpop.f32.mrb[0].mxu0
      %v2761 = vadd.f32 %v2247, %v2760
      %2762 = vdwg.mxu0
      %2763 = vmatprep.subr.mxu0 %v1774
      %2764 = vmatpush1.msra.mxu0 %v1773
      %2765 = vmatprep.subr.mxu0 %v1790
      %2766 = vmatpush1.msra.mxu0 %v1789
      %2767 = vmatprep.subr.mxu0 %v1806
      %2768 = vmatpush1.msra.mxu0 %v1805
      %2769 = vmatprep.subr.mxu0 %v1822
      %2770 = vmatpush1.msra.mxu0 %v1821
      %2771 = vmatprep.subr.mxu0 %v1838
      %2772 = vmatpush1.msra.mxu0 %v1837
      %2773 = vmatprep.subr.mxu0 %v1854
      %2774 = vmatpush1.msra.mxu0 %v1853
      %2775 = vmatprep.subr.mxu0 %v1870
      %2776 = vmatpush1.msra.mxu0 %v1869
      %2777 = vmatprep.subr.mxu0 %v1886
      %2778 = vmatpush1.msra.mxu0 %v1885
      %2779 = vmatprep.subr.mxu0 %v1902
      %2780 = vmatpush1.msra.mxu0 %v1901
      %2781 = vmatprep.subr.mxu0 %v1918
      %2782 = vmatpush1.msra.mxu0 %v1917
      %2783 = vmatprep.subr.mxu0 %v1934
      %2784 = vmatpush1.msra.mxu0 %v1933
      %2785 = vmatprep.subr.mxu0 %v1950
      %2786 = vmatpush1.msra.mxu0 %v1949
      %2787 = vmatprep.subr.mxu0 %v1966
      %2788 = vmatpush1.msra.mxu0 %v1965
      %2789 = vmatprep.subr.mxu0 %v1982
      %2790 = vmatpush1.msra.mxu0 %v1981
      %2791 = vmatprep.subr.mxu0 %v1998
      %2792 = vmatpush1.msra.mxu0 %v1997
      %2793 = vmatprep.subr.mxu0 %v2014
      %2794 = vmatpush1.msra.mxu0 %v2013
      %2795 = vmatprep.subr.mxu0 0.0
      %2796 = vmatpush1.msra.mxu0 0.0
      %2797 = vmatprep.subr.mxu0 0.0
      %2798 = vmatpush1.msra.mxu0 0.0
      %2799 = vmatprep.subr.mxu0 0.0
      %2800 = vmatpush1.msra.mxu0 0.0
      %2801 = vmatprep.subr.mxu0 0.0
      %2802 = vmatpush1.msra.mxu0 0.0
      %2803 = vmatprep.subr.mxu0 0.0
      %2804 = vmatpush1.msra.mxu0 0.0
      %2805 = vmatprep.subr.mxu0 0.0
      %2806 = vmatpush1.msra.mxu0 0.0
      %2807 = vmatprep.subr.mxu0 0.0
      %2808 = vmatpush1.msra.mxu0 0.0
      %2809 = vmatprep.subr.mxu0 0.0
      %2810 = vmatpush1.msra.mxu0 0.0
      %2811 = vmatprep.subr.mxu0 0.0
      %2812 = vmatpush1.msra.mxu0 0.0
      %2813 = vmatprep.subr.mxu0 0.0
      %2814 = vmatpush1.msra.mxu0 0.0
      %2815 = vmatprep.subr.mxu0 0.0
      %2816 = vmatpush1.msra.mxu0 0.0
      %2817 = vmatprep.subr.mxu0 0.0
      %2818 = vmatpush1.msra.mxu0 0.0
      %2819 = vmatprep.subr.mxu0 0.0
      %2820 = vmatpush1.msra.mxu0 0.0
      %2821 = vmatprep.subr.mxu0 0.0
      %2822 = vmatpush1.msra.mxu0 0.0
      %2823 = vmatprep.subr.mxu0 0.0
      %2824 = vmatpush1.msra.mxu0 0.0
      %2825 = vmatprep.subr.mxu0 0.0
      %2826 = vmatpush1.msra.mxu0 0.0
      %2827 = vmatprep.mubr.f32.mxu0 0.0
      %2828 = vmatmul.mubr.f32.gmra.mrb[0].mxu0 %v2025
      %v2829 = vpop.f32.mrb[0].mxu0
      %v2830 = vadd.f32 %v2092, %v2829
      %v2831 = vpop.f32.mrb[0].mxu0
      %v2832 = vadd.f32 %v2092, %v2831
      %2833 = vmatprep.mubr.f32.mxu0 0.0
      %2834 = vmatmul.mubr.f32.gmra.mrb[0].mxu0 %v2026
      %v2835 = vpop.f32.mrb[0].mxu0
      %v2836 = vadd.f32 %v2097, %v2835
      %v2837 = vpop.f32.mrb[0].mxu0
      %v2838 = vadd.f32 %v2097, %v2837
      %2839 = vmatprep.mubr.f32.mxu0 0.0
      %2840 = vmatmul.mubr.f32.gmra.mrb[0].mxu0 %v2027
      %v2841 = vpop.f32.mrb[0].mxu0
      %v2842 = vadd.f32 %v2102, %v2841
      %v2843 = vpop.f32.mrb[0].mxu0
      %v2844 = vadd.f32 %v2102, %v2843
      %2845 = vmatprep.mubr.f32.mxu0 0.0
      %2846 = vmatmul.mubr.f32.gmra.mrb[0].mxu0 %v2028
      %v2847 = vpop.f32.mrb[0].mxu0
      %v2848 = vadd.f32 %v2107, %v2847
      %v2849 = vpop.f32.mrb[0].mxu0
      %v2850 = vadd.f32 %v2107, %v2849
      %2851 = vmatprep.mubr.f32.mxu0 0.0
      %2852 = vmatmul.mubr.f32.gmra.mrb[0].mxu0 %v2029
      %v2853 = vpop.f32.mrb[0].mxu0
      %v2854 = vadd.f32 %v2112, %v2853
      %v2855 = vpop.f32.mrb[0].mxu0
      %v2856 = vadd.f32 %v2112, %v2855
      %2857 = vmatprep.mubr.f32.mxu0 0.0
      %2858 = vmatmul.mubr.f32.gmra.mrb[0].mxu0 %v2030
      %v2859 = vpop.f32.mrb[0].mxu0
      %v2860 = vadd.f32 %v2117, %v2859
      %v2861 = vpop.f32.mrb[0].mxu0
      %v2862 = vadd.f32 %v2117, %v2861
      %2863 = vmatprep.mubr.f32.mxu0 0.0
      %2864 = vmatmul.mubr.f32.gmra.mrb[0].mxu0 %v2031
      %v2865 = vpop.f32.mrb[0].mxu0
      %v2866 = vadd.f32 %v2122, %v2865
      %v2867 = vpop.f32.mrb[0].mxu0
      %v2868 = vadd.f32 %v2122, %v2867
      %2869 = vmatprep.mubr.f32.mxu0 0.0
      %2870 = vmatmul.mubr.f32.gmra.mrb[0].mxu0 %v2032
      %v2871 = vpop.f32.mrb[0].mxu0
      %v2872 = vadd.f32 %v2127, %v2871
      %v2873 = vpop.f32.mrb[0].mxu0
      %v2874 = vadd.f32 %v2127, %v2873
      %2875 = vmatprep.mubr.f32.mxu0 0.0
      %2876 = vmatmul.mubr.f32.gmra.mrb[0].mxu0 %v2033
      %v2877 = vpop.f32.mrb[0].mxu0
      %v2878 = vadd.f32 %v2132, %v2877
      %v2879 = vpop.f32.mrb[0].mxu0
      %v2880 = vadd.f32 %v2132, %v2879
      %2881 = vmatprep.mubr.f32.mxu0 0.0
      %2882 = vmatmul.mubr.f32.gmra.mrb[0].mxu0 %v2034
      %v2883 = vpop.f32.mrb[0].mxu0
      %v2884 = vadd.f32 %v2137, %v2883
      %v2885 = vpop.f32.mrb[0].mxu0
      %v2886 = vadd.f32 %v2137, %v2885
      %2887 = vmatprep.mubr.f32.mxu0 0.0
      %2888 = vmatmul.mubr.f32.gmra.mrb[0].mxu0 %v2035
      %v2889 = vpop.f32.mrb[0].mxu0
      %v2890 = vadd.f32 %v2142, %v2889
      %v2891 = vpop.f32.mrb[0].mxu0
      %v2892 = vadd.f32 %v2142, %v2891
      %2893 = vmatprep.mubr.f32.mxu0 0.0
      %2894 = vmatmul.mubr.f32.gmra.mrb[0].mxu0 %v2036
      %v2895 = vpop.f32.mrb[0].mxu0
      %v2896 = vadd.f32 %v2147, %v2895
      %v2897 = vpop.f32.mrb[0].mxu0
      %v2898 = vadd.f32 %v2147, %v2897
      %2899 = vmatprep.mubr.f32.mxu0 0.0
      %2900 = vmatmul.mubr.f32.gmra.mrb[0].mxu0 %v2037
      %v2901 = vpop.f32.mrb[0].mxu0
      %v2902 = vadd.f32 %v2152, %v2901
      %v2903 = vpop.f32.mrb[0].mxu0
      %v2904 = vadd.f32 %v2152, %v2903
      %2905 = vmatprep.mubr.f32.mxu0 0.0
      %2906 = vmatmul.mubr.f32.gmra.mrb[0].mxu0 %v2038
      %v2907 = vpop.f32.mrb[0].mxu0
      %v2908 = vadd.f32 %v2157, %v2907
      %v2909 = vpop.f32.mrb[0].mxu0
      %v2910 = vadd.f32 %v2157, %v2909
      %2911 = vmatprep.mubr.f32.mxu0 0.0
      %2912 = vmatmul.mubr.f32.gmra.mrb[0].mxu0 %v2039
      %v2913 = vpop.f32.mrb[0].mxu0
      %v2914 = vadd.f32 %v2162, %v2913
      %v2915 = vpop.f32.mrb[0].mxu0
      %v2916 = vadd.f32 %v2162, %v2915
      %2917 = vmatprep.mubr.f32.mxu0 0.0
      %2918 = vmatmul.mubr.f32.gmra.mrb[0].mxu0 %v2040
      %v2919 = vpop.f32.mrb[0].mxu0
      %v2920 = vadd.f32 %v2167, %v2919
      %v2921 = vpop.f32.mrb[0].mxu0
      %v2922 = vadd.f32 %v2167, %v2921
      %2923 = vmatprep.mubr.f32.mxu0 0.0
      %2924 = vmatmul.mubr.f32.gmra.mrb[0].mxu0 %v2041
      %v2925 = vpop.f32.mrb[0].mxu0
      %v2926 = vadd.f32 %v2172, %v2925
      %v2927 = vpop.f32.mrb[0].mxu0
      %v2928 = vadd.f32 %v2172, %v2927
      %2929 = vmatprep.mubr.f32.mxu0 0.0
      %2930 = vmatmul.mubr.f32.gmra.mrb[0].mxu0 %v2042
      %v2931 = vpop.f32.mrb[0].mxu0
      %v2932 = vadd.f32 %v2177, %v2931
      %v2933 = vpop.f32.mrb[0].mxu0
      %v2934 = vadd.f32 %v2177, %v2933
      %2935 = vmatprep.mubr.f32.mxu0 0.0
      %2936 = vmatmul.mubr.f32.gmra.mrb[0].mxu0 %v2043
      %v2937 = vpop.f32.mrb[0].mxu0
      %v2938 = vadd.f32 %v2182, %v2937
      %v2939 = vpop.f32.mrb[0].mxu0
      %v2940 = vadd.f32 %v2182, %v2939
      %2941 = vmatprep.mubr.f32.mxu0 0.0
      %2942 = vmatmul.mubr.f32.gmra.mrb[0].mxu0 %v2044
      %v2943 = vpop.f32.mrb[0].mxu0
      %v2944 = vadd.f32 %v2187, %v2943
      %v2945 = vpop.f32.mrb[0].mxu0
      %v2946 = vadd.f32 %v2187, %v2945
      %2947 = vmatprep.mubr.f32.mxu0 0.0
      %2948 = vmatmul.mubr.f32.gmra.mrb[0].mxu0 %v2045
      %v2949 = vpop.f32.mrb[0].mxu0
      %v2950 = vadd.f32 %v2192, %v2949
      %v2951 = vpop.f32.mrb[0].mxu0
      %v2952 = vadd.f32 %v2192, %v2951
      %2953 = vmatprep.mubr.f32.mxu0 0.0
      %2954 = vmatmul.mubr.f32.gmra.mrb[0].mxu0 %v2046
      %v2955 = vpop.f32.mrb[0].mxu0
      %v2956 = vadd.f32 %v2197, %v2955
      %v2957 = vpop.f32.mrb[0].mxu0
      %v2958 = vadd.f32 %v2197, %v2957
      %2959 = vmatprep.mubr.f32.mxu0 0.0
      %2960 = vmatmul.mubr.f32.gmra.mrb[0].mxu0 %v2047
      %v2961 = vpop.f32.mrb[0].mxu0
      %v2962 = vadd.f32 %v2202, %v2961
      %v2963 = vpop.f32.mrb[0].mxu0
      %v2964 = vadd.f32 %v2202, %v2963
      %2965 = vmatprep.mubr.f32.mxu0 0.0
      %2966 = vmatmul.mubr.f32.gmra.mrb[0].mxu0 %v2048
      %v2967 = vpop.f32.mrb[0].mxu0
      %v2968 = vadd.f32 %v2207, %v2967
      %v2969 = vpop.f32.mrb[0].mxu0
      %v2970 = vadd.f32 %v2207, %v2969
      %2971 = vmatprep.mubr.f32.mxu0 0.0
      %2972 = vmatmul.mubr.f32.gmra.mrb[0].mxu0 %v2049
      %v2973 = vpop.f32.mrb[0].mxu0
      %v2974 = vadd.f32 %v2212, %v2973
      %v2975 = vpop.f32.mrb[0].mxu0
      %v2976 = vadd.f32 %v2212, %v2975
      %2977 = vmatprep.mubr.f32.mxu0 0.0
      %2978 = vmatmul.mubr.f32.gmra.mrb[0].mxu0 %v2050
      %v2979 = vpop.f32.mrb[0].mxu0
      %v2980 = vadd.f32 %v2217, %v2979
      %v2981 = vpop.f32.mrb[0].mxu0
      %v2982 = vadd.f32 %v2217, %v2981
      %2983 = vmatprep.mubr.f32.mxu0 0.0
      %2984 = vmatmul.mubr.f32.gmra.mrb[0].mxu0 %v2051
      %v2985 = vpop.f32.mrb[0].mxu0
      %v2986 = vadd.f32 %v2222, %v2985
      %v2987 = vpop.f32.mrb[0].mxu0
      %v2988 = vadd.f32 %v2222, %v2987
      %2989 = vmatprep.mubr.f32.mxu0 0.0
      %2990 = vmatmul.mubr.f32.gmra.mrb[0].mxu0 %v2052
      %v2991 = vpop.f32.mrb[0].mxu0
      %v2992 = vadd.f32 %v2227, %v2991
      %v2993 = vpop.f32.mrb[0].mxu0
      %v2994 = vadd.f32 %v2227, %v2993
      %2995 = vmatprep.mubr.f32.mxu0 0.0
      %2996 = vmatmul.mubr.f32.gmra.mrb[0].mxu0 %v2053
      %v2997 = vpop.f32.mrb[0].mxu0
      %v2998 = vadd.f32 %v2232, %v2997
      %v2999 = vpop.f32.mrb[0].mxu0
      %v3000 = vadd.f32 %v2232, %v2999
      %3001 = vmatprep.mubr.f32.mxu0 0.0
      %3002 = vmatmul.mubr.f32.gmra.mrb[0].mxu0 %v2054
      %v3003 = vpop.f32.mrb[0].mxu0
      %v3004 = vadd.f32 %v2237, %v3003
      %v3005 = vpop.f32.mrb[0].mxu0
      %v3006 = vadd.f32 %v2237, %v3005
      %3007 = vmatprep.mubr.f32.mxu0 0.0
      %3008 = vmatmul.mubr.f32.gmra.mrb[0].mxu0 %v2055
      %v3009 = vpop.f32.mrb[0].mxu0
      %v3010 = vadd.f32 %v2242, %v3009
      %v3011 = vpop.f32.mrb[0].mxu0
      %v3012 = vadd.f32 %v2242, %v3011
      %3013 = vmatprep.mubr.f32.mxu0 0.0
      %3014 = vmatmul.mubr.f32.gmra.mrb[0].mxu0 %v2056
      %v3015 = vpop.f32.mrb[0].mxu0
      %v3016 = vadd.f32 %v2247, %v3015
      %v3017 = vpop.f32.mrb[0].mxu0
      %v3018 = vadd.f32 %v2247, %v3017
      %3019 = vdwg.mxu0
      %3020 = vmatprep.subr.mxu0 %v1776
      %3021 = vmatpush1.msra.mxu0 %v1775
      %3022 = vmatprep.subr.mxu0 %v1792
      %3023 = vmatpush1.msra.mxu0 %v1791
      %3024 = vmatprep.subr.mxu0 %v1808
      %3025 = vmatpush1.msra.mxu0 %v1807
      %3026 = vmatprep.subr.mxu0 %v1824
      %3027 = vmatpush1.msra.mxu0 %v1823
      %3028 = vmatprep.subr.mxu0 %v1840
      %3029 = vmatpush1.msra.mxu0 %v1839
      %3030 = vmatprep.subr.mxu0 %v1856
      %3031 = vmatpush1.msra.mxu0 %v1855
      %3032 = vmatprep.subr.mxu0 %v1872
      %3033 = vmatpush1.msra.mxu0 %v1871
      %3034 = vmatprep.subr.mxu0 %v1888
      %3035 = vmatpush1.msra.mxu0 %v1887
      %3036 = vmatprep.subr.mxu0 %v1904
      %3037 = vmatpush1.msra.mxu0 %v1903
      %3038 = vmatprep.subr.mxu0 %v1920
      %3039 = vmatpush1.msra.mxu0 %v1919
      %3040 = vmatprep.subr.mxu0 %v1936
      %3041 = vmatpush1.msra.mxu0 %v1935
      %3042 = vmatprep.subr.mxu0 %v1952
      %3043 = vmatpush1.msra.mxu0 %v1951
      %3044 = vmatprep.subr.mxu0 %v1968
      %3045 = vmatpush1.msra.mxu0 %v1967
      %3046 = vmatprep.subr.mxu0 %v1984
      %3047 = vmatpush1.msra.mxu0 %v1983
      %3048 = vmatprep.subr.mxu0 %v2000
      %3049 = vmatpush1.msra.mxu0 %v1999
      %3050 = vmatprep.subr.mxu0 %v2016
      %3051 = vmatpush1.msra.mxu0 %v2015
      %3052 = vmatprep.subr.mxu0 0.0
      %3053 = vmatpush1.msra.mxu0 0.0
      %3054 = vmatprep.subr.mxu0 0.0
      %3055 = vmatpush1.msra.mxu0 0.0
      %3056 = vmatprep.subr.mxu0 0.0
      %3057 = vmatpush1.msra.mxu0 0.0
      %3058 = vmatprep.subr.mxu0 0.0
      %3059 = vmatpush1.msra.mxu0 0.0
      %3060 = vmatprep.subr.mxu0 0.0
      %3061 = vmatpush1.msra.mxu0 0.0
      %3062 = vmatprep.subr.mxu0 0.0
      %3063 = vmatpush1.msra.mxu0 0.0
      %3064 = vmatprep.subr.mxu0 0.0
      %3065 = vmatpush1.msra.mxu0 0.0
      %3066 = vmatprep.subr.mxu0 0.0
      %3067 = vmatpush1.msra.mxu0 0.0
      %3068 = vmatprep.subr.mxu0 0.0
      %3069 = vmatpush1.msra.mxu0 0.0
      %3070 = vmatprep.subr.mxu0 0.0
      %3071 = vmatpush1.msra.mxu0 0.0
      %3072 = vmatprep.subr.mxu0 0.0
      %3073 = vmatpush1.msra.mxu0 0.0
      %3074 = vmatprep.subr.mxu0 0.0
      %3075 = vmatpush1.msra.mxu0 0.0
      %3076 = vmatprep.subr.mxu0 0.0
      %3077 = vmatpush1.msra.mxu0 0.0
      %3078 = vmatprep.subr.mxu0 0.0
      %3079 = vmatpush1.msra.mxu0 0.0
      %3080 = vmatprep.subr.mxu0 0.0
      %3081 = vmatpush1.msra.mxu0 0.0
      %3082 = vmatprep.subr.mxu0 0.0
      %3083 = vmatpush1.msra.mxu0 0.0
      %3084 = vmatprep.mubr.f32.mxu0 0.0
      %3085 = vmatmul.mubr.f32.gmra.mrb[0].mxu0 %v2025
      %v3086 = vpop.f32.mrb[0].mxu0
      %v3087 = vadd.f32 %v2092, %v3086
      %v3088 = vpop.f32.mrb[0].mxu0
      %v3089 = vadd.f32 %v2092, %v3088
      %3090 = vmatprep.mubr.f32.mxu0 0.0
      %3091 = vmatmul.mubr.f32.gmra.mrb[0].mxu0 %v2026
      %v3092 = vpop.f32.mrb[0].mxu0
      %v3093 = vadd.f32 %v2097, %v3092
      %v3094 = vpop.f32.mrb[0].mxu0
      %v3095 = vadd.f32 %v2097, %v3094
      %3096 = vmatprep.mubr.f32.mxu0 0.0
      %3097 = vmatmul.mubr.f32.gmra.mrb[0].mxu0 %v2027
      %v3098 = vpop.f32.mrb[0].mxu0
      %v3099 = vadd.f32 %v2102, %v3098
      %v3100 = vpop.f32.mrb[0].mxu0
      %v3101 = vadd.f32 %v2102, %v3100
      %3102 = vmatprep.mubr.f32.mxu0 0.0
      %3103 = vmatmul.mubr.f32.gmra.mrb[0].mxu0 %v2028
      %v3104 = vpop.f32.mrb[0].mxu0
      %v3105 = vadd.f32 %v2107, %v3104
      %v3106 = vpop.f32.mrb[0].mxu0
      %v3107 = vadd.f32 %v2107, %v3106
      %3108 = vmatprep.mubr.f32.mxu0 0.0
      %3109 = vmatmul.mubr.f32.gmra.mrb[0].mxu0 %v2029
      %v3110 = vpop.f32.mrb[0].mxu0
      %v3111 = vadd.f32 %v2112, %v3110
      %v3112 = vpop.f32.mrb[0].mxu0
      %v3113 = vadd.f32 %v2112, %v3112
      %3114 = vmatprep.mubr.f32.mxu0 0.0
      %3115 = vmatmul.mubr.f32.gmra.mrb[0].mxu0 %v2030
      %v3116 = vpop.f32.mrb[0].mxu0
      %v3117 = vadd.f32 %v2117, %v3116
      %v3118 = vpop.f32.mrb[0].mxu0
      %v3119 = vadd.f32 %v2117, %v3118
      %3120 = vmatprep.mubr.f32.mxu0 0.0
      %3121 = vmatmul.mubr.f32.gmra.mrb[0].mxu0 %v2031
      %v3122 = vpop.f32.mrb[0].mxu0
      %v3123 = vadd.f32 %v2122, %v3122
      %v3124 = vpop.f32.mrb[0].mxu0
      %v3125 = vadd.f32 %v2122, %v3124
      %3126 = vmatprep.mubr.f32.mxu0 0.0
      %3127 = vmatmul.mubr.f32.gmra.mrb[0].mxu0 %v2032
      %v3128 = vpop.f32.mrb[0].mxu0
      %v3129 = vadd.f32 %v2127, %v3128
      %v3130 = vpop.f32.mrb[0].mxu0
      %v3131 = vadd.f32 %v2127, %v3130
      %3132 = vmatprep.mubr.f32.mxu0 0.0
      %3133 = vmatmul.mubr.f32.gmra.mrb[0].mxu0 %v2033
      %v3134 = vpop.f32.mrb[0].mxu0
      %v3135 = vadd.f32 %v2132, %v3134
      %v3136 = vpop.f32.mrb[0].mxu0
      %v3137 = vadd.f32 %v2132, %v3136
      %3138 = vmatprep.mubr.f32.mxu0 0.0
      %3139 = vmatmul.mubr.f32.gmra.mrb[0].mxu0 %v2034
      %v3140 = vpop.f32.mrb[0].mxu0
      %v3141 = vadd.f32 %v2137, %v3140
      %v3142 = vpop.f32.mrb[0].mxu0
      %v3143 = vadd.f32 %v2137, %v3142
      %3144 = vmatprep.mubr.f32.mxu0 0.0
      %3145 = vmatmul.mubr.f32.gmra.mrb[0].mxu0 %v2035
      %v3146 = vpop.f32.mrb[0].mxu0
      %v3147 = vadd.f32 %v2142, %v3146
      %v3148 = vpop.f32.mrb[0].mxu0
      %v3149 = vadd.f32 %v2142, %v3148
      %3150 = vmatprep.mubr.f32.mxu0 0.0
      %3151 = vmatmul.mubr.f32.gmra.mrb[0].mxu0 %v2036
      %v3152 = vpop.f32.mrb[0].mxu0
      %v3153 = vadd.f32 %v2147, %v3152
      %v3154 = vpop.f32.mrb[0].mxu0
      %v3155 = vadd.f32 %v2147, %v3154
      %3156 = vmatprep.mubr.f32.mxu0 0.0
      %3157 = vmatmul.mubr.f32.gmra.mrb[0].mxu0 %v2037
      %v3158 = vpop.f32.mrb[0].mxu0
      %v3159 = vadd.f32 %v2152, %v3158
      %v3160 = vpop.f32.mrb[0].mxu0
      %v3161 = vadd.f32 %v2152, %v3160
      %3162 = vmatprep.mubr.f32.mxu0 0.0
      %3163 = vmatmul.mubr.f32.gmra.mrb[0].mxu0 %v2038
      %v3164 = vpop.f32.mrb[0].mxu0
      %v3165 = vadd.f32 %v2157, %v3164
      %v3166 = vpop.f32.mrb[0].mxu0
      %v3167 = vadd.f32 %v2157, %v3166
      %3168 = vmatprep.mubr.f32.mxu0 0.0
      %3169 = vmatmul.mubr.f32.gmra.mrb[0].mxu0 %v2039
      %v3170 = vpop.f32.mrb[0].mxu0
      %v3171 = vadd.f32 %v2162, %v3170
      %v3172 = vpop.f32.mrb[0].mxu0
      %v3173 = vadd.f32 %v2162, %v3172
      %3174 = vmatprep.mubr.f32.mxu0 0.0
      %3175 = vmatmul.mubr.f32.gmra.mrb[0].mxu0 %v2040
      %v3176 = vpop.f32.mrb[0].mxu0
      %v3177 = vadd.f32 %v2167, %v3176
      %v3178 = vpop.f32.mrb[0].mxu0
      %v3179 = vadd.f32 %v2167, %v3178
      %3180 = vmatprep.mubr.f32.mxu0 0.0
      %3181 = vmatmul.mubr.f32.gmra.mrb[0].mxu0 %v2041
      %v3182 = vpop.f32.mrb[0].mxu0
      %v3183 = vadd.f32 %v2172, %v3182
      %v3184 = vpop.f32.mrb[0].mxu0
      %v3185 = vadd.f32 %v2172, %v3184
      %3186 = vmatprep.mubr.f32.mxu0 0.0
      %3187 = vmatmul.mubr.f32.gmra.mrb[0].mxu0 %v2042
      %v3188 = vpop.f32.mrb[0].mxu0
      %v3189 = vadd.f32 %v2177, %v3188
      %v3190 = vpop.f32.mrb[0].mxu0
      %v3191 = vadd.f32 %v2177, %v3190
      %3192 = vmatprep.mubr.f32.mxu0 0.0
      %3193 = vmatmul.mubr.f32.gmra.mrb[0].mxu0 %v2043
      %v3194 = vpop.f32.mrb[0].mxu0
      %v3195 = vadd.f32 %v2182, %v3194
      %v3196 = vpop.f32.mrb[0].mxu0
      %v3197 = vadd.f32 %v2182, %v3196
      %3198 = vmatprep.mubr.f32.mxu0 0.0
      %3199 = vmatmul.mubr.f32.gmra.mrb[0].mxu0 %v2044
      %v3200 = vpop.f32.mrb[0].mxu0
      %v3201 = vadd.f32 %v2187, %v3200
      %v3202 = vpop.f32.mrb[0].mxu0
      %v3203 = vadd.f32 %v2187, %v3202
      %3204 = vmatprep.mubr.f32.mxu0 0.0
      %3205 = vmatmul.mubr.f32.gmra.mrb[0].mxu0 %v2045
      %v3206 = vpop.f32.mrb[0].mxu0
      %v3207 = vadd.f32 %v2192, %v3206
      %v3208 = vpop.f32.mrb[0].mxu0
      %v3209 = vadd.f32 %v2192, %v3208
      %3210 = vmatprep.mubr.f32.mxu0 0.0
      %3211 = vmatmul.mubr.f32.gmra.mrb[0].mxu0 %v2046
      %v3212 = vpop.f32.mrb[0].mxu0
      %v3213 = vadd.f32 %v2197, %v3212
      %v3214 = vpop.f32.mrb[0].mxu0
      %v3215 = vadd.f32 %v2197, %v3214
      %3216 = vmatprep.mubr.f32.mxu0 0.0
      %3217 = vmatmul.mubr.f32.gmra.mrb[0].mxu0 %v2047
      %v3218 = vpop.f32.mrb[0].mxu0
      %v3219 = vadd.f32 %v2202, %v3218
      %v3220 = vpop.f32.mrb[0].mxu0
      %v3221 = vadd.f32 %v2202, %v3220
      %3222 = vmatprep.mubr.f32.mxu0 0.0
      %3223 = vmatmul.mubr.f32.gmra.mrb[0].mxu0 %v2048
      %v3224 = vpop.f32.mrb[0].mxu0
      %v3225 = vadd.f32 %v2207, %v3224
      %v3226 = vpop.f32.mrb[0].mxu0
      %v3227 = vadd.f32 %v2207, %v3226
      %3228 = vmatprep.mubr.f32.mxu0 0.0
      %3229 = vmatmul.mubr.f32.gmra.mrb[0].mxu0 %v2049
      %v3230 = vpop.f32.mrb[0].mxu0
      %v3231 = vadd.f32 %v2212, %v3230
      %v3232 = vpop.f32.mrb[0].mxu0
      %v3233 = vadd.f32 %v2212, %v3232
      %3234 = vmatprep.mubr.f32.mxu0 0.0
      %3235 = vmatmul.mubr.f32.gmra.mrb[0].mxu0 %v2050
      %v3236 = vpop.f32.mrb[0].mxu0
      %v3237 = vadd.f32 %v2217, %v3236
      %v3238 = vpop.f32.mrb[0].mxu0
      %v3239 = vadd.f32 %v2217, %v3238
      %3240 = vmatprep.mubr.f32.mxu0 0.0
      %3241 = vmatmul.mubr.f32.gmra.mrb[0].mxu0 %v2051
      %v3242 = vpop.f32.mrb[0].mxu0
      %v3243 = vadd.f32 %v2222, %v3242
      %v3244 = vpop.f32.mrb[0].mxu0
      %v3245 = vadd.f32 %v2222, %v3244
      %3246 = vmatprep.mubr.f32.mxu0 0.0
      %3247 = vmatmul.mubr.f32.gmra.mrb[0].mxu0 %v2052
      %v3248 = vpop.f32.mrb[0].mxu0
      %v3249 = vadd.f32 %v2227, %v3248
      %v3250 = vpop.f32.mrb[0].mxu0
      %v3251 = vadd.f32 %v2227, %v3250
      %3252 = vmatprep.mubr.f32.mxu0 0.0
      %3253 = vmatmul.mubr.f32.gmra.mrb[0].mxu0 %v2053
      %v3254 = vpop.f32.mrb[0].mxu0
      %v3255 = vadd.f32 %v2232, %v3254
      %v3256 = vpop.f32.mrb[0].mxu0
      %v3257 = vadd.f32 %v2232, %v3256
      %3258 = vmatprep.mubr.f32.mxu0 0.0
      %3259 = vmatmul.mubr.f32.gmra.mrb[0].mxu0 %v2054
      %v3260 = vpop.f32.mrb[0].mxu0
      %v3261 = vadd.f32 %v2237, %v3260
      %v3262 = vpop.f32.mrb[0].mxu0
      %v3263 = vadd.f32 %v2237, %v3262
      %3264 = vmatprep.mubr.f32.mxu0 0.0
      %3265 = vmatmul.mubr.f32.gmra.mrb[0].mxu0 %v2055
      %v3266 = vpop.f32.mrb[0].mxu0
      %v3267 = vadd.f32 %v2242, %v3266
      %v3268 = vpop.f32.mrb[0].mxu0
      %v3269 = vadd.f32 %v2242, %v3268
      %3270 = vmatprep.mubr.f32.mxu0 0.0
      %3271 = vmatmul.mubr.f32.gmra.mrb[0].mxu0 %v2056
      %v3272 = vpop.f32.mrb[0].mxu0
      %v3273 = vadd.f32 %v2247, %v3272
      %v3274 = vpop.f32.mrb[0].mxu0
      %v3275 = vadd.f32 %v2247, %v3274
      %3276 = vdwg.mxu0
      %3277 = vmatprep.subr.mxu0 %v1778
      %3278 = vmatpush1.msra.mxu0 %v1777
      %3279 = vmatprep.subr.mxu0 %v1794
      %3280 = vmatpush1.msra.mxu0 %v1793
      %3281 = vmatprep.subr.mxu0 %v1810
      %3282 = vmatpush1.msra.mxu0 %v1809
      %3283 = vmatprep.subr.mxu0 %v1826
      %3284 = vmatpush1.msra.mxu0 %v1825
      %3285 = vmatprep.subr.mxu0 %v1842
      %3286 = vmatpush1.msra.mxu0 %v1841
      %3287 = vmatprep.subr.mxu0 %v1858
      %3288 = vmatpush1.msra.mxu0 %v1857
      %3289 = vmatprep.subr.mxu0 %v1874
      %3290 = vmatpush1.msra.mxu0 %v1873
      %3291 = vmatprep.subr.mxu0 %v1890
      %3292 = vmatpush1.msra.mxu0 %v1889
      %3293 = vmatprep.subr.mxu0 %v1906
      %3294 = vmatpush1.msra.mxu0 %v1905
      %3295 = vmatprep.subr.mxu0 %v1922
      %3296 = vmatpush1.msra.mxu0 %v1921
      %3297 = vmatprep.subr.mxu0 %v1938
      %3298 = vmatpush1.msra.mxu0 %v1937
      %3299 = vmatprep.subr.mxu0 %v1954
      %3300 = vmatpush1.msra.mxu0 %v1953
      %3301 = vmatprep.subr.mxu0 %v1970
      %3302 = vmatpush1.msra.mxu0 %v1969
      %3303 = vmatprep.subr.mxu0 %v1986
      %3304 = vmatpush1.msra.mxu0 %v1985
      %3305 = vmatprep.subr.mxu0 %v2002
      %3306 = vmatpush1.msra.mxu0 %v2001
      %3307 = vmatprep.subr.mxu0 %v2018
      %3308 = vmatpush1.msra.mxu0 %v2017
      %3309 = vmatprep.subr.mxu0 0.0
      %3310 = vmatpush1.msra.mxu0 0.0
      %3311 = vmatprep.subr.mxu0 0.0
      %3312 = vmatpush1.msra.mxu0 0.0
      %3313 = vmatprep.subr.mxu0 0.0
      %3314 = vmatpush1.msra.mxu0 0.0
      %3315 = vmatprep.subr.mxu0 0.0
      %3316 = vmatpush1.msra.mxu0 0.0
      %3317 = vmatprep.subr.mxu0 0.0
      %3318 = vmatpush1.msra.mxu0 0.0
      %3319 = vmatprep.subr.mxu0 0.0
      %3320 = vmatpush1.msra.mxu0 0.0
      %3321 = vmatprep.subr.mxu0 0.0
      %3322 = vmatpush1.msra.mxu0 0.0
      %3323 = vmatprep.subr.mxu0 0.0
      %3324 = vmatpush1.msra.mxu0 0.0
      %3325 = vmatprep.subr.mxu0 0.0
      %3326 = vmatpush1.msra.mxu0 0.0
      %3327 = vmatprep.subr.mxu0 0.0
      %3328 = vmatpush1.msra.mxu0 0.0
      %3329 = vmatprep.subr.mxu0 0.0
      %3330 = vmatpush1.msra.mxu0 0.0
      %3331 = vmatprep.subr.mxu0 0.0
      %3332 = vmatpush1.msra.mxu0 0.0
      %3333 = vmatprep.subr.mxu0 0.0
      %3334 = vmatpush1.msra.mxu0 0.0
      %3335 = vmatprep.subr.mxu0 0.0
      %3336 = vmatpush1.msra.mxu0 0.0
      %3337 = vmatprep.subr.mxu0 0.0
      %3338 = vmatpush1.msra.mxu0 0.0
      %3339 = vmatprep.subr.mxu0 0.0
      %3340 = vmatpush1.msra.mxu0 0.0
      %3341 = vmatprep.mubr.f32.mxu0 0.0
      %3342 = vmatmul.mubr.f32.gmra.mrb[0].mxu0 %v2025
      %v3343 = vpop.f32.mrb[0].mxu0
      %v3344 = vadd.f32 %v2092, %v3343
      %v3345 = vpop.f32.mrb[0].mxu0
      %v3346 = vadd.f32 %v2092, %v3345
      %3347 = vmatprep.mubr.f32.mxu0 0.0
      %3348 = vmatmul.mubr.f32.gmra.mrb[0].mxu0 %v2026
      %v3349 = vpop.f32.mrb[0].mxu0
      %v3350 = vadd.f32 %v2097, %v3349
      %v3351 = vpop.f32.mrb[0].mxu0
      %v3352 = vadd.f32 %v2097, %v3351
      %3353 = vmatprep.mubr.f32.mxu0 0.0
      %3354 = vmatmul.mubr.f32.gmra.mrb[0].mxu0 %v2027
      %v3355 = vpop.f32.mrb[0].mxu0
      %v3356 = vadd.f32 %v2102, %v3355
      %v3357 = vpop.f32.mrb[0].mxu0
      %v3358 = vadd.f32 %v2102, %v3357
      %3359 = vmatprep.mubr.f32.mxu0 0.0
      %3360 = vmatmul.mubr.f32.gmra.mrb[0].mxu0 %v2028
      %v3361 = vpop.f32.mrb[0].mxu0
      %v3362 = vadd.f32 %v2107, %v3361
      %v3363 = vpop.f32.mrb[0].mxu0
      %v3364 = vadd.f32 %v2107, %v3363
      %3365 = vmatprep.mubr.f32.mxu0 0.0
      %3366 = vmatmul.mubr.f32.gmra.mrb[0].mxu0 %v2029
      %v3367 = vpop.f32.mrb[0].mxu0
      %v3368 = vadd.f32 %v2112, %v3367
      %v3369 = vpop.f32.mrb[0].mxu0
      %v3370 = vadd.f32 %v2112, %v3369
      %3371 = vmatprep.mubr.f32.mxu0 0.0
      %3372 = vmatmul.mubr.f32.gmra.mrb[0].mxu0 %v2030
      %v3373 = vpop.f32.mrb[0].mxu0
      %v3374 = vadd.f32 %v2117, %v3373
      %v3375 = vpop.f32.mrb[0].mxu0
      %v3376 = vadd.f32 %v2117, %v3375
      %3377 = vmatprep.mubr.f32.mxu0 0.0
      %3378 = vmatmul.mubr.f32.gmra.mrb[0].mxu0 %v2031
      %v3379 = vpop.f32.mrb[0].mxu0
      %v3380 = vadd.f32 %v2122, %v3379
      %v3381 = vpop.f32.mrb[0].mxu0
      %v3382 = vadd.f32 %v2122, %v3381
      %3383 = vmatprep.mubr.f32.mxu0 0.0
      %3384 = vmatmul.mubr.f32.gmra.mrb[0].mxu0 %v2032
      %v3385 = vpop.f32.mrb[0].mxu0
      %v3386 = vadd.f32 %v2127, %v3385
      %v3387 = vpop.f32.mrb[0].mxu0
      %v3388 = vadd.f32 %v2127, %v3387
      %3389 = vmatprep.mubr.f32.mxu0 0.0
      %3390 = vmatmul.mubr.f32.gmra.mrb[0].mxu0 %v2033
      %v3391 = vpop.f32.mrb[0].mxu0
      %v3392 = vadd.f32 %v2132, %v3391
      %v3393 = vpop.f32.mrb[0].mxu0
      %v3394 = vadd.f32 %v2132, %v3393
      %3395 = vmatprep.mubr.f32.mxu0 0.0
      %3396 = vmatmul.mubr.f32.gmra.mrb[0].mxu0 %v2034
      %v3397 = vpop.f32.mrb[0].mxu0
      %v3398 = vadd.f32 %v2137, %v3397
      %v3399 = vpop.f32.mrb[0].mxu0
      %v3400 = vadd.f32 %v2137, %v3399
      %3401 = vmatprep.mubr.f32.mxu0 0.0
      %3402 = vmatmul.mubr.f32.gmra.mrb[0].mxu0 %v2035
      %v3403 = vpop.f32.mrb[0].mxu0
      %v3404 = vadd.f32 %v2142, %v3403
      %v3405 = vpop.f32.mrb[0].mxu0
      %v3406 = vadd.f32 %v2142, %v3405
      %3407 = vmatprep.mubr.f32.mxu0 0.0
      %3408 = vmatmul.mubr.f32.gmra.mrb[0].mxu0 %v2036
      %v3409 = vpop.f32.mrb[0].mxu0
      %v3410 = vadd.f32 %v2147, %v3409
      %v3411 = vpop.f32.mrb[0].mxu0
      %v3412 = vadd.f32 %v2147, %v3411
      %3413 = vmatprep.mubr.f32.mxu0 0.0
      %3414 = vmatmul.mubr.f32.gmra.mrb[0].mxu0 %v2037
      %v3415 = vpop.f32.mrb[0].mxu0
      %v3416 = vadd.f32 %v2152, %v3415
      %v3417 = vpop.f32.mrb[0].mxu0
      %v3418 = vadd.f32 %v2152, %v3417
      %3419 = vmatprep.mubr.f32.mxu0 0.0
      %3420 = vmatmul.mubr.f32.gmra.mrb[0].mxu0 %v2038
      %v3421 = vpop.f32.mrb[0].mxu0
      %v3422 = vadd.f32 %v2157, %v3421
      %v3423 = vpop.f32.mrb[0].mxu0
      %v3424 = vadd.f32 %v2157, %v3423
      %3425 = vmatprep.mubr.f32.mxu0 0.0
      %3426 = vmatmul.mubr.f32.gmra.mrb[0].mxu0 %v2039
      %v3427 = vpop.f32.mrb[0].mxu0
      %v3428 = vadd.f32 %v2162, %v3427
      %v3429 = vpop.f32.mrb[0].mxu0
      %v3430 = vadd.f32 %v2162, %v3429
      %3431 = vmatprep.mubr.f32.mxu0 0.0
      %3432 = vmatmul.mubr.f32.gmra.mrb[0].mxu0 %v2040
      %v3433 = vpop.f32.mrb[0].mxu0
      %v3434 = vadd.f32 %v2167, %v3433
      %v3435 = vpop.f32.mrb[0].mxu0
      %v3436 = vadd.f32 %v2167, %v3435
      %3437 = vmatprep.mubr.f32.mxu0 0.0
      %3438 = vmatmul.mubr.f32.gmra.mrb[0].mxu0 %v2041
      %v3439 = vpop.f32.mrb[0].mxu0
      %v3440 = vadd.f32 %v2172, %v3439
      %v3441 = vpop.f32.mrb[0].mxu0
      %v3442 = vadd.f32 %v2172, %v3441
      %3443 = vmatprep.mubr.f32.mxu0 0.0
      %3444 = vmatmul.mubr.f32.gmra.mrb[0].mxu0 %v2042
      %v3445 = vpop.f32.mrb[0].mxu0
      %v3446 = vadd.f32 %v2177, %v3445
      %v3447 = vpop.f32.mrb[0].mxu0
      %v3448 = vadd.f32 %v2177, %v3447
      %3449 = vmatprep.mubr.f32.mxu0 0.0
      %3450 = vmatmul.mubr.f32.gmra.mrb[0].mxu0 %v2043
      %v3451 = vpop.f32.mrb[0].mxu0
      %v3452 = vadd.f32 %v2182, %v3451
      %v3453 = vpop.f32.mrb[0].mxu0
      %v3454 = vadd.f32 %v2182, %v3453
      %3455 = vmatprep.mubr.f32.mxu0 0.0
      %3456 = vmatmul.mubr.f32.gmra.mrb[0].mxu0 %v2044
      %v3457 = vpop.f32.mrb[0].mxu0
      %v3458 = vadd.f32 %v2187, %v3457
      %v3459 = vpop.f32.mrb[0].mxu0
      %v3460 = vadd.f32 %v2187, %v3459
      %3461 = vmatprep.mubr.f32.mxu0 0.0
      %3462 = vmatmul.mubr.f32.gmra.mrb[0].mxu0 %v2045
      %v3463 = vpop.f32.mrb[0].mxu0
      %v3464 = vadd.f32 %v2192, %v3463
      %v3465 = vpop.f32.mrb[0].mxu0
      %v3466 = vadd.f32 %v2192, %v3465
      %3467 = vmatprep.mubr.f32.mxu0 0.0
      %3468 = vmatmul.mubr.f32.gmra.mrb[0].mxu0 %v2046
      %v3469 = vpop.f32.mrb[0].mxu0
      %v3470 = vadd.f32 %v2197, %v3469
      %v3471 = vpop.f32.mrb[0].mxu0
      %v3472 = vadd.f32 %v2197, %v3471
      %3473 = vmatprep.mubr.f32.mxu0 0.0
      %3474 = vmatmul.mubr.f32.gmra.mrb[0].mxu0 %v2047
      %v3475 = vpop.f32.mrb[0].mxu0
      %v3476 = vadd.f32 %v2202, %v3475
      %v3477 = vpop.f32.mrb[0].mxu0
      %v3478 = vadd.f32 %v2202, %v3477
      %3479 = vmatprep.mubr.f32.mxu0 0.0
      %3480 = vmatmul.mubr.f32.gmra.mrb[0].mxu0 %v2048
      %v3481 = vpop.f32.mrb[0].mxu0
      %v3482 = vadd.f32 %v2207, %v3481
      %v3483 = vpop.f32.mrb[0].mxu0
      %v3484 = vadd.f32 %v2207, %v3483
      %3485 = vmatprep.mubr.f32.mxu0 0.0
      %3486 = vmatmul.mubr.f32.gmra.mrb[0].mxu0 %v2049
      %v3487 = vpop.f32.mrb[0].mxu0
      %v3488 = vadd.f32 %v2212, %v3487
      %v3489 = vpop.f32.mrb[0].mxu0
      %v3490 = vadd.f32 %v2212, %v3489
      %3491 = vmatprep.mubr.f32.mxu0 0.0
      %3492 = vmatmul.mubr.f32.gmra.mrb[0].mxu0 %v2050
      %v3493 = vpop.f32.mrb[0].mxu0
      %v3494 = vadd.f32 %v2217, %v3493
      %v3495 = vpop.f32.mrb[0].mxu0
      %v3496 = vadd.f32 %v2217, %v3495
      %3497 = vmatprep.mubr.f32.mxu0 0.0
      %3498 = vmatmul.mubr.f32.gmra.mrb[0].mxu0 %v2051
      %v3499 = vpop.f32.mrb[0].mxu0
      %v3500 = vadd.f32 %v2222, %v3499
      %v3501 = vpop.f32.mrb[0].mxu0
      %v3502 = vadd.f32 %v2222, %v3501
      %3503 = vmatprep.mubr.f32.mxu0 0.0
      %3504 = vmatmul.mubr.f32.gmra.mrb[0].mxu0 %v2052
      %v3505 = vpop.f32.mrb[0].mxu0
      %v3506 = vadd.f32 %v2227, %v3505
      %v3507 = vpop.f32.mrb[0].mxu0
      %v3508 = vadd.f32 %v2227, %v3507
      %3509 = vmatprep.mubr.f32.mxu0 0.0
      %3510 = vmatmul.mubr.f32.gmra.mrb[0].mxu0 %v2053
      %v3511 = vpop.f32.mrb[0].mxu0
      %v3512 = vadd.f32 %v2232, %v3511
      %v3513 = vpop.f32.mrb[0].mxu0
      %v3514 = vadd.f32 %v2232, %v3513
      %3515 = vmatprep.mubr.f32.mxu0 0.0
      %3516 = vmatmul.mubr.f32.gmra.mrb[0].mxu0 %v2054
      %v3517 = vpop.f32.mrb[0].mxu0
      %v3518 = vadd.f32 %v2237, %v3517
      %v3519 = vpop.f32.mrb[0].mxu0
      %v3520 = vadd.f32 %v2237, %v3519
      %3521 = vmatprep.mubr.f32.mxu0 0.0
      %3522 = vmatmul.mubr.f32.gmra.mrb[0].mxu0 %v2055
      %v3523 = vpop.f32.mrb[0].mxu0
      %v3524 = vadd.f32 %v2242, %v3523
      %v3525 = vpop.f32.mrb[0].mxu0
      %v3526 = vadd.f32 %v2242, %v3525
      %3527 = vmatprep.mubr.f32.mxu0 0.0
      %3528 = vmatmul.mubr.f32.gmra.mrb[0].mxu0 %v2056
      %v3529 = vpop.f32.mrb[0].mxu0
      %v3530 = vadd.f32 %v2247, %v3529
      %v3531 = vpop.f32.mrb[0].mxu0
      %v3532 = vadd.f32 %v2247, %v3531
      %3533 = vdwg.mxu0
      %3534 = vmatprep.subr.mxu0 %v1780
      %3535 = vmatpush1.msra.mxu0 %v1779
      %3536 = vmatprep.subr.mxu0 %v1796
      %3537 = vmatpush1.msra.mxu0 %v1795
      %3538 = vmatprep.subr.mxu0 %v1812
      %3539 = vmatpush1.msra.mxu0 %v1811
      %3540 = vmatprep.subr.mxu0 %v1828
      %3541 = vmatpush1.msra.mxu0 %v1827
      %3542 = vmatprep.subr.mxu0 %v1844
      %3543 = vmatpush1.msra.mxu0 %v1843
      %3544 = vmatprep.subr.mxu0 %v1860
      %3545 = vmatpush1.msra.mxu0 %v1859
      %3546 = vmatprep.subr.mxu0 %v1876
      %3547 = vmatpush1.msra.mxu0 %v1875
      %3548 = vmatprep.subr.mxu0 %v1892
      %3549 = vmatpush1.msra.mxu0 %v1891
      %3550 = vmatprep.subr.mxu0 %v1908
      %3551 = vmatpush1.msra.mxu0 %v1907
      %3552 = vmatprep.subr.mxu0 %v1924
      %3553 = vmatpush1.msra.mxu0 %v1923
      %3554 = vmatprep.subr.mxu0 %v1940
      %3555 = vmatpush1.msra.mxu0 %v1939
      %3556 = vmatprep.subr.mxu0 %v1956
      %3557 = vmatpush1.msra.mxu0 %v1955
      %3558 = vmatprep.subr.mxu0 %v1972
      %3559 = vmatpush1.msra.mxu0 %v1971
      %3560 = vmatprep.subr.mxu0 %v1988
      %3561 = vmatpush1.msra.mxu0 %v1987
      %3562 = vmatprep.subr.mxu0 %v2004
      %3563 = vmatpush1.msra.mxu0 %v2003
      %3564 = vmatprep.subr.mxu0 %v2020
      %3565 = vmatpush1.msra.mxu0 %v2019
      %3566 = vmatprep.subr.mxu0 0.0
      %3567 = vmatpush1.msra.mxu0 0.0
      %3568 = vmatprep.subr.mxu0 0.0
      %3569 = vmatpush1.msra.mxu0 0.0
      %3570 = vmatprep.subr.mxu0 0.0
      %3571 = vmatpush1.msra.mxu0 0.0
      %3572 = vmatprep.subr.mxu0 0.0
      %3573 = vmatpush1.msra.mxu0 0.0
      %3574 = vmatprep.subr.mxu0 0.0
      %3575 = vmatpush1.msra.mxu0 0.0
      %3576 = vmatprep.subr.mxu0 0.0
      %3577 = vmatpush1.msra.mxu0 0.0
      %3578 = vmatprep.subr.mxu0 0.0
      %3579 = vmatpush1.msra.mxu0 0.0
      %3580 = vmatprep.subr.mxu0 0.0
      %3581 = vmatpush1.msra.mxu0 0.0
      %3582 = vmatprep.subr.mxu0 0.0
      %3583 = vmatpush1.msra.mxu0 0.0
      %3584 = vmatprep.subr.mxu0 0.0
      %3585 = vmatpush1.msra.mxu0 0.0
      %3586 = vmatprep.subr.mxu0 0.0
      %3587 = vmatpush1.msra.mxu0 0.0
      %3588 = vmatprep.subr.mxu0 0.0
      %3589 = vmatpush1.msra.mxu0 0.0
      %3590 = vmatprep.subr.mxu0 0.0
      %3591 = vmatpush1.msra.mxu0 0.0
      %3592 = vmatprep.subr.mxu0 0.0
      %3593 = vmatpush1.msra.mxu0 0.0
      %3594 = vmatprep.subr.mxu0 0.0
      %3595 = vmatpush1.msra.mxu0 0.0
      %3596 = vmatprep.subr.mxu0 0.0
      %3597 = vmatpush1.msra.mxu0 0.0
      %3598 = vmatprep.mubr.f32.mxu0 0.0
      %3599 = vmatmul.mubr.f32.gmra.mrb[0].mxu0 %v2025
      %v3600 = vpop.f32.mrb[0].mxu0
      %v3601 = vadd.f32 %v2092, %v3600
      %v3602 = vpop.f32.mrb[0].mxu0
      %v3603 = vadd.f32 %v2092, %v3602
      %3604 = vmatprep.mubr.f32.mxu0 0.0
      %3605 = vmatmul.mubr.f32.gmra.mrb[0].mxu0 %v2026
      %v3606 = vpop.f32.mrb[0].mxu0
      %v3607 = vadd.f32 %v2097, %v3606
      %v3608 = vpop.f32.mrb[0].mxu0
      %v3609 = vadd.f32 %v2097, %v3608
      %3610 = vmatprep.mubr.f32.mxu0 0.0
      %3611 = vmatmul.mubr.f32.gmra.mrb[0].mxu0 %v2027
      %v3612 = vpop.f32.mrb[0].mxu0
      %v3613 = vadd.f32 %v2102, %v3612
      %v3614 = vpop.f32.mrb[0].mxu0
      %v3615 = vadd.f32 %v2102, %v3614
      %3616 = vmatprep.mubr.f32.mxu0 0.0
      %3617 = vmatmul.mubr.f32.gmra.mrb[0].mxu0 %v2028
      %v3618 = vpop.f32.mrb[0].mxu0
      %v3619 = vadd.f32 %v2107, %v3618
      %v3620 = vpop.f32.mrb[0].mxu0
      %v3621 = vadd.f32 %v2107, %v3620
      %3622 = vmatprep.mubr.f32.mxu0 0.0
      %3623 = vmatmul.mubr.f32.gmra.mrb[0].mxu0 %v2029
      %v3624 = vpop.f32.mrb[0].mxu0
      %v3625 = vadd.f32 %v2112, %v3624
      %v3626 = vpop.f32.mrb[0].mxu0
      %v3627 = vadd.f32 %v2112, %v3626
      %3628 = vmatprep.mubr.f32.mxu0 0.0
      %3629 = vmatmul.mubr.f32.gmra.mrb[0].mxu0 %v2030
      %v3630 = vpop.f32.mrb[0].mxu0
      %v3631 = vadd.f32 %v2117, %v3630
      %v3632 = vpop.f32.mrb[0].mxu0
      %v3633 = vadd.f32 %v2117, %v3632
      %3634 = vmatprep.mubr.f32.mxu0 0.0
      %3635 = vmatmul.mubr.f32.gmra.mrb[0].mxu0 %v2031
      %v3636 = vpop.f32.mrb[0].mxu0
      %v3637 = vadd.f32 %v2122, %v3636
      %v3638 = vpop.f32.mrb[0].mxu0
      %v3639 = vadd.f32 %v2122, %v3638
      %3640 = vmatprep.mubr.f32.mxu0 0.0
      %3641 = vmatmul.mubr.f32.gmra.mrb[0].mxu0 %v2032
      %v3642 = vpop.f32.mrb[0].mxu0
      %v3643 = vadd.f32 %v2127, %v3642
      %v3644 = vpop.f32.mrb[0].mxu0
      %v3645 = vadd.f32 %v2127, %v3644
      %3646 = vmatprep.mubr.f32.mxu0 0.0
      %3647 = vmatmul.mubr.f32.gmra.mrb[0].mxu0 %v2033
      %v3648 = vpop.f32.mrb[0].mxu0
      %v3649 = vadd.f32 %v2132, %v3648
      %v3650 = vpop.f32.mrb[0].mxu0
      %v3651 = vadd.f32 %v2132, %v3650
      %3652 = vmatprep.mubr.f32.mxu0 0.0
      %3653 = vmatmul.mubr.f32.gmra.mrb[0].mxu0 %v2034
      %v3654 = vpop.f32.mrb[0].mxu0
      %v3655 = vadd.f32 %v2137, %v3654
      %v3656 = vpop.f32.mrb[0].mxu0
      %v3657 = vadd.f32 %v2137, %v3656
      %3658 = vmatprep.mubr.f32.mxu0 0.0
      %3659 = vmatmul.mubr.f32.gmra.mrb[0].mxu0 %v2035
      %v3660 = vpop.f32.mrb[0].mxu0
      %v3661 = vadd.f32 %v2142, %v3660
      %v3662 = vpop.f32.mrb[0].mxu0
      %v3663 = vadd.f32 %v2142, %v3662
      %3664 = vmatprep.mubr.f32.mxu0 0.0
      %3665 = vmatmul.mubr.f32.gmra.mrb[0].mxu0 %v2036
      %v3666 = vpop.f32.mrb[0].mxu0
      %v3667 = vadd.f32 %v2147, %v3666
      %v3668 = vpop.f32.mrb[0].mxu0
      %v3669 = vadd.f32 %v2147, %v3668
      %3670 = vmatprep.mubr.f32.mxu0 0.0
      %3671 = vmatmul.mubr.f32.gmra.mrb[0].mxu0 %v2037
      %v3672 = vpop.f32.mrb[0].mxu0
      %v3673 = vadd.f32 %v2152, %v3672
      %v3674 = vpop.f32.mrb[0].mxu0
      %v3675 = vadd.f32 %v2152, %v3674
      %3676 = vmatprep.mubr.f32.mxu0 0.0
      %3677 = vmatmul.mubr.f32.gmra.mrb[0].mxu0 %v2038
      %v3678 = vpop.f32.mrb[0].mxu0
      %v3679 = vadd.f32 %v2157, %v3678
      %v3680 = vpop.f32.mrb[0].mxu0
      %v3681 = vadd.f32 %v2157, %v3680
      %3682 = vmatprep.mubr.f32.mxu0 0.0
      %3683 = vmatmul.mubr.f32.gmra.mrb[0].mxu0 %v2039
      %v3684 = vpop.f32.mrb[0].mxu0
      %v3685 = vadd.f32 %v2162, %v3684
      %v3686 = vpop.f32.mrb[0].mxu0
      %v3687 = vadd.f32 %v2162, %v3686
      %3688 = vmatprep.mubr.f32.mxu0 0.0
      %3689 = vmatmul.mubr.f32.gmra.mrb[0].mxu0 %v2040
      %v3690 = vpop.f32.mrb[0].mxu0
      %v3691 = vadd.f32 %v2167, %v3690
      %v3692 = vpop.f32.mrb[0].mxu0
      %v3693 = vadd.f32 %v2167, %v3692
      %3694 = vmatprep.mubr.f32.mxu0 0.0
      %3695 = vmatmul.mubr.f32.gmra.mrb[0].mxu0 %v2041
      %v3696 = vpop.f32.mrb[0].mxu0
      %v3697 = vadd.f32 %v2172, %v3696
      %v3698 = vpop.f32.mrb[0].mxu0
      %v3699 = vadd.f32 %v2172, %v3698
      %3700 = vmatprep.mubr.f32.mxu0 0.0
      %3701 = vmatmul.mubr.f32.gmra.mrb[0].mxu0 %v2042
      %v3702 = vpop.f32.mrb[0].mxu0
      %v3703 = vadd.f32 %v2177, %v3702
      %v3704 = vpop.f32.mrb[0].mxu0
      %v3705 = vadd.f32 %v2177, %v3704
      %3706 = vmatprep.mubr.f32.mxu0 0.0
      %3707 = vmatmul.mubr.f32.gmra.mrb[0].mxu0 %v2043
      %v3708 = vpop.f32.mrb[0].mxu0
      %v3709 = vadd.f32 %v2182, %v3708
      %v3710 = vpop.f32.mrb[0].mxu0
      %v3711 = vadd.f32 %v2182, %v3710
      %3712 = vmatprep.mubr.f32.mxu0 0.0
      %3713 = vmatmul.mubr.f32.gmra.mrb[0].mxu0 %v2044
      %v3714 = vpop.f32.mrb[0].mxu0
      %v3715 = vadd.f32 %v2187, %v3714
      %v3716 = vpop.f32.mrb[0].mxu0
      %v3717 = vadd.f32 %v2187, %v3716
      %3718 = vmatprep.mubr.f32.mxu0 0.0
      %3719 = vmatmul.mubr.f32.gmra.mrb[0].mxu0 %v2045
      %v3720 = vpop.f32.mrb[0].mxu0
      %v3721 = vadd.f32 %v2192, %v3720
      %v3722 = vpop.f32.mrb[0].mxu0
      %v3723 = vadd.f32 %v2192, %v3722
      %3724 = vmatprep.mubr.f32.mxu0 0.0
      %3725 = vmatmul.mubr.f32.gmra.mrb[0].mxu0 %v2046
      %v3726 = vpop.f32.mrb[0].mxu0
      %v3727 = vadd.f32 %v2197, %v3726
      %v3728 = vpop.f32.mrb[0].mxu0
      %v3729 = vadd.f32 %v2197, %v3728
      %3730 = vmatprep.mubr.f32.mxu0 0.0
      %3731 = vmatmul.mubr.f32.gmra.mrb[0].mxu0 %v2047
      %v3732 = vpop.f32.mrb[0].mxu0
      %v3733 = vadd.f32 %v2202, %v3732
      %v3734 = vpop.f32.mrb[0].mxu0
      %v3735 = vadd.f32 %v2202, %v3734
      %3736 = vmatprep.mubr.f32.mxu0 0.0
      %3737 = vmatmul.mubr.f32.gmra.mrb[0].mxu0 %v2048
      %v3738 = vpop.f32.mrb[0].mxu0
      %v3739 = vadd.f32 %v2207, %v3738
      %v3740 = vpop.f32.mrb[0].mxu0
      %v3741 = vadd.f32 %v2207, %v3740
      %3742 = vmatprep.mubr.f32.mxu0 0.0
      %3743 = vmatmul.mubr.f32.gmra.mrb[0].mxu0 %v2049
      %v3744 = vpop.f32.mrb[0].mxu0
      %v3745 = vadd.f32 %v2212, %v3744
      %v3746 = vpop.f32.mrb[0].mxu0
      %v3747 = vadd.f32 %v2212, %v3746
      %3748 = vmatprep.mubr.f32.mxu0 0.0
      %3749 = vmatmul.mubr.f32.gmra.mrb[0].mxu0 %v2050
      %v3750 = vpop.f32.mrb[0].mxu0
      %v3751 = vadd.f32 %v2217, %v3750
      %v3752 = vpop.f32.mrb[0].mxu0
      %v3753 = vadd.f32 %v2217, %v3752
      %3754 = vmatprep.mubr.f32.mxu0 0.0
      %3755 = vmatmul.mubr.f32.gmra.mrb[0].mxu0 %v2051
      %v3756 = vpop.f32.mrb[0].mxu0
      %v3757 = vadd.f32 %v2222, %v3756
      %v3758 = vpop.f32.mrb[0].mxu0
      %v3759 = vadd.f32 %v2222, %v3758
      %3760 = vmatprep.mubr.f32.mxu0 0.0
      %3761 = vmatmul.mubr.f32.gmra.mrb[0].mxu0 %v2052
      %v3762 = vpop.f32.mrb[0].mxu0
      %v3763 = vadd.f32 %v2227, %v3762
      %v3764 = vpop.f32.mrb[0].mxu0
      %v3765 = vadd.f32 %v2227, %v3764
      %3766 = vmatprep.mubr.f32.mxu0 0.0
      %3767 = vmatmul.mubr.f32.gmra.mrb[0].mxu0 %v2053
      %v3768 = vpop.f32.mrb[0].mxu0
      %v3769 = vadd.f32 %v2232, %v3768
      %v3770 = vpop.f32.mrb[0].mxu0
      %v3771 = vadd.f32 %v2232, %v3770
      %3772 = vmatprep.mubr.f32.mxu0 0.0
      %3773 = vmatmul.mubr.f32.gmra.mrb[0].mxu0 %v2054
      %v3774 = vpop.f32.mrb[0].mxu0
      %v3775 = vadd.f32 %v2237, %v3774
      %v3776 = vpop.f32.mrb[0].mxu0
      %v3777 = vadd.f32 %v2237, %v3776
      %3778 = vmatprep.mubr.f32.mxu0 0.0
      %3779 = vmatmul.mubr.f32.gmra.mrb[0].mxu0 %v2055
      %v3780 = vpop.f32.mrb[0].mxu0
      %v3781 = vadd.f32 %v2242, %v3780
      %v3782 = vpop.f32.mrb[0].mxu0
      %v3783 = vadd.f32 %v2242, %v3782
      %3784 = vmatprep.mubr.f32.mxu0 0.0
      %3785 = vmatmul.mubr.f32.gmra.mrb[0].mxu0 %v2056
      %v3786 = vpop.f32.mrb[0].mxu0
      %v3787 = vadd.f32 %v2247, %v3786
      %v3788 = vpop.f32.mrb[0].mxu0
      %v3789 = vadd.f32 %v2247, %v3788
      %3790 = vdwg.mxu0
      %3791 = vmatprep.subr.mxu0 %v1782
      %3792 = vmatpush1.msra.mxu0 %v1781
      %3793 = vmatprep.subr.mxu0 %v1798
      %3794 = vmatpush1.msra.mxu0 %v1797
      %3795 = vmatprep.subr.mxu0 %v1814
      %3796 = vmatpush1.msra.mxu0 %v1813
      %3797 = vmatprep.subr.mxu0 %v1830
      %3798 = vmatpush1.msra.mxu0 %v1829
      %3799 = vmatprep.subr.mxu0 %v1846
      %3800 = vmatpush1.msra.mxu0 %v1845
      %3801 = vmatprep.subr.mxu0 %v1862
      %3802 = vmatpush1.msra.mxu0 %v1861
      %3803 = vmatprep.subr.mxu0 %v1878
      %3804 = vmatpush1.msra.mxu0 %v1877
      %3805 = vmatprep.subr.mxu0 %v1894
      %3806 = vmatpush1.msra.mxu0 %v1893
      %3807 = vmatprep.subr.mxu0 %v1910
      %3808 = vmatpush1.msra.mxu0 %v1909
      %3809 = vmatprep.subr.mxu0 %v1926
      %3810 = vmatpush1.msra.mxu0 %v1925
      %3811 = vmatprep.subr.mxu0 %v1942
      %3812 = vmatpush1.msra.mxu0 %v1941
      %3813 = vmatprep.subr.mxu0 %v1958
      %3814 = vmatpush1.msra.mxu0 %v1957
      %3815 = vmatprep.subr.mxu0 %v1974
      %3816 = vmatpush1.msra.mxu0 %v1973
      %3817 = vmatprep.subr.mxu0 %v1990
      %3818 = vmatpush1.msra.mxu0 %v1989
      %3819 = vmatprep.subr.mxu0 %v2006
      %3820 = vmatpush1.msra.mxu0 %v2005
      %3821 = vmatprep.subr.mxu0 %v2022
      %3822 = vmatpush1.msra.mxu0 %v2021
      %3823 = vmatprep.subr.mxu0 0.0
      %3824 = vmatpush1.msra.mxu0 0.0
      %3825 = vmatprep.subr.mxu0 0.0
      %3826 = vmatpush1.msra.mxu0 0.0
      %3827 = vmatprep.subr.mxu0 0.0
      %3828 = vmatpush1.msra.mxu0 0.0
      %3829 = vmatprep.subr.mxu0 0.0
      %3830 = vmatpush1.msra.mxu0 0.0
      %3831 = vmatprep.subr.mxu0 0.0
      %3832 = vmatpush1.msra.mxu0 0.0
      %3833 = vmatprep.subr.mxu0 0.0
      %3834 = vmatpush1.msra.mxu0 0.0
      %3835 = vmatprep.subr.mxu0 0.0
      %3836 = vmatpush1.msra.mxu0 0.0
      %3837 = vmatprep.subr.mxu0 0.0
      %3838 = vmatpush1.msra.mxu0 0.0
      %3839 = vmatprep.subr.mxu0 0.0
      %3840 = vmatpush1.msra.mxu0 0.0
      %3841 = vmatprep.subr.mxu0 0.0
      %3842 = vmatpush1.msra.mxu0 0.0
      %3843 = vmatprep.subr.mxu0 0.0
      %3844 = vmatpush1.msra.mxu0 0.0
      %3845 = vmatprep.subr.mxu0 0.0
      %3846 = vmatpush1.msra.mxu0 0.0
      %3847 = vmatprep.subr.mxu0 0.0
      %3848 = vmatpush1.msra.mxu0 0.0
      %3849 = vmatprep.subr.mxu0 0.0
      %3850 = vmatpush1.msra.mxu0 0.0
      %3851 = vmatprep.subr.mxu0 0.0
      %3852 = vmatpush1.msra.mxu0 0.0
      %3853 = vmatprep.subr.mxu0 0.0
      %3854 = vmatpush1.msra.mxu0 0.0
      %3855 = vmatprep.mubr.f32.mxu0 0.0
      %3856 = vmatmul.mubr.f32.gmra.mrb[0].mxu0 %v2025
      %v3857 = vpop.f32.mrb[0].mxu0
      %v3858 = vadd.f32 %v2092, %v3857
      %v3859 = vpop.f32.mrb[0].mxu0
      %v3860 = vadd.f32 %v2092, %v3859
      %3861 = vmatprep.mubr.f32.mxu0 0.0
      %3862 = vmatmul.mubr.f32.gmra.mrb[0].mxu0 %v2026
      %v3863 = vpop.f32.mrb[0].mxu0
      %v3864 = vadd.f32 %v2097, %v3863
      %v3865 = vpop.f32.mrb[0].mxu0
      %v3866 = vadd.f32 %v2097, %v3865
      %3867 = vmatprep.mubr.f32.mxu0 0.0
      %3868 = vmatmul.mubr.f32.gmra.mrb[0].mxu0 %v2027
      %v3869 = vpop.f32.mrb[0].mxu0
      %v3870 = vadd.f32 %v2102, %v3869
      %v3871 = vpop.f32.mrb[0].mxu0
      %v3872 = vadd.f32 %v2102, %v3871
      %3873 = vmatprep.mubr.f32.mxu0 0.0
      %3874 = vmatmul.mubr.f32.gmra.mrb[0].mxu0 %v2028
      %v3875 = vpop.f32.mrb[0].mxu0
      %v3876 = vadd.f32 %v2107, %v3875
      %v3877 = vpop.f32.mrb[0].mxu0
      %v3878 = vadd.f32 %v2107, %v3877
      %3879 = vmatprep.mubr.f32.mxu0 0.0
      %3880 = vmatmul.mubr.f32.gmra.mrb[0].mxu0 %v2029
      %v3881 = vpop.f32.mrb[0].mxu0
      %v3882 = vadd.f32 %v2112, %v3881
      %v3883 = vpop.f32.mrb[0].mxu0
      %v3884 = vadd.f32 %v2112, %v3883
      %3885 = vmatprep.mubr.f32.mxu0 0.0
      %3886 = vmatmul.mubr.f32.gmra.mrb[0].mxu0 %v2030
      %v3887 = vpop.f32.mrb[0].mxu0
      %v3888 = vadd.f32 %v2117, %v3887
      %v3889 = vpop.f32.mrb[0].mxu0
      %v3890 = vadd.f32 %v2117, %v3889
      %3891 = vmatprep.mubr.f32.mxu0 0.0
      %3892 = vmatmul.mubr.f32.gmra.mrb[0].mxu0 %v2031
      %v3893 = vpop.f32.mrb[0].mxu0
      %v3894 = vadd.f32 %v2122, %v3893
      %v3895 = vpop.f32.mrb[0].mxu0
      %v3896 = vadd.f32 %v2122, %v3895
      %3897 = vmatprep.mubr.f32.mxu0 0.0
      %3898 = vmatmul.mubr.f32.gmra.mrb[0].mxu0 %v2032
      %v3899 = vpop.f32.mrb[0].mxu0
      %v3900 = vadd.f32 %v2127, %v3899
      %v3901 = vpop.f32.mrb[0].mxu0
      %v3902 = vadd.f32 %v2127, %v3901
      %3903 = vmatprep.mubr.f32.mxu0 0.0
      %3904 = vmatmul.mubr.f32.gmra.mrb[0].mxu0 %v2033
      %v3905 = vpop.f32.mrb[0].mxu0
      %v3906 = vadd.f32 %v2132, %v3905
      %v3907 = vpop.f32.mrb[0].mxu0
      %v3908 = vadd.f32 %v2132, %v3907
      %3909 = vmatprep.mubr.f32.mxu0 0.0
      %3910 = vmatmul.mubr.f32.gmra.mrb[0].mxu0 %v2034
      %v3911 = vpop.f32.mrb[0].mxu0
      %v3912 = vadd.f32 %v2137, %v3911
      %v3913 = vpop.f32.mrb[0].mxu0
      %v3914 = vadd.f32 %v2137, %v3913
      %3915 = vmatprep.mubr.f32.mxu0 0.0
      %3916 = vmatmul.mubr.f32.gmra.mrb[0].mxu0 %v2035
      %v3917 = vpop.f32.mrb[0].mxu0
      %v3918 = vadd.f32 %v2142, %v3917
      %v3919 = vpop.f32.mrb[0].mxu0
      %v3920 = vadd.f32 %v2142, %v3919
      %3921 = vmatprep.mubr.f32.mxu0 0.0
      %3922 = vmatmul.mubr.f32.gmra.mrb[0].mxu0 %v2036
      %v3923 = vpop.f32.mrb[0].mxu0
      %v3924 = vadd.f32 %v2147, %v3923
      %v3925 = vpop.f32.mrb[0].mxu0
      %v3926 = vadd.f32 %v2147, %v3925
      %3927 = vmatprep.mubr.f32.mxu0 0.0
      %3928 = vmatmul.mubr.f32.gmra.mrb[0].mxu0 %v2037
      %v3929 = vpop.f32.mrb[0].mxu0
      %v3930 = vadd.f32 %v2152, %v3929
      %v3931 = vpop.f32.mrb[0].mxu0
      %v3932 = vadd.f32 %v2152, %v3931
      %3933 = vmatprep.mubr.f32.mxu0 0.0
      %3934 = vmatmul.mubr.f32.gmra.mrb[0].mxu0 %v2038
      %v3935 = vpop.f32.mrb[0].mxu0
      %v3936 = vadd.f32 %v2157, %v3935
      %v3937 = vpop.f32.mrb[0].mxu0
      %v3938 = vadd.f32 %v2157, %v3937
      %3939 = vmatprep.mubr.f32.mxu0 0.0
      %3940 = vmatmul.mubr.f32.gmra.mrb[0].mxu0 %v2039
      %v3941 = vpop.f32.mrb[0].mxu0
      %v3942 = vadd.f32 %v2162, %v3941
      %v3943 = vpop.f32.mrb[0].mxu0
      %v3944 = vadd.f32 %v2162, %v3943
      %3945 = vmatprep.mubr.f32.mxu0 0.0
      %3946 = vmatmul.mubr.f32.gmra.mrb[0].mxu0 %v2040
      %v3947 = vpop.f32.mrb[0].mxu0
      %v3948 = vadd.f32 %v2167, %v3947
      %v3949 = vpop.f32.mrb[0].mxu0
      %v3950 = vadd.f32 %v2167, %v3949
      %3951 = vmatprep.mubr.f32.mxu0 0.0
      %3952 = vmatmul.mubr.f32.gmra.mrb[0].mxu0 %v2041
      %v3953 = vpop.f32.mrb[0].mxu0
      %v3954 = vadd.f32 %v2172, %v3953
      %v3955 = vpop.f32.mrb[0].mxu0
      %v3956 = vadd.f32 %v2172, %v3955
      %3957 = vmatprep.mubr.f32.mxu0 0.0
      %3958 = vmatmul.mubr.f32.gmra.mrb[0].mxu0 %v2042
      %v3959 = vpop.f32.mrb[0].mxu0
      %v3960 = vadd.f32 %v2177, %v3959
      %v3961 = vpop.f32.mrb[0].mxu0
      %v3962 = vadd.f32 %v2177, %v3961
      %3963 = vmatprep.mubr.f32.mxu0 0.0
      %3964 = vmatmul.mubr.f32.gmra.mrb[0].mxu0 %v2043
      %v3965 = vpop.f32.mrb[0].mxu0
      %v3966 = vadd.f32 %v2182, %v3965
      %v3967 = vpop.f32.mrb[0].mxu0
      %v3968 = vadd.f32 %v2182, %v3967
      %3969 = vmatprep.mubr.f32.mxu0 0.0
      %3970 = vmatmul.mubr.f32.gmra.mrb[0].mxu0 %v2044
      %v3971 = vpop.f32.mrb[0].mxu0
      %v3972 = vadd.f32 %v2187, %v3971
      %v3973 = vpop.f32.mrb[0].mxu0
      %v3974 = vadd.f32 %v2187, %v3973
      %3975 = vmatprep.mubr.f32.mxu0 0.0
      %3976 = vmatmul.mubr.f32.gmra.mrb[0].mxu0 %v2045
      %v3977 = vpop.f32.mrb[0].mxu0
      %v3978 = vadd.f32 %v2192, %v3977
      %v3979 = vpop.f32.mrb[0].mxu0
      %v3980 = vadd.f32 %v2192, %v3979
      %3981 = vmatprep.mubr.f32.mxu0 0.0
      %3982 = vmatmul.mubr.f32.gmra.mrb[0].mxu0 %v2046
      %v3983 = vpop.f32.mrb[0].mxu0
      %v3984 = vadd.f32 %v2197, %v3983
      %v3985 = vpop.f32.mrb[0].mxu0
      %v3986 = vadd.f32 %v2197, %v3985
      %3987 = vmatprep.mubr.f32.mxu0 0.0
      %3988 = vmatmul.mubr.f32.gmra.mrb[0].mxu0 %v2047
      %v3989 = vpop.f32.mrb[0].mxu0
      %v3990 = vadd.f32 %v2202, %v3989
      %v3991 = vpop.f32.mrb[0].mxu0
      %v3992 = vadd.f32 %v2202, %v3991
      %3993 = vmatprep.mubr.f32.mxu0 0.0
      %3994 = vmatmul.mubr.f32.gmra.mrb[0].mxu0 %v2048
      %v3995 = vpop.f32.mrb[0].mxu0
      %v3996 = vadd.f32 %v2207, %v3995
      %v3997 = vpop.f32.mrb[0].mxu0
      %v3998 = vadd.f32 %v2207, %v3997
      %3999 = vmatprep.mubr.f32.mxu0 0.0
      %4000 = vmatmul.mubr.f32.gmra.mrb[0].mxu0 %v2049
      %v4001 = vpop.f32.mrb[0].mxu0
      %v4002 = vadd.f32 %v2212, %v4001
      %v4003 = vpop.f32.mrb[0].mxu0
      %v4004 = vadd.f32 %v2212, %v4003
      %4005 = vmatprep.mubr.f32.mxu0 0.0
      %4006 = vmatmul.mubr.f32.gmra.mrb[0].mxu0 %v2050
      %v4007 = vpop.f32.mrb[0].mxu0
      %v4008 = vadd.f32 %v2217, %v4007
      %v4009 = vpop.f32.mrb[0].mxu0
      %v4010 = vadd.f32 %v2217, %v4009
      %4011 = vmatprep.mubr.f32.mxu0 0.0
      %4012 = vmatmul.mubr.f32.gmra.mrb[0].mxu0 %v2051
      %v4013 = vpop.f32.mrb[0].mxu0
      %v4014 = vadd.f32 %v2222, %v4013
      %v4015 = vpop.f32.mrb[0].mxu0
      %v4016 = vadd.f32 %v2222, %v4015
      %4017 = vmatprep.mubr.f32.mxu0 0.0
      %4018 = vmatmul.mubr.f32.gmra.mrb[0].mxu0 %v2052
      %v4019 = vpop.f32.mrb[0].mxu0
      %v4020 = vadd.f32 %v2227, %v4019
      %v4021 = vpop.f32.mrb[0].mxu0
      %v4022 = vadd.f32 %v2227, %v4021
      %4023 = vmatprep.mubr.f32.mxu0 0.0
      %4024 = vmatmul.mubr.f32.gmra.mrb[0].mxu0 %v2053
      %v4025 = vpop.f32.mrb[0].mxu0
      %v4026 = vadd.f32 %v2232, %v4025
      %v4027 = vpop.f32.mrb[0].mxu0
      %v4028 = vadd.f32 %v2232, %v4027
      %4029 = vmatprep.mubr.f32.mxu0 0.0
      %4030 = vmatmul.mubr.f32.gmra.mrb[0].mxu0 %v2054
      %v4031 = vpop.f32.mrb[0].mxu0
      %v4032 = vadd.f32 %v2237, %v4031
      %v4033 = vpop.f32.mrb[0].mxu0
      %v4034 = vadd.f32 %v2237, %v4033
      %4035 = vmatprep.mubr.f32.mxu0 0.0
      %4036 = vmatmul.mubr.f32.gmra.mrb[0].mxu0 %v2055
      %v4037 = vpop.f32.mrb[0].mxu0
      %v4038 = vadd.f32 %v2242, %v4037
      %v4039 = vpop.f32.mrb[0].mxu0
      %v4040 = vadd.f32 %v2242, %v4039
      %4041 = vmatprep.mubr.f32.mxu0 0.0
      %4042 = vmatmul.mubr.f32.gmra.mrb[0].mxu0 %v2056
      %v4043 = vpop.f32.mrb[0].mxu0
      %v4044 = vadd.f32 %v2247, %v4043
      %v4045 = vpop.f32.mrb[0].mxu0
      %v4046 = vadd.f32 %v2247, %v4045
      %4047 = vdwg.mxu0
      %4048 = vmatprep.subr.mxu0 %v1784
      %4049 = vmatpush1.msra.mxu0 %v1783
      %4050 = vmatprep.subr.mxu0 %v1800
      %4051 = vmatpush1.msra.mxu0 %v1799
      %4052 = vmatprep.subr.mxu0 %v1816
      %4053 = vmatpush1.msra.mxu0 %v1815
      %4054 = vmatprep.subr.mxu0 %v1832
      %4055 = vmatpush1.msra.mxu0 %v1831
      %4056 = vmatprep.subr.mxu0 %v1848
      %4057 = vmatpush1.msra.mxu0 %v1847
      %4058 = vmatprep.subr.mxu0 %v1864
      %4059 = vmatpush1.msra.mxu0 %v1863
      %4060 = vmatprep.subr.mxu0 %v1880
      %4061 = vmatpush1.msra.mxu0 %v1879
      %4062 = vmatprep.subr.mxu0 %v1896
      %4063 = vmatpush1.msra.mxu0 %v1895
      %4064 = vmatprep.subr.mxu0 %v1912
      %4065 = vmatpush1.msra.mxu0 %v1911
      %4066 = vmatprep.subr.mxu0 %v1928
      %4067 = vmatpush1.msra.mxu0 %v1927
      %4068 = vmatprep.subr.mxu0 %v1944
      %4069 = vmatpush1.msra.mxu0 %v1943
      %4070 = vmatprep.subr.mxu0 %v1960
      %4071 = vmatpush1.msra.mxu0 %v1959
      %4072 = vmatprep.subr.mxu0 %v1976
      %4073 = vmatpush1.msra.mxu0 %v1975
      %4074 = vmatprep.subr.mxu0 %v1992
      %4075 = vmatpush1.msra.mxu0 %v1991
      %4076 = vmatprep.subr.mxu0 %v2008
      %4077 = vmatpush1.msra.mxu0 %v2007
      %4078 = vmatprep.subr.mxu0 %v2024
      %4079 = vmatpush1.msra.mxu0 %v2023
      %4080 = vmatprep.subr.mxu0 0.0
      %4081 = vmatpush1.msra.mxu0 0.0
      %4082 = vmatprep.subr.mxu0 0.0
      %4083 = vmatpush1.msra.mxu0 0.0
      %4084 = vmatprep.subr.mxu0 0.0
      %4085 = vmatpush1.msra.mxu0 0.0
      %4086 = vmatprep.subr.mxu0 0.0
      %4087 = vmatpush1.msra.mxu0 0.0
      %4088 = vmatprep.subr.mxu0 0.0
      %4089 = vmatpush1.msra.mxu0 0.0
      %4090 = vmatprep.subr.mxu0 0.0
      %4091 = vmatpush1.msra.mxu0 0.0
      %4092 = vmatprep.subr.mxu0 0.0
      %4093 = vmatpush1.msra.mxu0 0.0
      %4094 = vmatprep.subr.mxu0 0.0
      %4095 = vmatpush1.msra.mxu0 0.0
      %4096 = vmatprep.subr.mxu0 0.0
      %4097 = vmatpush1.msra.mxu0 0.0
      %4098 = vmatprep.subr.mxu0 0.0
      %4099 = vmatpush1.msra.mxu0 0.0
      %4100 = vmatprep.subr.mxu0 0.0
      %4101 = vmatpush1.msra.mxu0 0.0
      %4102 = vmatprep.subr.mxu0 0.0
      %4103 = vmatpush1.msra.mxu0 0.0
      %4104 = vmatprep.subr.mxu0 0.0
      %4105 = vmatpush1.msra.mxu0 0.0
      %4106 = vmatprep.subr.mxu0 0.0
      %4107 = vmatpush1.msra.mxu0 0.0
      %4108 = vmatprep.subr.mxu0 0.0
      %4109 = vmatpush1.msra.mxu0 0.0
      %4110 = vmatprep.subr.mxu0 0.0
      %4111 = vmatpush1.msra.mxu0 0.0
      %4112 = vmatprep.mubr.f32.mxu0 0.0
      %4113 = vmatmul.mubr.f32.gmra.mrb[0].mxu0 %v2025
      %v4114 = vpop.f32.mrb[0].mxu0
      %v4115 = vadd.f32 %v2092, %v4114
      %v4116 = vpop.f32.mrb[0].mxu0
      %v4117 = vadd.f32 %v2092, %v4116
      %4118 = vmatprep.mubr.f32.mxu0 0.0
      %4119 = vmatmul.mubr.f32.gmra.mrb[0].mxu0 %v2026
      %v4120 = vpop.f32.mrb[0].mxu0
      %v4121 = vadd.f32 %v2097, %v4120
      %v4122 = vpop.f32.mrb[0].mxu0
      %v4123 = vadd.f32 %v2097, %v4122
      %4124 = vmatprep.mubr.f32.mxu0 0.0
      %4125 = vmatmul.mubr.f32.gmra.mrb[0].mxu0 %v2027
      %v4126 = vpop.f32.mrb[0].mxu0
      %v4127 = vadd.f32 %v2102, %v4126
      %v4128 = vpop.f32.mrb[0].mxu0
      %v4129 = vadd.f32 %v2102, %v4128
      %4130 = vmatprep.mubr.f32.mxu0 0.0
      %4131 = vmatmul.mubr.f32.gmra.mrb[0].mxu0 %v2028
      %v4132 = vpop.f32.mrb[0].mxu0
      %v4133 = vadd.f32 %v2107, %v4132
      %v4134 = vpop.f32.mrb[0].mxu0
      %v4135 = vadd.f32 %v2107, %v4134
      %4136 = vmatprep.mubr.f32.mxu0 0.0
      %4137 = vmatmul.mubr.f32.gmra.mrb[0].mxu0 %v2029
      %v4138 = vpop.f32.mrb[0].mxu0
      %v4139 = vadd.f32 %v2112, %v4138
      %v4140 = vpop.f32.mrb[0].mxu0
      %v4141 = vadd.f32 %v2112, %v4140
      %4142 = vmatprep.mubr.f32.mxu0 0.0
      %4143 = vmatmul.mubr.f32.gmra.mrb[0].mxu0 %v2030
      %v4144 = vpop.f32.mrb[0].mxu0
      %v4145 = vadd.f32 %v2117, %v4144
      %v4146 = vpop.f32.mrb[0].mxu0
      %v4147 = vadd.f32 %v2117, %v4146
      %4148 = vmatprep.mubr.f32.mxu0 0.0
      %4149 = vmatmul.mubr.f32.gmra.mrb[0].mxu0 %v2031
      %v4150 = vpop.f32.mrb[0].mxu0
      %v4151 = vadd.f32 %v2122, %v4150
      %v4152 = vpop.f32.mrb[0].mxu0
      %v4153 = vadd.f32 %v2122, %v4152
      %4154 = vmatprep.mubr.f32.mxu0 0.0
      %4155 = vmatmul.mubr.f32.gmra.mrb[0].mxu0 %v2032
      %v4156 = vpop.f32.mrb[0].mxu0
      %v4157 = vadd.f32 %v2127, %v4156
      %v4158 = vpop.f32.mrb[0].mxu0
      %v4159 = vadd.f32 %v2127, %v4158
      %4160 = vmatprep.mubr.f32.mxu0 0.0
      %4161 = vmatmul.mubr.f32.gmra.mrb[0].mxu0 %v2033
      %v4162 = vpop.f32.mrb[0].mxu0
      %v4163 = vadd.f32 %v2132, %v4162
      %v4164 = vpop.f32.mrb[0].mxu0
      %v4165 = vadd.f32 %v2132, %v4164
      %4166 = vmatprep.mubr.f32.mxu0 0.0
      %4167 = vmatmul.mubr.f32.gmra.mrb[0].mxu0 %v2034
      %v4168 = vpop.f32.mrb[0].mxu0
      %v4169 = vadd.f32 %v2137, %v4168
      %v4170 = vpop.f32.mrb[0].mxu0
      %v4171 = vadd.f32 %v2137, %v4170
      %4172 = vmatprep.mubr.f32.mxu0 0.0
      %4173 = vmatmul.mubr.f32.gmra.mrb[0].mxu0 %v2035
      %v4174 = vpop.f32.mrb[0].mxu0
      %v4175 = vadd.f32 %v2142, %v4174
      %v4176 = vpop.f32.mrb[0].mxu0
      %v4177 = vadd.f32 %v2142, %v4176
      %4178 = vmatprep.mubr.f32.mxu0 0.0
      %4179 = vmatmul.mubr.f32.gmra.mrb[0].mxu0 %v2036
      %v4180 = vpop.f32.mrb[0].mxu0
      %v4181 = vadd.f32 %v2147, %v4180
      %v4182 = vpop.f32.mrb[0].mxu0
      %v4183 = vadd.f32 %v2147, %v4182
      %4184 = vmatprep.mubr.f32.mxu0 0.0
      %4185 = vmatmul.mubr.f32.gmra.mrb[0].mxu0 %v2037
      %v4186 = vpop.f32.mrb[0].mxu0
      %v4187 = vadd.f32 %v2152, %v4186
      %v4188 = vpop.f32.mrb[0].mxu0
      %v4189 = vadd.f32 %v2152, %v4188
      %4190 = vmatprep.mubr.f32.mxu0 0.0
      %4191 = vmatmul.mubr.f32.gmra.mrb[0].mxu0 %v2038
      %v4192 = vpop.f32.mrb[0].mxu0
      %v4193 = vadd.f32 %v2157, %v4192
      %v4194 = vpop.f32.mrb[0].mxu0
      %v4195 = vadd.f32 %v2157, %v4194
      %4196 = vmatprep.mubr.f32.mxu0 0.0
      %4197 = vmatmul.mubr.f32.gmra.mrb[0].mxu0 %v2039
      %v4198 = vpop.f32.mrb[0].mxu0
      %v4199 = vadd.f32 %v2162, %v4198
      %v4200 = vpop.f32.mrb[0].mxu0
      %v4201 = vadd.f32 %v2162, %v4200
      %4202 = vmatprep.mubr.f32.mxu0 0.0
      %4203 = vmatmul.mubr.f32.gmra.mrb[0].mxu0 %v2040
      %v4204 = vpop.f32.mrb[0].mxu0
      %v4205 = vadd.f32 %v2167, %v4204
      %v4206 = vpop.f32.mrb[0].mxu0
      %v4207 = vadd.f32 %v2167, %v4206
      %4208 = vmatprep.mubr.f32.mxu0 0.0
      %4209 = vmatmul.mubr.f32.gmra.mrb[0].mxu0 %v2041
      %v4210 = vpop.f32.mrb[0].mxu0
      %v4211 = vadd.f32 %v2172, %v4210
      %v4212 = vpop.f32.mrb[0].mxu0
      %v4213 = vadd.f32 %v2172, %v4212
      %4214 = vmatprep.mubr.f32.mxu0 0.0
      %4215 = vmatmul.mubr.f32.gmra.mrb[0].mxu0 %v2042
      %v4216 = vpop.f32.mrb[0].mxu0
      %v4217 = vadd.f32 %v2177, %v4216
      %v4218 = vpop.f32.mrb[0].mxu0
      %v4219 = vadd.f32 %v2177, %v4218
      %4220 = vmatprep.mubr.f32.mxu0 0.0
      %4221 = vmatmul.mubr.f32.gmra.mrb[0].mxu0 %v2043
      %v4222 = vpop.f32.mrb[0].mxu0
      %v4223 = vadd.f32 %v2182, %v4222
      %v4224 = vpop.f32.mrb[0].mxu0
      %v4225 = vadd.f32 %v2182, %v4224
      %4226 = vmatprep.mubr.f32.mxu0 0.0
      %4227 = vmatmul.mubr.f32.gmra.mrb[0].mxu0 %v2044
      %v4228 = vpop.f32.mrb[0].mxu0
      %v4229 = vadd.f32 %v2187, %v4228
      %v4230 = vpop.f32.mrb[0].mxu0
      %v4231 = vadd.f32 %v2187, %v4230
      %4232 = vmatprep.mubr.f32.mxu0 0.0
      %4233 = vmatmul.mubr.f32.gmra.mrb[0].mxu0 %v2045
      %v4234 = vpop.f32.mrb[0].mxu0
      %v4235 = vadd.f32 %v2192, %v4234
      %v4236 = vpop.f32.mrb[0].mxu0
      %v4237 = vadd.f32 %v2192, %v4236
      %4238 = vmatprep.mubr.f32.mxu0 0.0
      %4239 = vmatmul.mubr.f32.gmra.mrb[0].mxu0 %v2046
      %v4240 = vpop.f32.mrb[0].mxu0
      %v4241 = vadd.f32 %v2197, %v4240
      %v4242 = vpop.f32.mrb[0].mxu0
      %v4243 = vadd.f32 %v2197, %v4242
      %4244 = vmatprep.mubr.f32.mxu0 0.0
      %4245 = vmatmul.mubr.f32.gmra.mrb[0].mxu0 %v2047
      %v4246 = vpop.f32.mrb[0].mxu0
      %v4247 = vadd.f32 %v2202, %v4246
      %v4248 = vpop.f32.mrb[0].mxu0
      %v4249 = vadd.f32 %v2202, %v4248
      %4250 = vmatprep.mubr.f32.mxu0 0.0
      %4251 = vmatmul.mubr.f32.gmra.mrb[0].mxu0 %v2048
      %v4252 = vpop.f32.mrb[0].mxu0
      %v4253 = vadd.f32 %v2207, %v4252
      %v4254 = vpop.f32.mrb[0].mxu0
      %v4255 = vadd.f32 %v2207, %v4254
      %4256 = vmatprep.mubr.f32.mxu0 0.0
      %4257 = vmatmul.mubr.f32.gmra.mrb[0].mxu0 %v2049
      %v4258 = vpop.f32.mrb[0].mxu0
      %v4259 = vadd.f32 %v2212, %v4258
      %v4260 = vpop.f32.mrb[0].mxu0
      %v4261 = vadd.f32 %v2212, %v4260
      %4262 = vmatprep.mubr.f32.mxu0 0.0
      %4263 = vmatmul.mubr.f32.gmra.mrb[0].mxu0 %v2050
      %v4264 = vpop.f32.mrb[0].mxu0
      %v4265 = vadd.f32 %v2217, %v4264
      %v4266 = vpop.f32.mrb[0].mxu0
      %v4267 = vadd.f32 %v2217, %v4266
      %4268 = vmatprep.mubr.f32.mxu0 0.0
      %4269 = vmatmul.mubr.f32.gmra.mrb[0].mxu0 %v2051
      %v4270 = vpop.f32.mrb[0].mxu0
      %v4271 = vadd.f32 %v2222, %v4270
      %v4272 = vpop.f32.mrb[0].mxu0
      %v4273 = vadd.f32 %v2222, %v4272
      %4274 = vmatprep.mubr.f32.mxu0 0.0
      %4275 = vmatmul.mubr.f32.gmra.mrb[0].mxu0 %v2052
      %v4276 = vpop.f32.mrb[0].mxu0
      %v4277 = vadd.f32 %v2227, %v4276
      %v4278 = vpop.f32.mrb[0].mxu0
      %v4279 = vadd.f32 %v2227, %v4278
      %4280 = vmatprep.mubr.f32.mxu0 0.0
      %4281 = vmatmul.mubr.f32.gmra.mrb[0].mxu0 %v2053
      %v4282 = vpop.f32.mrb[0].mxu0
      %v4283 = vadd.f32 %v2232, %v4282
      %v4284 = vpop.f32.mrb[0].mxu0
      %v4285 = vadd.f32 %v2232, %v4284
      %4286 = vmatprep.mubr.f32.mxu0 0.0
      %4287 = vmatmul.mubr.f32.gmra.mrb[0].mxu0 %v2054
      %v4288 = vpop.f32.mrb[0].mxu0
      %v4289 = vadd.f32 %v2237, %v4288
      %v4290 = vpop.f32.mrb[0].mxu0
      %v4291 = vadd.f32 %v2237, %v4290
      %4292 = vmatprep.mubr.f32.mxu0 0.0
      %4293 = vmatmul.mubr.f32.gmra.mrb[0].mxu0 %v2055
      %v4294 = vpop.f32.mrb[0].mxu0
      %v4295 = vadd.f32 %v2242, %v4294
      %v4296 = vpop.f32.mrb[0].mxu0
      %v4297 = vadd.f32 %v2242, %v4296
      %4298 = vmatprep.mubr.f32.mxu0 0.0
      %4299 = vmatmul.mubr.f32.gmra.mrb[0].mxu0 %v2056
      %v4300 = vpop.f32.mrb[0].mxu0
      %v4301 = vadd.f32 %v2247, %v4300
      %v4302 = vpop.f32.mrb[0].mxu0
      %v4303 = vadd.f32 %v2247, %v4302
      %4304 = vdwg.mxu0
      %v4305 = vmul.f32 %v2316, 0.5
      %v4306 = vmul.f32 %v2318, 0.5
      %v4307 = vmul.f32 %v2573, 0.5
      %v4308 = vmul.f32 %v2575, 0.5
      %v4309 = vmul.f32 %v2830, 0.5
      %v4310 = vmul.f32 %v2832, 0.5
      %v4311 = vmul.f32 %v3087, 0.5
      %v4312 = vmul.f32 %v3089, 0.5
      %v4313 = vmul.f32 %v3344, 0.5
      %v4314 = vmul.f32 %v3346, 0.5
      %v4315 = vmul.f32 %v3601, 0.5
      %v4316 = vmul.f32 %v3603, 0.5
      %v4317 = vmul.f32 %v3858, 0.5
      %v4318 = vmul.f32 %v3860, 0.5
      %v4319 = vmul.f32 %v4115, 0.5
      %v4320 = vmul.f32 %v4117, 0.5
      %v4321 = vmul.f32 %v2322, 0.5
      %v4322 = vmul.f32 %v2324, 0.5
      %v4323 = vmul.f32 %v2579, 0.5
      %v4324 = vmul.f32 %v2581, 0.5
      %v4325 = vmul.f32 %v2836, 0.5
      %v4326 = vmul.f32 %v2838, 0.5
      %v4327 = vmul.f32 %v3093, 0.5
      %v4328 = vmul.f32 %v3095, 0.5
      %v4329 = vmul.f32 %v3350, 0.5
      %v4330 = vmul.f32 %v3352, 0.5
      %v4331 = vmul.f32 %v3607, 0.5
      %v4332 = vmul.f32 %v3609, 0.5
      %v4333 = vmul.f32 %v3864, 0.5
      %v4334 = vmul.f32 %v3866, 0.5
      %v4335 = vmul.f32 %v4121, 0.5
      %v4336 = vmul.f32 %v4123, 0.5
      %v4337 = vmul.f32 %v2328, 0.5
      %v4338 = vmul.f32 %v2330, 0.5
      %v4339 = vmul.f32 %v2585, 0.5
      %v4340 = vmul.f32 %v2587, 0.5
      %v4341 = vmul.f32 %v2842, 0.5
      %v4342 = vmul.f32 %v2844, 0.5
      %v4343 = vmul.f32 %v3099, 0.5
      %v4344 = vmul.f32 %v3101, 0.5
      %v4345 = vmul.f32 %v3356, 0.5
      %v4346 = vmul.f32 %v3358, 0.5
      %v4347 = vmul.f32 %v3613, 0.5
      %v4348 = vmul.f32 %v3615, 0.5
      %v4349 = vmul.f32 %v3870, 0.5
      %v4350 = vmul.f32 %v3872, 0.5
      %v4351 = vmul.f32 %v4127, 0.5
      %v4352 = vmul.f32 %v4129, 0.5
      %v4353 = vmul.f32 %v2334, 0.5
      %v4354 = vmul.f32 %v2336, 0.5
      %v4355 = vmul.f32 %v2591, 0.5
      %v4356 = vmul.f32 %v2593, 0.5
      %v4357 = vmul.f32 %v2848, 0.5
      %v4358 = vmul.f32 %v2850, 0.5
      %v4359 = vmul.f32 %v3105, 0.5
      %v4360 = vmul.f32 %v3107, 0.5
      %v4361 = vmul.f32 %v3362, 0.5
      %v4362 = vmul.f32 %v3364, 0.5
      %v4363 = vmul.f32 %v3619, 0.5
      %v4364 = vmul.f32 %v3621, 0.5
      %v4365 = vmul.f32 %v3876, 0.5
      %v4366 = vmul.f32 %v3878, 0.5
      %v4367 = vmul.f32 %v4133, 0.5
      %v4368 = vmul.f32 %v4135, 0.5
      %v4369 = vmul.f32 %v2340, 0.5
      %v4370 = vmul.f32 %v2342, 0.5
      %v4371 = vmul.f32 %v2597, 0.5
      %v4372 = vmul.f32 %v2599, 0.5
      %v4373 = vmul.f32 %v2854, 0.5
      %v4374 = vmul.f32 %v2856, 0.5
      %v4375 = vmul.f32 %v3111, 0.5
      %v4376 = vmul.f32 %v3113, 0.5
      %v4377 = vmul.f32 %v3368, 0.5
      %v4378 = vmul.f32 %v3370, 0.5
      %v4379 = vmul.f32 %v3625, 0.5
      %v4380 = vmul.f32 %v3627, 0.5
      %v4381 = vmul.f32 %v3882, 0.5
      %v4382 = vmul.f32 %v3884, 0.5
      %v4383 = vmul.f32 %v4139, 0.5
      %v4384 = vmul.f32 %v4141, 0.5
      %v4385 = vmul.f32 %v2346, 0.5
      %v4386 = vmul.f32 %v2348, 0.5
      %v4387 = vmul.f32 %v2603, 0.5
      %v4388 = vmul.f32 %v2605, 0.5
      %v4389 = vmul.f32 %v2860, 0.5
      %v4390 = vmul.f32 %v2862, 0.5
      %v4391 = vmul.f32 %v3117, 0.5
      %v4392 = vmul.f32 %v3119, 0.5
      %v4393 = vmul.f32 %v3374, 0.5
      %v4394 = vmul.f32 %v3376, 0.5
      %v4395 = vmul.f32 %v3631, 0.5
      %v4396 = vmul.f32 %v3633, 0.5
      %v4397 = vmul.f32 %v3888, 0.5
      %v4398 = vmul.f32 %v3890, 0.5
      %v4399 = vmul.f32 %v4145, 0.5
      %v4400 = vmul.f32 %v4147, 0.5
      %v4401 = vmul.f32 %v2352, 0.5
      %v4402 = vmul.f32 %v2354, 0.5
      %v4403 = vmul.f32 %v2609, 0.5
      %v4404 = vmul.f32 %v2611, 0.5
      %v4405 = vmul.f32 %v2866, 0.5
      %v4406 = vmul.f32 %v2868, 0.5
      %v4407 = vmul.f32 %v3123, 0.5
      %v4408 = vmul.f32 %v3125, 0.5
      %v4409 = vmul.f32 %v3380, 0.5
      %v4410 = vmul.f32 %v3382, 0.5
      %v4411 = vmul.f32 %v3637, 0.5
      %v4412 = vmul.f32 %v3639, 0.5
      %v4413 = vmul.f32 %v3894, 0.5
      %v4414 = vmul.f32 %v3896, 0.5
      %v4415 = vmul.f32 %v4151, 0.5
      %v4416 = vmul.f32 %v4153, 0.5
      %v4417 = vmul.f32 %v2358, 0.5
      %v4418 = vmul.f32 %v2360, 0.5
      %v4419 = vmul.f32 %v2615, 0.5
      %v4420 = vmul.f32 %v2617, 0.5
      %v4421 = vmul.f32 %v2872, 0.5
      %v4422 = vmul.f32 %v2874, 0.5
      %v4423 = vmul.f32 %v3129, 0.5
      %v4424 = vmul.f32 %v3131, 0.5
      %v4425 = vmul.f32 %v3386, 0.5
      %v4426 = vmul.f32 %v3388, 0.5
      %v4427 = vmul.f32 %v3643, 0.5
      %v4428 = vmul.f32 %v3645, 0.5
      %v4429 = vmul.f32 %v3900, 0.5
      %v4430 = vmul.f32 %v3902, 0.5
      %v4431 = vmul.f32 %v4157, 0.5
      %v4432 = vmul.f32 %v4159, 0.5
      %v4433 = vmul.f32 %v2364, 0.5
      %v4434 = vmul.f32 %v2366, 0.5
      %v4435 = vmul.f32 %v2621, 0.5
      %v4436 = vmul.f32 %v2623, 0.5
      %v4437 = vmul.f32 %v2878, 0.5
      %v4438 = vmul.f32 %v2880, 0.5
      %v4439 = vmul.f32 %v3135, 0.5
      %v4440 = vmul.f32 %v3137, 0.5
      %v4441 = vmul.f32 %v3392, 0.5
      %v4442 = vmul.f32 %v3394, 0.5
      %v4443 = vmul.f32 %v3649, 0.5
      %v4444 = vmul.f32 %v3651, 0.5
      %v4445 = vmul.f32 %v3906, 0.5
      %v4446 = vmul.f32 %v3908, 0.5
      %v4447 = vmul.f32 %v4163, 0.5
      %v4448 = vmul.f32 %v4165, 0.5
      %v4449 = vmul.f32 %v2370, 0.5
      %v4450 = vmul.f32 %v2372, 0.5
      %v4451 = vmul.f32 %v2627, 0.5
      %v4452 = vmul.f32 %v2629, 0.5
      %v4453 = vmul.f32 %v2884, 0.5
      %v4454 = vmul.f32 %v2886, 0.5
      %v4455 = vmul.f32 %v3141, 0.5
      %v4456 = vmul.f32 %v3143, 0.5
      %v4457 = vmul.f32 %v3398, 0.5
      %v4458 = vmul.f32 %v3400, 0.5
      %v4459 = vmul.f32 %v3655, 0.5
      %v4460 = vmul.f32 %v3657, 0.5
      %v4461 = vmul.f32 %v3912, 0.5
      %v4462 = vmul.f32 %v3914, 0.5
      %v4463 = vmul.f32 %v4169, 0.5
      %v4464 = vmul.f32 %v4171, 0.5
      %v4465 = vmul.f32 %v2376, 0.5
      %v4466 = vmul.f32 %v2378, 0.5
      %v4467 = vmul.f32 %v2633, 0.5
      %v4468 = vmul.f32 %v2635, 0.5
      %v4469 = vmul.f32 %v2890, 0.5
      %v4470 = vmul.f32 %v2892, 0.5
      %v4471 = vmul.f32 %v3147, 0.5
      %v4472 = vmul.f32 %v3149, 0.5
      %v4473 = vmul.f32 %v3404, 0.5
      %v4474 = vmul.f32 %v3406, 0.5
      %v4475 = vmul.f32 %v3661, 0.5
      %v4476 = vmul.f32 %v3663, 0.5
      %v4477 = vmul.f32 %v3918, 0.5
      %v4478 = vmul.f32 %v3920, 0.5
      %v4479 = vmul.f32 %v4175, 0.5
      %v4480 = vmul.f32 %v4177, 0.5
      %v4481 = vmul.f32 %v2382, 0.5
      %v4482 = vmul.f32 %v2384, 0.5
      %v4483 = vmul.f32 %v2639, 0.5
      %v4484 = vmul.f32 %v2641, 0.5
      %v4485 = vmul.f32 %v2896, 0.5
      %v4486 = vmul.f32 %v2898, 0.5
      %v4487 = vmul.f32 %v3153, 0.5
      %v4488 = vmul.f32 %v3155, 0.5
      %v4489 = vmul.f32 %v3410, 0.5
      %v4490 = vmul.f32 %v3412, 0.5
      %v4491 = vmul.f32 %v3667, 0.5
      %v4492 = vmul.f32 %v3669, 0.5
      %v4493 = vmul.f32 %v3924, 0.5
      %v4494 = vmul.f32 %v3926, 0.5
      %v4495 = vmul.f32 %v4181, 0.5
      %v4496 = vmul.f32 %v4183, 0.5
      %v4497 = vmul.f32 %v2388, 0.5
      %v4498 = vmul.f32 %v2390, 0.5
      %v4499 = vmul.f32 %v2645, 0.5
      %v4500 = vmul.f32 %v2647, 0.5
      %v4501 = vmul.f32 %v2902, 0.5
      %v4502 = vmul.f32 %v2904, 0.5
      %v4503 = vmul.f32 %v3159, 0.5
      %v4504 = vmul.f32 %v3161, 0.5
      %v4505 = vmul.f32 %v3416, 0.5
      %v4506 = vmul.f32 %v3418, 0.5
      %v4507 = vmul.f32 %v3673, 0.5
      %v4508 = vmul.f32 %v3675, 0.5
      %v4509 = vmul.f32 %v3930, 0.5
      %v4510 = vmul.f32 %v3932, 0.5
      %v4511 = vmul.f32 %v4187, 0.5
      %v4512 = vmul.f32 %v4189, 0.5
      %v4513 = vmul.f32 %v2394, 0.5
      %v4514 = vmul.f32 %v2396, 0.5
      %v4515 = vmul.f32 %v2651, 0.5
      %v4516 = vmul.f32 %v2653, 0.5
      %v4517 = vmul.f32 %v2908, 0.5
      %v4518 = vmul.f32 %v2910, 0.5
      %v4519 = vmul.f32 %v3165, 0.5
      %v4520 = vmul.f32 %v3167, 0.5
      %v4521 = vmul.f32 %v3422, 0.5
      %v4522 = vmul.f32 %v3424, 0.5
      %v4523 = vmul.f32 %v3679, 0.5
      %v4524 = vmul.f32 %v3681, 0.5
      %v4525 = vmul.f32 %v3936, 0.5
      %v4526 = vmul.f32 %v3938, 0.5
      %v4527 = vmul.f32 %v4193, 0.5
      %v4528 = vmul.f32 %v4195, 0.5
      %v4529 = vmul.f32 %v2400, 0.5
      %v4530 = vmul.f32 %v2402, 0.5
      %v4531 = vmul.f32 %v2657, 0.5
      %v4532 = vmul.f32 %v2659, 0.5
      %v4533 = vmul.f32 %v2914, 0.5
      %v4534 = vmul.f32 %v2916, 0.5
      %v4535 = vmul.f32 %v3171, 0.5
      %v4536 = vmul.f32 %v3173, 0.5
      %v4537 = vmul.f32 %v3428, 0.5
      %v4538 = vmul.f32 %v3430, 0.5
      %v4539 = vmul.f32 %v3685, 0.5
      %v4540 = vmul.f32 %v3687, 0.5
      %v4541 = vmul.f32 %v3942, 0.5
      %v4542 = vmul.f32 %v3944, 0.5
      %v4543 = vmul.f32 %v4199, 0.5
      %v4544 = vmul.f32 %v4201, 0.5
      %v4545 = vmul.f32 %v2406, 0.5
      %v4546 = vmul.f32 %v2408, 0.5
      %v4547 = vmul.f32 %v2663, 0.5
      %v4548 = vmul.f32 %v2665, 0.5
      %v4549 = vmul.f32 %v2920, 0.5
      %v4550 = vmul.f32 %v2922, 0.5
      %v4551 = vmul.f32 %v3177, 0.5
      %v4552 = vmul.f32 %v3179, 0.5
      %v4553 = vmul.f32 %v3434, 0.5
      %v4554 = vmul.f32 %v3436, 0.5
      %v4555 = vmul.f32 %v3691, 0.5
      %v4556 = vmul.f32 %v3693, 0.5
      %v4557 = vmul.f32 %v3948, 0.5
      %v4558 = vmul.f32 %v3950, 0.5
      %v4559 = vmul.f32 %v4205, 0.5
      %v4560 = vmul.f32 %v4207, 0.5
      %v4561 = vmul.f32 %v2412, 0.5
      %v4562 = vmul.f32 %v2414, 0.5
      %v4563 = vmul.f32 %v2669, 0.5
      %v4564 = vmul.f32 %v2671, 0.5
      %v4565 = vmul.f32 %v2926, 0.5
      %v4566 = vmul.f32 %v2928, 0.5
      %v4567 = vmul.f32 %v3183, 0.5
      %v4568 = vmul.f32 %v3185, 0.5
      %v4569 = vmul.f32 %v3440, 0.5
      %v4570 = vmul.f32 %v3442, 0.5
      %v4571 = vmul.f32 %v3697, 0.5
      %v4572 = vmul.f32 %v3699, 0.5
      %v4573 = vmul.f32 %v3954, 0.5
      %v4574 = vmul.f32 %v3956, 0.5
      %v4575 = vmul.f32 %v4211, 0.5
      %v4576 = vmul.f32 %v4213, 0.5
      %v4577 = vmul.f32 %v2418, 0.5
      %v4578 = vmul.f32 %v2420, 0.5
      %v4579 = vmul.f32 %v2675, 0.5
      %v4580 = vmul.f32 %v2677, 0.5
      %v4581 = vmul.f32 %v2932, 0.5
      %v4582 = vmul.f32 %v2934, 0.5
      %v4583 = vmul.f32 %v3189, 0.5
      %v4584 = vmul.f32 %v3191, 0.5
      %v4585 = vmul.f32 %v3446, 0.5
      %v4586 = vmul.f32 %v3448, 0.5
      %v4587 = vmul.f32 %v3703, 0.5
      %v4588 = vmul.f32 %v3705, 0.5
      %v4589 = vmul.f32 %v3960, 0.5
      %v4590 = vmul.f32 %v3962, 0.5
      %v4591 = vmul.f32 %v4217, 0.5
      %v4592 = vmul.f32 %v4219, 0.5
      %v4593 = vmul.f32 %v2424, 0.5
      %v4594 = vmul.f32 %v2426, 0.5
      %v4595 = vmul.f32 %v2681, 0.5
      %v4596 = vmul.f32 %v2683, 0.5
      %v4597 = vmul.f32 %v2938, 0.5
      %v4598 = vmul.f32 %v2940, 0.5
      %v4599 = vmul.f32 %v3195, 0.5
      %v4600 = vmul.f32 %v3197, 0.5
      %v4601 = vmul.f32 %v3452, 0.5
      %v4602 = vmul.f32 %v3454, 0.5
      %v4603 = vmul.f32 %v3709, 0.5
      %v4604 = vmul.f32 %v3711, 0.5
      %v4605 = vmul.f32 %v3966, 0.5
      %v4606 = vmul.f32 %v3968, 0.5
      %v4607 = vmul.f32 %v4223, 0.5
      %v4608 = vmul.f32 %v4225, 0.5
      %v4609 = vmul.f32 %v2430, 0.5
      %v4610 = vmul.f32 %v2432, 0.5
      %v4611 = vmul.f32 %v2687, 0.5
      %v4612 = vmul.f32 %v2689, 0.5
      %v4613 = vmul.f32 %v2944, 0.5
      %v4614 = vmul.f32 %v2946, 0.5
      %v4615 = vmul.f32 %v3201, 0.5
      %v4616 = vmul.f32 %v3203, 0.5
      %v4617 = vmul.f32 %v3458, 0.5
      %v4618 = vmul.f32 %v3460, 0.5
      %v4619 = vmul.f32 %v3715, 0.5
      %v4620 = vmul.f32 %v3717, 0.5
      %v4621 = vmul.f32 %v3972, 0.5
      %v4622 = vmul.f32 %v3974, 0.5
      %v4623 = vmul.f32 %v4229, 0.5
      %v4624 = vmul.f32 %v4231, 0.5
      %v4625 = vmul.f32 %v2436, 0.5
      %v4626 = vmul.f32 %v2438, 0.5
      %v4627 = vmul.f32 %v2693, 0.5
      %v4628 = vmul.f32 %v2695, 0.5
      %v4629 = vmul.f32 %v2950, 0.5
      %v4630 = vmul.f32 %v2952, 0.5
      %v4631 = vmul.f32 %v3207, 0.5
      %v4632 = vmul.f32 %v3209, 0.5
      %v4633 = vmul.f32 %v3464, 0.5
      %v4634 = vmul.f32 %v3466, 0.5
      %v4635 = vmul.f32 %v3721, 0.5
      %v4636 = vmul.f32 %v3723, 0.5
      %v4637 = vmul.f32 %v3978, 0.5
      %v4638 = vmul.f32 %v3980, 0.5
      %v4639 = vmul.f32 %v4235, 0.5
      %v4640 = vmul.f32 %v4237, 0.5
      %v4641 = vmul.f32 %v2442, 0.5
      %v4642 = vmul.f32 %v2444, 0.5
      %v4643 = vmul.f32 %v2699, 0.5
      %v4644 = vmul.f32 %v2701, 0.5
      %v4645 = vmul.f32 %v2956, 0.5
      %v4646 = vmul.f32 %v2958, 0.5
      %v4647 = vmul.f32 %v3213, 0.5
      %v4648 = vmul.f32 %v3215, 0.5
      %v4649 = vmul.f32 %v3470, 0.5
      %v4650 = vmul.f32 %v3472, 0.5
      %v4651 = vmul.f32 %v3727, 0.5
      %v4652 = vmul.f32 %v3729, 0.5
      %v4653 = vmul.f32 %v3984, 0.5
      %v4654 = vmul.f32 %v3986, 0.5
      %v4655 = vmul.f32 %v4241, 0.5
      %v4656 = vmul.f32 %v4243, 0.5
      %v4657 = vmul.f32 %v2448, 0.5
      %v4658 = vmul.f32 %v2450, 0.5
      %v4659 = vmul.f32 %v2705, 0.5
      %v4660 = vmul.f32 %v2707, 0.5
      %v4661 = vmul.f32 %v2962, 0.5
      %v4662 = vmul.f32 %v2964, 0.5
      %v4663 = vmul.f32 %v3219, 0.5
      %v4664 = vmul.f32 %v3221, 0.5
      %v4665 = vmul.f32 %v3476, 0.5
      %v4666 = vmul.f32 %v3478, 0.5
      %v4667 = vmul.f32 %v3733, 0.5
      %v4668 = vmul.f32 %v3735, 0.5
      %v4669 = vmul.f32 %v3990, 0.5
      %v4670 = vmul.f32 %v3992, 0.5
      %v4671 = vmul.f32 %v4247, 0.5
      %v4672 = vmul.f32 %v4249, 0.5
      %v4673 = vmul.f32 %v2454, 0.5
      %v4674 = vmul.f32 %v2456, 0.5
      %v4675 = vmul.f32 %v2711, 0.5
      %v4676 = vmul.f32 %v2713, 0.5
      %v4677 = vmul.f32 %v2968, 0.5
      %v4678 = vmul.f32 %v2970, 0.5
      %v4679 = vmul.f32 %v3225, 0.5
      %v4680 = vmul.f32 %v3227, 0.5
      %v4681 = vmul.f32 %v3482, 0.5
      %v4682 = vmul.f32 %v3484, 0.5
      %v4683 = vmul.f32 %v3739, 0.5
      %v4684 = vmul.f32 %v3741, 0.5
      %v4685 = vmul.f32 %v3996, 0.5
      %v4686 = vmul.f32 %v3998, 0.5
      %v4687 = vmul.f32 %v4253, 0.5
      %v4688 = vmul.f32 %v4255, 0.5
      %v4689 = vmul.f32 %v2460, 0.5
      %v4690 = vmul.f32 %v2462, 0.5
      %v4691 = vmul.f32 %v2717, 0.5
      %v4692 = vmul.f32 %v2719, 0.5
      %v4693 = vmul.f32 %v2974, 0.5
      %v4694 = vmul.f32 %v2976, 0.5
      %v4695 = vmul.f32 %v3231, 0.5
      %v4696 = vmul.f32 %v3233, 0.5
      %v4697 = vmul.f32 %v3488, 0.5
      %v4698 = vmul.f32 %v3490, 0.5
      %v4699 = vmul.f32 %v3745, 0.5
      %v4700 = vmul.f32 %v3747, 0.5
      %v4701 = vmul.f32 %v4002, 0.5
      %v4702 = vmul.f32 %v4004, 0.5
      %v4703 = vmul.f32 %v4259, 0.5
      %v4704 = vmul.f32 %v4261, 0.5
      %v4705 = vmul.f32 %v2466, 0.5
      %v4706 = vmul.f32 %v2468, 0.5
      %v4707 = vmul.f32 %v2723, 0.5
      %v4708 = vmul.f32 %v2725, 0.5
      %v4709 = vmul.f32 %v2980, 0.5
      %v4710 = vmul.f32 %v2982, 0.5
      %v4711 = vmul.f32 %v3237, 0.5
      %v4712 = vmul.f32 %v3239, 0.5
      %v4713 = vmul.f32 %v3494, 0.5
      %v4714 = vmul.f32 %v3496, 0.5
      %v4715 = vmul.f32 %v3751, 0.5
      %v4716 = vmul.f32 %v3753, 0.5
      %v4717 = vmul.f32 %v4008, 0.5
      %v4718 = vmul.f32 %v4010, 0.5
      %v4719 = vmul.f32 %v4265, 0.5
      %v4720 = vmul.f32 %v4267, 0.5
      %v4721 = vmul.f32 %v2472, 0.5
      %v4722 = vmul.f32 %v2474, 0.5
      %v4723 = vmul.f32 %v2729, 0.5
      %v4724 = vmul.f32 %v2731, 0.5
      %v4725 = vmul.f32 %v2986, 0.5
      %v4726 = vmul.f32 %v2988, 0.5
      %v4727 = vmul.f32 %v3243, 0.5
      %v4728 = vmul.f32 %v3245, 0.5
      %v4729 = vmul.f32 %v3500, 0.5
      %v4730 = vmul.f32 %v3502, 0.5
      %v4731 = vmul.f32 %v3757, 0.5
      %v4732 = vmul.f32 %v3759, 0.5
      %v4733 = vmul.f32 %v4014, 0.5
      %v4734 = vmul.f32 %v4016, 0.5
      %v4735 = vmul.f32 %v4271, 0.5
      %v4736 = vmul.f32 %v4273, 0.5
      %v4737 = vmul.f32 %v2478, 0.5
      %v4738 = vmul.f32 %v2480, 0.5
      %v4739 = vmul.f32 %v2735, 0.5
      %v4740 = vmul.f32 %v2737, 0.5
      %v4741 = vmul.f32 %v2992, 0.5
      %v4742 = vmul.f32 %v2994, 0.5
      %v4743 = vmul.f32 %v3249, 0.5
      %v4744 = vmul.f32 %v3251, 0.5
      %v4745 = vmul.f32 %v3506, 0.5
      %v4746 = vmul.f32 %v3508, 0.5
      %v4747 = vmul.f32 %v3763, 0.5
      %v4748 = vmul.f32 %v3765, 0.5
      %v4749 = vmul.f32 %v4020, 0.5
      %v4750 = vmul.f32 %v4022, 0.5
      %v4751 = vmul.f32 %v4277, 0.5
      %v4752 = vmul.f32 %v4279, 0.5
      %v4753 = vmul.f32 %v2484, 0.5
      %v4754 = vmul.f32 %v2486, 0.5
      %v4755 = vmul.f32 %v2741, 0.5
      %v4756 = vmul.f32 %v2743, 0.5
      %v4757 = vmul.f32 %v2998, 0.5
      %v4758 = vmul.f32 %v3000, 0.5
      %v4759 = vmul.f32 %v3255, 0.5
      %v4760 = vmul.f32 %v3257, 0.5
      %v4761 = vmul.f32 %v3512, 0.5
      %v4762 = vmul.f32 %v3514, 0.5
      %v4763 = vmul.f32 %v3769, 0.5
      %v4764 = vmul.f32 %v3771, 0.5
      %v4765 = vmul.f32 %v4026, 0.5
      %v4766 = vmul.f32 %v4028, 0.5
      %v4767 = vmul.f32 %v4283, 0.5
      %v4768 = vmul.f32 %v4285, 0.5
      %v4769 = vmul.f32 %v2490, 0.5
      %v4770 = vmul.f32 %v2492, 0.5
      %v4771 = vmul.f32 %v2747, 0.5
      %v4772 = vmul.f32 %v2749, 0.5
      %v4773 = vmul.f32 %v3004, 0.5
      %v4774 = vmul.f32 %v3006, 0.5
      %v4775 = vmul.f32 %v3261, 0.5
      %v4776 = vmul.f32 %v3263, 0.5
      %v4777 = vmul.f32 %v3518, 0.5
      %v4778 = vmul.f32 %v3520, 0.5
      %v4779 = vmul.f32 %v3775, 0.5
      %v4780 = vmul.f32 %v3777, 0.5
      %v4781 = vmul.f32 %v4032, 0.5
      %v4782 = vmul.f32 %v4034, 0.5
      %v4783 = vmul.f32 %v4289, 0.5
      %v4784 = vmul.f32 %v4291, 0.5
      %v4785 = vmul.f32 %v2496, 0.5
      %v4786 = vmul.f32 %v2498, 0.5
      %v4787 = vmul.f32 %v2753, 0.5
      %v4788 = vmul.f32 %v2755, 0.5
      %v4789 = vmul.f32 %v3010, 0.5
      %v4790 = vmul.f32 %v3012, 0.5
      %v4791 = vmul.f32 %v3267, 0.5
      %v4792 = vmul.f32 %v3269, 0.5
      %v4793 = vmul.f32 %v3524, 0.5
      %v4794 = vmul.f32 %v3526, 0.5
      %v4795 = vmul.f32 %v3781, 0.5
      %v4796 = vmul.f32 %v3783, 0.5
      %v4797 = vmul.f32 %v4038, 0.5
      %v4798 = vmul.f32 %v4040, 0.5
      %v4799 = vmul.f32 %v4295, 0.5
      %v4800 = vmul.f32 %v4297, 0.5
      %v4801 = vmul.f32 %v2502, 0.5
      %v4802 = vmul.f32 %v2504, 0.5
      %v4803 = vmul.f32 %v2759, 0.5
      %v4804 = vmul.f32 %v2761, 0.5
      %v4805 = vmul.f32 %v3016, 0.5
      %v4806 = vmul.f32 %v3018, 0.5
      %v4807 = vmul.f32 %v3273, 0.5
      %v4808 = vmul.f32 %v3275, 0.5
      %v4809 = vmul.f32 %v3530, 0.5
      %v4810 = vmul.f32 %v3532, 0.5
      %v4811 = vmul.f32 %v3787, 0.5
      %v4812 = vmul.f32 %v3789, 0.5
      %v4813 = vmul.f32 %v4044, 0.5
      %v4814 = vmul.f32 %v4046, 0.5
      %v4815 = vmul.f32 %v4301, 0.5
      %v4816 = vmul.f32 %v4303, 0.5
      %v4817 = vtanh.pop %v4305
      %v4818 = vtanh.pop %v4306
      %v4819 = vtanh.pop %v4307
      %v4820 = vtanh.pop %v4308
      %v4821 = vtanh.pop %v4309
      %v4822 = vtanh.pop %v4310
      %v4823 = vtanh.pop %v4311
      %v4824 = vtanh.pop %v4312
      %v4825 = vtanh.pop %v4313
      %v4826 = vtanh.pop %v4314
      %v4827 = vtanh.pop %v4315
      %v4828 = vtanh.pop %v4316
      %v4829 = vtanh.pop %v4317
      %v4830 = vtanh.pop %v4318
      %v4831 = vtanh.pop %v4319
      %v4832 = vtanh.pop %v4320
      %v4833 = vtanh.pop %v4321
      %v4834 = vtanh.pop %v4322
      %v4835 = vtanh.pop %v4323
      %v4836 = vtanh.pop %v4324
      %v4837 = vtanh.pop %v4325
      %v4838 = vtanh.pop %v4326
      %v4839 = vtanh.pop %v4327
      %v4840 = vtanh.pop %v4328
      %v4841 = vtanh.pop %v4329
      %v4842 = vtanh.pop %v4330
      %v4843 = vtanh.pop %v4331
      %v4844 = vtanh.pop %v4332
      %v4845 = vtanh.pop %v4333
      %v4846 = vtanh.pop %v4334
      %v4847 = vtanh.pop %v4335
      %v4848 = vtanh.pop %v4336
      %v4849 = vtanh.pop %v4337
      %v4850 = vtanh.pop %v4338
      %v4851 = vtanh.pop %v4339
      %v4852 = vtanh.pop %v4340
      %v4853 = vtanh.pop %v4341
      %v4854 = vtanh.pop %v4342
      %v4855 = vtanh.pop %v4343
      %v4856 = vtanh.pop %v4344
      %v4857 = vtanh.pop %v4345
      %v4858 = vtanh.pop %v4346
      %v4859 = vtanh.pop %v4347
      %v4860 = vtanh.pop %v4348
      %v4861 = vtanh.pop %v4349
      %v4862 = vtanh.pop %v4350
      %v4863 = vtanh.pop %v4351
      %v4864 = vtanh.pop %v4352
      %v4865 = vtanh.pop %v4353
      %v4866 = vtanh.pop %v4354
      %v4867 = vtanh.pop %v4355
      %v4868 = vtanh.pop %v4356
      %v4869 = vtanh.pop %v4357
      %v4870 = vtanh.pop %v4358
      %v4871 = vtanh.pop %v4359
      %v4872 = vtanh.pop %v4360
      %v4873 = vtanh.pop %v4361
      %v4874 = vtanh.pop %v4362
      %v4875 = vtanh.pop %v4363
      %v4876 = vtanh.pop %v4364
      %v4877 = vtanh.pop %v4365
      %v4878 = vtanh.pop %v4366
      %v4879 = vtanh.pop %v4367
      %v4880 = vtanh.pop %v4368
      %v4881 = vtanh.pop %v4369
      %v4882 = vtanh.pop %v4370
      %v4883 = vtanh.pop %v4371
      %v4884 = vtanh.pop %v4372
      %v4885 = vtanh.pop %v4373
      %v4886 = vtanh.pop %v4374
      %v4887 = vtanh.pop %v4375
      %v4888 = vtanh.pop %v4376
      %v4889 = vtanh.pop %v4377
      %v4890 = vtanh.pop %v4378
      %v4891 = vtanh.pop %v4379
      %v4892 = vtanh.pop %v4380
      %v4893 = vtanh.pop %v4381
      %v4894 = vtanh.pop %v4382
      %v4895 = vtanh.pop %v4383
      %v4896 = vtanh.pop %v4384
      %v4897 = vtanh.pop %v4385
      %v4898 = vtanh.pop %v4386
      %v4899 = vtanh.pop %v4387
      %v4900 = vtanh.pop %v4388
      %v4901 = vtanh.pop %v4389
      %v4902 = vtanh.pop %v4390
      %v4903 = vtanh.pop %v4391
      %v4904 = vtanh.pop %v4392
      %v4905 = vtanh.pop %v4393
      %v4906 = vtanh.pop %v4394
      %v4907 = vtanh.pop %v4395
      %v4908 = vtanh.pop %v4396
      %v4909 = vtanh.pop %v4397
      %v4910 = vtanh.pop %v4398
      %v4911 = vtanh.pop %v4399
      %v4912 = vtanh.pop %v4400
      %v4913 = vtanh.pop %v4401
      %v4914 = vtanh.pop %v4402
      %v4915 = vtanh.pop %v4403
      %v4916 = vtanh.pop %v4404
      %v4917 = vtanh.pop %v4405
      %v4918 = vtanh.pop %v4406
      %v4919 = vtanh.pop %v4407
      %v4920 = vtanh.pop %v4408
      %v4921 = vtanh.pop %v4409
      %v4922 = vtanh.pop %v4410
      %v4923 = vtanh.pop %v4411
      %v4924 = vtanh.pop %v4412
      %v4925 = vtanh.pop %v4413
      %v4926 = vtanh.pop %v4414
      %v4927 = vtanh.pop %v4415
      %v4928 = vtanh.pop %v4416
      %v4929 = vtanh.pop %v4417
      %v4930 = vtanh.pop %v4418
      %v4931 = vtanh.pop %v4419
      %v4932 = vtanh.pop %v4420
      %v4933 = vtanh.pop %v4421
      %v4934 = vtanh.pop %v4422
      %v4935 = vtanh.pop %v4423
      %v4936 = vtanh.pop %v4424
      %v4937 = vtanh.pop %v4425
      %v4938 = vtanh.pop %v4426
      %v4939 = vtanh.pop %v4427
      %v4940 = vtanh.pop %v4428
      %v4941 = vtanh.pop %v4429
      %v4942 = vtanh.pop %v4430
      %v4943 = vtanh.pop %v4431
      %v4944 = vtanh.pop %v4432
      %v4945 = vtanh.pop %v4433
      %v4946 = vtanh.pop %v4434
      %v4947 = vtanh.pop %v4435
      %v4948 = vtanh.pop %v4436
      %v4949 = vtanh.pop %v4437
      %v4950 = vtanh.pop %v4438
      %v4951 = vtanh.pop %v4439
      %v4952 = vtanh.pop %v4440
      %v4953 = vtanh.pop %v4441
      %v4954 = vtanh.pop %v4442
      %v4955 = vtanh.pop %v4443
      %v4956 = vtanh.pop %v4444
      %v4957 = vtanh.pop %v4445
      %v4958 = vtanh.pop %v4446
      %v4959 = vtanh.pop %v4447
      %v4960 = vtanh.pop %v4448
      %v4961 = vtanh.pop %v4449
      %v4962 = vtanh.pop %v4450
      %v4963 = vtanh.pop %v4451
      %v4964 = vtanh.pop %v4452
      %v4965 = vtanh.pop %v4453
      %v4966 = vtanh.pop %v4454
      %v4967 = vtanh.pop %v4455
      %v4968 = vtanh.pop %v4456
      %v4969 = vtanh.pop %v4457
      %v4970 = vtanh.pop %v4458
      %v4971 = vtanh.pop %v4459
      %v4972 = vtanh.pop %v4460
      %v4973 = vtanh.pop %v4461
      %v4974 = vtanh.pop %v4462
      %v4975 = vtanh.pop %v4463
      %v4976 = vtanh.pop %v4464
      %v4977 = vtanh.pop %v4465
      %v4978 = vtanh.pop %v4466
      %v4979 = vtanh.pop %v4467
      %v4980 = vtanh.pop %v4468
      %v4981 = vtanh.pop %v4469
      %v4982 = vtanh.pop %v4470
      %v4983 = vtanh.pop %v4471
      %v4984 = vtanh.pop %v4472
      %v4985 = vtanh.pop %v4473
      %v4986 = vtanh.pop %v4474
      %v4987 = vtanh.pop %v4475
      %v4988 = vtanh.pop %v4476
      %v4989 = vtanh.pop %v4477
      %v4990 = vtanh.pop %v4478
      %v4991 = vtanh.pop %v4479
      %v4992 = vtanh.pop %v4480
      %v4993 = vtanh.pop %v4481
      %v4994 = vtanh.pop %v4482
      %v4995 = vtanh.pop %v4483
      %v4996 = vtanh.pop %v4484
      %v4997 = vtanh.pop %v4485
      %v4998 = vtanh.pop %v4486
      %v4999 = vtanh.pop %v4487
      %v5000 = vtanh.pop %v4488
      %v5001 = vtanh.pop %v4489
      %v5002 = vtanh.pop %v4490
      %v5003 = vtanh.pop %v4491
      %v5004 = vtanh.pop %v4492
      %v5005 = vtanh.pop %v4493
      %v5006 = vtanh.pop %v4494
      %v5007 = vtanh.pop %v4495
      %v5008 = vtanh.pop %v4496
      %v5009 = vtanh.pop %v4497
      %v5010 = vtanh.pop %v4498
      %v5011 = vtanh.pop %v4499
      %v5012 = vtanh.pop %v4500
      %v5013 = vtanh.pop %v4501
      %v5014 = vtanh.pop %v4502
      %v5015 = vtanh.pop %v4503
      %v5016 = vtanh.pop %v4504
      %v5017 = vtanh.pop %v4505
      %v5018 = vtanh.pop %v4506
      %v5019 = vtanh.pop %v4507
      %v5020 = vtanh.pop %v4508
      %v5021 = vtanh.pop %v4509
      %v5022 = vtanh.pop %v4510
      %v5023 = vtanh.pop %v4511
      %v5024 = vtanh.pop %v4512
      %v5025 = vtanh.pop %v4513
      %v5026 = vtanh.pop %v4514
      %v5027 = vtanh.pop %v4515
      %v5028 = vtanh.pop %v4516
      %v5029 = vtanh.pop %v4517
      %v5030 = vtanh.pop %v4518
      %v5031 = vtanh.pop %v4519
      %v5032 = vtanh.pop %v4520
      %v5033 = vtanh.pop %v4521
      %v5034 = vtanh.pop %v4522
      %v5035 = vtanh.pop %v4523
      %v5036 = vtanh.pop %v4524
      %v5037 = vtanh.pop %v4525
      %v5038 = vtanh.pop %v4526
      %v5039 = vtanh.pop %v4527
      %v5040 = vtanh.pop %v4528
      %v5041 = vtanh.pop %v4529
      %v5042 = vtanh.pop %v4530
      %v5043 = vtanh.pop %v4531
      %v5044 = vtanh.pop %v4532
      %v5045 = vtanh.pop %v4533
      %v5046 = vtanh.pop %v4534
      %v5047 = vtanh.pop %v4535
      %v5048 = vtanh.pop %v4536
      %v5049 = vtanh.pop %v4537
      %v5050 = vtanh.pop %v4538
      %v5051 = vtanh.pop %v4539
      %v5052 = vtanh.pop %v4540
      %v5053 = vtanh.pop %v4541
      %v5054 = vtanh.pop %v4542
      %v5055 = vtanh.pop %v4543
      %v5056 = vtanh.pop %v4544
      %v5057 = vtanh.pop %v4545
      %v5058 = vtanh.pop %v4546
      %v5059 = vtanh.pop %v4547
      %v5060 = vtanh.pop %v4548
      %v5061 = vtanh.pop %v4549
      %v5062 = vtanh.pop %v4550
      %v5063 = vtanh.pop %v4551
      %v5064 = vtanh.pop %v4552
      %v5065 = vtanh.pop %v4553
      %v5066 = vtanh.pop %v4554
      %v5067 = vtanh.pop %v4555
      %v5068 = vtanh.pop %v4556
      %v5069 = vtanh.pop %v4557
      %v5070 = vtanh.pop %v4558
      %v5071 = vtanh.pop %v4559
      %v5072 = vtanh.pop %v4560
      %v5073 = vtanh.pop %v4561
      %v5074 = vtanh.pop %v4562
      %v5075 = vtanh.pop %v4563
      %v5076 = vtanh.pop %v4564
      %v5077 = vtanh.pop %v4565
      %v5078 = vtanh.pop %v4566
      %v5079 = vtanh.pop %v4567
      %v5080 = vtanh.pop %v4568
      %v5081 = vtanh.pop %v4569
      %v5082 = vtanh.pop %v4570
      %v5083 = vtanh.pop %v4571
      %v5084 = vtanh.pop %v4572
      %v5085 = vtanh.pop %v4573
      %v5086 = vtanh.pop %v4574
      %v5087 = vtanh.pop %v4575
      %v5088 = vtanh.pop %v4576
      %v5089 = vtanh.pop %v4577
      %v5090 = vtanh.pop %v4578
      %v5091 = vtanh.pop %v4579
      %v5092 = vtanh.pop %v4580
      %v5093 = vtanh.pop %v4581
      %v5094 = vtanh.pop %v4582
      %v5095 = vtanh.pop %v4583
      %v5096 = vtanh.pop %v4584
      %v5097 = vtanh.pop %v4585
      %v5098 = vtanh.pop %v4586
      %v5099 = vtanh.pop %v4587
      %v5100 = vtanh.pop %v4588
      %v5101 = vtanh.pop %v4589
      %v5102 = vtanh.pop %v4590
      %v5103 = vtanh.pop %v4591
      %v5104 = vtanh.pop %v4592
      %v5105 = vtanh.pop %v4593
      %v5106 = vtanh.pop %v4594
      %v5107 = vtanh.pop %v4595
      %v5108 = vtanh.pop %v4596
      %v5109 = vtanh.pop %v4597
      %v5110 = vtanh.pop %v4598
      %v5111 = vtanh.pop %v4599
      %v5112 = vtanh.pop %v4600
      %v5113 = vtanh.pop %v4601
      %v5114 = vtanh.pop %v4602
      %v5115 = vtanh.pop %v4603
      %v5116 = vtanh.pop %v4604
      %v5117 = vtanh.pop %v4605
      %v5118 = vtanh.pop %v4606
      %v5119 = vtanh.pop %v4607
      %v5120 = vtanh.pop %v4608
      %v5121 = vtanh.pop %v4609
      %v5122 = vtanh.pop %v4610
      %v5123 = vtanh.pop %v4611
      %v5124 = vtanh.pop %v4612
      %v5125 = vtanh.pop %v4613
      %v5126 = vtanh.pop %v4614
      %v5127 = vtanh.pop %v4615
      %v5128 = vtanh.pop %v4616
      %v5129 = vtanh.pop %v4617
      %v5130 = vtanh.pop %v4618
      %v5131 = vtanh.pop %v4619
      %v5132 = vtanh.pop %v4620
      %v5133 = vtanh.pop %v4621
      %v5134 = vtanh.pop %v4622
      %v5135 = vtanh.pop %v4623
      %v5136 = vtanh.pop %v4624
      %v5137 = vtanh.pop %v4625
      %v5138 = vtanh.pop %v4626
      %v5139 = vtanh.pop %v4627
      %v5140 = vtanh.pop %v4628
      %v5141 = vtanh.pop %v4629
      %v5142 = vtanh.pop %v4630
      %v5143 = vtanh.pop %v4631
      %v5144 = vtanh.pop %v4632
      %v5145 = vtanh.pop %v4633
      %v5146 = vtanh.pop %v4634
      %v5147 = vtanh.pop %v4635
      %v5148 = vtanh.pop %v4636
      %v5149 = vtanh.pop %v4637
      %v5150 = vtanh.pop %v4638
      %v5151 = vtanh.pop %v4639
      %v5152 = vtanh.pop %v4640
      %v5153 = vtanh.pop %v4641
      %v5154 = vtanh.pop %v4642
      %v5155 = vtanh.pop %v4643
      %v5156 = vtanh.pop %v4644
      %v5157 = vtanh.pop %v4645
      %v5158 = vtanh.pop %v4646
      %v5159 = vtanh.pop %v4647
      %v5160 = vtanh.pop %v4648
      %v5161 = vtanh.pop %v4649
      %v5162 = vtanh.pop %v4650
      %v5163 = vtanh.pop %v4651
      %v5164 = vtanh.pop %v4652
      %v5165 = vtanh.pop %v4653
      %v5166 = vtanh.pop %v4654
      %v5167 = vtanh.pop %v4655
      %v5168 = vtanh.pop %v4656
      %v5169 = vtanh.pop %v4657
      %v5170 = vtanh.pop %v4658
      %v5171 = vtanh.pop %v4659
      %v5172 = vtanh.pop %v4660
      %v5173 = vtanh.pop %v4661
      %v5174 = vtanh.pop %v4662
      %v5175 = vtanh.pop %v4663
      %v5176 = vtanh.pop %v4664
      %v5177 = vtanh.pop %v4665
      %v5178 = vtanh.pop %v4666
      %v5179 = vtanh.pop %v4667
      %v5180 = vtanh.pop %v4668
      %v5181 = vtanh.pop %v4669
      %v5182 = vtanh.pop %v4670
      %v5183 = vtanh.pop %v4671
      %v5184 = vtanh.pop %v4672
      %v5185 = vtanh.pop %v4673
      %v5186 = vtanh.pop %v4674
      %v5187 = vtanh.pop %v4675
      %v5188 = vtanh.pop %v4676
      %v5189 = vtanh.pop %v4677
      %v5190 = vtanh.pop %v4678
      %v5191 = vtanh.pop %v4679
      %v5192 = vtanh.pop %v4680
      %v5193 = vtanh.pop %v4681
      %v5194 = vtanh.pop %v4682
      %v5195 = vtanh.pop %v4683
      %v5196 = vtanh.pop %v4684
      %v5197 = vtanh.pop %v4685
      %v5198 = vtanh.pop %v4686
      %v5199 = vtanh.pop %v4687
      %v5200 = vtanh.pop %v4688
      %v5201 = vtanh.pop %v4689
      %v5202 = vtanh.pop %v4690
      %v5203 = vtanh.pop %v4691
      %v5204 = vtanh.pop %v4692
      %v5205 = vtanh.pop %v4693
      %v5206 = vtanh.pop %v4694
      %v5207 = vtanh.pop %v4695
      %v5208 = vtanh.pop %v4696
      %v5209 = vtanh.pop %v4697
      %v5210 = vtanh.pop %v4698
      %v5211 = vtanh.pop %v4699
      %v5212 = vtanh.pop %v4700
      %v5213 = vtanh.pop %v4701
      %v5214 = vtanh.pop %v4702
      %v5215 = vtanh.pop %v4703
      %v5216 = vtanh.pop %v4704
      %v5217 = vtanh.pop %v4705
      %v5218 = vtanh.pop %v4706
      %v5219 = vtanh.pop %v4707
      %v5220 = vtanh.pop %v4708
      %v5221 = vtanh.pop %v4709
      %v5222 = vtanh.pop %v4710
      %v5223 = vtanh.pop %v4711
      %v5224 = vtanh.pop %v4712
      %v5225 = vtanh.pop %v4713
      %v5226 = vtanh.pop %v4714
      %v5227 = vtanh.pop %v4715
      %v5228 = vtanh.pop %v4716
      %v5229 = vtanh.pop %v4717
      %v5230 = vtanh.pop %v4718
      %v5231 = vtanh.pop %v4719
      %v5232 = vtanh.pop %v4720
      %v5233 = vtanh.pop %v4721
      %v5234 = vtanh.pop %v4722
      %v5235 = vtanh.pop %v4723
      %v5236 = vtanh.pop %v4724
      %v5237 = vtanh.pop %v4725
      %v5238 = vtanh.pop %v4726
      %v5239 = vtanh.pop %v4727
      %v5240 = vtanh.pop %v4728
      %v5241 = vtanh.pop %v4729
      %v5242 = vtanh.pop %v4730
      %v5243 = vtanh.pop %v4731
      %v5244 = vtanh.pop %v4732
      %v5245 = vtanh.pop %v4733
      %v5246 = vtanh.pop %v4734
      %v5247 = vtanh.pop %v4735
      %v5248 = vtanh.pop %v4736
      %v5249 = vtanh.pop %v4737
      %v5250 = vtanh.pop %v4738
      %v5251 = vtanh.pop %v4739
      %v5252 = vtanh.pop %v4740
      %v5253 = vtanh.pop %v4741
      %v5254 = vtanh.pop %v4742
      %v5255 = vtanh.pop %v4743
      %v5256 = vtanh.pop %v4744
      %v5257 = vtanh.pop %v4745
      %v5258 = vtanh.pop %v4746
      %v5259 = vtanh.pop %v4747
      %v5260 = vtanh.pop %v4748
      %v5261 = vtanh.pop %v4749
      %v5262 = vtanh.pop %v4750
      %v5263 = vtanh.pop %v4751
      %v5264 = vtanh.pop %v4752
      %v5265 = vtanh.pop %v4753
      %v5266 = vtanh.pop %v4754
      %v5267 = vtanh.pop %v4755
      %v5268 = vtanh.pop %v4756
      %v5269 = vtanh.pop %v4757
      %v5270 = vtanh.pop %v4758
      %v5271 = vtanh.pop %v4759
      %v5272 = vtanh.pop %v4760
      %v5273 = vtanh.pop %v4761
      %v5274 = vtanh.pop %v4762
      %v5275 = vtanh.pop %v4763
      %v5276 = vtanh.pop %v4764
      %v5277 = vtanh.pop %v4765
      %v5278 = vtanh.pop %v4766
      %v5279 = vtanh.pop %v4767
      %v5280 = vtanh.pop %v4768
      %v5281 = vtanh.pop %v4769
      %v5282 = vtanh.pop %v4770
      %v5283 = vtanh.pop %v4771
      %v5284 = vtanh.pop %v4772
      %v5285 = vtanh.pop %v4773
      %v5286 = vtanh.pop %v4774
      %v5287 = vtanh.pop %v4775
      %v5288 = vtanh.pop %v4776
      %v5289 = vtanh.pop %v4777
      %v5290 = vtanh.pop %v4778
      %v5291 = vtanh.pop %v4779
      %v5292 = vtanh.pop %v4780
      %v5293 = vtanh.pop %v4781
      %v5294 = vtanh.pop %v4782
      %v5295 = vtanh.pop %v4783
      %v5296 = vtanh.pop %v4784
      %v5297 = vtanh.pop %v4785
      %v5298 = vtanh.pop %v4786
      %v5299 = vtanh.pop %v4787
      %v5300 = vtanh.pop %v4788
      %v5301 = vtanh.pop %v4789
      %v5302 = vtanh.pop %v4790
      %v5303 = vtanh.pop %v4791
      %v5304 = vtanh.pop %v4792
      %v5305 = vtanh.pop %v4793
      %v5306 = vtanh.pop %v4794
      %v5307 = vtanh.pop %v4795
      %v5308 = vtanh.pop %v4796
      %v5309 = vtanh.pop %v4797
      %v5310 = vtanh.pop %v4798
      %v5311 = vtanh.pop %v4799
      %v5312 = vtanh.pop %v4800
      %v5313 = vtanh.pop %v4801
      %v5314 = vtanh.pop %v4802
      %v5315 = vtanh.pop %v4803
      %v5316 = vtanh.pop %v4804
      %v5317 = vtanh.pop %v4805
      %v5318 = vtanh.pop %v4806
      %v5319 = vtanh.pop %v4807
      %v5320 = vtanh.pop %v4808
      %v5321 = vtanh.pop %v4809
      %v5322 = vtanh.pop %v4810
      %v5323 = vtanh.pop %v4811
      %v5324 = vtanh.pop %v4812
      %v5325 = vtanh.pop %v4813
      %v5326 = vtanh.pop %v4814
      %v5327 = vtanh.pop %v4815
      %v5328 = vtanh.pop %v4816
      %v5329 = vadd.f32 %v4817, 1.0
      %v5330 = vadd.f32 %v4818, 1.0
      %v5331 = vadd.f32 %v4819, 1.0
      %v5332 = vadd.f32 %v4820, 1.0
      %v5333 = vadd.f32 %v4821, 1.0
      %v5334 = vadd.f32 %v4822, 1.0
      %v5335 = vadd.f32 %v4823, 1.0
      %v5336 = vadd.f32 %v4824, 1.0
      %v5337 = vadd.f32 %v4825, 1.0
      %v5338 = vadd.f32 %v4826, 1.0
      %v5339 = vadd.f32 %v4827, 1.0
      %v5340 = vadd.f32 %v4828, 1.0
      %v5341 = vadd.f32 %v4829, 1.0
      %v5342 = vadd.f32 %v4830, 1.0
      %v5343 = vadd.f32 %v4831, 1.0
      %v5344 = vadd.f32 %v4832, 1.0
      %v5345 = vadd.f32 %v4833, 1.0
      %v5346 = vadd.f32 %v4834, 1.0
      %v5347 = vadd.f32 %v4835, 1.0
      %v5348 = vadd.f32 %v4836, 1.0
      %v5349 = vadd.f32 %v4837, 1.0
      %v5350 = vadd.f32 %v4838, 1.0
      %v5351 = vadd.f32 %v4839, 1.0
      %v5352 = vadd.f32 %v4840, 1.0
      %v5353 = vadd.f32 %v4841, 1.0
      %v5354 = vadd.f32 %v4842, 1.0
      %v5355 = vadd.f32 %v4843, 1.0
      %v5356 = vadd.f32 %v4844, 1.0
      %v5357 = vadd.f32 %v4845, 1.0
      %v5358 = vadd.f32 %v4846, 1.0
      %v5359 = vadd.f32 %v4847, 1.0
      %v5360 = vadd.f32 %v4848, 1.0
      %v5361 = vadd.f32 %v4849, 1.0
      %v5362 = vadd.f32 %v4850, 1.0
      %v5363 = vadd.f32 %v4851, 1.0
      %v5364 = vadd.f32 %v4852, 1.0
      %v5365 = vadd.f32 %v4853, 1.0
      %v5366 = vadd.f32 %v4854, 1.0
      %v5367 = vadd.f32 %v4855, 1.0
      %v5368 = vadd.f32 %v4856, 1.0
      %v5369 = vadd.f32 %v4857, 1.0
      %v5370 = vadd.f32 %v4858, 1.0
      %v5371 = vadd.f32 %v4859, 1.0
      %v5372 = vadd.f32 %v4860, 1.0
      %v5373 = vadd.f32 %v4861, 1.0
      %v5374 = vadd.f32 %v4862, 1.0
      %v5375 = vadd.f32 %v4863, 1.0
      %v5376 = vadd.f32 %v4864, 1.0
      %v5377 = vadd.f32 %v4865, 1.0
      %v5378 = vadd.f32 %v4866, 1.0
      %v5379 = vadd.f32 %v4867, 1.0
      %v5380 = vadd.f32 %v4868, 1.0
      %v5381 = vadd.f32 %v4869, 1.0
      %v5382 = vadd.f32 %v4870, 1.0
      %v5383 = vadd.f32 %v4871, 1.0
      %v5384 = vadd.f32 %v4872, 1.0
      %v5385 = vadd.f32 %v4873, 1.0
      %v5386 = vadd.f32 %v4874, 1.0
      %v5387 = vadd.f32 %v4875, 1.0
      %v5388 = vadd.f32 %v4876, 1.0
      %v5389 = vadd.f32 %v4877, 1.0
      %v5390 = vadd.f32 %v4878, 1.0
      %v5391 = vadd.f32 %v4879, 1.0
      %v5392 = vadd.f32 %v4880, 1.0
      %v5393 = vadd.f32 %v4881, 1.0
      %v5394 = vadd.f32 %v4882, 1.0
      %v5395 = vadd.f32 %v4883, 1.0
      %v5396 = vadd.f32 %v4884, 1.0
      %v5397 = vadd.f32 %v4885, 1.0
      %v5398 = vadd.f32 %v4886, 1.0
      %v5399 = vadd.f32 %v4887, 1.0
      %v5400 = vadd.f32 %v4888, 1.0
      %v5401 = vadd.f32 %v4889, 1.0
      %v5402 = vadd.f32 %v4890, 1.0
      %v5403 = vadd.f32 %v4891, 1.0
      %v5404 = vadd.f32 %v4892, 1.0
      %v5405 = vadd.f32 %v4893, 1.0
      %v5406 = vadd.f32 %v4894, 1.0
      %v5407 = vadd.f32 %v4895, 1.0
      %v5408 = vadd.f32 %v4896, 1.0
      %v5409 = vadd.f32 %v4897, 1.0
      %v5410 = vadd.f32 %v4898, 1.0
      %v5411 = vadd.f32 %v4899, 1.0
      %v5412 = vadd.f32 %v4900, 1.0
      %v5413 = vadd.f32 %v4901, 1.0
      %v5414 = vadd.f32 %v4902, 1.0
      %v5415 = vadd.f32 %v4903, 1.0
      %v5416 = vadd.f32 %v4904, 1.0
      %v5417 = vadd.f32 %v4905, 1.0
      %v5418 = vadd.f32 %v4906, 1.0
      %v5419 = vadd.f32 %v4907, 1.0
      %v5420 = vadd.f32 %v4908, 1.0
      %v5421 = vadd.f32 %v4909, 1.0
      %v5422 = vadd.f32 %v4910, 1.0
      %v5423 = vadd.f32 %v4911, 1.0
      %v5424 = vadd.f32 %v4912, 1.0
      %v5425 = vadd.f32 %v4913, 1.0
      %v5426 = vadd.f32 %v4914, 1.0
      %v5427 = vadd.f32 %v4915, 1.0
      %v5428 = vadd.f32 %v4916, 1.0
      %v5429 = vadd.f32 %v4917, 1.0
      %v5430 = vadd.f32 %v4918, 1.0
      %v5431 = vadd.f32 %v4919, 1.0
      %v5432 = vadd.f32 %v4920, 1.0
      %v5433 = vadd.f32 %v4921, 1.0
      %v5434 = vadd.f32 %v4922, 1.0
      %v5435 = vadd.f32 %v4923, 1.0
      %v5436 = vadd.f32 %v4924, 1.0
      %v5437 = vadd.f32 %v4925, 1.0
      %v5438 = vadd.f32 %v4926, 1.0
      %v5439 = vadd.f32 %v4927, 1.0
      %v5440 = vadd.f32 %v4928, 1.0
      %v5441 = vadd.f32 %v4929, 1.0
      %v5442 = vadd.f32 %v4930, 1.0
      %v5443 = vadd.f32 %v4931, 1.0
      %v5444 = vadd.f32 %v4932, 1.0
      %v5445 = vadd.f32 %v4933, 1.0
      %v5446 = vadd.f32 %v4934, 1.0
      %v5447 = vadd.f32 %v4935, 1.0
      %v5448 = vadd.f32 %v4936, 1.0
      %v5449 = vadd.f32 %v4937, 1.0
      %v5450 = vadd.f32 %v4938, 1.0
      %v5451 = vadd.f32 %v4939, 1.0
      %v5452 = vadd.f32 %v4940, 1.0
      %v5453 = vadd.f32 %v4941, 1.0
      %v5454 = vadd.f32 %v4942, 1.0
      %v5455 = vadd.f32 %v4943, 1.0
      %v5456 = vadd.f32 %v4944, 1.0
      %v5457 = vadd.f32 %v4945, 1.0
      %v5458 = vadd.f32 %v4946, 1.0
      %v5459 = vadd.f32 %v4947, 1.0
      %v5460 = vadd.f32 %v4948, 1.0
      %v5461 = vadd.f32 %v4949, 1.0
      %v5462 = vadd.f32 %v4950, 1.0
      %v5463 = vadd.f32 %v4951, 1.0
      %v5464 = vadd.f32 %v4952, 1.0
      %v5465 = vadd.f32 %v4953, 1.0
      %v5466 = vadd.f32 %v4954, 1.0
      %v5467 = vadd.f32 %v4955, 1.0
      %v5468 = vadd.f32 %v4956, 1.0
      %v5469 = vadd.f32 %v4957, 1.0
      %v5470 = vadd.f32 %v4958, 1.0
      %v5471 = vadd.f32 %v4959, 1.0
      %v5472 = vadd.f32 %v4960, 1.0
      %v5473 = vadd.f32 %v4961, 1.0
      %v5474 = vadd.f32 %v4962, 1.0
      %v5475 = vadd.f32 %v4963, 1.0
      %v5476 = vadd.f32 %v4964, 1.0
      %v5477 = vadd.f32 %v4965, 1.0
      %v5478 = vadd.f32 %v4966, 1.0
      %v5479 = vadd.f32 %v4967, 1.0
      %v5480 = vadd.f32 %v4968, 1.0
      %v5481 = vadd.f32 %v4969, 1.0
      %v5482 = vadd.f32 %v4970, 1.0
      %v5483 = vadd.f32 %v4971, 1.0
      %v5484 = vadd.f32 %v4972, 1.0
      %v5485 = vadd.f32 %v4973, 1.0
      %v5486 = vadd.f32 %v4974, 1.0
      %v5487 = vadd.f32 %v4975, 1.0
      %v5488 = vadd.f32 %v4976, 1.0
      %v5489 = vadd.f32 %v4977, 1.0
      %v5490 = vadd.f32 %v4978, 1.0
      %v5491 = vadd.f32 %v4979, 1.0
      %v5492 = vadd.f32 %v4980, 1.0
      %v5493 = vadd.f32 %v4981, 1.0
      %v5494 = vadd.f32 %v4982, 1.0
      %v5495 = vadd.f32 %v4983, 1.0
      %v5496 = vadd.f32 %v4984, 1.0
      %v5497 = vadd.f32 %v4985, 1.0
      %v5498 = vadd.f32 %v4986, 1.0
      %v5499 = vadd.f32 %v4987, 1.0
      %v5500 = vadd.f32 %v4988, 1.0
      %v5501 = vadd.f32 %v4989, 1.0
      %v5502 = vadd.f32 %v4990, 1.0
      %v5503 = vadd.f32 %v4991, 1.0
      %v5504 = vadd.f32 %v4992, 1.0
      %v5505 = vadd.f32 %v4993, 1.0
      %v5506 = vadd.f32 %v4994, 1.0
      %v5507 = vadd.f32 %v4995, 1.0
      %v5508 = vadd.f32 %v4996, 1.0
      %v5509 = vadd.f32 %v4997, 1.0
      %v5510 = vadd.f32 %v4998, 1.0
      %v5511 = vadd.f32 %v4999, 1.0
      %v5512 = vadd.f32 %v5000, 1.0
      %v5513 = vadd.f32 %v5001, 1.0
      %v5514 = vadd.f32 %v5002, 1.0
      %v5515 = vadd.f32 %v5003, 1.0
      %v5516 = vadd.f32 %v5004, 1.0
      %v5517 = vadd.f32 %v5005, 1.0
      %v5518 = vadd.f32 %v5006, 1.0
      %v5519 = vadd.f32 %v5007, 1.0
      %v5520 = vadd.f32 %v5008, 1.0
      %v5521 = vadd.f32 %v5009, 1.0
      %v5522 = vadd.f32 %v5010, 1.0
      %v5523 = vadd.f32 %v5011, 1.0
      %v5524 = vadd.f32 %v5012, 1.0
      %v5525 = vadd.f32 %v5013, 1.0
      %v5526 = vadd.f32 %v5014, 1.0
      %v5527 = vadd.f32 %v5015, 1.0
      %v5528 = vadd.f32 %v5016, 1.0
      %v5529 = vadd.f32 %v5017, 1.0
      %v5530 = vadd.f32 %v5018, 1.0
      %v5531 = vadd.f32 %v5019, 1.0
      %v5532 = vadd.f32 %v5020, 1.0
      %v5533 = vadd.f32 %v5021, 1.0
      %v5534 = vadd.f32 %v5022, 1.0
      %v5535 = vadd.f32 %v5023, 1.0
      %v5536 = vadd.f32 %v5024, 1.0
      %v5537 = vadd.f32 %v5025, 1.0
      %v5538 = vadd.f32 %v5026, 1.0
      %v5539 = vadd.f32 %v5027, 1.0
      %v5540 = vadd.f32 %v5028, 1.0
      %v5541 = vadd.f32 %v5029, 1.0
      %v5542 = vadd.f32 %v5030, 1.0
      %v5543 = vadd.f32 %v5031, 1.0
      %v5544 = vadd.f32 %v5032, 1.0
      %v5545 = vadd.f32 %v5033, 1.0
      %v5546 = vadd.f32 %v5034, 1.0
      %v5547 = vadd.f32 %v5035, 1.0
      %v5548 = vadd.f32 %v5036, 1.0
      %v5549 = vadd.f32 %v5037, 1.0
      %v5550 = vadd.f32 %v5038, 1.0
      %v5551 = vadd.f32 %v5039, 1.0
      %v5552 = vadd.f32 %v5040, 1.0
      %v5553 = vadd.f32 %v5041, 1.0
      %v5554 = vadd.f32 %v5042, 1.0
      %v5555 = vadd.f32 %v5043, 1.0
      %v5556 = vadd.f32 %v5044, 1.0
      %v5557 = vadd.f32 %v5045, 1.0
      %v5558 = vadd.f32 %v5046, 1.0
      %v5559 = vadd.f32 %v5047, 1.0
      %v5560 = vadd.f32 %v5048, 1.0
      %v5561 = vadd.f32 %v5049, 1.0
      %v5562 = vadd.f32 %v5050, 1.0
      %v5563 = vadd.f32 %v5051, 1.0
      %v5564 = vadd.f32 %v5052, 1.0
      %v5565 = vadd.f32 %v5053, 1.0
      %v5566 = vadd.f32 %v5054, 1.0
      %v5567 = vadd.f32 %v5055, 1.0
      %v5568 = vadd.f32 %v5056, 1.0
      %v5569 = vadd.f32 %v5057, 1.0
      %v5570 = vadd.f32 %v5058, 1.0
      %v5571 = vadd.f32 %v5059, 1.0
      %v5572 = vadd.f32 %v5060, 1.0
      %v5573 = vadd.f32 %v5061, 1.0
      %v5574 = vadd.f32 %v5062, 1.0
      %v5575 = vadd.f32 %v5063, 1.0
      %v5576 = vadd.f32 %v5064, 1.0
      %v5577 = vadd.f32 %v5065, 1.0
      %v5578 = vadd.f32 %v5066, 1.0
      %v5579 = vadd.f32 %v5067, 1.0
      %v5580 = vadd.f32 %v5068, 1.0
      %v5581 = vadd.f32 %v5069, 1.0
      %v5582 = vadd.f32 %v5070, 1.0
      %v5583 = vadd.f32 %v5071, 1.0
      %v5584 = vadd.f32 %v5072, 1.0
      %v5585 = vadd.f32 %v5073, 1.0
      %v5586 = vadd.f32 %v5074, 1.0
      %v5587 = vadd.f32 %v5075, 1.0
      %v5588 = vadd.f32 %v5076, 1.0
      %v5589 = vadd.f32 %v5077, 1.0
      %v5590 = vadd.f32 %v5078, 1.0
      %v5591 = vadd.f32 %v5079, 1.0
      %v5592 = vadd.f32 %v5080, 1.0
      %v5593 = vadd.f32 %v5081, 1.0
      %v5594 = vadd.f32 %v5082, 1.0
      %v5595 = vadd.f32 %v5083, 1.0
      %v5596 = vadd.f32 %v5084, 1.0
      %v5597 = vadd.f32 %v5085, 1.0
      %v5598 = vadd.f32 %v5086, 1.0
      %v5599 = vadd.f32 %v5087, 1.0
      %v5600 = vadd.f32 %v5088, 1.0
      %v5601 = vadd.f32 %v5089, 1.0
      %v5602 = vadd.f32 %v5090, 1.0
      %v5603 = vadd.f32 %v5091, 1.0
      %v5604 = vadd.f32 %v5092, 1.0
      %v5605 = vadd.f32 %v5093, 1.0
      %v5606 = vadd.f32 %v5094, 1.0
      %v5607 = vadd.f32 %v5095, 1.0
      %v5608 = vadd.f32 %v5096, 1.0
      %v5609 = vadd.f32 %v5097, 1.0
      %v5610 = vadd.f32 %v5098, 1.0
      %v5611 = vadd.f32 %v5099, 1.0
      %v5612 = vadd.f32 %v5100, 1.0
      %v5613 = vadd.f32 %v5101, 1.0
      %v5614 = vadd.f32 %v5102, 1.0
      %v5615 = vadd.f32 %v5103, 1.0
      %v5616 = vadd.f32 %v5104, 1.0
      %v5617 = vadd.f32 %v5105, 1.0
      %v5618 = vadd.f32 %v5106, 1.0
      %v5619 = vadd.f32 %v5107, 1.0
      %v5620 = vadd.f32 %v5108, 1.0
      %v5621 = vadd.f32 %v5109, 1.0
      %v5622 = vadd.f32 %v5110, 1.0
      %v5623 = vadd.f32 %v5111, 1.0
      %v5624 = vadd.f32 %v5112, 1.0
      %v5625 = vadd.f32 %v5113, 1.0
      %v5626 = vadd.f32 %v5114, 1.0
      %v5627 = vadd.f32 %v5115, 1.0
      %v5628 = vadd.f32 %v5116, 1.0
      %v5629 = vadd.f32 %v5117, 1.0
      %v5630 = vadd.f32 %v5118, 1.0
      %v5631 = vadd.f32 %v5119, 1.0
      %v5632 = vadd.f32 %v5120, 1.0
      %v5633 = vadd.f32 %v5121, 1.0
      %v5634 = vadd.f32 %v5122, 1.0
      %v5635 = vadd.f32 %v5123, 1.0
      %v5636 = vadd.f32 %v5124, 1.0
      %v5637 = vadd.f32 %v5125, 1.0
      %v5638 = vadd.f32 %v5126, 1.0
      %v5639 = vadd.f32 %v5127, 1.0
      %v5640 = vadd.f32 %v5128, 1.0
      %v5641 = vadd.f32 %v5129, 1.0
      %v5642 = vadd.f32 %v5130, 1.0
      %v5643 = vadd.f32 %v5131, 1.0
      %v5644 = vadd.f32 %v5132, 1.0
      %v5645 = vadd.f32 %v5133, 1.0
      %v5646 = vadd.f32 %v5134, 1.0
      %v5647 = vadd.f32 %v5135, 1.0
      %v5648 = vadd.f32 %v5136, 1.0
      %v5649 = vadd.f32 %v5137, 1.0
      %v5650 = vadd.f32 %v5138, 1.0
      %v5651 = vadd.f32 %v5139, 1.0
      %v5652 = vadd.f32 %v5140, 1.0
      %v5653 = vadd.f32 %v5141, 1.0
      %v5654 = vadd.f32 %v5142, 1.0
      %v5655 = vadd.f32 %v5143, 1.0
      %v5656 = vadd.f32 %v5144, 1.0
      %v5657 = vadd.f32 %v5145, 1.0
      %v5658 = vadd.f32 %v5146, 1.0
      %v5659 = vadd.f32 %v5147, 1.0
      %v5660 = vadd.f32 %v5148, 1.0
      %v5661 = vadd.f32 %v5149, 1.0
      %v5662 = vadd.f32 %v5150, 1.0
      %v5663 = vadd.f32 %v5151, 1.0
      %v5664 = vadd.f32 %v5152, 1.0
      %v5665 = vadd.f32 %v5153, 1.0
      %v5666 = vadd.f32 %v5154, 1.0
      %v5667 = vadd.f32 %v5155, 1.0
      %v5668 = vadd.f32 %v5156, 1.0
      %v5669 = vadd.f32 %v5157, 1.0
      %v5670 = vadd.f32 %v5158, 1.0
      %v5671 = vadd.f32 %v5159, 1.0
      %v5672 = vadd.f32 %v5160, 1.0
      %v5673 = vadd.f32 %v5161, 1.0
      %v5674 = vadd.f32 %v5162, 1.0
      %v5675 = vadd.f32 %v5163, 1.0
      %v5676 = vadd.f32 %v5164, 1.0
      %v5677 = vadd.f32 %v5165, 1.0
      %v5678 = vadd.f32 %v5166, 1.0
      %v5679 = vadd.f32 %v5167, 1.0
      %v5680 = vadd.f32 %v5168, 1.0
      %v5681 = vadd.f32 %v5169, 1.0
      %v5682 = vadd.f32 %v5170, 1.0
      %v5683 = vadd.f32 %v5171, 1.0
      %v5684 = vadd.f32 %v5172, 1.0
      %v5685 = vadd.f32 %v5173, 1.0
      %v5686 = vadd.f32 %v5174, 1.0
      %v5687 = vadd.f32 %v5175, 1.0
      %v5688 = vadd.f32 %v5176, 1.0
      %v5689 = vadd.f32 %v5177, 1.0
      %v5690 = vadd.f32 %v5178, 1.0
      %v5691 = vadd.f32 %v5179, 1.0
      %v5692 = vadd.f32 %v5180, 1.0
      %v5693 = vadd.f32 %v5181, 1.0
      %v5694 = vadd.f32 %v5182, 1.0
      %v5695 = vadd.f32 %v5183, 1.0
      %v5696 = vadd.f32 %v5184, 1.0
      %v5697 = vadd.f32 %v5185, 1.0
      %v5698 = vadd.f32 %v5186, 1.0
      %v5699 = vadd.f32 %v5187, 1.0
      %v5700 = vadd.f32 %v5188, 1.0
      %v5701 = vadd.f32 %v5189, 1.0
      %v5702 = vadd.f32 %v5190, 1.0
      %v5703 = vadd.f32 %v5191, 1.0
      %v5704 = vadd.f32 %v5192, 1.0
      %v5705 = vadd.f32 %v5193, 1.0
      %v5706 = vadd.f32 %v5194, 1.0
      %v5707 = vadd.f32 %v5195, 1.0
      %v5708 = vadd.f32 %v5196, 1.0
      %v5709 = vadd.f32 %v5197, 1.0
      %v5710 = vadd.f32 %v5198, 1.0
      %v5711 = vadd.f32 %v5199, 1.0
      %v5712 = vadd.f32 %v5200, 1.0
      %v5713 = vadd.f32 %v5201, 1.0
      %v5714 = vadd.f32 %v5202, 1.0
      %v5715 = vadd.f32 %v5203, 1.0
      %v5716 = vadd.f32 %v5204, 1.0
      %v5717 = vadd.f32 %v5205, 1.0
      %v5718 = vadd.f32 %v5206, 1.0
      %v5719 = vadd.f32 %v5207, 1.0
      %v5720 = vadd.f32 %v5208, 1.0
      %v5721 = vadd.f32 %v5209, 1.0
      %v5722 = vadd.f32 %v5210, 1.0
      %v5723 = vadd.f32 %v5211, 1.0
      %v5724 = vadd.f32 %v5212, 1.0
      %v5725 = vadd.f32 %v5213, 1.0
      %v5726 = vadd.f32 %v5214, 1.0
      %v5727 = vadd.f32 %v5215, 1.0
      %v5728 = vadd.f32 %v5216, 1.0
      %v5729 = vadd.f32 %v5217, 1.0
      %v5730 = vadd.f32 %v5218, 1.0
      %v5731 = vadd.f32 %v5219, 1.0
      %v5732 = vadd.f32 %v5220, 1.0
      %v5733 = vadd.f32 %v5221, 1.0
      %v5734 = vadd.f32 %v5222, 1.0
      %v5735 = vadd.f32 %v5223, 1.0
      %v5736 = vadd.f32 %v5224, 1.0
      %v5737 = vadd.f32 %v5225, 1.0
      %v5738 = vadd.f32 %v5226, 1.0
      %v5739 = vadd.f32 %v5227, 1.0
      %v5740 = vadd.f32 %v5228, 1.0
      %v5741 = vadd.f32 %v5229, 1.0
      %v5742 = vadd.f32 %v5230, 1.0
      %v5743 = vadd.f32 %v5231, 1.0
      %v5744 = vadd.f32 %v5232, 1.0
      %v5745 = vadd.f32 %v5233, 1.0
      %v5746 = vadd.f32 %v5234, 1.0
      %v5747 = vadd.f32 %v5235, 1.0
      %v5748 = vadd.f32 %v5236, 1.0
      %v5749 = vadd.f32 %v5237, 1.0
      %v5750 = vadd.f32 %v5238, 1.0
      %v5751 = vadd.f32 %v5239, 1.0
      %v5752 = vadd.f32 %v5240, 1.0
      %v5753 = vadd.f32 %v5241, 1.0
      %v5754 = vadd.f32 %v5242, 1.0
      %v5755 = vadd.f32 %v5243, 1.0
      %v5756 = vadd.f32 %v5244, 1.0
      %v5757 = vadd.f32 %v5245, 1.0
      %v5758 = vadd.f32 %v5246, 1.0
      %v5759 = vadd.f32 %v5247, 1.0
      %v5760 = vadd.f32 %v5248, 1.0
      %v5761 = vadd.f32 %v5249, 1.0
      %v5762 = vadd.f32 %v5250, 1.0
      %v5763 = vadd.f32 %v5251, 1.0
      %v5764 = vadd.f32 %v5252, 1.0
      %v5765 = vadd.f32 %v5253, 1.0
      %v5766 = vadd.f32 %v5254, 1.0
      %v5767 = vadd.f32 %v5255, 1.0
      %v5768 = vadd.f32 %v5256, 1.0
      %v5769 = vadd.f32 %v5257, 1.0
      %v5770 = vadd.f32 %v5258, 1.0
      %v5771 = vadd.f32 %v5259, 1.0
      %v5772 = vadd.f32 %v5260, 1.0
      %v5773 = vadd.f32 %v5261, 1.0
      %v5774 = vadd.f32 %v5262, 1.0
      %v5775 = vadd.f32 %v5263, 1.0
      %v5776 = vadd.f32 %v5264, 1.0
      %v5777 = vadd.f32 %v5265, 1.0
      %v5778 = vadd.f32 %v5266, 1.0
      %v5779 = vadd.f32 %v5267, 1.0
      %v5780 = vadd.f32 %v5268, 1.0
      %v5781 = vadd.f32 %v5269, 1.0
      %v5782 = vadd.f32 %v5270, 1.0
      %v5783 = vadd.f32 %v5271, 1.0
      %v5784 = vadd.f32 %v5272, 1.0
      %v5785 = vadd.f32 %v5273, 1.0
      %v5786 = vadd.f32 %v5274, 1.0
      %v5787 = vadd.f32 %v5275, 1.0
      %v5788 = vadd.f32 %v5276, 1.0
      %v5789 = vadd.f32 %v5277, 1.0
      %v5790 = vadd.f32 %v5278, 1.0
      %v5791 = vadd.f32 %v5279, 1.0
      %v5792 = vadd.f32 %v5280, 1.0
      %v5793 = vadd.f32 %v5281, 1.0
      %v5794 = vadd.f32 %v5282, 1.0
      %v5795 = vadd.f32 %v5283, 1.0
      %v5796 = vadd.f32 %v5284, 1.0
      %v5797 = vadd.f32 %v5285, 1.0
      %v5798 = vadd.f32 %v5286, 1.0
      %v5799 = vadd.f32 %v5287, 1.0
      %v5800 = vadd.f32 %v5288, 1.0
      %v5801 = vadd.f32 %v5289, 1.0
      %v5802 = vadd.f32 %v5290, 1.0
      %v5803 = vadd.f32 %v5291, 1.0
      %v5804 = vadd.f32 %v5292, 1.0
      %v5805 = vadd.f32 %v5293, 1.0
      %v5806 = vadd.f32 %v5294, 1.0
      %v5807 = vadd.f32 %v5295, 1.0
      %v5808 = vadd.f32 %v5296, 1.0
      %v5809 = vadd.f32 %v5297, 1.0
      %v5810 = vadd.f32 %v5298, 1.0
      %v5811 = vadd.f32 %v5299, 1.0
      %v5812 = vadd.f32 %v5300, 1.0
      %v5813 = vadd.f32 %v5301, 1.0
      %v5814 = vadd.f32 %v5302, 1.0
      %v5815 = vadd.f32 %v5303, 1.0
      %v5816 = vadd.f32 %v5304, 1.0
      %v5817 = vadd.f32 %v5305, 1.0
      %v5818 = vadd.f32 %v5306, 1.0
      %v5819 = vadd.f32 %v5307, 1.0
      %v5820 = vadd.f32 %v5308, 1.0
      %v5821 = vadd.f32 %v5309, 1.0
      %v5822 = vadd.f32 %v5310, 1.0
      %v5823 = vadd.f32 %v5311, 1.0
      %v5824 = vadd.f32 %v5312, 1.0
      %v5825 = vadd.f32 %v5313, 1.0
      %v5826 = vadd.f32 %v5314, 1.0
      %v5827 = vadd.f32 %v5315, 1.0
      %v5828 = vadd.f32 %v5316, 1.0
      %v5829 = vadd.f32 %v5317, 1.0
      %v5830 = vadd.f32 %v5318, 1.0
      %v5831 = vadd.f32 %v5319, 1.0
      %v5832 = vadd.f32 %v5320, 1.0
      %v5833 = vadd.f32 %v5321, 1.0
      %v5834 = vadd.f32 %v5322, 1.0
      %v5835 = vadd.f32 %v5323, 1.0
      %v5836 = vadd.f32 %v5324, 1.0
      %v5837 = vadd.f32 %v5325, 1.0
      %v5838 = vadd.f32 %v5326, 1.0
      %v5839 = vadd.f32 %v5327, 1.0
      %v5840 = vadd.f32 %v5328, 1.0
      %v5841 = vmul.f32 %v5329, 0.5
      %v5842 = vmul.f32 %v5330, 0.5
      %v5843 = vmul.f32 %v5331, 0.5
      %v5844 = vmul.f32 %v5332, 0.5
      %v5845 = vmul.f32 %v5333, 0.5
      %v5846 = vmul.f32 %v5334, 0.5
      %v5847 = vmul.f32 %v5335, 0.5
      %v5848 = vmul.f32 %v5336, 0.5
      %v5849 = vmul.f32 %v5337, 0.5
      %v5850 = vmul.f32 %v5338, 0.5
      %v5851 = vmul.f32 %v5339, 0.5
      %v5852 = vmul.f32 %v5340, 0.5
      %v5853 = vmul.f32 %v5341, 0.5
      %v5854 = vmul.f32 %v5342, 0.5
      %v5855 = vmul.f32 %v5343, 0.5
      %v5856 = vmul.f32 %v5344, 0.5
      %v5857 = vmul.f32 %v5345, 0.5
      %v5858 = vmul.f32 %v5346, 0.5
      %v5859 = vmul.f32 %v5347, 0.5
      %v5860 = vmul.f32 %v5348, 0.5
      %v5861 = vmul.f32 %v5349, 0.5
      %v5862 = vmul.f32 %v5350, 0.5
      %v5863 = vmul.f32 %v5351, 0.5
      %v5864 = vmul.f32 %v5352, 0.5
      %v5865 = vmul.f32 %v5353, 0.5
      %v5866 = vmul.f32 %v5354, 0.5
      %v5867 = vmul.f32 %v5355, 0.5
      %v5868 = vmul.f32 %v5356, 0.5
      %v5869 = vmul.f32 %v5357, 0.5
      %v5870 = vmul.f32 %v5358, 0.5
      %v5871 = vmul.f32 %v5359, 0.5
      %v5872 = vmul.f32 %v5360, 0.5
      %v5873 = vmul.f32 %v5361, 0.5
      %v5874 = vmul.f32 %v5362, 0.5
      %v5875 = vmul.f32 %v5363, 0.5
      %v5876 = vmul.f32 %v5364, 0.5
      %v5877 = vmul.f32 %v5365, 0.5
      %v5878 = vmul.f32 %v5366, 0.5
      %v5879 = vmul.f32 %v5367, 0.5
      %v5880 = vmul.f32 %v5368, 0.5
      %v5881 = vmul.f32 %v5369, 0.5
      %v5882 = vmul.f32 %v5370, 0.5
      %v5883 = vmul.f32 %v5371, 0.5
      %v5884 = vmul.f32 %v5372, 0.5
      %v5885 = vmul.f32 %v5373, 0.5
      %v5886 = vmul.f32 %v5374, 0.5
      %v5887 = vmul.f32 %v5375, 0.5
      %v5888 = vmul.f32 %v5376, 0.5
      %v5889 = vmul.f32 %v5377, 0.5
      %v5890 = vmul.f32 %v5378, 0.5
      %v5891 = vmul.f32 %v5379, 0.5
      %v5892 = vmul.f32 %v5380, 0.5
      %v5893 = vmul.f32 %v5381, 0.5
      %v5894 = vmul.f32 %v5382, 0.5
      %v5895 = vmul.f32 %v5383, 0.5
      %v5896 = vmul.f32 %v5384, 0.5
      %v5897 = vmul.f32 %v5385, 0.5
      %v5898 = vmul.f32 %v5386, 0.5
      %v5899 = vmul.f32 %v5387, 0.5
      %v5900 = vmul.f32 %v5388, 0.5
      %v5901 = vmul.f32 %v5389, 0.5
      %v5902 = vmul.f32 %v5390, 0.5
      %v5903 = vmul.f32 %v5391, 0.5
      %v5904 = vmul.f32 %v5392, 0.5
      %v5905 = vmul.f32 %v5393, 0.5
      %v5906 = vmul.f32 %v5394, 0.5
      %v5907 = vmul.f32 %v5395, 0.5
      %v5908 = vmul.f32 %v5396, 0.5
      %v5909 = vmul.f32 %v5397, 0.5
      %v5910 = vmul.f32 %v5398, 0.5
      %v5911 = vmul.f32 %v5399, 0.5
      %v5912 = vmul.f32 %v5400, 0.5
      %v5913 = vmul.f32 %v5401, 0.5
      %v5914 = vmul.f32 %v5402, 0.5
      %v5915 = vmul.f32 %v5403, 0.5
      %v5916 = vmul.f32 %v5404, 0.5
      %v5917 = vmul.f32 %v5405, 0.5
      %v5918 = vmul.f32 %v5406, 0.5
      %v5919 = vmul.f32 %v5407, 0.5
      %v5920 = vmul.f32 %v5408, 0.5
      %v5921 = vmul.f32 %v5409, 0.5
      %v5922 = vmul.f32 %v5410, 0.5
      %v5923 = vmul.f32 %v5411, 0.5
      %v5924 = vmul.f32 %v5412, 0.5
      %v5925 = vmul.f32 %v5413, 0.5
      %v5926 = vmul.f32 %v5414, 0.5
      %v5927 = vmul.f32 %v5415, 0.5
      %v5928 = vmul.f32 %v5416, 0.5
      %v5929 = vmul.f32 %v5417, 0.5
      %v5930 = vmul.f32 %v5418, 0.5
      %v5931 = vmul.f32 %v5419, 0.5
      %v5932 = vmul.f32 %v5420, 0.5
      %v5933 = vmul.f32 %v5421, 0.5
      %v5934 = vmul.f32 %v5422, 0.5
      %v5935 = vmul.f32 %v5423, 0.5
      %v5936 = vmul.f32 %v5424, 0.5
      %v5937 = vmul.f32 %v5425, 0.5
      %v5938 = vmul.f32 %v5426, 0.5
      %v5939 = vmul.f32 %v5427, 0.5
      %v5940 = vmul.f32 %v5428, 0.5
      %v5941 = vmul.f32 %v5429, 0.5
      %v5942 = vmul.f32 %v5430, 0.5
      %v5943 = vmul.f32 %v5431, 0.5
      %v5944 = vmul.f32 %v5432, 0.5
      %v5945 = vmul.f32 %v5433, 0.5
      %v5946 = vmul.f32 %v5434, 0.5
      %v5947 = vmul.f32 %v5435, 0.5
      %v5948 = vmul.f32 %v5436, 0.5
      %v5949 = vmul.f32 %v5437, 0.5
      %v5950 = vmul.f32 %v5438, 0.5
      %v5951 = vmul.f32 %v5439, 0.5
      %v5952 = vmul.f32 %v5440, 0.5
      %v5953 = vmul.f32 %v5441, 0.5
      %v5954 = vmul.f32 %v5442, 0.5
      %v5955 = vmul.f32 %v5443, 0.5
      %v5956 = vmul.f32 %v5444, 0.5
      %v5957 = vmul.f32 %v5445, 0.5
      %v5958 = vmul.f32 %v5446, 0.5
      %v5959 = vmul.f32 %v5447, 0.5
      %v5960 = vmul.f32 %v5448, 0.5
      %v5961 = vmul.f32 %v5449, 0.5
      %v5962 = vmul.f32 %v5450, 0.5
      %v5963 = vmul.f32 %v5451, 0.5
      %v5964 = vmul.f32 %v5452, 0.5
      %v5965 = vmul.f32 %v5453, 0.5
      %v5966 = vmul.f32 %v5454, 0.5
      %v5967 = vmul.f32 %v5455, 0.5
      %v5968 = vmul.f32 %v5456, 0.5
      %v5969 = vmul.f32 %v5457, 0.5
      %v5970 = vmul.f32 %v5458, 0.5
      %v5971 = vmul.f32 %v5459, 0.5
      %v5972 = vmul.f32 %v5460, 0.5
      %v5973 = vmul.f32 %v5461, 0.5
      %v5974 = vmul.f32 %v5462, 0.5
      %v5975 = vmul.f32 %v5463, 0.5
      %v5976 = vmul.f32 %v5464, 0.5
      %v5977 = vmul.f32 %v5465, 0.5
      %v5978 = vmul.f32 %v5466, 0.5
      %v5979 = vmul.f32 %v5467, 0.5
      %v5980 = vmul.f32 %v5468, 0.5
      %v5981 = vmul.f32 %v5469, 0.5
      %v5982 = vmul.f32 %v5470, 0.5
      %v5983 = vmul.f32 %v5471, 0.5
      %v5984 = vmul.f32 %v5472, 0.5
      %v5985 = vmul.f32 %v5473, 0.5
      %v5986 = vmul.f32 %v5474, 0.5
      %v5987 = vmul.f32 %v5475, 0.5
      %v5988 = vmul.f32 %v5476, 0.5
      %v5989 = vmul.f32 %v5477, 0.5
      %v5990 = vmul.f32 %v5478, 0.5
      %v5991 = vmul.f32 %v5479, 0.5
      %v5992 = vmul.f32 %v5480, 0.5
      %v5993 = vmul.f32 %v5481, 0.5
      %v5994 = vmul.f32 %v5482, 0.5
      %v5995 = vmul.f32 %v5483, 0.5
      %v5996 = vmul.f32 %v5484, 0.5
      %v5997 = vmul.f32 %v5485, 0.5
      %v5998 = vmul.f32 %v5486, 0.5
      %v5999 = vmul.f32 %v5487, 0.5
      %v6000 = vmul.f32 %v5488, 0.5
      %v6001 = vmul.f32 %v5489, 0.5
      %v6002 = vmul.f32 %v5490, 0.5
      %v6003 = vmul.f32 %v5491, 0.5
      %v6004 = vmul.f32 %v5492, 0.5
      %v6005 = vmul.f32 %v5493, 0.5
      %v6006 = vmul.f32 %v5494, 0.5
      %v6007 = vmul.f32 %v5495, 0.5
      %v6008 = vmul.f32 %v5496, 0.5
      %v6009 = vmul.f32 %v5497, 0.5
      %v6010 = vmul.f32 %v5498, 0.5
      %v6011 = vmul.f32 %v5499, 0.5
      %v6012 = vmul.f32 %v5500, 0.5
      %v6013 = vmul.f32 %v5501, 0.5
      %v6014 = vmul.f32 %v5502, 0.5
      %v6015 = vmul.f32 %v5503, 0.5
      %v6016 = vmul.f32 %v5504, 0.5
      %v6017 = vmul.f32 %v5505, 0.5
      %v6018 = vmul.f32 %v5506, 0.5
      %v6019 = vmul.f32 %v5507, 0.5
      %v6020 = vmul.f32 %v5508, 0.5
      %v6021 = vmul.f32 %v5509, 0.5
      %v6022 = vmul.f32 %v5510, 0.5
      %v6023 = vmul.f32 %v5511, 0.5
      %v6024 = vmul.f32 %v5512, 0.5
      %v6025 = vmul.f32 %v5513, 0.5
      %v6026 = vmul.f32 %v5514, 0.5
      %v6027 = vmul.f32 %v5515, 0.5
      %v6028 = vmul.f32 %v5516, 0.5
      %v6029 = vmul.f32 %v5517, 0.5
      %v6030 = vmul.f32 %v5518, 0.5
      %v6031 = vmul.f32 %v5519, 0.5
      %v6032 = vmul.f32 %v5520, 0.5
      %v6033 = vmul.f32 %v5521, 0.5
      %v6034 = vmul.f32 %v5522, 0.5
      %v6035 = vmul.f32 %v5523, 0.5
      %v6036 = vmul.f32 %v5524, 0.5
      %v6037 = vmul.f32 %v5525, 0.5
      %v6038 = vmul.f32 %v5526, 0.5
      %v6039 = vmul.f32 %v5527, 0.5
      %v6040 = vmul.f32 %v5528, 0.5
      %v6041 = vmul.f32 %v5529, 0.5
      %v6042 = vmul.f32 %v5530, 0.5
      %v6043 = vmul.f32 %v5531, 0.5
      %v6044 = vmul.f32 %v5532, 0.5
      %v6045 = vmul.f32 %v5533, 0.5
      %v6046 = vmul.f32 %v5534, 0.5
      %v6047 = vmul.f32 %v5535, 0.5
      %v6048 = vmul.f32 %v5536, 0.5
      %v6049 = vmul.f32 %v5537, 0.5
      %v6050 = vmul.f32 %v5538, 0.5
      %v6051 = vmul.f32 %v5539, 0.5
      %v6052 = vmul.f32 %v5540, 0.5
      %v6053 = vmul.f32 %v5541, 0.5
      %v6054 = vmul.f32 %v5542, 0.5
      %v6055 = vmul.f32 %v5543, 0.5
      %v6056 = vmul.f32 %v5544, 0.5
      %v6057 = vmul.f32 %v5545, 0.5
      %v6058 = vmul.f32 %v5546, 0.5
      %v6059 = vmul.f32 %v5547, 0.5
      %v6060 = vmul.f32 %v5548, 0.5
      %v6061 = vmul.f32 %v5549, 0.5
      %v6062 = vmul.f32 %v5550, 0.5
      %v6063 = vmul.f32 %v5551, 0.5
      %v6064 = vmul.f32 %v5552, 0.5
      %v6065 = vmul.f32 %v5553, 0.5
      %v6066 = vmul.f32 %v5554, 0.5
      %v6067 = vmul.f32 %v5555, 0.5
      %v6068 = vmul.f32 %v5556, 0.5
      %v6069 = vmul.f32 %v5557, 0.5
      %v6070 = vmul.f32 %v5558, 0.5
      %v6071 = vmul.f32 %v5559, 0.5
      %v6072 = vmul.f32 %v5560, 0.5
      %v6073 = vmul.f32 %v5561, 0.5
      %v6074 = vmul.f32 %v5562, 0.5
      %v6075 = vmul.f32 %v5563, 0.5
      %v6076 = vmul.f32 %v5564, 0.5
      %v6077 = vmul.f32 %v5565, 0.5
      %v6078 = vmul.f32 %v5566, 0.5
      %v6079 = vmul.f32 %v5567, 0.5
      %v6080 = vmul.f32 %v5568, 0.5
      %v6081 = vmul.f32 %v5569, 0.5
      %v6082 = vmul.f32 %v5570, 0.5
      %v6083 = vmul.f32 %v5571, 0.5
      %v6084 = vmul.f32 %v5572, 0.5
      %v6085 = vmul.f32 %v5573, 0.5
      %v6086 = vmul.f32 %v5574, 0.5
      %v6087 = vmul.f32 %v5575, 0.5
      %v6088 = vmul.f32 %v5576, 0.5
      %v6089 = vmul.f32 %v5577, 0.5
      %v6090 = vmul.f32 %v5578, 0.5
      %v6091 = vmul.f32 %v5579, 0.5
      %v6092 = vmul.f32 %v5580, 0.5
      %v6093 = vmul.f32 %v5581, 0.5
      %v6094 = vmul.f32 %v5582, 0.5
      %v6095 = vmul.f32 %v5583, 0.5
      %v6096 = vmul.f32 %v5584, 0.5
      %v6097 = vmul.f32 %v5585, 0.5
      %v6098 = vmul.f32 %v5586, 0.5
      %v6099 = vmul.f32 %v5587, 0.5
      %v6100 = vmul.f32 %v5588, 0.5
      %v6101 = vmul.f32 %v5589, 0.5
      %v6102 = vmul.f32 %v5590, 0.5
      %v6103 = vmul.f32 %v5591, 0.5
      %v6104 = vmul.f32 %v5592, 0.5
      %v6105 = vmul.f32 %v5593, 0.5
      %v6106 = vmul.f32 %v5594, 0.5
      %v6107 = vmul.f32 %v5595, 0.5
      %v6108 = vmul.f32 %v5596, 0.5
      %v6109 = vmul.f32 %v5597, 0.5
      %v6110 = vmul.f32 %v5598, 0.5
      %v6111 = vmul.f32 %v5599, 0.5
      %v6112 = vmul.f32 %v5600, 0.5
      %v6113 = vmul.f32 %v5601, 0.5
      %v6114 = vmul.f32 %v5602, 0.5
      %v6115 = vmul.f32 %v5603, 0.5
      %v6116 = vmul.f32 %v5604, 0.5
      %v6117 = vmul.f32 %v5605, 0.5
      %v6118 = vmul.f32 %v5606, 0.5
      %v6119 = vmul.f32 %v5607, 0.5
      %v6120 = vmul.f32 %v5608, 0.5
      %v6121 = vmul.f32 %v5609, 0.5
      %v6122 = vmul.f32 %v5610, 0.5
      %v6123 = vmul.f32 %v5611, 0.5
      %v6124 = vmul.f32 %v5612, 0.5
      %v6125 = vmul.f32 %v5613, 0.5
      %v6126 = vmul.f32 %v5614, 0.5
      %v6127 = vmul.f32 %v5615, 0.5
      %v6128 = vmul.f32 %v5616, 0.5
      %v6129 = vmul.f32 %v5617, 0.5
      %v6130 = vmul.f32 %v5618, 0.5
      %v6131 = vmul.f32 %v5619, 0.5
      %v6132 = vmul.f32 %v5620, 0.5
      %v6133 = vmul.f32 %v5621, 0.5
      %v6134 = vmul.f32 %v5622, 0.5
      %v6135 = vmul.f32 %v5623, 0.5
      %v6136 = vmul.f32 %v5624, 0.5
      %v6137 = vmul.f32 %v5625, 0.5
      %v6138 = vmul.f32 %v5626, 0.5
      %v6139 = vmul.f32 %v5627, 0.5
      %v6140 = vmul.f32 %v5628, 0.5
      %v6141 = vmul.f32 %v5629, 0.5
      %v6142 = vmul.f32 %v5630, 0.5
      %v6143 = vmul.f32 %v5631, 0.5
      %v6144 = vmul.f32 %v5632, 0.5
      %v6145 = vmul.f32 %v5633, 0.5
      %v6146 = vmul.f32 %v5634, 0.5
      %v6147 = vmul.f32 %v5635, 0.5
      %v6148 = vmul.f32 %v5636, 0.5
      %v6149 = vmul.f32 %v5637, 0.5
      %v6150 = vmul.f32 %v5638, 0.5
      %v6151 = vmul.f32 %v5639, 0.5
      %v6152 = vmul.f32 %v5640, 0.5
      %v6153 = vmul.f32 %v5641, 0.5
      %v6154 = vmul.f32 %v5642, 0.5
      %v6155 = vmul.f32 %v5643, 0.5
      %v6156 = vmul.f32 %v5644, 0.5
      %v6157 = vmul.f32 %v5645, 0.5
      %v6158 = vmul.f32 %v5646, 0.5
      %v6159 = vmul.f32 %v5647, 0.5
      %v6160 = vmul.f32 %v5648, 0.5
      %v6161 = vmul.f32 %v5649, 0.5
      %v6162 = vmul.f32 %v5650, 0.5
      %v6163 = vmul.f32 %v5651, 0.5
      %v6164 = vmul.f32 %v5652, 0.5
      %v6165 = vmul.f32 %v5653, 0.5
      %v6166 = vmul.f32 %v5654, 0.5
      %v6167 = vmul.f32 %v5655, 0.5
      %v6168 = vmul.f32 %v5656, 0.5
      %v6169 = vmul.f32 %v5657, 0.5
      %v6170 = vmul.f32 %v5658, 0.5
      %v6171 = vmul.f32 %v5659, 0.5
      %v6172 = vmul.f32 %v5660, 0.5
      %v6173 = vmul.f32 %v5661, 0.5
      %v6174 = vmul.f32 %v5662, 0.5
      %v6175 = vmul.f32 %v5663, 0.5
      %v6176 = vmul.f32 %v5664, 0.5
      %v6177 = vmul.f32 %v5665, 0.5
      %v6178 = vmul.f32 %v5666, 0.5
      %v6179 = vmul.f32 %v5667, 0.5
      %v6180 = vmul.f32 %v5668, 0.5
      %v6181 = vmul.f32 %v5669, 0.5
      %v6182 = vmul.f32 %v5670, 0.5
      %v6183 = vmul.f32 %v5671, 0.5
      %v6184 = vmul.f32 %v5672, 0.5
      %v6185 = vmul.f32 %v5673, 0.5
      %v6186 = vmul.f32 %v5674, 0.5
      %v6187 = vmul.f32 %v5675, 0.5
      %v6188 = vmul.f32 %v5676, 0.5
      %v6189 = vmul.f32 %v5677, 0.5
      %v6190 = vmul.f32 %v5678, 0.5
      %v6191 = vmul.f32 %v5679, 0.5
      %v6192 = vmul.f32 %v5680, 0.5
      %v6193 = vmul.f32 %v5681, 0.5
      %v6194 = vmul.f32 %v5682, 0.5
      %v6195 = vmul.f32 %v5683, 0.5
      %v6196 = vmul.f32 %v5684, 0.5
      %v6197 = vmul.f32 %v5685, 0.5
      %v6198 = vmul.f32 %v5686, 0.5
      %v6199 = vmul.f32 %v5687, 0.5
      %v6200 = vmul.f32 %v5688, 0.5
      %v6201 = vmul.f32 %v5689, 0.5
      %v6202 = vmul.f32 %v5690, 0.5
      %v6203 = vmul.f32 %v5691, 0.5
      %v6204 = vmul.f32 %v5692, 0.5
      %v6205 = vmul.f32 %v5693, 0.5
      %v6206 = vmul.f32 %v5694, 0.5
      %v6207 = vmul.f32 %v5695, 0.5
      %v6208 = vmul.f32 %v5696, 0.5
      %v6209 = vmul.f32 %v5697, 0.5
      %v6210 = vmul.f32 %v5698, 0.5
      %v6211 = vmul.f32 %v5699, 0.5
      %v6212 = vmul.f32 %v5700, 0.5
      %v6213 = vmul.f32 %v5701, 0.5
      %v6214 = vmul.f32 %v5702, 0.5
      %v6215 = vmul.f32 %v5703, 0.5
      %v6216 = vmul.f32 %v5704, 0.5
      %v6217 = vmul.f32 %v5705, 0.5
      %v6218 = vmul.f32 %v5706, 0.5
      %v6219 = vmul.f32 %v5707, 0.5
      %v6220 = vmul.f32 %v5708, 0.5
      %v6221 = vmul.f32 %v5709, 0.5
      %v6222 = vmul.f32 %v5710, 0.5
      %v6223 = vmul.f32 %v5711, 0.5
      %v6224 = vmul.f32 %v5712, 0.5
      %v6225 = vmul.f32 %v5713, 0.5
      %v6226 = vmul.f32 %v5714, 0.5
      %v6227 = vmul.f32 %v5715, 0.5
      %v6228 = vmul.f32 %v5716, 0.5
      %v6229 = vmul.f32 %v5717, 0.5
      %v6230 = vmul.f32 %v5718, 0.5
      %v6231 = vmul.f32 %v5719, 0.5
      %v6232 = vmul.f32 %v5720, 0.5
      %v6233 = vmul.f32 %v5721, 0.5
      %v6234 = vmul.f32 %v5722, 0.5
      %v6235 = vmul.f32 %v5723, 0.5
      %v6236 = vmul.f32 %v5724, 0.5
      %v6237 = vmul.f32 %v5725, 0.5
      %v6238 = vmul.f32 %v5726, 0.5
      %v6239 = vmul.f32 %v5727, 0.5
      %v6240 = vmul.f32 %v5728, 0.5
      %v6241 = vmul.f32 %v5729, 0.5
      %v6242 = vmul.f32 %v5730, 0.5
      %v6243 = vmul.f32 %v5731, 0.5
      %v6244 = vmul.f32 %v5732, 0.5
      %v6245 = vmul.f32 %v5733, 0.5
      %v6246 = vmul.f32 %v5734, 0.5
      %v6247 = vmul.f32 %v5735, 0.5
      %v6248 = vmul.f32 %v5736, 0.5
      %v6249 = vmul.f32 %v5737, 0.5
      %v6250 = vmul.f32 %v5738, 0.5
      %v6251 = vmul.f32 %v5739, 0.5
      %v6252 = vmul.f32 %v5740, 0.5
      %v6253 = vmul.f32 %v5741, 0.5
      %v6254 = vmul.f32 %v5742, 0.5
      %v6255 = vmul.f32 %v5743, 0.5
      %v6256 = vmul.f32 %v5744, 0.5
      %v6257 = vmul.f32 %v5745, 0.5
      %v6258 = vmul.f32 %v5746, 0.5
      %v6259 = vmul.f32 %v5747, 0.5
      %v6260 = vmul.f32 %v5748, 0.5
      %v6261 = vmul.f32 %v5749, 0.5
      %v6262 = vmul.f32 %v5750, 0.5
      %v6263 = vmul.f32 %v5751, 0.5
      %v6264 = vmul.f32 %v5752, 0.5
      %v6265 = vmul.f32 %v5753, 0.5
      %v6266 = vmul.f32 %v5754, 0.5
      %v6267 = vmul.f32 %v5755, 0.5
      %v6268 = vmul.f32 %v5756, 0.5
      %v6269 = vmul.f32 %v5757, 0.5
      %v6270 = vmul.f32 %v5758, 0.5
      %v6271 = vmul.f32 %v5759, 0.5
      %v6272 = vmul.f32 %v5760, 0.5
      %v6273 = vmul.f32 %v5761, 0.5
      %v6274 = vmul.f32 %v5762, 0.5
      %v6275 = vmul.f32 %v5763, 0.5
      %v6276 = vmul.f32 %v5764, 0.5
      %v6277 = vmul.f32 %v5765, 0.5
      %v6278 = vmul.f32 %v5766, 0.5
      %v6279 = vmul.f32 %v5767, 0.5
      %v6280 = vmul.f32 %v5768, 0.5
      %v6281 = vmul.f32 %v5769, 0.5
      %v6282 = vmul.f32 %v5770, 0.5
      %v6283 = vmul.f32 %v5771, 0.5
      %v6284 = vmul.f32 %v5772, 0.5
      %v6285 = vmul.f32 %v5773, 0.5
      %v6286 = vmul.f32 %v5774, 0.5
      %v6287 = vmul.f32 %v5775, 0.5
      %v6288 = vmul.f32 %v5776, 0.5
      %v6289 = vmul.f32 %v5777, 0.5
      %v6290 = vmul.f32 %v5778, 0.5
      %v6291 = vmul.f32 %v5779, 0.5
      %v6292 = vmul.f32 %v5780, 0.5
      %v6293 = vmul.f32 %v5781, 0.5
      %v6294 = vmul.f32 %v5782, 0.5
      %v6295 = vmul.f32 %v5783, 0.5
      %v6296 = vmul.f32 %v5784, 0.5
      %v6297 = vmul.f32 %v5785, 0.5
      %v6298 = vmul.f32 %v5786, 0.5
      %v6299 = vmul.f32 %v5787, 0.5
      %v6300 = vmul.f32 %v5788, 0.5
      %v6301 = vmul.f32 %v5789, 0.5
      %v6302 = vmul.f32 %v5790, 0.5
      %v6303 = vmul.f32 %v5791, 0.5
      %v6304 = vmul.f32 %v5792, 0.5
      %v6305 = vmul.f32 %v5793, 0.5
      %v6306 = vmul.f32 %v5794, 0.5
      %v6307 = vmul.f32 %v5795, 0.5
      %v6308 = vmul.f32 %v5796, 0.5
      %v6309 = vmul.f32 %v5797, 0.5
      %v6310 = vmul.f32 %v5798, 0.5
      %v6311 = vmul.f32 %v5799, 0.5
      %v6312 = vmul.f32 %v5800, 0.5
      %v6313 = vmul.f32 %v5801, 0.5
      %v6314 = vmul.f32 %v5802, 0.5
      %v6315 = vmul.f32 %v5803, 0.5
      %v6316 = vmul.f32 %v5804, 0.5
      %v6317 = vmul.f32 %v5805, 0.5
      %v6318 = vmul.f32 %v5806, 0.5
      %v6319 = vmul.f32 %v5807, 0.5
      %v6320 = vmul.f32 %v5808, 0.5
      %v6321 = vmul.f32 %v5809, 0.5
      %v6322 = vmul.f32 %v5810, 0.5
      %v6323 = vmul.f32 %v5811, 0.5
      %v6324 = vmul.f32 %v5812, 0.5
      %v6325 = vmul.f32 %v5813, 0.5
      %v6326 = vmul.f32 %v5814, 0.5
      %v6327 = vmul.f32 %v5815, 0.5
      %v6328 = vmul.f32 %v5816, 0.5
      %v6329 = vmul.f32 %v5817, 0.5
      %v6330 = vmul.f32 %v5818, 0.5
      %v6331 = vmul.f32 %v5819, 0.5
      %v6332 = vmul.f32 %v5820, 0.5
      %v6333 = vmul.f32 %v5821, 0.5
      %v6334 = vmul.f32 %v5822, 0.5
      %v6335 = vmul.f32 %v5823, 0.5
      %v6336 = vmul.f32 %v5824, 0.5
      %v6337 = vmul.f32 %v5825, 0.5
      %v6338 = vmul.f32 %v5826, 0.5
      %v6339 = vmul.f32 %v5827, 0.5
      %v6340 = vmul.f32 %v5828, 0.5
      %v6341 = vmul.f32 %v5829, 0.5
      %v6342 = vmul.f32 %v5830, 0.5
      %v6343 = vmul.f32 %v5831, 0.5
      %v6344 = vmul.f32 %v5832, 0.5
      %v6345 = vmul.f32 %v5833, 0.5
      %v6346 = vmul.f32 %v5834, 0.5
      %v6347 = vmul.f32 %v5835, 0.5
      %v6348 = vmul.f32 %v5836, 0.5
      %v6349 = vmul.f32 %v5837, 0.5
      %v6350 = vmul.f32 %v5838, 0.5
      %v6351 = vmul.f32 %v5839, 0.5
      %v6352 = vmul.f32 %v5840, 0.5
      %v6353 = vld [vmem:[%s5] sm:$0xff]
      %v6354 = vld [vmem:[%s5 + $0x8] sm:$0xff]
      %v6355 = vld [vmem:[%s5 + $0x10] sm:$0xff]
      %v6356 = vld [vmem:[%s5 + $0x18] sm:$0xff]
      %v6357 = vld [vmem:[%s5 + $0x20] sm:$0xff]
      %v6358 = vld [vmem:[%s5 + $0x28] sm:$0xff]
      %v6359 = vld [vmem:[%s5 + $0x30] sm:$0xff]
      %v6360 = vld [vmem:[%s5 + $0x38] sm:$0xff]
      %v6361 = vld [vmem:[%s5 + $0x40] sm:$0xff]
      %v6362 = vld [vmem:[%s5 + $0x48] sm:$0xff]
      %v6363 = vld [vmem:[%s5 + $0x50] sm:$0xff]
      %v6364 = vld [vmem:[%s5 + $0x58] sm:$0xff]
      %v6365 = vld [vmem:[%s5 + $0x60] sm:$0xff]
      %v6366 = vld [vmem:[%s5 + $0x68] sm:$0xff]
      %v6367 = vld [vmem:[%s5 + $0x70] sm:$0xff]
      %v6368 = vld [vmem:[%s5 + $0x78] sm:$0xff]
      %v6369 = vld [vmem:[%s5 + $0x80] sm:$0xff]
      %v6370 = vld [vmem:[%s5 + $0x88] sm:$0xff]
      %v6371 = vld [vmem:[%s5 + $0x90] sm:$0xff]
      %v6372 = vld [vmem:[%s5 + $0x98] sm:$0xff]
      %v6373 = vld [vmem:[%s5 + $0xa0] sm:$0xff]
      %v6374 = vld [vmem:[%s5 + $0xa8] sm:$0xff]
      %v6375 = vld [vmem:[%s5 + $0xb0] sm:$0xff]
      %v6376 = vld [vmem:[%s5 + $0xb8] sm:$0xff]
      %v6377 = vld [vmem:[%s5 + $0xc0] sm:$0xff]
      %v6378 = vld [vmem:[%s5 + $0xc8] sm:$0xff]
      %v6379 = vld [vmem:[%s5 + $0xd0] sm:$0xff]
      %v6380 = vld [vmem:[%s5 + $0xd8] sm:$0xff]
      %v6381 = vld [vmem:[%s5 + $0xe0] sm:$0xff]
      %v6382 = vld [vmem:[%s5 + $0xe8] sm:$0xff]
      %v6383 = vld [vmem:[%s5 + $0xf0] sm:$0xff]
      %v6384 = vld [vmem:[%s5 + $0xf8] sm:$0xff]
      %6386 = vset.pattern.permute.xlu0 0
      %6387 = vperm.xlu0 %6386, %v6353
      %v6388 = vpop.permute.xlu0 %6387
      %6391 = vset.pattern.permute.xlu0 0
      %6392 = vperm.xlu0 %6391, %v6354
      %v6393 = vpop.permute.xlu0 %6392
      %6396 = vset.pattern.permute.xlu0 0
      %6397 = vperm.xlu0 %6396, %v6355
      %v6398 = vpop.permute.xlu0 %6397
      %6401 = vset.pattern.permute.xlu0 0
      %6402 = vperm.xlu0 %6401, %v6356
      %v6403 = vpop.permute.xlu0 %6402
      %6406 = vset.pattern.permute.xlu0 0
      %6407 = vperm.xlu0 %6406, %v6357
      %v6408 = vpop.permute.xlu0 %6407
      %6411 = vset.pattern.permute.xlu0 0
      %6412 = vperm.xlu0 %6411, %v6358
      %v6413 = vpop.permute.xlu0 %6412
      %6416 = vset.pattern.permute.xlu0 0
      %6417 = vperm.xlu0 %6416, %v6359
      %v6418 = vpop.permute.xlu0 %6417
      %6421 = vset.pattern.permute.xlu0 0
      %6422 = vperm.xlu0 %6421, %v6360
      %v6423 = vpop.permute.xlu0 %6422
      %6426 = vset.pattern.permute.xlu0 0
      %6427 = vperm.xlu0 %6426, %v6361
      %v6428 = vpop.permute.xlu0 %6427
      %6431 = vset.pattern.permute.xlu0 0
      %6432 = vperm.xlu0 %6431, %v6362
      %v6433 = vpop.permute.xlu0 %6432
      %6436 = vset.pattern.permute.xlu0 0
      %6437 = vperm.xlu0 %6436, %v6363
      %v6438 = vpop.permute.xlu0 %6437
      %6441 = vset.pattern.permute.xlu0 0
      %6442 = vperm.xlu0 %6441, %v6364
      %v6443 = vpop.permute.xlu0 %6442
      %6446 = vset.pattern.permute.xlu0 0
      %6447 = vperm.xlu0 %6446, %v6365
      %v6448 = vpop.permute.xlu0 %6447
      %6451 = vset.pattern.permute.xlu0 0
      %6452 = vperm.xlu0 %6451, %v6366
      %v6453 = vpop.permute.xlu0 %6452
      %6456 = vset.pattern.permute.xlu0 0
      %6457 = vperm.xlu0 %6456, %v6367
      %v6458 = vpop.permute.xlu0 %6457
      %6461 = vset.pattern.permute.xlu0 0
      %6462 = vperm.xlu0 %6461, %v6368
      %v6463 = vpop.permute.xlu0 %6462
      %6466 = vset.pattern.permute.xlu0 0
      %6467 = vperm.xlu0 %6466, %v6369
      %v6468 = vpop.permute.xlu0 %6467
      %6471 = vset.pattern.permute.xlu0 0
      %6472 = vperm.xlu0 %6471, %v6370
      %v6473 = vpop.permute.xlu0 %6472
      %6476 = vset.pattern.permute.xlu0 0
      %6477 = vperm.xlu0 %6476, %v6371
      %v6478 = vpop.permute.xlu0 %6477
      %6481 = vset.pattern.permute.xlu0 0
      %6482 = vperm.xlu0 %6481, %v6372
      %v6483 = vpop.permute.xlu0 %6482
      %6486 = vset.pattern.permute.xlu0 0
      %6487 = vperm.xlu0 %6486, %v6373
      %v6488 = vpop.permute.xlu0 %6487
      %6491 = vset.pattern.permute.xlu0 0
      %6492 = vperm.xlu0 %6491, %v6374
      %v6493 = vpop.permute.xlu0 %6492
      %6496 = vset.pattern.permute.xlu0 0
      %6497 = vperm.xlu0 %6496, %v6375
      %v6498 = vpop.permute.xlu0 %6497
      %6501 = vset.pattern.permute.xlu0 0
      %6502 = vperm.xlu0 %6501, %v6376
      %v6503 = vpop.permute.xlu0 %6502
      %6506 = vset.pattern.permute.xlu0 0
      %6507 = vperm.xlu0 %6506, %v6377
      %v6508 = vpop.permute.xlu0 %6507
      %6511 = vset.pattern.permute.xlu0 0
      %6512 = vperm.xlu0 %6511, %v6378
      %v6513 = vpop.permute.xlu0 %6512
      %6516 = vset.pattern.permute.xlu0 0
      %6517 = vperm.xlu0 %6516, %v6379
      %v6518 = vpop.permute.xlu0 %6517
      %6521 = vset.pattern.permute.xlu0 0
      %6522 = vperm.xlu0 %6521, %v6380
      %v6523 = vpop.permute.xlu0 %6522
      %6526 = vset.pattern.permute.xlu0 0
      %6527 = vperm.xlu0 %6526, %v6381
      %v6528 = vpop.permute.xlu0 %6527
      %6531 = vset.pattern.permute.xlu0 0
      %6532 = vperm.xlu0 %6531, %v6382
      %v6533 = vpop.permute.xlu0 %6532
      %6536 = vset.pattern.permute.xlu0 0
      %6537 = vperm.xlu0 %6536, %v6383
      %v6538 = vpop.permute.xlu0 %6537
      %6541 = vset.pattern.permute.xlu0 0
      %6542 = vperm.xlu0 %6541, %v6384
      %v6543 = vpop.permute.xlu0 %6542
      %v6545 = vmul.f32 %v6388, %v5841
      %v6546 = vmul.f32 %v6388, %v5842
      %v6547 = vmul.f32 %v6388, %v5843
      %v6548 = vmul.f32 %v6388, %v5844
      %v6549 = vmul.f32 %v6388, %v5845
      %v6550 = vmul.f32 %v6388, %v5846
      %v6551 = vmul.f32 %v6388, %v5847
      %v6552 = vmul.f32 %v6388, %v5848
      %v6553 = vmul.f32 %v6388, %v5849
      %v6554 = vmul.f32 %v6388, %v5850
      %v6555 = vmul.f32 %v6388, %v5851
      %v6556 = vmul.f32 %v6388, %v5852
      %v6557 = vmul.f32 %v6388, %v5853
      %v6558 = vmul.f32 %v6388, %v5854
      %v6559 = vmul.f32 %v6388, %v5855
      %v6560 = vmul.f32 %v6388, %v5856
      %v6561 = vmul.f32 %v6393, %v5857
      %v6562 = vmul.f32 %v6393, %v5858
      %v6563 = vmul.f32 %v6393, %v5859
      %v6564 = vmul.f32 %v6393, %v5860
      %v6565 = vmul.f32 %v6393, %v5861
      %v6566 = vmul.f32 %v6393, %v5862
      %v6567 = vmul.f32 %v6393, %v5863
      %v6568 = vmul.f32 %v6393, %v5864
      %v6569 = vmul.f32 %v6393, %v5865
      %v6570 = vmul.f32 %v6393, %v5866
      %v6571 = vmul.f32 %v6393, %v5867
      %v6572 = vmul.f32 %v6393, %v5868
      %v6573 = vmul.f32 %v6393, %v5869
      %v6574 = vmul.f32 %v6393, %v5870
      %v6575 = vmul.f32 %v6393, %v5871
      %v6576 = vmul.f32 %v6393, %v5872
      %v6577 = vmul.f32 %v6398, %v5873
      %v6578 = vmul.f32 %v6398, %v5874
      %v6579 = vmul.f32 %v6398, %v5875
      %v6580 = vmul.f32 %v6398, %v5876
      %v6581 = vmul.f32 %v6398, %v5877
      %v6582 = vmul.f32 %v6398, %v5878
      %v6583 = vmul.f32 %v6398, %v5879
      %v6584 = vmul.f32 %v6398, %v5880
      %v6585 = vmul.f32 %v6398, %v5881
      %v6586 = vmul.f32 %v6398, %v5882
      %v6587 = vmul.f32 %v6398, %v5883
      %v6588 = vmul.f32 %v6398, %v5884
      %v6589 = vmul.f32 %v6398, %v5885
      %v6590 = vmul.f32 %v6398, %v5886
      %v6591 = vmul.f32 %v6398, %v5887
      %v6592 = vmul.f32 %v6398, %v5888
      %v6593 = vmul.f32 %v6403, %v5889
      %v6594 = vmul.f32 %v6403, %v5890
      %v6595 = vmul.f32 %v6403, %v5891
      %v6596 = vmul.f32 %v6403, %v5892
      %v6597 = vmul.f32 %v6403, %v5893
      %v6598 = vmul.f32 %v6403, %v5894
      %v6599 = vmul.f32 %v6403, %v5895
      %v6600 = vmul.f32 %v6403, %v5896
      %v6601 = vmul.f32 %v6403, %v5897
      %v6602 = vmul.f32 %v6403, %v5898
      %v6603 = vmul.f32 %v6403, %v5899
      %v6604 = vmul.f32 %v6403, %v5900
      %v6605 = vmul.f32 %v6403, %v5901
      %v6606 = vmul.f32 %v6403, %v5902
      %v6607 = vmul.f32 %v6403, %v5903
      %v6608 = vmul.f32 %v6403, %v5904
      %v6609 = vmul.f32 %v6408, %v5905
      %v6610 = vmul.f32 %v6408, %v5906
      %v6611 = vmul.f32 %v6408, %v5907
      %v6612 = vmul.f32 %v6408, %v5908
      %v6613 = vmul.f32 %v6408, %v5909
      %v6614 = vmul.f32 %v6408, %v5910
      %v6615 = vmul.f32 %v6408, %v5911
      %v6616 = vmul.f32 %v6408, %v5912
      %v6617 = vmul.f32 %v6408, %v5913
      %v6618 = vmul.f32 %v6408, %v5914
      %v6619 = vmul.f32 %v6408, %v5915
      %v6620 = vmul.f32 %v6408, %v5916
      %v6621 = vmul.f32 %v6408, %v5917
      %v6622 = vmul.f32 %v6408, %v5918
      %v6623 = vmul.f32 %v6408, %v5919
      %v6624 = vmul.f32 %v6408, %v5920
      %v6625 = vmul.f32 %v6413, %v5921
      %v6626 = vmul.f32 %v6413, %v5922
      %v6627 = vmul.f32 %v6413, %v5923
      %v6628 = vmul.f32 %v6413, %v5924
      %v6629 = vmul.f32 %v6413, %v5925
      %v6630 = vmul.f32 %v6413, %v5926
      %v6631 = vmul.f32 %v6413, %v5927
      %v6632 = vmul.f32 %v6413, %v5928
      %v6633 = vmul.f32 %v6413, %v5929
      %v6634 = vmul.f32 %v6413, %v5930
      %v6635 = vmul.f32 %v6413, %v5931
      %v6636 = vmul.f32 %v6413, %v5932
      %v6637 = vmul.f32 %v6413, %v5933
      %v6638 = vmul.f32 %v6413, %v5934
      %v6639 = vmul.f32 %v6413, %v5935
      %v6640 = vmul.f32 %v6413, %v5936
      %v6641 = vmul.f32 %v6418, %v5937
      %v6642 = vmul.f32 %v6418, %v5938
      %v6643 = vmul.f32 %v6418, %v5939
      %v6644 = vmul.f32 %v6418, %v5940
      %v6645 = vmul.f32 %v6418, %v5941
      %v6646 = vmul.f32 %v6418, %v5942
      %v6647 = vmul.f32 %v6418, %v5943
      %v6648 = vmul.f32 %v6418, %v5944
      %v6649 = vmul.f32 %v6418, %v5945
      %v6650 = vmul.f32 %v6418, %v5946
      %v6651 = vmul.f32 %v6418, %v5947
      %v6652 = vmul.f32 %v6418, %v5948
      %v6653 = vmul.f32 %v6418, %v5949
      %v6654 = vmul.f32 %v6418, %v5950
      %v6655 = vmul.f32 %v6418, %v5951
      %v6656 = vmul.f32 %v6418, %v5952
      %v6657 = vmul.f32 %v6423, %v5953
      %v6658 = vmul.f32 %v6423, %v5954
      %v6659 = vmul.f32 %v6423, %v5955
      %v6660 = vmul.f32 %v6423, %v5956
      %v6661 = vmul.f32 %v6423, %v5957
      %v6662 = vmul.f32 %v6423, %v5958
      %v6663 = vmul.f32 %v6423, %v5959
      %v6664 = vmul.f32 %v6423, %v5960
      %v6665 = vmul.f32 %v6423, %v5961
      %v6666 = vmul.f32 %v6423, %v5962
      %v6667 = vmul.f32 %v6423, %v5963
      %v6668 = vmul.f32 %v6423, %v5964
      %v6669 = vmul.f32 %v6423, %v5965
      %v6670 = vmul.f32 %v6423, %v5966
      %v6671 = vmul.f32 %v6423, %v5967
      %v6672 = vmul.f32 %v6423, %v5968
      %v6673 = vmul.f32 %v6428, %v5969
      %v6674 = vmul.f32 %v6428, %v5970
      %v6675 = vmul.f32 %v6428, %v5971
      %v6676 = vmul.f32 %v6428, %v5972
      %v6677 = vmul.f32 %v6428, %v5973
      %v6678 = vmul.f32 %v6428, %v5974
      %v6679 = vmul.f32 %v6428, %v5975
      %v6680 = vmul.f32 %v6428, %v5976
      %v6681 = vmul.f32 %v6428, %v5977
      %v6682 = vmul.f32 %v6428, %v5978
      %v6683 = vmul.f32 %v6428, %v5979
      %v6684 = vmul.f32 %v6428, %v5980
      %v6685 = vmul.f32 %v6428, %v5981
      %v6686 = vmul.f32 %v6428, %v5982
      %v6687 = vmul.f32 %v6428, %v5983
      %v6688 = vmul.f32 %v6428, %v5984
      %v6689 = vmul.f32 %v6433, %v5985
      %v6690 = vmul.f32 %v6433, %v5986
      %v6691 = vmul.f32 %v6433, %v5987
      %v6692 = vmul.f32 %v6433, %v5988
      %v6693 = vmul.f32 %v6433, %v5989
      %v6694 = vmul.f32 %v6433, %v5990
      %v6695 = vmul.f32 %v6433, %v5991
      %v6696 = vmul.f32 %v6433, %v5992
      %v6697 = vmul.f32 %v6433, %v5993
      %v6698 = vmul.f32 %v6433, %v5994
      %v6699 = vmul.f32 %v6433, %v5995
      %v6700 = vmul.f32 %v6433, %v5996
      %v6701 = vmul.f32 %v6433, %v5997
      %v6702 = vmul.f32 %v6433, %v5998
      %v6703 = vmul.f32 %v6433, %v5999
      %v6704 = vmul.f32 %v6433, %v6000
      %v6705 = vmul.f32 %v6438, %v6001
      %v6706 = vmul.f32 %v6438, %v6002
      %v6707 = vmul.f32 %v6438, %v6003
      %v6708 = vmul.f32 %v6438, %v6004
      %v6709 = vmul.f32 %v6438, %v6005
      %v6710 = vmul.f32 %v6438, %v6006
      %v6711 = vmul.f32 %v6438, %v6007
      %v6712 = vmul.f32 %v6438, %v6008
      %v6713 = vmul.f32 %v6438, %v6009
      %v6714 = vmul.f32 %v6438, %v6010
      %v6715 = vmul.f32 %v6438, %v6011
      %v6716 = vmul.f32 %v6438, %v6012
      %v6717 = vmul.f32 %v6438, %v6013
      %v6718 = vmul.f32 %v6438, %v6014
      %v6719 = vmul.f32 %v6438, %v6015
      %v6720 = vmul.f32 %v6438, %v6016
      %v6721 = vmul.f32 %v6443, %v6017
      %v6722 = vmul.f32 %v6443, %v6018
      %v6723 = vmul.f32 %v6443, %v6019
      %v6724 = vmul.f32 %v6443, %v6020
      %v6725 = vmul.f32 %v6443, %v6021
      %v6726 = vmul.f32 %v6443, %v6022
      %v6727 = vmul.f32 %v6443, %v6023
      %v6728 = vmul.f32 %v6443, %v6024
      %v6729 = vmul.f32 %v6443, %v6025
      %v6730 = vmul.f32 %v6443, %v6026
      %v6731 = vmul.f32 %v6443, %v6027
      %v6732 = vmul.f32 %v6443, %v6028
      %v6733 = vmul.f32 %v6443, %v6029
      %v6734 = vmul.f32 %v6443, %v6030
      %v6735 = vmul.f32 %v6443, %v6031
      %v6736 = vmul.f32 %v6443, %v6032
      %v6737 = vmul.f32 %v6448, %v6033
      %v6738 = vmul.f32 %v6448, %v6034
      %v6739 = vmul.f32 %v6448, %v6035
      %v6740 = vmul.f32 %v6448, %v6036
      %v6741 = vmul.f32 %v6448, %v6037
      %v6742 = vmul.f32 %v6448, %v6038
      %v6743 = vmul.f32 %v6448, %v6039
      %v6744 = vmul.f32 %v6448, %v6040
      %v6745 = vmul.f32 %v6448, %v6041
      %v6746 = vmul.f32 %v6448, %v6042
      %v6747 = vmul.f32 %v6448, %v6043
      %v6748 = vmul.f32 %v6448, %v6044
      %v6749 = vmul.f32 %v6448, %v6045
      %v6750 = vmul.f32 %v6448, %v6046
      %v6751 = vmul.f32 %v6448, %v6047
      %v6752 = vmul.f32 %v6448, %v6048
      %v6753 = vmul.f32 %v6453, %v6049
      %v6754 = vmul.f32 %v6453, %v6050
      %v6755 = vmul.f32 %v6453, %v6051
      %v6756 = vmul.f32 %v6453, %v6052
      %v6757 = vmul.f32 %v6453, %v6053
      %v6758 = vmul.f32 %v6453, %v6054
      %v6759 = vmul.f32 %v6453, %v6055
      %v6760 = vmul.f32 %v6453, %v6056
      %v6761 = vmul.f32 %v6453, %v6057
      %v6762 = vmul.f32 %v6453, %v6058
      %v6763 = vmul.f32 %v6453, %v6059
      %v6764 = vmul.f32 %v6453, %v6060
      %v6765 = vmul.f32 %v6453, %v6061
      %v6766 = vmul.f32 %v6453, %v6062
      %v6767 = vmul.f32 %v6453, %v6063
      %v6768 = vmul.f32 %v6453, %v6064
      %v6769 = vmul.f32 %v6458, %v6065
      %v6770 = vmul.f32 %v6458, %v6066
      %v6771 = vmul.f32 %v6458, %v6067
      %v6772 = vmul.f32 %v6458, %v6068
      %v6773 = vmul.f32 %v6458, %v6069
      %v6774 = vmul.f32 %v6458, %v6070
      %v6775 = vmul.f32 %v6458, %v6071
      %v6776 = vmul.f32 %v6458, %v6072
      %v6777 = vmul.f32 %v6458, %v6073
      %v6778 = vmul.f32 %v6458, %v6074
      %v6779 = vmul.f32 %v6458, %v6075
      %v6780 = vmul.f32 %v6458, %v6076
      %v6781 = vmul.f32 %v6458, %v6077
      %v6782 = vmul.f32 %v6458, %v6078
      %v6783 = vmul.f32 %v6458, %v6079
      %v6784 = vmul.f32 %v6458, %v6080
      %v6785 = vmul.f32 %v6463, %v6081
      %v6786 = vmul.f32 %v6463, %v6082
      %v6787 = vmul.f32 %v6463, %v6083
      %v6788 = vmul.f32 %v6463, %v6084
      %v6789 = vmul.f32 %v6463, %v6085
      %v6790 = vmul.f32 %v6463, %v6086
      %v6791 = vmul.f32 %v6463, %v6087
      %v6792 = vmul.f32 %v6463, %v6088
      %v6793 = vmul.f32 %v6463, %v6089
      %v6794 = vmul.f32 %v6463, %v6090
      %v6795 = vmul.f32 %v6463, %v6091
      %v6796 = vmul.f32 %v6463, %v6092
      %v6797 = vmul.f32 %v6463, %v6093
      %v6798 = vmul.f32 %v6463, %v6094
      %v6799 = vmul.f32 %v6463, %v6095
      %v6800 = vmul.f32 %v6463, %v6096
      %v6801 = vmul.f32 %v6468, %v6097
      %v6802 = vmul.f32 %v6468, %v6098
      %v6803 = vmul.f32 %v6468, %v6099
      %v6804 = vmul.f32 %v6468, %v6100
      %v6805 = vmul.f32 %v6468, %v6101
      %v6806 = vmul.f32 %v6468, %v6102
      %v6807 = vmul.f32 %v6468, %v6103
      %v6808 = vmul.f32 %v6468, %v6104
      %v6809 = vmul.f32 %v6468, %v6105
      %v6810 = vmul.f32 %v6468, %v6106
      %v6811 = vmul.f32 %v6468, %v6107
      %v6812 = vmul.f32 %v6468, %v6108
      %v6813 = vmul.f32 %v6468, %v6109
      %v6814 = vmul.f32 %v6468, %v6110
      %v6815 = vmul.f32 %v6468, %v6111
      %v6816 = vmul.f32 %v6468, %v6112
      %v6817 = vmul.f32 %v6473, %v6113
      %v6818 = vmul.f32 %v6473, %v6114
      %v6819 = vmul.f32 %v6473, %v6115
      %v6820 = vmul.f32 %v6473, %v6116
      %v6821 = vmul.f32 %v6473, %v6117
      %v6822 = vmul.f32 %v6473, %v6118
      %v6823 = vmul.f32 %v6473, %v6119
      %v6824 = vmul.f32 %v6473, %v6120
      %v6825 = vmul.f32 %v6473, %v6121
      %v6826 = vmul.f32 %v6473, %v6122
      %v6827 = vmul.f32 %v6473, %v6123
      %v6828 = vmul.f32 %v6473, %v6124
      %v6829 = vmul.f32 %v6473, %v6125
      %v6830 = vmul.f32 %v6473, %v6126
      %v6831 = vmul.f32 %v6473, %v6127
      %v6832 = vmul.f32 %v6473, %v6128
      %v6833 = vmul.f32 %v6478, %v6129
      %v6834 = vmul.f32 %v6478, %v6130
      %v6835 = vmul.f32 %v6478, %v6131
      %v6836 = vmul.f32 %v6478, %v6132
      %v6837 = vmul.f32 %v6478, %v6133
      %v6838 = vmul.f32 %v6478, %v6134
      %v6839 = vmul.f32 %v6478, %v6135
      %v6840 = vmul.f32 %v6478, %v6136
      %v6841 = vmul.f32 %v6478, %v6137
      %v6842 = vmul.f32 %v6478, %v6138
      %v6843 = vmul.f32 %v6478, %v6139
      %v6844 = vmul.f32 %v6478, %v6140
      %v6845 = vmul.f32 %v6478, %v6141
      %v6846 = vmul.f32 %v6478, %v6142
      %v6847 = vmul.f32 %v6478, %v6143
      %v6848 = vmul.f32 %v6478, %v6144
      %v6849 = vmul.f32 %v6483, %v6145
      %v6850 = vmul.f32 %v6483, %v6146
      %v6851 = vmul.f32 %v6483, %v6147
      %v6852 = vmul.f32 %v6483, %v6148
      %v6853 = vmul.f32 %v6483, %v6149
      %v6854 = vmul.f32 %v6483, %v6150
      %v6855 = vmul.f32 %v6483, %v6151
      %v6856 = vmul.f32 %v6483, %v6152
      %v6857 = vmul.f32 %v6483, %v6153
      %v6858 = vmul.f32 %v6483, %v6154
      %v6859 = vmul.f32 %v6483, %v6155
      %v6860 = vmul.f32 %v6483, %v6156
      %v6861 = vmul.f32 %v6483, %v6157
      %v6862 = vmul.f32 %v6483, %v6158
      %v6863 = vmul.f32 %v6483, %v6159
      %v6864 = vmul.f32 %v6483, %v6160
      %v6865 = vmul.f32 %v6488, %v6161
      %v6866 = vmul.f32 %v6488, %v6162
      %v6867 = vmul.f32 %v6488, %v6163
      %v6868 = vmul.f32 %v6488, %v6164
      %v6869 = vmul.f32 %v6488, %v6165
      %v6870 = vmul.f32 %v6488, %v6166
      %v6871 = vmul.f32 %v6488, %v6167
      %v6872 = vmul.f32 %v6488, %v6168
      %v6873 = vmul.f32 %v6488, %v6169
      %v6874 = vmul.f32 %v6488, %v6170
      %v6875 = vmul.f32 %v6488, %v6171
      %v6876 = vmul.f32 %v6488, %v6172
      %v6877 = vmul.f32 %v6488, %v6173
      %v6878 = vmul.f32 %v6488, %v6174
      %v6879 = vmul.f32 %v6488, %v6175
      %v6880 = vmul.f32 %v6488, %v6176
      %v6881 = vmul.f32 %v6493, %v6177
      %v6882 = vmul.f32 %v6493, %v6178
      %v6883 = vmul.f32 %v6493, %v6179
      %v6884 = vmul.f32 %v6493, %v6180
      %v6885 = vmul.f32 %v6493, %v6181
      %v6886 = vmul.f32 %v6493, %v6182
      %v6887 = vmul.f32 %v6493, %v6183
      %v6888 = vmul.f32 %v6493, %v6184
      %v6889 = vmul.f32 %v6493, %v6185
      %v6890 = vmul.f32 %v6493, %v6186
      %v6891 = vmul.f32 %v6493, %v6187
      %v6892 = vmul.f32 %v6493, %v6188
      %v6893 = vmul.f32 %v6493, %v6189
      %v6894 = vmul.f32 %v6493, %v6190
      %v6895 = vmul.f32 %v6493, %v6191
      %v6896 = vmul.f32 %v6493, %v6192
      %v6897 = vmul.f32 %v6498, %v6193
      %v6898 = vmul.f32 %v6498, %v6194
      %v6899 = vmul.f32 %v6498, %v6195
      %v6900 = vmul.f32 %v6498, %v6196
      %v6901 = vmul.f32 %v6498, %v6197
      %v6902 = vmul.f32 %v6498, %v6198
      %v6903 = vmul.f32 %v6498, %v6199
      %v6904 = vmul.f32 %v6498, %v6200
      %v6905 = vmul.f32 %v6498, %v6201
      %v6906 = vmul.f32 %v6498, %v6202
      %v6907 = vmul.f32 %v6498, %v6203
      %v6908 = vmul.f32 %v6498, %v6204
      %v6909 = vmul.f32 %v6498, %v6205
      %v6910 = vmul.f32 %v6498, %v6206
      %v6911 = vmul.f32 %v6498, %v6207
      %v6912 = vmul.f32 %v6498, %v6208
      %v6913 = vmul.f32 %v6503, %v6209
      %v6914 = vmul.f32 %v6503, %v6210
      %v6915 = vmul.f32 %v6503, %v6211
      %v6916 = vmul.f32 %v6503, %v6212
      %v6917 = vmul.f32 %v6503, %v6213
      %v6918 = vmul.f32 %v6503, %v6214
      %v6919 = vmul.f32 %v6503, %v6215
      %v6920 = vmul.f32 %v6503, %v6216
      %v6921 = vmul.f32 %v6503, %v6217
      %v6922 = vmul.f32 %v6503, %v6218
      %v6923 = vmul.f32 %v6503, %v6219
      %v6924 = vmul.f32 %v6503, %v6220
      %v6925 = vmul.f32 %v6503, %v6221
      %v6926 = vmul.f32 %v6503, %v6222
      %v6927 = vmul.f32 %v6503, %v6223
      %v6928 = vmul.f32 %v6503, %v6224
      %v6929 = vmul.f32 %v6508, %v6225
      %v6930 = vmul.f32 %v6508, %v6226
      %v6931 = vmul.f32 %v6508, %v6227
      %v6932 = vmul.f32 %v6508, %v6228
      %v6933 = vmul.f32 %v6508, %v6229
      %v6934 = vmul.f32 %v6508, %v6230
      %v6935 = vmul.f32 %v6508, %v6231
      %v6936 = vmul.f32 %v6508, %v6232
      %v6937 = vmul.f32 %v6508, %v6233
      %v6938 = vmul.f32 %v6508, %v6234
      %v6939 = vmul.f32 %v6508, %v6235
      %v6940 = vmul.f32 %v6508, %v6236
      %v6941 = vmul.f32 %v6508, %v6237
      %v6942 = vmul.f32 %v6508, %v6238
      %v6943 = vmul.f32 %v6508, %v6239
      %v6944 = vmul.f32 %v6508, %v6240
      %v6945 = vmul.f32 %v6513, %v6241
      %v6946 = vmul.f32 %v6513, %v6242
      %v6947 = vmul.f32 %v6513, %v6243
      %v6948 = vmul.f32 %v6513, %v6244
      %v6949 = vmul.f32 %v6513, %v6245
      %v6950 = vmul.f32 %v6513, %v6246
      %v6951 = vmul.f32 %v6513, %v6247
      %v6952 = vmul.f32 %v6513, %v6248
      %v6953 = vmul.f32 %v6513, %v6249
      %v6954 = vmul.f32 %v6513, %v6250
      %v6955 = vmul.f32 %v6513, %v6251
      %v6956 = vmul.f32 %v6513, %v6252
      %v6957 = vmul.f32 %v6513, %v6253
      %v6958 = vmul.f32 %v6513, %v6254
      %v6959 = vmul.f32 %v6513, %v6255
      %v6960 = vmul.f32 %v6513, %v6256
      %v6961 = vmul.f32 %v6518, %v6257
      %v6962 = vmul.f32 %v6518, %v6258
      %v6963 = vmul.f32 %v6518, %v6259
      %v6964 = vmul.f32 %v6518, %v6260
      %v6965 = vmul.f32 %v6518, %v6261
      %v6966 = vmul.f32 %v6518, %v6262
      %v6967 = vmul.f32 %v6518, %v6263
      %v6968 = vmul.f32 %v6518, %v6264
      %v6969 = vmul.f32 %v6518, %v6265
      %v6970 = vmul.f32 %v6518, %v6266
      %v6971 = vmul.f32 %v6518, %v6267
      %v6972 = vmul.f32 %v6518, %v6268
      %v6973 = vmul.f32 %v6518, %v6269
      %v6974 = vmul.f32 %v6518, %v6270
      %v6975 = vmul.f32 %v6518, %v6271
      %v6976 = vmul.f32 %v6518, %v6272
      %v6977 = vmul.f32 %v6523, %v6273
      %v6978 = vmul.f32 %v6523, %v6274
      %v6979 = vmul.f32 %v6523, %v6275
      %v6980 = vmul.f32 %v6523, %v6276
      %v6981 = vmul.f32 %v6523, %v6277
      %v6982 = vmul.f32 %v6523, %v6278
      %v6983 = vmul.f32 %v6523, %v6279
      %v6984 = vmul.f32 %v6523, %v6280
      %v6985 = vmul.f32 %v6523, %v6281
      %v6986 = vmul.f32 %v6523, %v6282
      %v6987 = vmul.f32 %v6523, %v6283
      %v6988 = vmul.f32 %v6523, %v6284
      %v6989 = vmul.f32 %v6523, %v6285
      %v6990 = vmul.f32 %v6523, %v6286
      %v6991 = vmul.f32 %v6523, %v6287
      %v6992 = vmul.f32 %v6523, %v6288
      %v6993 = vmul.f32 %v6528, %v6289
      %v6994 = vmul.f32 %v6528, %v6290
      %v6995 = vmul.f32 %v6528, %v6291
      %v6996 = vmul.f32 %v6528, %v6292
      %v6997 = vmul.f32 %v6528, %v6293
      %v6998 = vmul.f32 %v6528, %v6294
      %v6999 = vmul.f32 %v6528, %v6295
      %v7000 = vmul.f32 %v6528, %v6296
      %v7001 = vmul.f32 %v6528, %v6297
      %v7002 = vmul.f32 %v6528, %v6298
      %v7003 = vmul.f32 %v6528, %v6299
      %v7004 = vmul.f32 %v6528, %v6300
      %v7005 = vmul.f32 %v6528, %v6301
      %v7006 = vmul.f32 %v6528, %v6302
      %v7007 = vmul.f32 %v6528, %v6303
      %v7008 = vmul.f32 %v6528, %v6304
      %v7009 = vmul.f32 %v6533, %v6305
      %v7010 = vmul.f32 %v6533, %v6306
      %v7011 = vmul.f32 %v6533, %v6307
      %v7012 = vmul.f32 %v6533, %v6308
      %v7013 = vmul.f32 %v6533, %v6309
      %v7014 = vmul.f32 %v6533, %v6310
      %v7015 = vmul.f32 %v6533, %v6311
      %v7016 = vmul.f32 %v6533, %v6312
      %v7017 = vmul.f32 %v6533, %v6313
      %v7018 = vmul.f32 %v6533, %v6314
      %v7019 = vmul.f32 %v6533, %v6315
      %v7020 = vmul.f32 %v6533, %v6316
      %v7021 = vmul.f32 %v6533, %v6317
      %v7022 = vmul.f32 %v6533, %v6318
      %v7023 = vmul.f32 %v6533, %v6319
      %v7024 = vmul.f32 %v6533, %v6320
      %v7025 = vmul.f32 %v6538, %v6321
      %v7026 = vmul.f32 %v6538, %v6322
      %v7027 = vmul.f32 %v6538, %v6323
      %v7028 = vmul.f32 %v6538, %v6324
      %v7029 = vmul.f32 %v6538, %v6325
      %v7030 = vmul.f32 %v6538, %v6326
      %v7031 = vmul.f32 %v6538, %v6327
      %v7032 = vmul.f32 %v6538, %v6328
      %v7033 = vmul.f32 %v6538, %v6329
      %v7034 = vmul.f32 %v6538, %v6330
      %v7035 = vmul.f32 %v6538, %v6331
      %v7036 = vmul.f32 %v6538, %v6332
      %v7037 = vmul.f32 %v6538, %v6333
      %v7038 = vmul.f32 %v6538, %v6334
      %v7039 = vmul.f32 %v6538, %v6335
      %v7040 = vmul.f32 %v6538, %v6336
      %v7041 = vmul.f32 %v6543, %v6337
      %v7042 = vmul.f32 %v6543, %v6338
      %v7043 = vmul.f32 %v6543, %v6339
      %v7044 = vmul.f32 %v6543, %v6340
      %v7045 = vmul.f32 %v6543, %v6341
      %v7046 = vmul.f32 %v6543, %v6342
      %v7047 = vmul.f32 %v6543, %v6343
      %v7048 = vmul.f32 %v6543, %v6344
      %v7049 = vmul.f32 %v6543, %v6345
      %v7050 = vmul.f32 %v6543, %v6346
      %v7051 = vmul.f32 %v6543, %v6347
      %v7052 = vmul.f32 %v6543, %v6348
      %v7053 = vmul.f32 %v6543, %v6349
      %v7054 = vmul.f32 %v6543, %v6350
      %v7055 = vmul.f32 %v6543, %v6351
      %v7056 = vmul.f32 %v6543, %v6352
      %v7057 = vadd.f32 %v6545, %v6561
      %v7058 = vadd.f32 %v6546, %v6562
      %v7059 = vadd.f32 %v6547, %v6563
      %v7060 = vadd.f32 %v6548, %v6564
      %v7061 = vadd.f32 %v6549, %v6565
      %v7062 = vadd.f32 %v6550, %v6566
      %v7063 = vadd.f32 %v6551, %v6567
      %v7064 = vadd.f32 %v6552, %v6568
      %v7065 = vadd.f32 %v6553, %v6569
      %v7066 = vadd.f32 %v6554, %v6570
      %v7067 = vadd.f32 %v6555, %v6571
      %v7068 = vadd.f32 %v6556, %v6572
      %v7069 = vadd.f32 %v6557, %v6573
      %v7070 = vadd.f32 %v6558, %v6574
      %v7071 = vadd.f32 %v6559, %v6575
      %v7072 = vadd.f32 %v6560, %v6576
      %v7073 = vadd.f32 %v7057, %v6577
      %v7074 = vadd.f32 %v7058, %v6578
      %v7075 = vadd.f32 %v7059, %v6579
      %v7076 = vadd.f32 %v7060, %v6580
      %v7077 = vadd.f32 %v7061, %v6581
      %v7078 = vadd.f32 %v7062, %v6582
      %v7079 = vadd.f32 %v7063, %v6583
      %v7080 = vadd.f32 %v7064, %v6584
      %v7081 = vadd.f32 %v7065, %v6585
      %v7082 = vadd.f32 %v7066, %v6586
      %v7083 = vadd.f32 %v7067, %v6587
      %v7084 = vadd.f32 %v7068, %v6588
      %v7085 = vadd.f32 %v7069, %v6589
      %v7086 = vadd.f32 %v7070, %v6590
      %v7087 = vadd.f32 %v7071, %v6591
      %v7088 = vadd.f32 %v7072, %v6592
      %v7089 = vadd.f32 %v7073, %v6593
      %v7090 = vadd.f32 %v7074, %v6594
      %v7091 = vadd.f32 %v7075, %v6595
      %v7092 = vadd.f32 %v7076, %v6596
      %v7093 = vadd.f32 %v7077, %v6597
      %v7094 = vadd.f32 %v7078, %v6598
      %v7095 = vadd.f32 %v7079, %v6599
      %v7096 = vadd.f32 %v7080, %v6600
      %v7097 = vadd.f32 %v7081, %v6601
      %v7098 = vadd.f32 %v7082, %v6602
      %v7099 = vadd.f32 %v7083, %v6603
      %v7100 = vadd.f32 %v7084, %v6604
      %v7101 = vadd.f32 %v7085, %v6605
      %v7102 = vadd.f32 %v7086, %v6606
      %v7103 = vadd.f32 %v7087, %v6607
      %v7104 = vadd.f32 %v7088, %v6608
      %v7105 = vadd.f32 %v7089, %v6609
      %v7106 = vadd.f32 %v7090, %v6610
      %v7107 = vadd.f32 %v7091, %v6611
      %v7108 = vadd.f32 %v7092, %v6612
      %v7109 = vadd.f32 %v7093, %v6613
      %v7110 = vadd.f32 %v7094, %v6614
      %v7111 = vadd.f32 %v7095, %v6615
      %v7112 = vadd.f32 %v7096, %v6616
      %v7113 = vadd.f32 %v7097, %v6617
      %v7114 = vadd.f32 %v7098, %v6618
      %v7115 = vadd.f32 %v7099, %v6619
      %v7116 = vadd.f32 %v7100, %v6620
      %v7117 = vadd.f32 %v7101, %v6621
      %v7118 = vadd.f32 %v7102, %v6622
      %v7119 = vadd.f32 %v7103, %v6623
      %v7120 = vadd.f32 %v7104, %v6624
      %v7121 = vadd.f32 %v7105, %v6625
      %v7122 = vadd.f32 %v7106, %v6626
      %v7123 = vadd.f32 %v7107, %v6627
      %v7124 = vadd.f32 %v7108, %v6628
      %v7125 = vadd.f32 %v7109, %v6629
      %v7126 = vadd.f32 %v7110, %v6630
      %v7127 = vadd.f32 %v7111, %v6631
      %v7128 = vadd.f32 %v7112, %v6632
      %v7129 = vadd.f32 %v7113, %v6633
      %v7130 = vadd.f32 %v7114, %v6634
      %v7131 = vadd.f32 %v7115, %v6635
      %v7132 = vadd.f32 %v7116, %v6636
      %v7133 = vadd.f32 %v7117, %v6637
      %v7134 = vadd.f32 %v7118, %v6638
      %v7135 = vadd.f32 %v7119, %v6639
      %v7136 = vadd.f32 %v7120, %v6640
      %v7137 = vadd.f32 %v7121, %v6641
      %v7138 = vadd.f32 %v7122, %v6642
      %v7139 = vadd.f32 %v7123, %v6643
      %v7140 = vadd.f32 %v7124, %v6644
      %v7141 = vadd.f32 %v7125, %v6645
      %v7142 = vadd.f32 %v7126, %v6646
      %v7143 = vadd.f32 %v7127, %v6647
      %v7144 = vadd.f32 %v7128, %v6648
      %v7145 = vadd.f32 %v7129, %v6649
      %v7146 = vadd.f32 %v7130, %v6650
      %v7147 = vadd.f32 %v7131, %v6651
      %v7148 = vadd.f32 %v7132, %v6652
      %v7149 = vadd.f32 %v7133, %v6653
      %v7150 = vadd.f32 %v7134, %v6654
      %v7151 = vadd.f32 %v7135, %v6655
      %v7152 = vadd.f32 %v7136, %v6656
      %v7153 = vadd.f32 %v7137, %v6657
      %v7154 = vadd.f32 %v7138, %v6658
      %v7155 = vadd.f32 %v7139, %v6659
      %v7156 = vadd.f32 %v7140, %v6660
      %v7157 = vadd.f32 %v7141, %v6661
      %v7158 = vadd.f32 %v7142, %v6662
      %v7159 = vadd.f32 %v7143, %v6663
      %v7160 = vadd.f32 %v7144, %v6664
      %v7161 = vadd.f32 %v7145, %v6665
      %v7162 = vadd.f32 %v7146, %v6666
      %v7163 = vadd.f32 %v7147, %v6667
      %v7164 = vadd.f32 %v7148, %v6668
      %v7165 = vadd.f32 %v7149, %v6669
      %v7166 = vadd.f32 %v7150, %v6670
      %v7167 = vadd.f32 %v7151, %v6671
      %v7168 = vadd.f32 %v7152, %v6672
      %v7169 = vadd.f32 %v7153, %v6673
      %v7170 = vadd.f32 %v7154, %v6674
      %v7171 = vadd.f32 %v7155, %v6675
      %v7172 = vadd.f32 %v7156, %v6676
      %v7173 = vadd.f32 %v7157, %v6677
      %v7174 = vadd.f32 %v7158, %v6678
      %v7175 = vadd.f32 %v7159, %v6679
      %v7176 = vadd.f32 %v7160, %v6680
      %v7177 = vadd.f32 %v7161, %v6681
      %v7178 = vadd.f32 %v7162, %v6682
      %v7179 = vadd.f32 %v7163, %v6683
      %v7180 = vadd.f32 %v7164, %v6684
      %v7181 = vadd.f32 %v7165, %v6685
      %v7182 = vadd.f32 %v7166, %v6686
      %v7183 = vadd.f32 %v7167, %v6687
      %v7184 = vadd.f32 %v7168, %v6688
      %v7185 = vadd.f32 %v7169, %v6689
      %v7186 = vadd.f32 %v7170, %v6690
      %v7187 = vadd.f32 %v7171, %v6691
      %v7188 = vadd.f32 %v7172, %v6692
      %v7189 = vadd.f32 %v7173, %v6693
      %v7190 = vadd.f32 %v7174, %v6694
      %v7191 = vadd.f32 %v7175, %v6695
      %v7192 = vadd.f32 %v7176, %v6696
      %v7193 = vadd.f32 %v7177, %v6697
      %v7194 = vadd.f32 %v7178, %v6698
      %v7195 = vadd.f32 %v7179, %v6699
      %v7196 = vadd.f32 %v7180, %v6700
      %v7197 = vadd.f32 %v7181, %v6701
      %v7198 = vadd.f32 %v7182, %v6702
      %v7199 = vadd.f32 %v7183, %v6703
      %v7200 = vadd.f32 %v7184, %v6704
      %v7201 = vadd.f32 %v7185, %v6705
      %v7202 = vadd.f32 %v7186, %v6706
      %v7203 = vadd.f32 %v7187, %v6707
      %v7204 = vadd.f32 %v7188, %v6708
      %v7205 = vadd.f32 %v7189, %v6709
      %v7206 = vadd.f32 %v7190, %v6710
      %v7207 = vadd.f32 %v7191, %v6711
      %v7208 = vadd.f32 %v7192, %v6712
      %v7209 = vadd.f32 %v7193, %v6713
      %v7210 = vadd.f32 %v7194, %v6714
      %v7211 = vadd.f32 %v7195, %v6715
      %v7212 = vadd.f32 %v7196, %v6716
      %v7213 = vadd.f32 %v7197, %v6717
      %v7214 = vadd.f32 %v7198, %v6718
      %v7215 = vadd.f32 %v7199, %v6719
      %v7216 = vadd.f32 %v7200, %v6720
      %v7217 = vadd.f32 %v7201, %v6721
      %v7218 = vadd.f32 %v7202, %v6722
      %v7219 = vadd.f32 %v7203, %v6723
      %v7220 = vadd.f32 %v7204, %v6724
      %v7221 = vadd.f32 %v7205, %v6725
      %v7222 = vadd.f32 %v7206, %v6726
      %v7223 = vadd.f32 %v7207, %v6727
      %v7224 = vadd.f32 %v7208, %v6728
      %v7225 = vadd.f32 %v7209, %v6729
      %v7226 = vadd.f32 %v7210, %v6730
      %v7227 = vadd.f32 %v7211, %v6731
      %v7228 = vadd.f32 %v7212, %v6732
      %v7229 = vadd.f32 %v7213, %v6733
      %v7230 = vadd.f32 %v7214, %v6734
      %v7231 = vadd.f32 %v7215, %v6735
      %v7232 = vadd.f32 %v7216, %v6736
      %v7233 = vadd.f32 %v7217, %v6737
      %v7234 = vadd.f32 %v7218, %v6738
      %v7235 = vadd.f32 %v7219, %v6739
      %v7236 = vadd.f32 %v7220, %v6740
      %v7237 = vadd.f32 %v7221, %v6741
      %v7238 = vadd.f32 %v7222, %v6742
      %v7239 = vadd.f32 %v7223, %v6743
      %v7240 = vadd.f32 %v7224, %v6744
      %v7241 = vadd.f32 %v7225, %v6745
      %v7242 = vadd.f32 %v7226, %v6746
      %v7243 = vadd.f32 %v7227, %v6747
      %v7244 = vadd.f32 %v7228, %v6748
      %v7245 = vadd.f32 %v7229, %v6749
      %v7246 = vadd.f32 %v7230, %v6750
      %v7247 = vadd.f32 %v7231, %v6751
      %v7248 = vadd.f32 %v7232, %v6752
      %v7249 = vadd.f32 %v7233, %v6753
      %v7250 = vadd.f32 %v7234, %v6754
      %v7251 = vadd.f32 %v7235, %v6755
      %v7252 = vadd.f32 %v7236, %v6756
      %v7253 = vadd.f32 %v7237, %v6757
      %v7254 = vadd.f32 %v7238, %v6758
      %v7255 = vadd.f32 %v7239, %v6759
      %v7256 = vadd.f32 %v7240, %v6760
      %v7257 = vadd.f32 %v7241, %v6761
      %v7258 = vadd.f32 %v7242, %v6762
      %v7259 = vadd.f32 %v7243, %v6763
      %v7260 = vadd.f32 %v7244, %v6764
      %v7261 = vadd.f32 %v7245, %v6765
      %v7262 = vadd.f32 %v7246, %v6766
      %v7263 = vadd.f32 %v7247, %v6767
      %v7264 = vadd.f32 %v7248, %v6768
      %v7265 = vadd.f32 %v7249, %v6769
      %v7266 = vadd.f32 %v7250, %v6770
      %v7267 = vadd.f32 %v7251, %v6771
      %v7268 = vadd.f32 %v7252, %v6772
      %v7269 = vadd.f32 %v7253, %v6773
      %v7270 = vadd.f32 %v7254, %v6774
      %v7271 = vadd.f32 %v7255, %v6775
      %v7272 = vadd.f32 %v7256, %v6776
      %v7273 = vadd.f32 %v7257, %v6777
      %v7274 = vadd.f32 %v7258, %v6778
      %v7275 = vadd.f32 %v7259, %v6779
      %v7276 = vadd.f32 %v7260, %v6780
      %v7277 = vadd.f32 %v7261, %v6781
      %v7278 = vadd.f32 %v7262, %v6782
      %v7279 = vadd.f32 %v7263, %v6783
      %v7280 = vadd.f32 %v7264, %v6784
      %v7281 = vadd.f32 %v7265, %v6785
      %v7282 = vadd.f32 %v7266, %v6786
      %v7283 = vadd.f32 %v7267, %v6787
      %v7284 = vadd.f32 %v7268, %v6788
      %v7285 = vadd.f32 %v7269, %v6789
      %v7286 = vadd.f32 %v7270, %v6790
      %v7287 = vadd.f32 %v7271, %v6791
      %v7288 = vadd.f32 %v7272, %v6792
      %v7289 = vadd.f32 %v7273, %v6793
      %v7290 = vadd.f32 %v7274, %v6794
      %v7291 = vadd.f32 %v7275, %v6795
      %v7292 = vadd.f32 %v7276, %v6796
      %v7293 = vadd.f32 %v7277, %v6797
      %v7294 = vadd.f32 %v7278, %v6798
      %v7295 = vadd.f32 %v7279, %v6799
      %v7296 = vadd.f32 %v7280, %v6800
      %v7297 = vadd.f32 %v7281, %v6801
      %v7298 = vadd.f32 %v7282, %v6802
      %v7299 = vadd.f32 %v7283, %v6803
      %v7300 = vadd.f32 %v7284, %v6804
      %v7301 = vadd.f32 %v7285, %v6805
      %v7302 = vadd.f32 %v7286, %v6806
      %v7303 = vadd.f32 %v7287, %v6807
      %v7304 = vadd.f32 %v7288, %v6808
      %v7305 = vadd.f32 %v7289, %v6809
      %v7306 = vadd.f32 %v7290, %v6810
      %v7307 = vadd.f32 %v7291, %v6811
      %v7308 = vadd.f32 %v7292, %v6812
      %v7309 = vadd.f32 %v7293, %v6813
      %v7310 = vadd.f32 %v7294, %v6814
      %v7311 = vadd.f32 %v7295, %v6815
      %v7312 = vadd.f32 %v7296, %v6816
      %v7313 = vadd.f32 %v7297, %v6817
      %v7314 = vadd.f32 %v7298, %v6818
      %v7315 = vadd.f32 %v7299, %v6819
      %v7316 = vadd.f32 %v7300, %v6820
      %v7317 = vadd.f32 %v7301, %v6821
      %v7318 = vadd.f32 %v7302, %v6822
      %v7319 = vadd.f32 %v7303, %v6823
      %v7320 = vadd.f32 %v7304, %v6824
      %v7321 = vadd.f32 %v7305, %v6825
      %v7322 = vadd.f32 %v7306, %v6826
      %v7323 = vadd.f32 %v7307, %v6827
      %v7324 = vadd.f32 %v7308, %v6828
      %v7325 = vadd.f32 %v7309, %v6829
      %v7326 = vadd.f32 %v7310, %v6830
      %v7327 = vadd.f32 %v7311, %v6831
      %v7328 = vadd.f32 %v7312, %v6832
      %v7329 = vadd.f32 %v7313, %v6833
      %v7330 = vadd.f32 %v7314, %v6834
      %v7331 = vadd.f32 %v7315, %v6835
      %v7332 = vadd.f32 %v7316, %v6836
      %v7333 = vadd.f32 %v7317, %v6837
      %v7334 = vadd.f32 %v7318, %v6838
      %v7335 = vadd.f32 %v7319, %v6839
      %v7336 = vadd.f32 %v7320, %v6840
      %v7337 = vadd.f32 %v7321, %v6841
      %v7338 = vadd.f32 %v7322, %v6842
      %v7339 = vadd.f32 %v7323, %v6843
      %v7340 = vadd.f32 %v7324, %v6844
      %v7341 = vadd.f32 %v7325, %v6845
      %v7342 = vadd.f32 %v7326, %v6846
      %v7343 = vadd.f32 %v7327, %v6847
      %v7344 = vadd.f32 %v7328, %v6848
      %v7345 = vadd.f32 %v7329, %v6849
      %v7346 = vadd.f32 %v7330, %v6850
      %v7347 = vadd.f32 %v7331, %v6851
      %v7348 = vadd.f32 %v7332, %v6852
      %v7349 = vadd.f32 %v7333, %v6853
      %v7350 = vadd.f32 %v7334, %v6854
      %v7351 = vadd.f32 %v7335, %v6855
      %v7352 = vadd.f32 %v7336, %v6856
      %v7353 = vadd.f32 %v7337, %v6857
      %v7354 = vadd.f32 %v7338, %v6858
      %v7355 = vadd.f32 %v7339, %v6859
      %v7356 = vadd.f32 %v7340, %v6860
      %v7357 = vadd.f32 %v7341, %v6861
      %v7358 = vadd.f32 %v7342, %v6862
      %v7359 = vadd.f32 %v7343, %v6863
      %v7360 = vadd.f32 %v7344, %v6864
      %v7361 = vadd.f32 %v7345, %v6865
      %v7362 = vadd.f32 %v7346, %v6866
      %v7363 = vadd.f32 %v7347, %v6867
      %v7364 = vadd.f32 %v7348, %v6868
      %v7365 = vadd.f32 %v7349, %v6869
      %v7366 = vadd.f32 %v7350, %v6870
      %v7367 = vadd.f32 %v7351, %v6871
      %v7368 = vadd.f32 %v7352, %v6872
      %v7369 = vadd.f32 %v7353, %v6873
      %v7370 = vadd.f32 %v7354, %v6874
      %v7371 = vadd.f32 %v7355, %v6875
      %v7372 = vadd.f32 %v7356, %v6876
      %v7373 = vadd.f32 %v7357, %v6877
      %v7374 = vadd.f32 %v7358, %v6878
      %v7375 = vadd.f32 %v7359, %v6879
      %v7376 = vadd.f32 %v7360, %v6880
      %v7377 = vadd.f32 %v7361, %v6881
      %v7378 = vadd.f32 %v7362, %v6882
      %v7379 = vadd.f32 %v7363, %v6883
      %v7380 = vadd.f32 %v7364, %v6884
      %v7381 = vadd.f32 %v7365, %v6885
      %v7382 = vadd.f32 %v7366, %v6886
      %v7383 = vadd.f32 %v7367, %v6887
      %v7384 = vadd.f32 %v7368, %v6888
      %v7385 = vadd.f32 %v7369, %v6889
      %v7386 = vadd.f32 %v7370, %v6890
      %v7387 = vadd.f32 %v7371, %v6891
      %v7388 = vadd.f32 %v7372, %v6892
      %v7389 = vadd.f32 %v7373, %v6893
      %v7390 = vadd.f32 %v7374, %v6894
      %v7391 = vadd.f32 %v7375, %v6895
      %v7392 = vadd.f32 %v7376, %v6896
      %v7393 = vadd.f32 %v7377, %v6897
      %v7394 = vadd.f32 %v7378, %v6898
      %v7395 = vadd.f32 %v7379, %v6899
      %v7396 = vadd.f32 %v7380, %v6900
      %v7397 = vadd.f32 %v7381, %v6901
      %v7398 = vadd.f32 %v7382, %v6902
      %v7399 = vadd.f32 %v7383, %v6903
      %v7400 = vadd.f32 %v7384, %v6904
      %v7401 = vadd.f32 %v7385, %v6905
      %v7402 = vadd.f32 %v7386, %v6906
      %v7403 = vadd.f32 %v7387, %v6907
      %v7404 = vadd.f32 %v7388, %v6908
      %v7405 = vadd.f32 %v7389, %v6909
      %v7406 = vadd.f32 %v7390, %v6910
      %v7407 = vadd.f32 %v7391, %v6911
      %v7408 = vadd.f32 %v7392, %v6912
      %v7409 = vadd.f32 %v7393, %v6913
      %v7410 = vadd.f32 %v7394, %v6914
      %v7411 = vadd.f32 %v7395, %v6915
      %v7412 = vadd.f32 %v7396, %v6916
      %v7413 = vadd.f32 %v7397, %v6917
      %v7414 = vadd.f32 %v7398, %v6918
      %v7415 = vadd.f32 %v7399, %v6919
      %v7416 = vadd.f32 %v7400, %v6920
      %v7417 = vadd.f32 %v7401, %v6921
      %v7418 = vadd.f32 %v7402, %v6922
      %v7419 = vadd.f32 %v7403, %v6923
      %v7420 = vadd.f32 %v7404, %v6924
      %v7421 = vadd.f32 %v7405, %v6925
      %v7422 = vadd.f32 %v7406, %v6926
      %v7423 = vadd.f32 %v7407, %v6927
      %v7424 = vadd.f32 %v7408, %v6928
      %v7425 = vadd.f32 %v7409, %v6929
      %v7426 = vadd.f32 %v7410, %v6930
      %v7427 = vadd.f32 %v7411, %v6931
      %v7428 = vadd.f32 %v7412, %v6932
      %v7429 = vadd.f32 %v7413, %v6933
      %v7430 = vadd.f32 %v7414, %v6934
      %v7431 = vadd.f32 %v7415, %v6935
      %v7432 = vadd.f32 %v7416, %v6936
      %v7433 = vadd.f32 %v7417, %v6937
      %v7434 = vadd.f32 %v7418, %v6938
      %v7435 = vadd.f32 %v7419, %v6939
      %v7436 = vadd.f32 %v7420, %v6940
      %v7437 = vadd.f32 %v7421, %v6941
      %v7438 = vadd.f32 %v7422, %v6942
      %v7439 = vadd.f32 %v7423, %v6943
      %v7440 = vadd.f32 %v7424, %v6944
      %v7441 = vadd.f32 %v7425, %v6945
      %v7442 = vadd.f32 %v7426, %v6946
      %v7443 = vadd.f32 %v7427, %v6947
      %v7444 = vadd.f32 %v7428, %v6948
      %v7445 = vadd.f32 %v7429, %v6949
      %v7446 = vadd.f32 %v7430, %v6950
      %v7447 = vadd.f32 %v7431, %v6951
      %v7448 = vadd.f32 %v7432, %v6952
      %v7449 = vadd.f32 %v7433, %v6953
      %v7450 = vadd.f32 %v7434, %v6954
      %v7451 = vadd.f32 %v7435, %v6955
      %v7452 = vadd.f32 %v7436, %v6956
      %v7453 = vadd.f32 %v7437, %v6957
      %v7454 = vadd.f32 %v7438, %v6958
      %v7455 = vadd.f32 %v7439, %v6959
      %v7456 = vadd.f32 %v7440, %v6960
      %v7457 = vadd.f32 %v7441, %v6961
      %v7458 = vadd.f32 %v7442, %v6962
      %v7459 = vadd.f32 %v7443, %v6963
      %v7460 = vadd.f32 %v7444, %v6964
      %v7461 = vadd.f32 %v7445, %v6965
      %v7462 = vadd.f32 %v7446, %v6966
      %v7463 = vadd.f32 %v7447, %v6967
      %v7464 = vadd.f32 %v7448, %v6968
      %v7465 = vadd.f32 %v7449, %v6969
      %v7466 = vadd.f32 %v7450, %v6970
      %v7467 = vadd.f32 %v7451, %v6971
      %v7468 = vadd.f32 %v7452, %v6972
      %v7469 = vadd.f32 %v7453, %v6973
      %v7470 = vadd.f32 %v7454, %v6974
      %v7471 = vadd.f32 %v7455, %v6975
      %v7472 = vadd.f32 %v7456, %v6976
      %v7473 = vadd.f32 %v7457, %v6977
      %v7474 = vadd.f32 %v7458, %v6978
      %v7475 = vadd.f32 %v7459, %v6979
      %v7476 = vadd.f32 %v7460, %v6980
      %v7477 = vadd.f32 %v7461, %v6981
      %v7478 = vadd.f32 %v7462, %v6982
      %v7479 = vadd.f32 %v7463, %v6983
      %v7480 = vadd.f32 %v7464, %v6984
      %v7481 = vadd.f32 %v7465, %v6985
      %v7482 = vadd.f32 %v7466, %v6986
      %v7483 = vadd.f32 %v7467, %v6987
      %v7484 = vadd.f32 %v7468, %v6988
      %v7485 = vadd.f32 %v7469, %v6989
      %v7486 = vadd.f32 %v7470, %v6990
      %v7487 = vadd.f32 %v7471, %v6991
      %v7488 = vadd.f32 %v7472, %v6992
      %v7489 = vadd.f32 %v7473, %v6993
      %v7490 = vadd.f32 %v7474, %v6994
      %v7491 = vadd.f32 %v7475, %v6995
      %v7492 = vadd.f32 %v7476, %v6996
      %v7493 = vadd.f32 %v7477, %v6997
      %v7494 = vadd.f32 %v7478, %v6998
      %v7495 = vadd.f32 %v7479, %v6999
      %v7496 = vadd.f32 %v7480, %v7000
      %v7497 = vadd.f32 %v7481, %v7001
      %v7498 = vadd.f32 %v7482, %v7002
      %v7499 = vadd.f32 %v7483, %v7003
      %v7500 = vadd.f32 %v7484, %v7004
      %v7501 = vadd.f32 %v7485, %v7005
      %v7502 = vadd.f32 %v7486, %v7006
      %v7503 = vadd.f32 %v7487, %v7007
      %v7504 = vadd.f32 %v7488, %v7008
      %v7505 = vadd.f32 %v7489, %v7009
      %v7506 = vadd.f32 %v7490, %v7010
      %v7507 = vadd.f32 %v7491, %v7011
      %v7508 = vadd.f32 %v7492, %v7012
      %v7509 = vadd.f32 %v7493, %v7013
      %v7510 = vadd.f32 %v7494, %v7014
      %v7511 = vadd.f32 %v7495, %v7015
      %v7512 = vadd.f32 %v7496, %v7016
      %v7513 = vadd.f32 %v7497, %v7017
      %v7514 = vadd.f32 %v7498, %v7018
      %v7515 = vadd.f32 %v7499, %v7019
      %v7516 = vadd.f32 %v7500, %v7020
      %v7517 = vadd.f32 %v7501, %v7021
      %v7518 = vadd.f32 %v7502, %v7022
      %v7519 = vadd.f32 %v7503, %v7023
      %v7520 = vadd.f32 %v7504, %v7024
      %v7521 = vadd.f32 %v7505, %v7025
      %v7522 = vadd.f32 %v7506, %v7026
      %v7523 = vadd.f32 %v7507, %v7027
      %v7524 = vadd.f32 %v7508, %v7028
      %v7525 = vadd.f32 %v7509, %v7029
      %v7526 = vadd.f32 %v7510, %v7030
      %v7527 = vadd.f32 %v7511, %v7031
      %v7528 = vadd.f32 %v7512, %v7032
      %v7529 = vadd.f32 %v7513, %v7033
      %v7530 = vadd.f32 %v7514, %v7034
      %v7531 = vadd.f32 %v7515, %v7035
      %v7532 = vadd.f32 %v7516, %v7036
      %v7533 = vadd.f32 %v7517, %v7037
      %v7534 = vadd.f32 %v7518, %v7038
      %v7535 = vadd.f32 %v7519, %v7039
      %v7536 = vadd.f32 %v7520, %v7040
      %v7537 = vadd.f32 %v7521, %v7041
      %v7538 = vadd.f32 %v7522, %v7042
      %v7539 = vadd.f32 %v7523, %v7043
      %v7540 = vadd.f32 %v7524, %v7044
      %v7541 = vadd.f32 %v7525, %v7045
      %v7542 = vadd.f32 %v7526, %v7046
      %v7543 = vadd.f32 %v7527, %v7047
      %v7544 = vadd.f32 %v7528, %v7048
      %v7545 = vadd.f32 %v7529, %v7049
      %v7546 = vadd.f32 %v7530, %v7050
      %v7547 = vadd.f32 %v7531, %v7051
      %v7548 = vadd.f32 %v7532, %v7052
      %v7549 = vadd.f32 %v7533, %v7053
      %v7550 = vadd.f32 %v7534, %v7054
      %v7551 = vadd.f32 %v7535, %v7055
      %v7552 = vadd.f32 %v7536, %v7056
      %v7553 = vld [vmem:[#allocation2] sm:$0x1]
      %v7555 = vlaneseq
      %v7556 = vshrl.u32 %v7555, 7
      %v7557 = vsub.s32 0, %v7556
      %v7558 = vrot.slane %v7553, %v7557
      %7559 = vset.pattern.permute.xlu0 0
      %7560 = vperm.xlu0 %7559, %v7558
      %v7561 = vpop.permute.xlu0 %7560
      %v7563 = vadd.f32 %v7537, %v7561
      %v7564 = vadd.f32 %v7538, %v7561
      %v7565 = vadd.f32 %v7539, %v7561
      %v7566 = vadd.f32 %v7540, %v7561
      %v7567 = vadd.f32 %v7541, %v7561
      %v7568 = vadd.f32 %v7542, %v7561
      %v7569 = vadd.f32 %v7543, %v7561
      %v7570 = vadd.f32 %v7544, %v7561
      %v7571 = vadd.f32 %v7545, %v7561
      %v7572 = vadd.f32 %v7546, %v7561
      %v7573 = vadd.f32 %v7547, %v7561
      %v7574 = vadd.f32 %v7548, %v7561
      %v7575 = vadd.f32 %v7549, %v7561
      %v7576 = vadd.f32 %v7550, %v7561
      %v7577 = vadd.f32 %v7551, %v7561
      %v7578 = vadd.f32 %v7552, %v7561
      %7579 = vst [vmem:[%s280] sm:$0xff] %v7563
      %7580 = vst [vmem:[%s280 + $0x8] sm:$0xff] %v7564
      %7581 = vst [vmem:[%s280 + $0x10] sm:$0xff] %v7565
      %7582 = vst [vmem:[%s280 + $0x18] sm:$0xff] %v7566
      %7583 = vst [vmem:[%s280 + $0x20] sm:$0xff] %v7567
      %7584 = vst [vmem:[%s280 + $0x28] sm:$0xff] %v7568
      %7585 = vst [vmem:[%s280 + $0x30] sm:$0xff] %v7569
      %7586 = vst [vmem:[%s280 + $0x38] sm:$0xff] %v7570
      %7587 = vst [vmem:[%s280 + $0x40] sm:$0xff] %v7571
      %7588 = vst [vmem:[%s280 + $0x48] sm:$0xff] %v7572
      %7589 = vst [vmem:[%s280 + $0x50] sm:$0xff] %v7573
      %7590 = vst [vmem:[%s280 + $0x58] sm:$0xff] %v7574
      %7591 = vst [vmem:[%s280 + $0x60] sm:$0xff] %v7575
      %7592 = vst [vmem:[%s280 + $0x68] sm:$0xff] %v7576
      %7593 = vst [vmem:[%s280 + $0x70] sm:$0xff] %v7577
      %7594 = vst [vmem:[%s280 + $0x78] sm:$0xff] %v7578
      %p7595 = scmp.lt.s32.totalorder %s20, 1
      %s7596 = scalar_select %p7595, %s20, 1
      %s7597 = smul.addr %s7596, 16
      %s7598 = smul.addr %s7597, 8
      %s7599 = scalar_lea.vmem %s7, %s7598
      // Predicated region
      $region49: #{mlp_forward.1} parent=47 // pred_check
        %p7600 = pneg %p190
      $region50: #{mlp_forward.1} parent=47 // pred_check_branch
        %7602 = sbr.rel (%p7600) target = $region52
      $region51: #{mlp_forward.1} parent=47 // pred_region
        _
      $region52: #{mlp_forward.1} parent=47 // pred_fallthru
        _
    $region48: #{mlp_forward.1} parent=5 // pred_fallthru
      _
    %p7603 = scmp.le.s32.totalorder 2, %s15
    // Predicated region
    $region53: #{mlp_forward.1} parent=5 // pred_check
      %p7604 = pneg %p7603
    $region54: #{mlp_forward.1} parent=5 // pred_check_branch
      %7606 = sbr.rel (%p7604) target = $region56
    $region55: #{mlp_forward.1} parent=5 // pred_region
      %s7607 = ssub.s32 %s15, 2
      // Predicated region
      $region57: #{mlp_forward.1} parent=55 // pred_check
        %p7608 = pneg %p196
      $region58: #{mlp_forward.1} parent=55 // pred_check_branch
        %7610 = sbr.rel (%p7608) target = $region60
      $region59: #{mlp_forward.1} parent=55 // pred_region
        %p7611 = scmp.lt.s32.totalorder %s21, 1
        %s7612 = scalar_select %p7611, %s21, 1
        %s7613 = smul.addr %s7612, 16
        %s7614 = smul.addr %s7613, 8
        %s7615 = scalar_lea.vmem %s7, %s7614
      $region60: #{mlp_forward.1} parent=55 // pred_fallthru
        _
    $region56: #{mlp_forward.1} parent=5 // pred_fallthru
      _
  $region6: #{mlp_forward.1} parent=0 // loop_footer
    %s19 = sadd.s32 1, %s15
  $region7: #{mlp_forward.1} parent=0 // loop_footer_branch
    %14 = sbr.rel target = $region3
  $region8: #{mlp_forward.1} parent=0 // loop_exit
    _

</llo_original>
